<compile_context>
chip_gen: v7x
topology: tpu7x:2x2x1
jax: 0.10.0
libtpu: 0.0.40
codegen_flags: <defaults>
</compile_context>

<pallas_src>
import jax
import jax.numpy as jnp
import numpy as np
from jax.experimental import pallas as pl
from jax.experimental.pallas import tpu as pltpu


def _make_resnet_block_kernel(H, W):
    HW = H * W

    def kernel(x_ref, w1_ref, b1_ref, w2_ref, b2_ref, o_ref, pad_ref, col_ref):
        # x_ref:   (1, C, H*W)          one image, lane-dense
        # w*_ref:  (C, 9*C) f32         conv taps, column index (kh*3+kw)*C + c_in
        # b*_ref:  (C, 1)   f32         conv bias
        # pad_ref: VMEM (C, H+2, W+2)   reflection-pad scratch
        # col_ref: VMEM (9*C, H*W)      im2col slab scratch (lane-dense matmul rhs)
        _, C, _ = x_ref.shape

        def conv3x3(t_flat, w_ref, b_ref):
            # t_flat (C, HW) f32 -> conv3x3(reflect_pad1(t)) + bias as (C, HW) f32.
            t = t_flat.reshape(C, H, W)
            # Reflection pad (pad=1): row 0 <- row 1, row H+1 <- row H-2; border
            # columns mirror the already-filled padded rows (covers corners too).
            pad_ref[:, 1:H + 1, 1:W + 1] = t
            pad_ref[:, 0:1, 1:W + 1] = t[:, 1:2, :]
            pad_ref[:, H + 1:H + 2, 1:W + 1] = t[:, H - 2:H - 1, :]
            pad_ref[:, :, 0:1] = pad_ref[:, :, 2:3]
            pad_ref[:, :, W + 1:W + 2] = pad_ref[:, :, W - 1:W]
            # Build the im2col slab once: tap k = kh*3+kw -> rows [k*C, (k+1)*C).
            for kh in range(3):
                for kw in range(3):
                    k = kh * 3 + kw
                    col_ref[k * C:(k + 1) * C, :] = (
                        pad_ref[:, kh:kh + H, kw:kw + W].reshape(C, HW))
            # Single fused MXU matmul: (C, 9C) @ (9C, HW), bf16 in / f32 accumulate.
            slab = col_ref[...].astype(jnp.bfloat16)
            wk = w_ref[...].astype(jnp.bfloat16)
            y = jnp.dot(wk, slab, preferred_element_type=jnp.float32)
            return y + b_ref[...]                       # (C,1) broadcast -> (C,HW)

        def instance_norm(y):
            # Single-pass per-channel mean/var over the lane (spatial) axis, eps=1e-5.
            inv_n = 1.0 / HW
            mean = jnp.sum(y, axis=1, keepdims=True) * inv_n
            ex2 = jnp.sum(y * y, axis=1, keepdims=True) * inv_n
            var = ex2 - mean * mean
            return (y - mean) * jax.lax.rsqrt(var + 1e-5)

        h1 = jnp.maximum(instance_norm(conv3x3(x_ref[0], w1_ref, b1_ref)), 0.0)
        h2 = instance_norm(conv3x3(h1, w2_ref, b2_ref))
        # Residual: re-read x from VMEM here (keeps x's live range out of the convs).
        o_ref[0] = (x_ref[0] + h2).astype(o_ref.dtype)

    return kernel


def resnet_block(x, w1, b1, w2, b2):
    """x: (N, C, H, W) f32; w*: (C, C, 3, 3) f32; b*: (C,) f32."""
    N, C, H, W = x.shape
    HW = H * W
    # Lane-dense activations (last dim a multiple of 128 for H=W=16).
    x_flat = x.reshape(N, C, HW)
    # Flatten weights for the fused im2col matmul: column = (kh*3+kw)*C + c_in.
    w1f = jnp.transpose(w1, (0, 2, 3, 1)).reshape(C, 9 * C)
    w2f = jnp.transpose(w2, (0, 2, 3, 1)).reshape(C, 9 * C)
    b1c = b1.reshape(C, 1).astype(jnp.float32)
    b2c = b2.reshape(C, 1).astype(jnp.float32)

    kernel = _make_resnet_block_kernel(H, W)
    out = pl.pallas_call(
        kernel,
        out_shape=jax.ShapeDtypeStruct((N, C, HW), x.dtype),
        grid_spec=pltpu.PrefetchScalarGridSpec(
            num_scalar_prefetch=0,
            grid=(N,),
            in_specs=[
                pl.BlockSpec((1, C, HW), lambda n: (n, 0, 0)),
                pl.BlockSpec((C, 9 * C), lambda n: (0, 0)),
                pl.BlockSpec((C, 1), lambda n: (0, 0)),
                pl.BlockSpec((C, 9 * C), lambda n: (0, 0)),
                pl.BlockSpec((C, 1), lambda n: (0, 0)),
            ],
            out_specs=pl.BlockSpec((1, C, HW), lambda n: (n, 0, 0)),
            scratch_shapes=[
                pltpu.VMEM((C, H + 2, W + 2), jnp.float32),   # reflection-pad scratch
                pltpu.VMEM((9 * C, HW), jnp.float32),         # im2col slab scratch
            ],
        ),
        compiler_params=pltpu.CompilerParams(
            dimension_semantics=("parallel",),      # >=2 steps keeps both v7x TCs busy
            vmem_limit_bytes=32 * 1024 * 1024,
        ),
    )(x_flat, w1f, b1c, w2f, b2c)
    return out.reshape(N, C, H, W)


def ref_forward(x, w1, b1, w2, b2):
    """Pure-JAX f32 reference matching the PyTorch forward."""
    def conv_norm(t, w, b):
        tp = jnp.pad(t, ((0, 0), (0, 0), (1, 1), (1, 1)), mode="reflect")
        y = jax.lax.conv_general_dilated(
            tp, w, window_strides=(1, 1), padding="VALID",
            dimension_numbers=("NCHW", "OIHW", "NCHW"))
        y = y + b[None, :, None, None]
        mean = y.mean(axis=(2, 3), keepdims=True)
        var = ((y - mean) ** 2).mean(axis=(2, 3), keepdims=True)
        return (y - mean) / jnp.sqrt(var + 1e-5)

    h = jax.nn.relu(conv_norm(x, w1, b1))
    h = conv_norm(h, w2, b2)
    return x + h


if __name__ == "__main__":
    N, C, H, W = 2, 8, 16, 16  # dim = 8

    key = jax.random.PRNGKey(0)
    kx, k1, k2, k3, k4 = jax.random.split(key, 5)

    # deterministic synthetic parameters (PyTorch-like uniform fan-in init)
    fan_in = C * 3 * 3
    bound = 1.0 / np.sqrt(fan_in)
    w1 = jax.random.uniform(k1, (C, C, 3, 3), jnp.float32, -bound, bound)
    b1 = jax.random.uniform(k2, (C,), jnp.float32, -bound, bound)
    w2 = jax.random.uniform(k3, (C, C, 3, 3), jnp.float32, -bound, bound)
    b2 = jax.random.uniform(k4, (C,), jnp.float32, -bound, bound)

    x = jax.random.normal(kx, (N, C, H, W), jnp.float32)

    out = jax.block_until_ready(resnet_block(x, w1, b1, w2, b2))
    ref = jax.block_until_ready(ref_forward(x, w1, b1, w2, b2))

    max_err = float(jnp.max(jnp.abs(out - ref)))
    assert out.shape == (N, C, H, W) and out.dtype == jnp.float32
    # bf16 MXU operands (f32 reference conv) -> expected max |err| ~1e-2 at unit scale.
    assert max_err < 3e-2, f"mismatch vs reference: max_err={max_err}"

    print("KERNEL_OK")
</pallas_src>

<mosaic_0001>
module attributes {stable_mosaic.version = 11 : i64} {
  func.func @kernel(%arg0: i32, %arg1: memref<1x8x256xf32, #tpu.memory_space<vmem>>, %arg2: memref<8x72xf32, #tpu.memory_space<vmem>>, %arg3: memref<8x1xf32, #tpu.memory_space<vmem>>, %arg4: memref<8x72xf32, #tpu.memory_space<vmem>>, %arg5: memref<8x1xf32, #tpu.memory_space<vmem>>, %arg6: memref<1x8x256xf32, #tpu.memory_space<vmem>>, %arg7: memref<8x18x18xf32, #tpu.memory_space<vmem>>, %arg8: memref<72x256xf32, #tpu.memory_space<vmem>>) attributes {dimension_semantics = [#tpu.dimension_semantics<parallel>], iteration_bounds = array<i64: 2>, scalar_prefetch = 0 : i64, scratch_operands = 2 : i64, tpu.core_type = #tpu.core_type<tc>, window_params = [{transform_indices = @transform_0, window_bounds = array<i64: 1, 8, 256>}, {pipeline_mode = #tpu.pipeline_mode<synchronous>, transform_indices = @transform_1, window_bounds = array<i64: 8, 72>}, {pipeline_mode = #tpu.pipeline_mode<synchronous>, transform_indices = @transform_2, window_bounds = array<i64: 8, 1>}, {pipeline_mode = #tpu.pipeline_mode<synchronous>, transform_indices = @transform_3, window_bounds = array<i64: 8, 72>}, {pipeline_mode = #tpu.pipeline_mode<synchronous>, transform_indices = @transform_4, window_bounds = array<i64: 8, 1>}, {transform_indices = @transform_5, window_bounds = array<i64: 1, 8, 256>}]} {
    %c0 = arith.constant 0 : index
    %c0_0 = arith.constant 0 : index
    %c0_1 = arith.constant 0 : index
    %0 = vector.load %arg1[%c0, %c0_0, %c0_1] : memref<1x8x256xf32, #tpu.memory_space<vmem>>, vector<1x8x256xf32>
    %1 = vector.shape_cast %0 : vector<1x8x256xf32> to vector<8x256xf32>
    %2 = vector.shape_cast %1 : vector<8x256xf32> to vector<8x16x16xf32>
    %c0_2 = arith.constant 0 : index
    %c1 = arith.constant 1 : index
    %c1_3 = arith.constant 1 : index
    %3 = vector.load %arg7[%c0_2, %c1, %c1_3] : memref<8x18x18xf32, #tpu.memory_space<vmem>>, vector<8x16x16xf32>
    tpu.vector_store %arg7[%c0_2, %c1, %c1_3], %2 {strides = array<i32>} : memref<8x18x18xf32, #tpu.memory_space<vmem>>, vector<8x16x16xf32>,
    %4 = vector.extract_strided_slice %2 {offsets = [0, 1, 0], sizes = [8, 1, 16], strides = [1, 1, 1]} : vector<8x16x16xf32> to vector<8x1x16xf32>
    %c0_4 = arith.constant 0 : index
    %c0_5 = arith.constant 0 : index
    %c1_6 = arith.constant 1 : index
    %5 = vector.load %arg7[%c0_4, %c0_5, %c1_6] : memref<8x18x18xf32, #tpu.memory_space<vmem>>, vector<8x1x16xf32>
    tpu.vector_store %arg7[%c0_4, %c0_5, %c1_6], %4 {strides = array<i32>} : memref<8x18x18xf32, #tpu.memory_space<vmem>>, vector<8x1x16xf32>,
    %6 = vector.extract_strided_slice %2 {offsets = [0, 14, 0], sizes = [8, 1, 16], strides = [1, 1, 1]} : vector<8x16x16xf32> to vector<8x1x16xf32>
    %c0_7 = arith.constant 0 : index
    %c17 = arith.constant 17 : index
    %c1_8 = arith.constant 1 : index
    %7 = vector.load %arg7[%c0_7, %c17, %c1_8] : memref<8x18x18xf32, #tpu.memory_space<vmem>>, vector<8x1x16xf32>
    tpu.vector_store %arg7[%c0_7, %c17, %c1_8], %6 {strides = array<i32>} : memref<8x18x18xf32, #tpu.memory_space<vmem>>, vector<8x1x16xf32>,
    %c0_9 = arith.constant 0 : index
    %c0_10 = arith.constant 0 : index
    %c2 = arith.constant 2 : index
    %8 = vector.load %arg7[%c0_9, %c0_10, %c2] : memref<8x18x18xf32, #tpu.memory_space<vmem>>, vector<8x18x1xf32>
    %c0_11 = arith.constant 0 : index
    %c0_12 = arith.constant 0 : index
    %c0_13 = arith.constant 0 : index
    %9 = vector.load %arg7[%c0_11, %c0_12, %c0_13] : memref<8x18x18xf32, #tpu.memory_space<vmem>>, vector<8x18x1xf32>
    tpu.vector_store %arg7[%c0_11, %c0_12, %c0_13], %8 {strides = array<i32>} : memref<8x18x18xf32, #tpu.memory_space<vmem>>, vector<8x18x1xf32>,
    %c0_14 = arith.constant 0 : index
    %c0_15 = arith.constant 0 : index
    %c15 = arith.constant 15 : index
    %10 = vector.load %arg7[%c0_14, %c0_15, %c15] : memref<8x18x18xf32, #tpu.memory_space<vmem>>, vector<8x18x1xf32>
    %c0_16 = arith.constant 0 : index
    %c0_17 = arith.constant 0 : index
    %c17_18 = arith.constant 17 : index
    %11 = vector.load %arg7[%c0_16, %c0_17, %c17_18] : memref<8x18x18xf32, #tpu.memory_space<vmem>>, vector<8x18x1xf32>
    tpu.vector_store %arg7[%c0_16, %c0_17, %c17_18], %10 {strides = array<i32>} : memref<8x18x18xf32, #tpu.memory_space<vmem>>, vector<8x18x1xf32>,
    %c0_19 = arith.constant 0 : index
    %c0_20 = arith.constant 0 : index
    %c0_21 = arith.constant 0 : index
    %12 = vector.load %arg7[%c0_19, %c0_20, %c0_21] : memref<8x18x18xf32, #tpu.memory_space<vmem>>, vector<8x16x16xf32>
    %13 = vector.shape_cast %12 : vector<8x16x16xf32> to vector<8x256xf32>
    %c0_22 = arith.constant 0 : index
    %c0_23 = arith.constant 0 : index
    %14 = vector.load %arg8[%c0_22, %c0_23] : memref<72x256xf32, #tpu.memory_space<vmem>>, vector<8x256xf32>
    tpu.vector_store %arg8[%c0_22, %c0_23], %13 {strides = array<i32>} : memref<72x256xf32, #tpu.memory_space<vmem>>, vector<8x256xf32>,
    %c0_24 = arith.constant 0 : index
    %c0_25 = arith.constant 0 : index
    %c1_26 = arith.constant 1 : index
    %15 = vector.load %arg7[%c0_24, %c0_25, %c1_26] : memref<8x18x18xf32, #tpu.memory_space<vmem>>, vector<8x16x16xf32>
    %16 = vector.shape_cast %15 : vector<8x16x16xf32> to vector<8x256xf32>
    %c8 = arith.constant 8 : index
    %c0_27 = arith.constant 0 : index
    %17 = vector.load %arg8[%c8, %c0_27] : memref<72x256xf32, #tpu.memory_space<vmem>>, vector<8x256xf32>
    tpu.vector_store %arg8[%c8, %c0_27], %16 {strides = array<i32>} : memref<72x256xf32, #tpu.memory_space<vmem>>, vector<8x256xf32>,
    %c0_28 = arith.constant 0 : index
    %c0_29 = arith.constant 0 : index
    %c2_30 = arith.constant 2 : index
    %18 = vector.load %arg7[%c0_28, %c0_29, %c2_30] : memref<8x18x18xf32, #tpu.memory_space<vmem>>, vector<8x16x16xf32>
    %19 = vector.shape_cast %18 : vector<8x16x16xf32> to vector<8x256xf32>
    %c16 = arith.constant 16 : index
    %c0_31 = arith.constant 0 : index
    %20 = vector.load %arg8[%c16, %c0_31] : memref<72x256xf32, #tpu.memory_space<vmem>>, vector<8x256xf32>
    tpu.vector_store %arg8[%c16, %c0_31], %19 {strides = array<i32>} : memref<72x256xf32, #tpu.memory_space<vmem>>, vector<8x256xf32>,
    %c0_32 = arith.constant 0 : index
    %c1_33 = arith.constant 1 : index
    %c0_34 = arith.constant 0 : index
    %21 = vector.load %arg7[%c0_32, %c1_33, %c0_34] : memref<8x18x18xf32, #tpu.memory_space<vmem>>, vector<8x16x16xf32>
    %22 = vector.shape_cast %21 : vector<8x16x16xf32> to vector<8x256xf32>
    %c24 = arith.constant 24 : index
    %c0_35 = arith.constant 0 : index
    %23 = vector.load %arg8[%c24, %c0_35] : memref<72x256xf32, #tpu.memory_space<vmem>>, vector<8x256xf32>
    tpu.vector_store %arg8[%c24, %c0_35], %22 {strides = array<i32>} : memref<72x256xf32, #tpu.memory_space<vmem>>, vector<8x256xf32>,
    %c0_36 = arith.constant 0 : index
    %c1_37 = arith.constant 1 : index
    %c1_38 = arith.constant 1 : index
    %24 = vector.load %arg7[%c0_36, %c1_37, %c1_38] : memref<8x18x18xf32, #tpu.memory_space<vmem>>, vector<8x16x16xf32>
    %25 = vector.shape_cast %24 : vector<8x16x16xf32> to vector<8x256xf32>
    %c32 = arith.constant 32 : index
    %c0_39 = arith.constant 0 : index
    %26 = vector.load %arg8[%c32, %c0_39] : memref<72x256xf32, #tpu.memory_space<vmem>>, vector<8x256xf32>
    tpu.vector_store %arg8[%c32, %c0_39], %25 {strides = array<i32>} : memref<72x256xf32, #tpu.memory_space<vmem>>, vector<8x256xf32>,
    %c0_40 = arith.constant 0 : index
    %c1_41 = arith.constant 1 : index
    %c2_42 = arith.constant 2 : index
    %27 = vector.load %arg7[%c0_40, %c1_41, %c2_42] : memref<8x18x18xf32, #tpu.memory_space<vmem>>, vector<8x16x16xf32>
    %28 = vector.shape_cast %27 : vector<8x16x16xf32> to vector<8x256xf32>
    %c40 = arith.constant 40 : index
    %c0_43 = arith.constant 0 : index
    %29 = vector.load %arg8[%c40, %c0_43] : memref<72x256xf32, #tpu.memory_space<vmem>>, vector<8x256xf32>
    tpu.vector_store %arg8[%c40, %c0_43], %28 {strides = array<i32>} : memref<72x256xf32, #tpu.memory_space<vmem>>, vector<8x256xf32>,
    %c0_44 = arith.constant 0 : index
    %c2_45 = arith.constant 2 : index
    %c0_46 = arith.constant 0 : index
    %30 = vector.load %arg7[%c0_44, %c2_45, %c0_46] : memref<8x18x18xf32, #tpu.memory_space<vmem>>, vector<8x16x16xf32>
    %31 = vector.shape_cast %30 : vector<8x16x16xf32> to vector<8x256xf32>
    %c48 = arith.constant 48 : index
    %c0_47 = arith.constant 0 : index
    %32 = vector.load %arg8[%c48, %c0_47] : memref<72x256xf32, #tpu.memory_space<vmem>>, vector<8x256xf32>
    tpu.vector_store %arg8[%c48, %c0_47], %31 {strides = array<i32>} : memref<72x256xf32, #tpu.memory_space<vmem>>, vector<8x256xf32>,
    %c0_48 = arith.constant 0 : index
    %c2_49 = arith.constant 2 : index
    %c1_50 = arith.constant 1 : index
    %33 = vector.load %arg7[%c0_48, %c2_49, %c1_50] : memref<8x18x18xf32, #tpu.memory_space<vmem>>, vector<8x16x16xf32>
    %34 = vector.shape_cast %33 : vector<8x16x16xf32> to vector<8x256xf32>
    %c56 = arith.constant 56 : index
    %c0_51 = arith.constant 0 : index
    %35 = vector.load %arg8[%c56, %c0_51] : memref<72x256xf32, #tpu.memory_space<vmem>>, vector<8x256xf32>
    tpu.vector_store %arg8[%c56, %c0_51], %34 {strides = array<i32>} : memref<72x256xf32, #tpu.memory_space<vmem>>, vector<8x256xf32>,
    %c0_52 = arith.constant 0 : index
    %c2_53 = arith.constant 2 : index
    %c2_54 = arith.constant 2 : index
    %36 = vector.load %arg7[%c0_52, %c2_53, %c2_54] : memref<8x18x18xf32, #tpu.memory_space<vmem>>, vector<8x16x16xf32>
    %37 = vector.shape_cast %36 : vector<8x16x16xf32> to vector<8x256xf32>
    %c64 = arith.constant 64 : index
    %c0_55 = arith.constant 0 : index
    %38 = vector.load %arg8[%c64, %c0_55] : memref<72x256xf32, #tpu.memory_space<vmem>>, vector<8x256xf32>
    tpu.vector_store %arg8[%c64, %c0_55], %37 {strides = array<i32>} : memref<72x256xf32, #tpu.memory_space<vmem>>, vector<8x256xf32>,
    %c0_56 = arith.constant 0 : index
    %c0_57 = arith.constant 0 : index
    %39 = vector.load %arg8[%c0_56, %c0_57] : memref<72x256xf32, #tpu.memory_space<vmem>>, vector<72x256xf32>
    %40 = arith.truncf %39 : vector<72x256xf32> to vector<72x256xbf16>
    %c0_58 = arith.constant 0 : index
    %c0_59 = arith.constant 0 : index
    %41 = vector.load %arg2[%c0_58, %c0_59] : memref<8x72xf32, #tpu.memory_space<vmem>>, vector<8x72xf32>
    %42 = arith.truncf %41 : vector<8x72xf32> to vector<8x72xbf16>
    %cst = arith.constant dense<0.000000e+00> : vector<8x256xf32>
    %43 = tpu.matmul %42, %40, %cst {dimension_numbers = #tpu.dot_dimension_numbers<[1], [0], [0], [1], [0, 0, 1, 1], [], []>} : vector<8x72xbf16>, vector<72x256xbf16>, vector<8x256xf32> -> vector<8x256xf32>
    %c0_60 = arith.constant 0 : index
    %c0_61 = arith.constant 0 : index
    %44 = vector.load %arg3[%c0_60, %c0_61] : memref<8x1xf32, #tpu.memory_space<vmem>>, vector<8x1xf32>
    %45 = vector.broadcast %44 : vector<8x1xf32> to vector<8x256xf32>
    %46 = arith.addf %43, %45 : vector<8x256xf32>
    %cst_62 = arith.constant dense<0.000000e+00> : vector<8xf32>
    %47 = vector.multi_reduction <add>, %46, %cst_62 [1] : vector<8x256xf32> to vector<8xf32>
    %48 = vector.shape_cast %47 : vector<8xf32> to vector<8x1xf32>
    %cst_63 = arith.constant 3.906250e-03 : f32
    %49 = vector.broadcast %cst_63 : f32 to vector<8x1xf32>
    %50 = arith.mulf %48, %49 : vector<8x1xf32>
    %51 = arith.mulf %46, %46 : vector<8x256xf32>
    %cst_64 = arith.constant dense<0.000000e+00> : vector<8xf32>
    %52 = vector.multi_reduction <add>, %51, %cst_64 [1] : vector<8x256xf32> to vector<8xf32>
    %53 = vector.shape_cast %52 : vector<8xf32> to vector<8x1xf32>
    %cst_65 = arith.constant 3.906250e-03 : f32
    %54 = vector.broadcast %cst_65 : f32 to vector<8x1xf32>
    %55 = arith.mulf %53, %54 : vector<8x1xf32>
    %56 = arith.mulf %50, %50 : vector<8x1xf32>
    %57 = arith.subf %55, %56 : vector<8x1xf32>
    %58 = vector.broadcast %50 : vector<8x1xf32> to vector<8x256xf32>
    %59 = arith.subf %46, %58 : vector<8x256xf32>
    %cst_66 = arith.constant 9.99999974E-6 : f32
    %60 = vector.broadcast %cst_66 : f32 to vector<8x1xf32>
    %61 = arith.addf %57, %60 : vector<8x1xf32>
    %62 = math.rsqrt %61 : vector<8x1xf32>
    %63 = vector.broadcast %62 : vector<8x1xf32> to vector<8x256xf32>
    %64 = arith.mulf %59, %63 : vector<8x256xf32>
    %cst_67 = arith.constant 0.000000e+00 : f32
    %65 = vector.broadcast %cst_67 : f32 to vector<8x256xf32>
    %66 = arith.maximumf %64, %65 : vector<8x256xf32>
    %67 = vector.shape_cast %66 : vector<8x256xf32> to vector<8x16x16xf32>
    %c0_68 = arith.constant 0 : index
    %c1_69 = arith.constant 1 : index
    %c1_70 = arith.constant 1 : index
    %68 = vector.load %arg7[%c0_68, %c1_69, %c1_70] : memref<8x18x18xf32, #tpu.memory_space<vmem>>, vector<8x16x16xf32>
    tpu.vector_store %arg7[%c0_68, %c1_69, %c1_70], %67 {strides = array<i32>} : memref<8x18x18xf32, #tpu.memory_space<vmem>>, vector<8x16x16xf32>,
    %69 = vector.extract_strided_slice %67 {offsets = [0, 1, 0], sizes = [8, 1, 16], strides = [1, 1, 1]} : vector<8x16x16xf32> to vector<8x1x16xf32>
    %c0_71 = arith.constant 0 : index
    %c0_72 = arith.constant 0 : index
    %c1_73 = arith.constant 1 : index
    %70 = vector.load %arg7[%c0_71, %c0_72, %c1_73] : memref<8x18x18xf32, #tpu.memory_space<vmem>>, vector<8x1x16xf32>
    tpu.vector_store %arg7[%c0_71, %c0_72, %c1_73], %69 {strides = array<i32>} : memref<8x18x18xf32, #tpu.memory_space<vmem>>, vector<8x1x16xf32>,
    %71 = vector.extract_strided_slice %67 {offsets = [0, 14, 0], sizes = [8, 1, 16], strides = [1, 1, 1]} : vector<8x16x16xf32> to vector<8x1x16xf32>
    %c0_74 = arith.constant 0 : index
    %c17_75 = arith.constant 17 : index
    %c1_76 = arith.constant 1 : index
    %72 = vector.load %arg7[%c0_74, %c17_75, %c1_76] : memref<8x18x18xf32, #tpu.memory_space<vmem>>, vector<8x1x16xf32>
    tpu.vector_store %arg7[%c0_74, %c17_75, %c1_76], %71 {strides = array<i32>} : memref<8x18x18xf32, #tpu.memory_space<vmem>>, vector<8x1x16xf32>,
    %c0_77 = arith.constant 0 : index
    %c0_78 = arith.constant 0 : index
    %c2_79 = arith.constant 2 : index
    %73 = vector.load %arg7[%c0_77, %c0_78, %c2_79] : memref<8x18x18xf32, #tpu.memory_space<vmem>>, vector<8x18x1xf32>
    %c0_80 = arith.constant 0 : index
    %c0_81 = arith.constant 0 : index
    %c0_82 = arith.constant 0 : index
    %74 = vector.load %arg7[%c0_80, %c0_81, %c0_82] : memref<8x18x18xf32, #tpu.memory_space<vmem>>, vector<8x18x1xf32>
    tpu.vector_store %arg7[%c0_80, %c0_81, %c0_82], %73 {strides = array<i32>} : memref<8x18x18xf32, #tpu.memory_space<vmem>>, vector<8x18x1xf32>,
    %c0_83 = arith.constant 0 : index
    %c0_84 = arith.constant 0 : index
    %c15_85 = arith.constant 15 : index
    %75 = vector.load %arg7[%c0_83, %c0_84, %c15_85] : memref<8x18x18xf32, #tpu.memory_space<vmem>>, vector<8x18x1xf32>
    %c0_86 = arith.constant 0 : index
    %c0_87 = arith.constant 0 : index
    %c17_88 = arith.constant 17 : index
    %76 = vector.load %arg7[%c0_86, %c0_87, %c17_88] : memref<8x18x18xf32, #tpu.memory_space<vmem>>, vector<8x18x1xf32>
    tpu.vector_store %arg7[%c0_86, %c0_87, %c17_88], %75 {strides = array<i32>} : memref<8x18x18xf32, #tpu.memory_space<vmem>>, vector<8x18x1xf32>,
    %c0_89 = arith.constant 0 : index
    %c0_90 = arith.constant 0 : index
    %c0_91 = arith.constant 0 : index
    %77 = vector.load %arg7[%c0_89, %c0_90, %c0_91] : memref<8x18x18xf32, #tpu.memory_space<vmem>>, vector<8x16x16xf32>
    %78 = vector.shape_cast %77 : vector<8x16x16xf32> to vector<8x256xf32>
    %c0_92 = arith.constant 0 : index
    %c0_93 = arith.constant 0 : index
    %79 = vector.load %arg8[%c0_92, %c0_93] : memref<72x256xf32, #tpu.memory_space<vmem>>, vector<8x256xf32>
    tpu.vector_store %arg8[%c0_92, %c0_93], %78 {strides = array<i32>} : memref<72x256xf32, #tpu.memory_space<vmem>>, vector<8x256xf32>,
    %c0_94 = arith.constant 0 : index
    %c0_95 = arith.constant 0 : index
    %c1_96 = arith.constant 1 : index
    %80 = vector.load %arg7[%c0_94, %c0_95, %c1_96] : memref<8x18x18xf32, #tpu.memory_space<vmem>>, vector<8x16x16xf32>
    %81 = vector.shape_cast %80 : vector<8x16x16xf32> to vector<8x256xf32>
    %c8_97 = arith.constant 8 : index
    %c0_98 = arith.constant 0 : index
    %82 = vector.load %arg8[%c8_97, %c0_98] : memref<72x256xf32, #tpu.memory_space<vmem>>, vector<8x256xf32>
    tpu.vector_store %arg8[%c8_97, %c0_98], %81 {strides = array<i32>} : memref<72x256xf32, #tpu.memory_space<vmem>>, vector<8x256xf32>,
    %c0_99 = arith.constant 0 : index
    %c0_100 = arith.constant 0 : index
    %c2_101 = arith.constant 2 : index
    %83 = vector.load %arg7[%c0_99, %c0_100, %c2_101] : memref<8x18x18xf32, #tpu.memory_space<vmem>>, vector<8x16x16xf32>
    %84 = vector.shape_cast %83 : vector<8x16x16xf32> to vector<8x256xf32>
    %c16_102 = arith.constant 16 : index
    %c0_103 = arith.constant 0 : index
    %85 = vector.load %arg8[%c16_102, %c0_103] : memref<72x256xf32, #tpu.memory_space<vmem>>, vector<8x256xf32>
    tpu.vector_store %arg8[%c16_102, %c0_103], %84 {strides = array<i32>} : memref<72x256xf32, #tpu.memory_space<vmem>>, vector<8x256xf32>,
    %c0_104 = arith.constant 0 : index
    %c1_105 = arith.constant 1 : index
    %c0_106 = arith.constant 0 : index
    %86 = vector.load %arg7[%c0_104, %c1_105, %c0_106] : memref<8x18x18xf32, #tpu.memory_space<vmem>>, vector<8x16x16xf32>
    %87 = vector.shape_cast %86 : vector<8x16x16xf32> to vector<8x256xf32>
    %c24_107 = arith.constant 24 : index
    %c0_108 = arith.constant 0 : index
    %88 = vector.load %arg8[%c24_107, %c0_108] : memref<72x256xf32, #tpu.memory_space<vmem>>, vector<8x256xf32>
    tpu.vector_store %arg8[%c24_107, %c0_108], %87 {strides = array<i32>} : memref<72x256xf32, #tpu.memory_space<vmem>>, vector<8x256xf32>,
    %c0_109 = arith.constant 0 : index
    %c1_110 = arith.constant 1 : index
    %c1_111 = arith.constant 1 : index
    %89 = vector.load %arg7[%c0_109, %c1_110, %c1_111] : memref<8x18x18xf32, #tpu.memory_space<vmem>>, vector<8x16x16xf32>
    %90 = vector.shape_cast %89 : vector<8x16x16xf32> to vector<8x256xf32>
    %c32_112 = arith.constant 32 : index
    %c0_113 = arith.constant 0 : index
    %91 = vector.load %arg8[%c32_112, %c0_113] : memref<72x256xf32, #tpu.memory_space<vmem>>, vector<8x256xf32>
    tpu.vector_store %arg8[%c32_112, %c0_113], %90 {strides = array<i32>} : memref<72x256xf32, #tpu.memory_space<vmem>>, vector<8x256xf32>,
    %c0_114 = arith.constant 0 : index
    %c1_115 = arith.constant 1 : index
    %c2_116 = arith.constant 2 : index
    %92 = vector.load %arg7[%c0_114, %c1_115, %c2_116] : memref<8x18x18xf32, #tpu.memory_space<vmem>>, vector<8x16x16xf32>
    %93 = vector.shape_cast %92 : vector<8x16x16xf32> to vector<8x256xf32>
    %c40_117 = arith.constant 40 : index
    %c0_118 = arith.constant 0 : index
    %94 = vector.load %arg8[%c40_117, %c0_118] : memref<72x256xf32, #tpu.memory_space<vmem>>, vector<8x256xf32>
    tpu.vector_store %arg8[%c40_117, %c0_118], %93 {strides = array<i32>} : memref<72x256xf32, #tpu.memory_space<vmem>>, vector<8x256xf32>,
    %c0_119 = arith.constant 0 : index
    %c2_120 = arith.constant 2 : index
    %c0_121 = arith.constant 0 : index
    %95 = vector.load %arg7[%c0_119, %c2_120, %c0_121] : memref<8x18x18xf32, #tpu.memory_space<vmem>>, vector<8x16x16xf32>
    %96 = vector.shape_cast %95 : vector<8x16x16xf32> to vector<8x256xf32>
    %c48_122 = arith.constant 48 : index
    %c0_123 = arith.constant 0 : index
    %97 = vector.load %arg8[%c48_122, %c0_123] : memref<72x256xf32, #tpu.memory_space<vmem>>, vector<8x256xf32>
    tpu.vector_store %arg8[%c48_122, %c0_123], %96 {strides = array<i32>} : memref<72x256xf32, #tpu.memory_space<vmem>>, vector<8x256xf32>,
    %c0_124 = arith.constant 0 : index
    %c2_125 = arith.constant 2 : index
    %c1_126 = arith.constant 1 : index
    %98 = vector.load %arg7[%c0_124, %c2_125, %c1_126] : memref<8x18x18xf32, #tpu.memory_space<vmem>>, vector<8x16x16xf32>
    %99 = vector.shape_cast %98 : vector<8x16x16xf32> to vector<8x256xf32>
    %c56_127 = arith.constant 56 : index
    %c0_128 = arith.constant 0 : index
    %100 = vector.load %arg8[%c56_127, %c0_128] : memref<72x256xf32, #tpu.memory_space<vmem>>, vector<8x256xf32>
    tpu.vector_store %arg8[%c56_127, %c0_128], %99 {strides = array<i32>} : memref<72x256xf32, #tpu.memory_space<vmem>>, vector<8x256xf32>,
    %c0_129 = arith.constant 0 : index
    %c2_130 = arith.constant 2 : index
    %c2_131 = arith.constant 2 : index
    %101 = vector.load %arg7[%c0_129, %c2_130, %c2_131] : memref<8x18x18xf32, #tpu.memory_space<vmem>>, vector<8x16x16xf32>
    %102 = vector.shape_cast %101 : vector<8x16x16xf32> to vector<8x256xf32>
    %c64_132 = arith.constant 64 : index
    %c0_133 = arith.constant 0 : index
    %103 = vector.load %arg8[%c64_132, %c0_133] : memref<72x256xf32, #tpu.memory_space<vmem>>, vector<8x256xf32>
    tpu.vector_store %arg8[%c64_132, %c0_133], %102 {strides = array<i32>} : memref<72x256xf32, #tpu.memory_space<vmem>>, vector<8x256xf32>,
    %c0_134 = arith.constant 0 : index
    %c0_135 = arith.constant 0 : index
    %104 = vector.load %arg8[%c0_134, %c0_135] : memref<72x256xf32, #tpu.memory_space<vmem>>, vector<72x256xf32>
    %105 = arith.truncf %104 : vector<72x256xf32> to vector<72x256xbf16>
    %c0_136 = arith.constant 0 : index
    %c0_137 = arith.constant 0 : index
    %106 = vector.load %arg4[%c0_136, %c0_137] : memref<8x72xf32, #tpu.memory_space<vmem>>, vector<8x72xf32>
    %107 = arith.truncf %106 : vector<8x72xf32> to vector<8x72xbf16>
    %cst_138 = arith.constant dense<0.000000e+00> : vector<8x256xf32>
    %108 = tpu.matmul %107, %105, %cst_138 {dimension_numbers = #tpu.dot_dimension_numbers<[1], [0], [0], [1], [0, 0, 1, 1], [], []>} : vector<8x72xbf16>, vector<72x256xbf16>, vector<8x256xf32> -> vector<8x256xf32>
    %c0_139 = arith.constant 0 : index
    %c0_140 = arith.constant 0 : index
    %109 = vector.load %arg5[%c0_139, %c0_140] : memref<8x1xf32, #tpu.memory_space<vmem>>, vector<8x1xf32>
    %110 = vector.broadcast %109 : vector<8x1xf32> to vector<8x256xf32>
    %111 = arith.addf %108, %110 : vector<8x256xf32>
    %cst_141 = arith.constant dense<0.000000e+00> : vector<8xf32>
    %112 = vector.multi_reduction <add>, %111, %cst_141 [1] : vector<8x256xf32> to vector<8xf32>
    %113 = vector.shape_cast %112 : vector<8xf32> to vector<8x1xf32>
    %cst_142 = arith.constant 3.906250e-03 : f32
    %114 = vector.broadcast %cst_142 : f32 to vector<8x1xf32>
    %115 = arith.mulf %113, %114 : vector<8x1xf32>
    %116 = arith.mulf %111, %111 : vector<8x256xf32>
    %cst_143 = arith.constant dense<0.000000e+00> : vector<8xf32>
    %117 = vector.multi_reduction <add>, %116, %cst_143 [1] : vector<8x256xf32> to vector<8xf32>
    %118 = vector.shape_cast %117 : vector<8xf32> to vector<8x1xf32>
    %cst_144 = arith.constant 3.906250e-03 : f32
    %119 = vector.broadcast %cst_144 : f32 to vector<8x1xf32>
    %120 = arith.mulf %118, %119 : vector<8x1xf32>
    %121 = arith.mulf %115, %115 : vector<8x1xf32>
    %122 = arith.subf %120, %121 : vector<8x1xf32>
    %123 = vector.broadcast %115 : vector<8x1xf32> to vector<8x256xf32>
    %124 = arith.subf %111, %123 : vector<8x256xf32>
    %cst_145 = arith.constant 9.99999974E-6 : f32
    %125 = vector.broadcast %cst_145 : f32 to vector<8x1xf32>
    %126 = arith.addf %122, %125 : vector<8x1xf32>
    %127 = math.rsqrt %126 : vector<8x1xf32>
    %128 = vector.broadcast %127 : vector<8x1xf32> to vector<8x256xf32>
    %129 = arith.mulf %124, %128 : vector<8x256xf32>
    %c0_146 = arith.constant 0 : index
    %c0_147 = arith.constant 0 : index
    %c0_148 = arith.constant 0 : index
    %130 = vector.load %arg1[%c0_146, %c0_147, %c0_148] : memref<1x8x256xf32, #tpu.memory_space<vmem>>, vector<1x8x256xf32>
    %131 = vector.shape_cast %130 : vector<1x8x256xf32> to vector<8x256xf32>
    %132 = arith.addf %131, %129 : vector<8x256xf32>
    %c0_149 = arith.constant 0 : index
    %c0_150 = arith.constant 0 : index
    %c0_151 = arith.constant 0 : index
    %133 = vector.load %arg6[%c0_149, %c0_150, %c0_151] : memref<1x8x256xf32, #tpu.memory_space<vmem>>, vector<1x8x256xf32>
    %134 = vector.shape_cast %133 : vector<1x8x256xf32> to vector<8x256xf32>
    %135 = vector.shape_cast %132 : vector<8x256xf32> to vector<1x8x256xf32>
    tpu.vector_store %arg6[%c0_149, %c0_150, %c0_151], %135 {strides = array<i32>} : memref<1x8x256xf32, #tpu.memory_space<vmem>>, vector<1x8x256xf32>,
    return
  }
  func.func @transform_0(%arg0: i32) -> (i32, i32, i32) {
    %c0_i32 = arith.constant 0 : i32
    %c0_i32_0 = arith.constant 0 : i32
    %c0_i32_1 = arith.constant 0 : i32
    return %arg0, %c0_i32, %c0_i32_0 : i32, i32, i32
  }
  func.func @transform_1(%arg0: i32) -> (i32, i32) {
    %c0_i32 = arith.constant 0 : i32
    %c0_i32_0 = arith.constant 0 : i32
    %c0_i32_1 = arith.constant 0 : i32
    return %c0_i32, %c0_i32_0 : i32, i32
  }
  func.func @transform_2(%arg0: i32) -> (i32, i32) {
    %c0_i32 = arith.constant 0 : i32
    %c0_i32_0 = arith.constant 0 : i32
    %c0_i32_1 = arith.constant 0 : i32
    return %c0_i32, %c0_i32_0 : i32, i32
  }
  func.func @transform_3(%arg0: i32) -> (i32, i32) {
    %c0_i32 = arith.constant 0 : i32
    %c0_i32_0 = arith.constant 0 : i32
    %c0_i32_1 = arith.constant 0 : i32
    return %c0_i32, %c0_i32_0 : i32, i32
  }
  func.func @transform_4(%arg0: i32) -> (i32, i32) {
    %c0_i32 = arith.constant 0 : i32
    %c0_i32_0 = arith.constant 0 : i32
    %c0_i32_1 = arith.constant 0 : i32
    return %c0_i32, %c0_i32_0 : i32, i32
  }
  func.func @transform_5(%arg0: i32) -> (i32, i32, i32) {
    %c0_i32 = arith.constant 0 : i32
    %c0_i32_0 = arith.constant 0 : i32
    %c0_i32_1 = arith.constant 0 : i32
    return %arg0, %c0_i32, %c0_i32_0 : i32, i32, i32
  }
}

</mosaic_0001>

<llo_original>
// kernel: tpu_custom_call.1
$region0: #{tpu_custom_call.1}
  #allocation0 [shape = 'u32[]', space=smem, size = 0x4, offset = 0x4, fixed_abs, tag = 'smem constant byte address 0x4 - core index']
  #allocation1 [shape = 'u32[144,128]{1,0:T(1,128)}', space=vmem, size = 0x12000, scoped, tag = 'internal scratch']
  #allocation2 [shape = 'f32[8,18,18]{2,1,0:T(8,128)}', space=vmem, size = 0x18000, scoped, tag = 'scratch operand']
  #allocation3 [shape = 'f32[72,256]{1,0:T(8,128)}', space=vmem, size = 0x12000, scoped, tag = 'scratch operand']
  %s0 = inlined_call_operand.hbm [shape: f32[2,8,256], index: 0, kind: input, shape index: {}]
  %s1 = inlined_call_operand.vmem [shape: f32[8,72], index: 1, kind: input, shape index: {}]
  %s2 = inlined_call_operand.vmem [shape: f32[8,1], index: 2, kind: input, shape index: {}]
  %s3 = inlined_call_operand.vmem [shape: f32[8,72], index: 3, kind: input, shape index: {}]
  %s4 = inlined_call_operand.vmem [shape: f32[8,1], index: 4, kind: input, shape index: {}]
  %s5 = inlined_call_operand.hbm [shape: f32[2,8,256], index: 5, kind: output, shape index: {}]
  %s6 = sld [smem:[#allocation0]]
  $region57: #{tpu_custom_call.1} parent=0
    _
  %s8 = ssub.s32 1, %s6
  %s9 = scalar_select 0, %s8, %s6
  $region1: #{tpu_custom_call.1} parent=0
    #allocation4 [shape = 'u8[16384]{0}', space=vmem, size = 0x4000, scoped, tag = 'input window, operand 0']
    #allocation5 [shape = 's32[2]{0}', space=sflag, size = 0x8, scoped, tag = 'scoped memory for tpu_custom_call.1']
    #allocation6 [shape = 's32[2]{0}', space=sflag, size = 0x8, scoped, tag = 'scoped memory for tpu_custom_call.1']
    #allocation7 [shape = 'u8[16384]{0}', space=vmem, size = 0x4000, scoped, tag = 'output window, operand 0']
    %10 = vsyncpa [#allocation5], 0
    %s11 = scalar_lea.sflag [#allocation5], 1
    %12 = vsyncpa %s11, 0
    %13 = vsyncpa [#allocation6], 0
    %s14 = scalar_lea.sflag [#allocation6], 1
    %15 = vsyncpa %s14, 0
    loop: start=0, step=1, limit=4
    $region2: #{tpu_custom_call.1} parent=1 // loop_pre_header
      _
    $region3: #{tpu_custom_call.1} parent=1 // loop_header
      %s17 = sphi 0, %s21
      %p18 = scmp.ge.s32.totalorder %s17, 4
      %s27 = sphi 0, %s29
      %s30 = sphi 0, %s27
      %s31 = sphi 0, %s30
      %s47 = sphi 0, %s31
      %s51 = sphi 0, %s51
      %s53 = sphi 0, %s51
      %s54 = sphi 0, %s53
      %s68 = sphi 0, %s54
      %s72 = sphi 0, %s72
      %s74 = sphi 0, %s72
      %s75 = sphi 0, %s74
      %s89 = sphi 0, %s75
      %s93 = sphi 0, %s93
      %s95 = sphi 0, %s93
      %s96 = sphi 0, %s95
      %s110 = sphi 0, %s96
      %s114 = sphi 0, %s114
      %s116 = sphi 0, %s114
      %s117 = sphi 0, %s116
      %s131 = sphi 0, %s117
      %s137 = sphi 0, %s139
      %s140 = sphi 0, %s137
      %s141 = sphi 0, %s140
      %s157 = sphi 0, %s141
    $region4: #{tpu_custom_call.1} parent=1 // loop_header_branch
      %20 = sbr.rel (%p18) target = $region8
    $region5: #{tpu_custom_call.1} parent=1 // loop_body
      %s22 = ssub.s32 %s17, 1
      %s23 = ssub.s32 %s17, 2
      %s24 = sadd.s32 %s17, 1
      %s25 = ssub.s32 %s17, %s24
      %p26 = scmp.eq.s32.totalorder %s25, 0
      %s28 = sadd.s32 %s27, 1
      %s29 = scalar_select %p26, %s27, %s28
      %p32 = pneg %p26
      %p33 = scmp.eq.s32.totalorder %s17, 1
      %p34 = por %p32, %p33
      %p35 = scmp.ne.s32.totalorder %s27, %s30
      %p36 = scmp.eq.s32.totalorder %s17, 0
      %p37 = por %p35, %p36
      %p38 = scmp.ne.s32.totalorder %s27, %s30
      %p39 = scmp.eq.s32.totalorder %s22, 1
      %p40 = por %p38, %p39
      %p41 = scmp.ne.s32.totalorder %s30, %s31
      %p42 = scmp.eq.s32.totalorder %s22, 0
      %p43 = por %p41, %p42
      %p44 = scmp.ne.s32.totalorder %s30, %s31
      %p45 = scmp.eq.s32.totalorder %s23, 1
      %p46 = por %p44, %p45
      %p48 = scmp.ne.s32.totalorder %s31, %s47
      %p49 = scmp.eq.s32.totalorder %s23, 0
      %p50 = por %p48, %p49
      %s52 = sadd.s32 %s51, 1
      %p55 = scmp.eq.s32.totalorder %s17, 1
      %p56 = scmp.ne.s32.totalorder %s51, %s53
      %p57 = scmp.eq.s32.totalorder %s17, 0
      %p58 = por %p56, %p57
      %p59 = scmp.ne.s32.totalorder %s51, %s53
      %p60 = scmp.eq.s32.totalorder %s22, 1
      %p61 = por %p59, %p60
      %p62 = scmp.ne.s32.totalorder %s53, %s54
      %p63 = scmp.eq.s32.totalorder %s22, 0
      %p64 = por %p62, %p63
      %p65 = scmp.ne.s32.totalorder %s53, %s54
      %p66 = scmp.eq.s32.totalorder %s23, 1
      %p67 = por %p65, %p66
      %p69 = scmp.ne.s32.totalorder %s54, %s68
      %p70 = scmp.eq.s32.totalorder %s23, 0
      %p71 = por %p69, %p70
      %s73 = sadd.s32 %s72, 1
      %p76 = scmp.eq.s32.totalorder %s17, 1
      %p77 = scmp.ne.s32.totalorder %s72, %s74
      %p78 = scmp.eq.s32.totalorder %s17, 0
      %p79 = por %p77, %p78
      %p80 = scmp.ne.s32.totalorder %s72, %s74
      %p81 = scmp.eq.s32.totalorder %s22, 1
      %p82 = por %p80, %p81
      %p83 = scmp.ne.s32.totalorder %s74, %s75
      %p84 = scmp.eq.s32.totalorder %s22, 0
      %p85 = por %p83, %p84
      %p86 = scmp.ne.s32.totalorder %s74, %s75
      %p87 = scmp.eq.s32.totalorder %s23, 1
      %p88 = por %p86, %p87
      %p90 = scmp.ne.s32.totalorder %s75, %s89
      %p91 = scmp.eq.s32.totalorder %s23, 0
      %p92 = por %p90, %p91
      %s94 = sadd.s32 %s93, 1
      %p97 = scmp.eq.s32.totalorder %s17, 1
      %p98 = scmp.ne.s32.totalorder %s93, %s95
      %p99 = scmp.eq.s32.totalorder %s17, 0
      %p100 = por %p98, %p99
      %p101 = scmp.ne.s32.totalorder %s93, %s95
      %p102 = scmp.eq.s32.totalorder %s22, 1
      %p103 = por %p101, %p102
      %p104 = scmp.ne.s32.totalorder %s95, %s96
      %p105 = scmp.eq.s32.totalorder %s22, 0
      %p106 = por %p104, %p105
      %p107 = scmp.ne.s32.totalorder %s95, %s96
      %p108 = scmp.eq.s32.totalorder %s23, 1
      %p109 = por %p107, %p108
      %p111 = scmp.ne.s32.totalorder %s96, %s110
      %p112 = scmp.eq.s32.totalorder %s23, 0
      %p113 = por %p111, %p112
      %s115 = sadd.s32 %s114, 1
      %p118 = scmp.eq.s32.totalorder %s17, 1
      %p119 = scmp.ne.s32.totalorder %s114, %s116
      %p120 = scmp.eq.s32.totalorder %s17, 0
      %p121 = por %p119, %p120
      %p122 = scmp.ne.s32.totalorder %s114, %s116
      %p123 = scmp.eq.s32.totalorder %s22, 1
      %p124 = por %p122, %p123
      %p125 = scmp.ne.s32.totalorder %s116, %s117
      %p126 = scmp.eq.s32.totalorder %s22, 0
      %p127 = por %p125, %p126
      %p128 = scmp.ne.s32.totalorder %s116, %s117
      %p129 = scmp.eq.s32.totalorder %s23, 1
      %p130 = por %p128, %p129
      %p132 = scmp.ne.s32.totalorder %s117, %s131
      %p133 = scmp.eq.s32.totalorder %s23, 0
      %p134 = por %p132, %p133
      %s135 = ssub.s32 %s17, %s24
      %p136 = scmp.eq.s32.totalorder %s135, 0
      %s138 = sadd.s32 %s137, 1
      %s139 = scalar_select %p136, %s137, %s138
      %p142 = pneg %p136
      %p143 = scmp.eq.s32.totalorder %s17, 1
      %p144 = por %p142, %p143
      %p145 = scmp.ne.s32.totalorder %s137, %s140
      %p146 = scmp.eq.s32.totalorder %s17, 0
      %p147 = por %p145, %p146
      %p148 = scmp.ne.s32.totalorder %s137, %s140
      %p149 = scmp.eq.s32.totalorder %s22, 1
      %p150 = por %p148, %p149
      %p151 = scmp.ne.s32.totalorder %s140, %s141
      %p152 = scmp.eq.s32.totalorder %s22, 0
      %p153 = por %p151, %p152
      %p154 = scmp.ne.s32.totalorder %s140, %s141
      %p155 = scmp.eq.s32.totalorder %s23, 1
      %p156 = por %p154, %p155
      %p158 = scmp.ne.s32.totalorder %s141, %s157
      %p159 = scmp.eq.s32.totalorder %s23, 0
      %p160 = por %p158, %p159
      %p161 = scmp.le.s32.totalorder 1, %s17
      %p162 = scmp.lt.s32.totalorder %s17, 3
      %p163 = pnand %p161, %p162
      %p164 = pneg %p163
      // Predicated region
      $region9: #{tpu_custom_call.1} parent=5 // pred_check
        _
      $region10: #{tpu_custom_call.1} parent=5 // pred_check_branch
        %166 = sbr.rel (%p163) target = $region12
      $region11: #{tpu_custom_call.1} parent=5 // pred_region
        %s167 = ssub.s32 %s17, 1
        // Predicated region
        $region13: #{tpu_custom_call.1} parent=11 // pred_check
          %p168 = pneg %p64
        $region14: #{tpu_custom_call.1} parent=11 // pred_check_branch
          %170 = sbr.rel (%p168) target = $region16
        $region15: #{tpu_custom_call.1} parent=11 // pred_region
          _
        $region16: #{tpu_custom_call.1} parent=11 // pred_fallthru
          _
        // Predicated region
        $region17: #{tpu_custom_call.1} parent=11 // pred_check
          %p171 = pneg %p85
        $region18: #{tpu_custom_call.1} parent=11 // pred_check_branch
          %173 = sbr.rel (%p171) target = $region20
        $region19: #{tpu_custom_call.1} parent=11 // pred_region
          _
        $region20: #{tpu_custom_call.1} parent=11 // pred_fallthru
          _
        // Predicated region
        $region21: #{tpu_custom_call.1} parent=11 // pred_check
          %p174 = pneg %p106
        $region22: #{tpu_custom_call.1} parent=11 // pred_check_branch
          %176 = sbr.rel (%p174) target = $region24
        $region23: #{tpu_custom_call.1} parent=11 // pred_region
          _
        $region24: #{tpu_custom_call.1} parent=11 // pred_fallthru
          _
        // Predicated region
        $region25: #{tpu_custom_call.1} parent=11 // pred_check
          %p177 = pneg %p127
        $region26: #{tpu_custom_call.1} parent=11 // pred_check_branch
          %179 = sbr.rel (%p177) target = $region28
        $region27: #{tpu_custom_call.1} parent=11 // pred_region
          _
        $region28: #{tpu_custom_call.1} parent=11 // pred_fallthru
          _
      $region12: #{tpu_custom_call.1} parent=5 // pred_fallthru
        _
      %p180 = scmp.lt.s32.totalorder %s17, 2
      // Predicated region
      $region29: #{tpu_custom_call.1} parent=5 // pred_check
        %p181 = pneg %p180
      $region30: #{tpu_custom_call.1} parent=5 // pred_check_branch
        %183 = sbr.rel (%p181) target = $region32
      $region31: #{tpu_custom_call.1} parent=5 // pred_region
        // Predicated region
        $region33: #{tpu_custom_call.1} parent=31 // pred_check
          %p184 = pneg %p37
        $region34: #{tpu_custom_call.1} parent=31 // pred_check_branch
          %186 = sbr.rel (%p184) target = $region36
        $region35: #{tpu_custom_call.1} parent=31 // pred_region
          %s187 = sand.u32 %s27, 1
          %s188 = scalar_lea.sflag [#allocation5], %s187
          %s189 = sand.u32 %s27, 1
          %s190 = smul.addr %s189, 16
          %s191 = scalar_lea.vmem [#allocation4], %s190
          %s193 = ssub.s32 256, 256
          %194 = vsyncadd %s188, %s193
          %s195 = smul.addr %s17, 2
          %s196 = smul.addr %s195, 128
          %s197 = scalar_lea.hbm %s0, %s196
          %s199 = sshll.u32 %s191, 4
          %s200 = int_to_ptr.vmem [resolvable:$true] %s199
          %202 = dma.hbm_to_vmem [thread:$0]  %s197, 256, %s200, %s188
        $region36: #{tpu_custom_call.1} parent=31 // pred_fallthru
          _
      $region32: #{tpu_custom_call.1} parent=5 // pred_fallthru
        _
      %p203 = scmp.le.s32.totalorder 1, %s17
      %p204 = scmp.lt.s32.totalorder %s17, 3
      %p205 = pnand %p203, %p204
      %p206 = pneg %p205
      // Predicated region
      $region37: #{tpu_custom_call.1} parent=5 // pred_check
        _
      $region38: #{tpu_custom_call.1} parent=5 // pred_check_branch
        %208 = sbr.rel (%p205) target = $region40
      $region39: #{tpu_custom_call.1} parent=5 // pred_region
        %s209 = ssub.s32 %s17, 1
        %s210 = sand.u32 %s30, 1
        %s211 = scalar_lea.sflag [#allocation5], %s210
        %s212 = sand.u32 %s30, 1
        %s213 = smul.addr %s212, 16
        %s214 = scalar_lea.vmem [#allocation4], %s213
        // Predicated region
        $region41: #{tpu_custom_call.1} parent=39 // pred_check
          %p215 = pneg %p43
        $region42: #{tpu_custom_call.1} parent=39 // pred_check_branch
          %217 = sbr.rel (%p215) target = $region44
        $region43: #{tpu_custom_call.1} parent=39 // pred_region
          %218 = dma.done %s211, 256
        $region44: #{tpu_custom_call.1} parent=39 // pred_fallthru
          _
        %s219 = sand.u32 %s30, 1
        %s220 = scalar_lea.sflag [#allocation5], %s219
        %s221 = sand.u32 %s30, 1
        %s222 = smul.addr %s221, 16
        %s223 = scalar_lea.vmem [#allocation4], %s222
        %p224 = pneg %p43
        %p225 = pneg %p40
        %p226 = pneg %p64
        %p227 = pneg %p61
        %p228 = pneg %p85
        %p229 = pneg %p82
        %p230 = pneg %p106
        %p231 = pneg %p103
        %p232 = pneg %p127
        %p233 = pneg %p124
        %p234 = pneg %p153
        %p235 = pneg %p150
        %s236 = sand.u32 %s140, 1
        %s237 = scalar_lea.sflag [#allocation6], %s236
        %s238 = sand.u32 %s140, 1
        %s239 = smul.addr %s238, 16
        %s240 = scalar_lea.vmem [#allocation7], %s239
        %v242 = vld [vmem:[%s214] sm:$0xff]
        %v243 = vld [vmem:[%s214 + $0x8] sm:$0xff]
        %245 = vrot.lane.b32.xlu0 %v242, 112
        %v246 = vpop.permute.xlu0 %245
        %248 = vrot.lane.b32.xlu0 %v242, 96
        %v249 = vpop.permute.xlu0 %248
        %251 = vrot.lane.b32.xlu0 %v242, 80
        %v252 = vpop.permute.xlu0 %251
        %254 = vrot.lane.b32.xlu0 %v242, 64
        %v255 = vpop.permute.xlu0 %254
        %257 = vrot.lane.b32.xlu0 %v242, 48
        %v258 = vpop.permute.xlu0 %257
        %260 = vrot.lane.b32.xlu0 %v242, 32
        %v261 = vpop.permute.xlu0 %260
        %263 = vrot.lane.b32.xlu0 %v242, 16
        %v264 = vpop.permute.xlu0 %263
        %267 = vrot.lane.b32.xlu0 %v243, 112
        %v268 = vpop.permute.xlu0 %267
        %270 = vrot.lane.b32.xlu0 %v243, 96
        %v271 = vpop.permute.xlu0 %270
        %273 = vrot.lane.b32.xlu0 %v243, 80
        %v274 = vpop.permute.xlu0 %273
        %276 = vrot.lane.b32.xlu0 %v243, 64
        %v277 = vpop.permute.xlu0 %276
        %279 = vrot.lane.b32.xlu0 %v243, 48
        %v280 = vpop.permute.xlu0 %279
        %282 = vrot.lane.b32.xlu0 %v243, 32
        %v283 = vpop.permute.xlu0 %282
        %285 = vrot.lane.b32.xlu0 %v243, 16
        %v286 = vpop.permute.xlu0 %285
        %v288 = vcombine.low %v242, %v249
        %v289 = vcombine.high %v242, %v249
        %v291 = vunpack.c.l.s4 1983009808
        %v292 = vunpack.c.0.s8 %v291
        %v293 = vlaneseq
        %v294 = vshrl.u32 %v293, 7
        %v295 = vsub.s32 %v292, %v294
        %v296 = vrot.slane %v288, %v295
        %v298 = vunpack.c.l.s4 1983009808
        %v299 = vunpack.c.0.s8 %v298
        %v300 = vlaneseq
        %v301 = vshrl.u32 %v300, 7
        %v302 = vsub.s32 %v299, %v301
        %v303 = vrot.slane %v289, %v302
        %v304 = vcombine.low %v246, %v252
        %v305 = vcombine.high %v246, %v252
        %v307 = vunpack.c.l.s4 1983009808
        %v308 = vunpack.c.0.s8 %v307
        %v309 = vlaneseq
        %v310 = vshrl.u32 %v309, 7
        %v311 = vsub.s32 %v308, %v310
        %v312 = vrot.slane %v304, %v311
        %v314 = vunpack.c.l.s4 1983009808
        %v315 = vunpack.c.0.s8 %v314
        %v316 = vlaneseq
        %v317 = vshrl.u32 %v316, 7
        %v318 = vsub.s32 %v315, %v317
        %v319 = vrot.slane %v305, %v318
        %v320 = vcombine.low %v255, %v261
        %v321 = vcombine.high %v255, %v261
        %v323 = vunpack.c.l.s4 1983009808
        %v324 = vunpack.c.0.s8 %v323
        %v325 = vlaneseq
        %v326 = vshrl.u32 %v325, 7
        %v327 = vsub.s32 %v324, %v326
        %v328 = vrot.slane %v320, %v327
        %v330 = vunpack.c.l.s4 1983009808
        %v331 = vunpack.c.0.s8 %v330
        %v332 = vlaneseq
        %v333 = vshrl.u32 %v332, 7
        %v334 = vsub.s32 %v331, %v333
        %v335 = vrot.slane %v321, %v334
        %v336 = vcombine.low %v258, %v264
        %v337 = vcombine.high %v258, %v264
        %v339 = vunpack.c.l.s4 1983009808
        %v340 = vunpack.c.0.s8 %v339
        %v341 = vlaneseq
        %v342 = vshrl.u32 %v341, 7
        %v343 = vsub.s32 %v340, %v342
        %v344 = vrot.slane %v336, %v343
        %v346 = vunpack.c.l.s4 1983009808
        %v347 = vunpack.c.0.s8 %v346
        %v348 = vlaneseq
        %v349 = vshrl.u32 %v348, 7
        %v350 = vsub.s32 %v347, %v349
        %v351 = vrot.slane %v337, %v350
        %v352 = vcombine.low %v296, %v312
        %v353 = vcombine.high %v296, %v312
        %v355 = vunpack.c.l.s4 1934713408
        %v356 = vunpack.c.0.s8 %v355
        %v357 = vlaneseq
        %v358 = vshrl.u32 %v357, 7
        %v359 = vsub.s32 %v356, %v358
        %v360 = vrot.slane %v352, %v359
        %v362 = vunpack.c.l.s4 1934713408
        %v363 = vunpack.c.0.s8 %v362
        %v364 = vlaneseq
        %v365 = vshrl.u32 %v364, 7
        %v366 = vsub.s32 %v363, %v365
        %v367 = vrot.slane %v353, %v366
        %v368 = vcombine.low %v303, %v319
        %v369 = vcombine.high %v303, %v319
        %v371 = vunpack.c.l.s4 1934713408
        %v372 = vunpack.c.0.s8 %v371
        %v373 = vlaneseq
        %v374 = vshrl.u32 %v373, 7
        %v375 = vsub.s32 %v372, %v374
        %v376 = vrot.slane %v368, %v375
        %v378 = vunpack.c.l.s4 1934713408
        %v379 = vunpack.c.0.s8 %v378
        %v380 = vlaneseq
        %v381 = vshrl.u32 %v380, 7
        %v382 = vsub.s32 %v379, %v381
        %v383 = vrot.slane %v369, %v382
        %v384 = vcombine.low %v328, %v344
        %v385 = vcombine.high %v328, %v344
        %v387 = vunpack.c.l.s4 1934713408
        %v388 = vunpack.c.0.s8 %v387
        %v389 = vlaneseq
        %v390 = vshrl.u32 %v389, 7
        %v391 = vsub.s32 %v388, %v390
        %v392 = vrot.slane %v384, %v391
        %v394 = vunpack.c.l.s4 1934713408
        %v395 = vunpack.c.0.s8 %v394
        %v396 = vlaneseq
        %v397 = vshrl.u32 %v396, 7
        %v398 = vsub.s32 %v395, %v397
        %v399 = vrot.slane %v385, %v398
        %v400 = vcombine.low %v335, %v351
        %v401 = vcombine.high %v335, %v351
        %v403 = vunpack.c.l.s4 1934713408
        %v404 = vunpack.c.0.s8 %v403
        %v405 = vlaneseq
        %v406 = vshrl.u32 %v405, 7
        %v407 = vsub.s32 %v404, %v406
        %v408 = vrot.slane %v400, %v407
        %v410 = vunpack.c.l.s4 1934713408
        %v411 = vunpack.c.0.s8 %v410
        %v412 = vlaneseq
        %v413 = vshrl.u32 %v412, 7
        %v414 = vsub.s32 %v411, %v413
        %v415 = vrot.slane %v401, %v414
        %v416 = vcombine.low %v360, %v392
        %v417 = vcombine.high %v360, %v392
        %v418 = vcombine.low %v367, %v399
        %v419 = vcombine.high %v367, %v399
        %v420 = vcombine.low %v376, %v408
        %v421 = vcombine.high %v376, %v408
        %v422 = vcombine.low %v383, %v415
        %v423 = vcombine.high %v383, %v415
        %v424 = vcombine.low %v243, %v271
        %v425 = vcombine.high %v243, %v271
        %v427 = vunpack.c.l.s4 1983009808
        %v428 = vunpack.c.0.s8 %v427
        %v429 = vlaneseq
        %v430 = vshrl.u32 %v429, 7
        %v431 = vsub.s32 %v428, %v430
        %v432 = vrot.slane %v424, %v431
        %v434 = vunpack.c.l.s4 1983009808
        %v435 = vunpack.c.0.s8 %v434
        %v436 = vlaneseq
        %v437 = vshrl.u32 %v436, 7
        %v438 = vsub.s32 %v435, %v437
        %v439 = vrot.slane %v425, %v438
        %v440 = vcombine.low %v268, %v274
        %v441 = vcombine.high %v268, %v274
        %v443 = vunpack.c.l.s4 1983009808
        %v444 = vunpack.c.0.s8 %v443
        %v445 = vlaneseq
        %v446 = vshrl.u32 %v445, 7
        %v447 = vsub.s32 %v444, %v446
        %v448 = vrot.slane %v440, %v447
        %v450 = vunpack.c.l.s4 1983009808
        %v451 = vunpack.c.0.s8 %v450
        %v452 = vlaneseq
        %v453 = vshrl.u32 %v452, 7
        %v454 = vsub.s32 %v451, %v453
        %v455 = vrot.slane %v441, %v454
        %v456 = vcombine.low %v277, %v283
        %v457 = vcombine.high %v277, %v283
        %v459 = vunpack.c.l.s4 1983009808
        %v460 = vunpack.c.0.s8 %v459
        %v461 = vlaneseq
        %v462 = vshrl.u32 %v461, 7
        %v463 = vsub.s32 %v460, %v462
        %v464 = vrot.slane %v456, %v463
        %v466 = vunpack.c.l.s4 1983009808
        %v467 = vunpack.c.0.s8 %v466
        %v468 = vlaneseq
        %v469 = vshrl.u32 %v468, 7
        %v470 = vsub.s32 %v467, %v469
        %v471 = vrot.slane %v457, %v470
        %v472 = vcombine.low %v280, %v286
        %v473 = vcombine.high %v280, %v286
        %v475 = vunpack.c.l.s4 1983009808
        %v476 = vunpack.c.0.s8 %v475
        %v477 = vlaneseq
        %v478 = vshrl.u32 %v477, 7
        %v479 = vsub.s32 %v476, %v478
        %v480 = vrot.slane %v472, %v479
        %v482 = vunpack.c.l.s4 1983009808
        %v483 = vunpack.c.0.s8 %v482
        %v484 = vlaneseq
        %v485 = vshrl.u32 %v484, 7
        %v486 = vsub.s32 %v483, %v485
        %v487 = vrot.slane %v473, %v486
        %v488 = vcombine.low %v432, %v448
        %v489 = vcombine.high %v432, %v448
        %v491 = vunpack.c.l.s4 1934713408
        %v492 = vunpack.c.0.s8 %v491
        %v493 = vlaneseq
        %v494 = vshrl.u32 %v493, 7
        %v495 = vsub.s32 %v492, %v494
        %v496 = vrot.slane %v488, %v495
        %v498 = vunpack.c.l.s4 1934713408
        %v499 = vunpack.c.0.s8 %v498
        %v500 = vlaneseq
        %v501 = vshrl.u32 %v500, 7
        %v502 = vsub.s32 %v499, %v501
        %v503 = vrot.slane %v489, %v502
        %v504 = vcombine.low %v439, %v455
        %v505 = vcombine.high %v439, %v455
        %v507 = vunpack.c.l.s4 1934713408
        %v508 = vunpack.c.0.s8 %v507
        %v509 = vlaneseq
        %v510 = vshrl.u32 %v509, 7
        %v511 = vsub.s32 %v508, %v510
        %v512 = vrot.slane %v504, %v511
        %v514 = vunpack.c.l.s4 1934713408
        %v515 = vunpack.c.0.s8 %v514
        %v516 = vlaneseq
        %v517 = vshrl.u32 %v516, 7
        %v518 = vsub.s32 %v515, %v517
        %v519 = vrot.slane %v505, %v518
        %v520 = vcombine.low %v464, %v480
        %v521 = vcombine.high %v464, %v480
        %v523 = vunpack.c.l.s4 1934713408
        %v524 = vunpack.c.0.s8 %v523
        %v525 = vlaneseq
        %v526 = vshrl.u32 %v525, 7
        %v527 = vsub.s32 %v524, %v526
        %v528 = vrot.slane %v520, %v527
        %v530 = vunpack.c.l.s4 1934713408
        %v531 = vunpack.c.0.s8 %v530
        %v532 = vlaneseq
        %v533 = vshrl.u32 %v532, 7
        %v534 = vsub.s32 %v531, %v533
        %v535 = vrot.slane %v521, %v534
        %v536 = vcombine.low %v471, %v487
        %v537 = vcombine.high %v471, %v487
        %v539 = vunpack.c.l.s4 1934713408
        %v540 = vunpack.c.0.s8 %v539
        %v541 = vlaneseq
        %v542 = vshrl.u32 %v541, 7
        %v543 = vsub.s32 %v540, %v542
        %v544 = vrot.slane %v536, %v543
        %v546 = vunpack.c.l.s4 1934713408
        %v547 = vunpack.c.0.s8 %v546
        %v548 = vlaneseq
        %v549 = vshrl.u32 %v548, 7
        %v550 = vsub.s32 %v547, %v549
        %v551 = vrot.slane %v537, %v550
        %v552 = vcombine.low %v496, %v528
        %v553 = vcombine.high %v496, %v528
        %v554 = vcombine.low %v503, %v535
        %v555 = vcombine.high %v503, %v535
        %v556 = vcombine.low %v512, %v544
        %v557 = vcombine.high %v512, %v544
        %v558 = vcombine.low %v519, %v551
        %v559 = vcombine.high %v519, %v551
        %576 = vrot.lane.b32.xlu0 %v416, 1
        %v577 = vpop.permute.xlu0 %576
        %578 = vrot.lane.b32.xlu0 %v552, 1
        %v579 = vpop.permute.xlu0 %578
        %580 = vrot.lane.b32.xlu0 %v417, 1
        %v581 = vpop.permute.xlu0 %580
        %582 = vrot.lane.b32.xlu0 %v553, 1
        %v583 = vpop.permute.xlu0 %582
        %584 = vrot.lane.b32.xlu0 %v418, 1
        %v585 = vpop.permute.xlu0 %584
        %586 = vrot.lane.b32.xlu0 %v554, 1
        %v587 = vpop.permute.xlu0 %586
        %588 = vrot.lane.b32.xlu0 %v419, 1
        %v589 = vpop.permute.xlu0 %588
        %590 = vrot.lane.b32.xlu0 %v555, 1
        %v591 = vpop.permute.xlu0 %590
        %592 = vrot.lane.b32.xlu0 %v420, 1
        %v593 = vpop.permute.xlu0 %592
        %594 = vrot.lane.b32.xlu0 %v556, 1
        %v595 = vpop.permute.xlu0 %594
        %596 = vrot.lane.b32.xlu0 %v421, 1
        %v597 = vpop.permute.xlu0 %596
        %598 = vrot.lane.b32.xlu0 %v557, 1
        %v599 = vpop.permute.xlu0 %598
        %600 = vrot.lane.b32.xlu0 %v422, 1
        %v601 = vpop.permute.xlu0 %600
        %602 = vrot.lane.b32.xlu0 %v558, 1
        %v603 = vpop.permute.xlu0 %602
        %604 = vrot.lane.b32.xlu0 %v423, 1
        %v605 = vpop.permute.xlu0 %604
        %606 = vrot.lane.b32.xlu0 %v559, 1
        %v607 = vpop.permute.xlu0 %606
        %vm624 = vcmask 138248
        %625 = vst.msk [vmem:[#allocation2 + $0x1] sm:$0xff] %vm624, %v577
        %626 = vst.msk [vmem:[#allocation2 + $0x9] sm:$0xff] %vm624, %v579
        %627 = vst.msk [vmem:[#allocation2 + $0x19] sm:$0xff] %vm624, %v581
        %628 = vst.msk [vmem:[#allocation2 + $0x21] sm:$0xff] %vm624, %v583
        %629 = vst.msk [vmem:[#allocation2 + $0x31] sm:$0xff] %vm624, %v585
        %630 = vst.msk [vmem:[#allocation2 + $0x39] sm:$0xff] %vm624, %v587
        %631 = vst.msk [vmem:[#allocation2 + $0x49] sm:$0xff] %vm624, %v589
        %632 = vst.msk [vmem:[#allocation2 + $0x51] sm:$0xff] %vm624, %v591
        %633 = vst.msk [vmem:[#allocation2 + $0x61] sm:$0xff] %vm624, %v593
        %634 = vst.msk [vmem:[#allocation2 + $0x69] sm:$0xff] %vm624, %v595
        %635 = vst.msk [vmem:[#allocation2 + $0x79] sm:$0xff] %vm624, %v597
        %636 = vst.msk [vmem:[#allocation2 + $0x81] sm:$0xff] %vm624, %v599
        %637 = vst.msk [vmem:[#allocation2 + $0x91] sm:$0xff] %vm624, %v601
        %638 = vst.msk [vmem:[#allocation2 + $0x99] sm:$0xff] %vm624, %v603
        %639 = vst.msk [vmem:[#allocation2 + $0xa9] sm:$0xff] %vm624, %v605
        %640 = vst.msk [vmem:[#allocation2 + $0xb1] sm:$0xff] %vm624, %v607
        %vm641 = vcmask 132105
        %642 = vst.msk [vmem:[#allocation2 - $0x1] sm:$0x2] %vm641, %v577
        %643 = vst.msk [vmem:[#allocation2 + $0x17] sm:$0x2] %vm641, %v581
        %644 = vst.msk [vmem:[#allocation2 + $0x2f] sm:$0x2] %vm641, %v585
        %645 = vst.msk [vmem:[#allocation2 + $0x47] sm:$0x2] %vm641, %v589
        %646 = vst.msk [vmem:[#allocation2 + $0x5f] sm:$0x2] %vm641, %v593
        %647 = vst.msk [vmem:[#allocation2 + $0x77] sm:$0x2] %vm641, %v597
        %648 = vst.msk [vmem:[#allocation2 + $0x8f] sm:$0x2] %vm641, %v601
        %649 = vst.msk [vmem:[#allocation2 + $0xa7] sm:$0x2] %vm641, %v605
        %vm650 = vcmask 137230
        %651 = vst.msk [vmem:[#allocation2 + $0xb] sm:$0x40] %vm650, %v579
        %652 = vst.msk [vmem:[#allocation2 + $0x23] sm:$0x40] %vm650, %v583
        %653 = vst.msk [vmem:[#allocation2 + $0x3b] sm:$0x40] %vm650, %v587
        %654 = vst.msk [vmem:[#allocation2 + $0x53] sm:$0x40] %vm650, %v591
        %655 = vst.msk [vmem:[#allocation2 + $0x6b] sm:$0x40] %vm650, %v595
        %656 = vst.msk [vmem:[#allocation2 + $0x83] sm:$0x40] %vm650, %v599
        %657 = vst.msk [vmem:[#allocation2 + $0x9b] sm:$0x40] %vm650, %v603
        %658 = vst.msk [vmem:[#allocation2 + $0xb3] sm:$0x40] %vm650, %v607
        %v659 = vld [vmem:[#allocation2] sm:$0xff]
        %v660 = vld [vmem:[#allocation2 + $0x8] sm:$0xff]
        %v661 = vld [vmem:[#allocation2 + $0x10] sm:$0x3]
        %v662 = vld [vmem:[#allocation2 + $0x18] sm:$0xff]
        %v663 = vld [vmem:[#allocation2 + $0x20] sm:$0xff]
        %v664 = vld [vmem:[#allocation2 + $0x28] sm:$0x3]
        %v665 = vld [vmem:[#allocation2 + $0x30] sm:$0xff]
        %v666 = vld [vmem:[#allocation2 + $0x38] sm:$0xff]
        %v667 = vld [vmem:[#allocation2 + $0x40] sm:$0x3]
        %v668 = vld [vmem:[#allocation2 + $0x48] sm:$0xff]
        %v669 = vld [vmem:[#allocation2 + $0x50] sm:$0xff]
        %v670 = vld [vmem:[#allocation2 + $0x58] sm:$0x3]
        %v671 = vld [vmem:[#allocation2 + $0x60] sm:$0xff]
        %v672 = vld [vmem:[#allocation2 + $0x68] sm:$0xff]
        %v673 = vld [vmem:[#allocation2 + $0x70] sm:$0x3]
        %v674 = vld [vmem:[#allocation2 + $0x78] sm:$0xff]
        %v675 = vld [vmem:[#allocation2 + $0x80] sm:$0xff]
        %v676 = vld [vmem:[#allocation2 + $0x88] sm:$0x3]
        %v677 = vld [vmem:[#allocation2 + $0x90] sm:$0xff]
        %v678 = vld [vmem:[#allocation2 + $0x98] sm:$0xff]
        %v679 = vld [vmem:[#allocation2 + $0xa0] sm:$0x3]
        %v680 = vld [vmem:[#allocation2 + $0xa8] sm:$0xff]
        %v681 = vld [vmem:[#allocation2 + $0xb0] sm:$0xff]
        %v682 = vld [vmem:[#allocation2 + $0xb8] sm:$0x3]
        %707 = vrot.lane.b32.xlu0 %v659, 126
        %v708 = vpop.permute.xlu0 %707
        %709 = vrot.lane.b32.xlu0 %v660, 126
        %v710 = vpop.permute.xlu0 %709
        %711 = vrot.lane.b32.xlu0 %v661, 126
        %v712 = vpop.permute.xlu0 %711
        %713 = vrot.lane.b32.xlu0 %v662, 126
        %v714 = vpop.permute.xlu0 %713
        %715 = vrot.lane.b32.xlu0 %v663, 126
        %v716 = vpop.permute.xlu0 %715
        %717 = vrot.lane.b32.xlu0 %v664, 126
        %v718 = vpop.permute.xlu0 %717
        %719 = vrot.lane.b32.xlu0 %v665, 126
        %v720 = vpop.permute.xlu0 %719
        %721 = vrot.lane.b32.xlu0 %v666, 126
        %v722 = vpop.permute.xlu0 %721
        %723 = vrot.lane.b32.xlu0 %v667, 126
        %v724 = vpop.permute.xlu0 %723
        %725 = vrot.lane.b32.xlu0 %v668, 126
        %v726 = vpop.permute.xlu0 %725
        %727 = vrot.lane.b32.xlu0 %v669, 126
        %v728 = vpop.permute.xlu0 %727
        %729 = vrot.lane.b32.xlu0 %v670, 126
        %v730 = vpop.permute.xlu0 %729
        %731 = vrot.lane.b32.xlu0 %v671, 126
        %v732 = vpop.permute.xlu0 %731
        %733 = vrot.lane.b32.xlu0 %v672, 126
        %v734 = vpop.permute.xlu0 %733
        %735 = vrot.lane.b32.xlu0 %v673, 126
        %v736 = vpop.permute.xlu0 %735
        %737 = vrot.lane.b32.xlu0 %v674, 126
        %v738 = vpop.permute.xlu0 %737
        %739 = vrot.lane.b32.xlu0 %v675, 126
        %v740 = vpop.permute.xlu0 %739
        %741 = vrot.lane.b32.xlu0 %v676, 126
        %v742 = vpop.permute.xlu0 %741
        %743 = vrot.lane.b32.xlu0 %v677, 126
        %v744 = vpop.permute.xlu0 %743
        %745 = vrot.lane.b32.xlu0 %v678, 126
        %v746 = vpop.permute.xlu0 %745
        %747 = vrot.lane.b32.xlu0 %v679, 126
        %v748 = vpop.permute.xlu0 %747
        %749 = vrot.lane.b32.xlu0 %v680, 126
        %v750 = vpop.permute.xlu0 %749
        %751 = vrot.lane.b32.xlu0 %v681, 126
        %v752 = vpop.permute.xlu0 %751
        %753 = vrot.lane.b32.xlu0 %v682, 126
        %v754 = vpop.permute.xlu0 %753
        %vm779 = vcmask 7168
        %780 = vst.msk [vmem:[#allocation2] sm:$0xff] %vm779, %v708
        %781 = vst.msk [vmem:[#allocation2 + $0x8] sm:$0xff] %vm779, %v710
        %vm782 = vcmask 1024
        %783 = vst.msk [vmem:[#allocation2 + $0x10] sm:$0x3] %vm782, %v712
        %784 = vst.msk [vmem:[#allocation2 + $0x18] sm:$0xff] %vm779, %v714
        %785 = vst.msk [vmem:[#allocation2 + $0x20] sm:$0xff] %vm779, %v716
        %786 = vst.msk [vmem:[#allocation2 + $0x28] sm:$0x3] %vm782, %v718
        %787 = vst.msk [vmem:[#allocation2 + $0x30] sm:$0xff] %vm779, %v720
        %788 = vst.msk [vmem:[#allocation2 + $0x38] sm:$0xff] %vm779, %v722
        %789 = vst.msk [vmem:[#allocation2 + $0x40] sm:$0x3] %vm782, %v724
        %790 = vst.msk [vmem:[#allocation2 + $0x48] sm:$0xff] %vm779, %v726
        %791 = vst.msk [vmem:[#allocation2 + $0x50] sm:$0xff] %vm779, %v728
        %792 = vst.msk [vmem:[#allocation2 + $0x58] sm:$0x3] %vm782, %v730
        %793 = vst.msk [vmem:[#allocation2 + $0x60] sm:$0xff] %vm779, %v732
        %794 = vst.msk [vmem:[#allocation2 + $0x68] sm:$0xff] %vm779, %v734
        %795 = vst.msk [vmem:[#allocation2 + $0x70] sm:$0x3] %vm782, %v736
        %796 = vst.msk [vmem:[#allocation2 + $0x78] sm:$0xff] %vm779, %v738
        %797 = vst.msk [vmem:[#allocation2 + $0x80] sm:$0xff] %vm779, %v740
        %798 = vst.msk [vmem:[#allocation2 + $0x88] sm:$0x3] %vm782, %v742
        %799 = vst.msk [vmem:[#allocation2 + $0x90] sm:$0xff] %vm779, %v744
        %800 = vst.msk [vmem:[#allocation2 + $0x98] sm:$0xff] %vm779, %v746
        %801 = vst.msk [vmem:[#allocation2 + $0xa0] sm:$0x3] %vm782, %v748
        %802 = vst.msk [vmem:[#allocation2 + $0xa8] sm:$0xff] %vm779, %v750
        %803 = vst.msk [vmem:[#allocation2 + $0xb0] sm:$0xff] %vm779, %v752
        %804 = vst.msk [vmem:[#allocation2 + $0xb8] sm:$0x3] %vm782, %v754
        %v805 = vld [vmem:[#allocation2] sm:$0xff]
        %v806 = vld [vmem:[#allocation2 + $0x8] sm:$0xff]
        %v807 = vld [vmem:[#allocation2 + $0x10] sm:$0x3]
        %v808 = vld [vmem:[#allocation2 + $0x18] sm:$0xff]
        %v809 = vld [vmem:[#allocation2 + $0x20] sm:$0xff]
        %v810 = vld [vmem:[#allocation2 + $0x28] sm:$0x3]
        %v811 = vld [vmem:[#allocation2 + $0x30] sm:$0xff]
        %v812 = vld [vmem:[#allocation2 + $0x38] sm:$0xff]
        %v813 = vld [vmem:[#allocation2 + $0x40] sm:$0x3]
        %v814 = vld [vmem:[#allocation2 + $0x48] sm:$0xff]
        %v815 = vld [vmem:[#allocation2 + $0x50] sm:$0xff]
        %v816 = vld [vmem:[#allocation2 + $0x58] sm:$0x3]
        %v817 = vld [vmem:[#allocation2 + $0x60] sm:$0xff]
        %v818 = vld [vmem:[#allocation2 + $0x68] sm:$0xff]
        %v819 = vld [vmem:[#allocation2 + $0x70] sm:$0x3]
        %v820 = vld [vmem:[#allocation2 + $0x78] sm:$0xff]
        %v821 = vld [vmem:[#allocation2 + $0x80] sm:$0xff]
        %v822 = vld [vmem:[#allocation2 + $0x88] sm:$0x3]
        %v823 = vld [vmem:[#allocation2 + $0x90] sm:$0xff]
        %v824 = vld [vmem:[#allocation2 + $0x98] sm:$0xff]
        %v825 = vld [vmem:[#allocation2 + $0xa0] sm:$0x3]
        %v826 = vld [vmem:[#allocation2 + $0xa8] sm:$0xff]
        %v827 = vld [vmem:[#allocation2 + $0xb0] sm:$0xff]
        %v828 = vld [vmem:[#allocation2 + $0xb8] sm:$0x3]
        %853 = vrot.lane.b32.xlu0 %v805, 2
        %v854 = vpop.permute.xlu0 %853
        %855 = vrot.lane.b32.xlu0 %v806, 2
        %v856 = vpop.permute.xlu0 %855
        %857 = vrot.lane.b32.xlu0 %v807, 2
        %v858 = vpop.permute.xlu0 %857
        %859 = vrot.lane.b32.xlu0 %v808, 2
        %v860 = vpop.permute.xlu0 %859
        %861 = vrot.lane.b32.xlu0 %v809, 2
        %v862 = vpop.permute.xlu0 %861
        %863 = vrot.lane.b32.xlu0 %v810, 2
        %v864 = vpop.permute.xlu0 %863
        %865 = vrot.lane.b32.xlu0 %v811, 2
        %v866 = vpop.permute.xlu0 %865
        %867 = vrot.lane.b32.xlu0 %v812, 2
        %v868 = vpop.permute.xlu0 %867
        %869 = vrot.lane.b32.xlu0 %v813, 2
        %v870 = vpop.permute.xlu0 %869
        %871 = vrot.lane.b32.xlu0 %v814, 2
        %v872 = vpop.permute.xlu0 %871
        %873 = vrot.lane.b32.xlu0 %v815, 2
        %v874 = vpop.permute.xlu0 %873
        %875 = vrot.lane.b32.xlu0 %v816, 2
        %v876 = vpop.permute.xlu0 %875
        %877 = vrot.lane.b32.xlu0 %v817, 2
        %v878 = vpop.permute.xlu0 %877
        %879 = vrot.lane.b32.xlu0 %v818, 2
        %v880 = vpop.permute.xlu0 %879
        %881 = vrot.lane.b32.xlu0 %v819, 2
        %v882 = vpop.permute.xlu0 %881
        %883 = vrot.lane.b32.xlu0 %v820, 2
        %v884 = vpop.permute.xlu0 %883
        %885 = vrot.lane.b32.xlu0 %v821, 2
        %v886 = vpop.permute.xlu0 %885
        %887 = vrot.lane.b32.xlu0 %v822, 2
        %v888 = vpop.permute.xlu0 %887
        %889 = vrot.lane.b32.xlu0 %v823, 2
        %v890 = vpop.permute.xlu0 %889
        %891 = vrot.lane.b32.xlu0 %v824, 2
        %v892 = vpop.permute.xlu0 %891
        %893 = vrot.lane.b32.xlu0 %v825, 2
        %v894 = vpop.permute.xlu0 %893
        %895 = vrot.lane.b32.xlu0 %v826, 2
        %v896 = vpop.permute.xlu0 %895
        %897 = vrot.lane.b32.xlu0 %v827, 2
        %v898 = vpop.permute.xlu0 %897
        %899 = vrot.lane.b32.xlu0 %v828, 2
        %v900 = vpop.permute.xlu0 %899
        %vm925 = vcmask 146568
        %926 = vst.msk [vmem:[#allocation2] sm:$0xff] %vm925, %v854
        %927 = vst.msk [vmem:[#allocation2 + $0x8] sm:$0xff] %vm925, %v856
        %vm928 = vcmask 140424
        %929 = vst.msk [vmem:[#allocation2 + $0x10] sm:$0x3] %vm928, %v858
        %930 = vst.msk [vmem:[#allocation2 + $0x18] sm:$0xff] %vm925, %v860
        %931 = vst.msk [vmem:[#allocation2 + $0x20] sm:$0xff] %vm925, %v862
        %932 = vst.msk [vmem:[#allocation2 + $0x28] sm:$0x3] %vm928, %v864
        %933 = vst.msk [vmem:[#allocation2 + $0x30] sm:$0xff] %vm925, %v866
        %934 = vst.msk [vmem:[#allocation2 + $0x38] sm:$0xff] %vm925, %v868
        %935 = vst.msk [vmem:[#allocation2 + $0x40] sm:$0x3] %vm928, %v870
        %936 = vst.msk [vmem:[#allocation2 + $0x48] sm:$0xff] %vm925, %v872
        %937 = vst.msk [vmem:[#allocation2 + $0x50] sm:$0xff] %vm925, %v874
        %938 = vst.msk [vmem:[#allocation2 + $0x58] sm:$0x3] %vm928, %v876
        %939 = vst.msk [vmem:[#allocation2 + $0x60] sm:$0xff] %vm925, %v878
        %940 = vst.msk [vmem:[#allocation2 + $0x68] sm:$0xff] %vm925, %v880
        %941 = vst.msk [vmem:[#allocation2 + $0x70] sm:$0x3] %vm928, %v882
        %942 = vst.msk [vmem:[#allocation2 + $0x78] sm:$0xff] %vm925, %v884
        %943 = vst.msk [vmem:[#allocation2 + $0x80] sm:$0xff] %vm925, %v886
        %944 = vst.msk [vmem:[#allocation2 + $0x88] sm:$0x3] %vm928, %v888
        %945 = vst.msk [vmem:[#allocation2 + $0x90] sm:$0xff] %vm925, %v890
        %946 = vst.msk [vmem:[#allocation2 + $0x98] sm:$0xff] %vm925, %v892
        %947 = vst.msk [vmem:[#allocation2 + $0xa0] sm:$0x3] %vm928, %v894
        %948 = vst.msk [vmem:[#allocation2 + $0xa8] sm:$0xff] %vm925, %v896
        %949 = vst.msk [vmem:[#allocation2 + $0xb0] sm:$0xff] %vm925, %v898
        %950 = vst.msk [vmem:[#allocation2 + $0xb8] sm:$0x3] %vm928, %v900
        %v951 = vld [vmem:[#allocation2] sm:$0xff]
        %v952 = vld [vmem:[#allocation2 + $0x8] sm:$0xff]
        %v953 = vld [vmem:[#allocation2 + $0x18] sm:$0xff]
        %v954 = vld [vmem:[#allocation2 + $0x20] sm:$0xff]
        %v955 = vld [vmem:[#allocation2 + $0x30] sm:$0xff]
        %v956 = vld [vmem:[#allocation2 + $0x38] sm:$0xff]
        %v957 = vld [vmem:[#allocation2 + $0x48] sm:$0xff]
        %v958 = vld [vmem:[#allocation2 + $0x50] sm:$0xff]
        %v959 = vld [vmem:[#allocation2 + $0x60] sm:$0xff]
        %v960 = vld [vmem:[#allocation2 + $0x68] sm:$0xff]
        %v961 = vld [vmem:[#allocation2 + $0x78] sm:$0xff]
        %v962 = vld [vmem:[#allocation2 + $0x80] sm:$0xff]
        %v963 = vld [vmem:[#allocation2 + $0x90] sm:$0xff]
        %v964 = vld [vmem:[#allocation2 + $0x98] sm:$0xff]
        %v965 = vld [vmem:[#allocation2 + $0xa8] sm:$0xff]
        %v966 = vld [vmem:[#allocation2 + $0xb0] sm:$0xff]
        %v967 = vcombine.low %v951, %v955
        %v968 = vcombine.high %v951, %v955
        %v970 = vunpack.c.l.s4 1983009808
        %v971 = vunpack.c.0.s8 %v970
        %v972 = vlaneseq
        %v973 = vshrl.u32 %v972, 7
        %v974 = vsub.s32 %v971, %v973
        %v975 = vrot.slane %v967, %v974
        %v977 = vunpack.c.l.s4 1983009808
        %v978 = vunpack.c.0.s8 %v977
        %v979 = vlaneseq
        %v980 = vshrl.u32 %v979, 7
        %v981 = vsub.s32 %v978, %v980
        %v982 = vrot.slane %v968, %v981
        %v983 = vcombine.low %v953, %v957
        %v984 = vcombine.high %v953, %v957
        %v986 = vunpack.c.l.s4 1983009808
        %v987 = vunpack.c.0.s8 %v986
        %v988 = vlaneseq
        %v989 = vshrl.u32 %v988, 7
        %v990 = vsub.s32 %v987, %v989
        %v991 = vrot.slane %v983, %v990
        %v993 = vunpack.c.l.s4 1983009808
        %v994 = vunpack.c.0.s8 %v993
        %v995 = vlaneseq
        %v996 = vshrl.u32 %v995, 7
        %v997 = vsub.s32 %v994, %v996
        %v998 = vrot.slane %v984, %v997
        %v999 = vcombine.low %v959, %v963
        %v1000 = vcombine.high %v959, %v963
        %v1002 = vunpack.c.l.s4 1983009808
        %v1003 = vunpack.c.0.s8 %v1002
        %v1004 = vlaneseq
        %v1005 = vshrl.u32 %v1004, 7
        %v1006 = vsub.s32 %v1003, %v1005
        %v1007 = vrot.slane %v999, %v1006
        %v1009 = vunpack.c.l.s4 1983009808
        %v1010 = vunpack.c.0.s8 %v1009
        %v1011 = vlaneseq
        %v1012 = vshrl.u32 %v1011, 7
        %v1013 = vsub.s32 %v1010, %v1012
        %v1014 = vrot.slane %v1000, %v1013
        %v1015 = vcombine.low %v961, %v965
        %v1016 = vcombine.high %v961, %v965
        %v1018 = vunpack.c.l.s4 1983009808
        %v1019 = vunpack.c.0.s8 %v1018
        %v1020 = vlaneseq
        %v1021 = vshrl.u32 %v1020, 7
        %v1022 = vsub.s32 %v1019, %v1021
        %v1023 = vrot.slane %v1015, %v1022
        %v1025 = vunpack.c.l.s4 1983009808
        %v1026 = vunpack.c.0.s8 %v1025
        %v1027 = vlaneseq
        %v1028 = vshrl.u32 %v1027, 7
        %v1029 = vsub.s32 %v1026, %v1028
        %v1030 = vrot.slane %v1016, %v1029
        %v1031 = vcombine.low %v975, %v991
        %v1032 = vcombine.high %v975, %v991
        %v1034 = vunpack.c.l.s4 1934713408
        %v1035 = vunpack.c.0.s8 %v1034
        %v1036 = vlaneseq
        %v1037 = vshrl.u32 %v1036, 7
        %v1038 = vsub.s32 %v1035, %v1037
        %v1039 = vrot.slane %v1031, %v1038
        %v1041 = vunpack.c.l.s4 1934713408
        %v1042 = vunpack.c.0.s8 %v1041
        %v1043 = vlaneseq
        %v1044 = vshrl.u32 %v1043, 7
        %v1045 = vsub.s32 %v1042, %v1044
        %v1046 = vrot.slane %v1032, %v1045
        %v1047 = vcombine.low %v982, %v998
        %v1048 = vcombine.high %v982, %v998
        %v1050 = vunpack.c.l.s4 1934713408
        %v1051 = vunpack.c.0.s8 %v1050
        %v1052 = vlaneseq
        %v1053 = vshrl.u32 %v1052, 7
        %v1054 = vsub.s32 %v1051, %v1053
        %v1055 = vrot.slane %v1047, %v1054
        %v1057 = vunpack.c.l.s4 1934713408
        %v1058 = vunpack.c.0.s8 %v1057
        %v1059 = vlaneseq
        %v1060 = vshrl.u32 %v1059, 7
        %v1061 = vsub.s32 %v1058, %v1060
        %v1062 = vrot.slane %v1048, %v1061
        %v1063 = vcombine.low %v1007, %v1023
        %v1064 = vcombine.high %v1007, %v1023
        %v1066 = vunpack.c.l.s4 1934713408
        %v1067 = vunpack.c.0.s8 %v1066
        %v1068 = vlaneseq
        %v1069 = vshrl.u32 %v1068, 7
        %v1070 = vsub.s32 %v1067, %v1069
        %v1071 = vrot.slane %v1063, %v1070
        %v1073 = vunpack.c.l.s4 1934713408
        %v1074 = vunpack.c.0.s8 %v1073
        %v1075 = vlaneseq
        %v1076 = vshrl.u32 %v1075, 7
        %v1077 = vsub.s32 %v1074, %v1076
        %v1078 = vrot.slane %v1064, %v1077
        %v1079 = vcombine.low %v1014, %v1030
        %v1080 = vcombine.high %v1014, %v1030
        %v1082 = vunpack.c.l.s4 1934713408
        %v1083 = vunpack.c.0.s8 %v1082
        %v1084 = vlaneseq
        %v1085 = vshrl.u32 %v1084, 7
        %v1086 = vsub.s32 %v1083, %v1085
        %v1087 = vrot.slane %v1079, %v1086
        %v1089 = vunpack.c.l.s4 1934713408
        %v1090 = vunpack.c.0.s8 %v1089
        %v1091 = vlaneseq
        %v1092 = vshrl.u32 %v1091, 7
        %v1093 = vsub.s32 %v1090, %v1092
        %v1094 = vrot.slane %v1080, %v1093
        %v1095 = vcombine.low %v1039, %v1071
        %v1096 = vcombine.high %v1039, %v1071
        %v1097 = vcombine.low %v1046, %v1078
        %v1098 = vcombine.high %v1046, %v1078
        %v1099 = vcombine.low %v1055, %v1087
        %v1100 = vcombine.high %v1055, %v1087
        %v1101 = vcombine.low %v1062, %v1094
        %v1102 = vcombine.high %v1062, %v1094
        %v1103 = vcombine.low %v952, %v956
        %v1104 = vcombine.high %v952, %v956
        %v1106 = vunpack.c.l.s4 1983009808
        %v1107 = vunpack.c.0.s8 %v1106
        %v1108 = vlaneseq
        %v1109 = vshrl.u32 %v1108, 7
        %v1110 = vsub.s32 %v1107, %v1109
        %v1111 = vrot.slane %v1103, %v1110
        %v1113 = vunpack.c.l.s4 1983009808
        %v1114 = vunpack.c.0.s8 %v1113
        %v1115 = vlaneseq
        %v1116 = vshrl.u32 %v1115, 7
        %v1117 = vsub.s32 %v1114, %v1116
        %v1118 = vrot.slane %v1104, %v1117
        %v1119 = vcombine.low %v954, %v958
        %v1120 = vcombine.high %v954, %v958
        %v1122 = vunpack.c.l.s4 1983009808
        %v1123 = vunpack.c.0.s8 %v1122
        %v1124 = vlaneseq
        %v1125 = vshrl.u32 %v1124, 7
        %v1126 = vsub.s32 %v1123, %v1125
        %v1127 = vrot.slane %v1119, %v1126
        %v1129 = vunpack.c.l.s4 1983009808
        %v1130 = vunpack.c.0.s8 %v1129
        %v1131 = vlaneseq
        %v1132 = vshrl.u32 %v1131, 7
        %v1133 = vsub.s32 %v1130, %v1132
        %v1134 = vrot.slane %v1120, %v1133
        %v1135 = vcombine.low %v960, %v964
        %v1136 = vcombine.high %v960, %v964
        %v1138 = vunpack.c.l.s4 1983009808
        %v1139 = vunpack.c.0.s8 %v1138
        %v1140 = vlaneseq
        %v1141 = vshrl.u32 %v1140, 7
        %v1142 = vsub.s32 %v1139, %v1141
        %v1143 = vrot.slane %v1135, %v1142
        %v1145 = vunpack.c.l.s4 1983009808
        %v1146 = vunpack.c.0.s8 %v1145
        %v1147 = vlaneseq
        %v1148 = vshrl.u32 %v1147, 7
        %v1149 = vsub.s32 %v1146, %v1148
        %v1150 = vrot.slane %v1136, %v1149
        %v1151 = vcombine.low %v962, %v966
        %v1152 = vcombine.high %v962, %v966
        %v1154 = vunpack.c.l.s4 1983009808
        %v1155 = vunpack.c.0.s8 %v1154
        %v1156 = vlaneseq
        %v1157 = vshrl.u32 %v1156, 7
        %v1158 = vsub.s32 %v1155, %v1157
        %v1159 = vrot.slane %v1151, %v1158
        %v1161 = vunpack.c.l.s4 1983009808
        %v1162 = vunpack.c.0.s8 %v1161
        %v1163 = vlaneseq
        %v1164 = vshrl.u32 %v1163, 7
        %v1165 = vsub.s32 %v1162, %v1164
        %v1166 = vrot.slane %v1152, %v1165
        %v1167 = vcombine.low %v1111, %v1127
        %v1168 = vcombine.high %v1111, %v1127
        %v1170 = vunpack.c.l.s4 1934713408
        %v1171 = vunpack.c.0.s8 %v1170
        %v1172 = vlaneseq
        %v1173 = vshrl.u32 %v1172, 7
        %v1174 = vsub.s32 %v1171, %v1173
        %v1175 = vrot.slane %v1167, %v1174
        %v1177 = vunpack.c.l.s4 1934713408
        %v1178 = vunpack.c.0.s8 %v1177
        %v1179 = vlaneseq
        %v1180 = vshrl.u32 %v1179, 7
        %v1181 = vsub.s32 %v1178, %v1180
        %v1182 = vrot.slane %v1168, %v1181
        %v1183 = vcombine.low %v1118, %v1134
        %v1184 = vcombine.high %v1118, %v1134
        %v1186 = vunpack.c.l.s4 1934713408
        %v1187 = vunpack.c.0.s8 %v1186
        %v1188 = vlaneseq
        %v1189 = vshrl.u32 %v1188, 7
        %v1190 = vsub.s32 %v1187, %v1189
        %v1191 = vrot.slane %v1183, %v1190
        %v1193 = vunpack.c.l.s4 1934713408
        %v1194 = vunpack.c.0.s8 %v1193
        %v1195 = vlaneseq
        %v1196 = vshrl.u32 %v1195, 7
        %v1197 = vsub.s32 %v1194, %v1196
        %v1198 = vrot.slane %v1184, %v1197
        %v1199 = vcombine.low %v1143, %v1159
        %v1200 = vcombine.high %v1143, %v1159
        %v1202 = vunpack.c.l.s4 1934713408
        %v1203 = vunpack.c.0.s8 %v1202
        %v1204 = vlaneseq
        %v1205 = vshrl.u32 %v1204, 7
        %v1206 = vsub.s32 %v1203, %v1205
        %v1207 = vrot.slane %v1199, %v1206
        %v1209 = vunpack.c.l.s4 1934713408
        %v1210 = vunpack.c.0.s8 %v1209
        %v1211 = vlaneseq
        %v1212 = vshrl.u32 %v1211, 7
        %v1213 = vsub.s32 %v1210, %v1212
        %v1214 = vrot.slane %v1200, %v1213
        %v1215 = vcombine.low %v1150, %v1166
        %v1216 = vcombine.high %v1150, %v1166
        %v1218 = vunpack.c.l.s4 1934713408
        %v1219 = vunpack.c.0.s8 %v1218
        %v1220 = vlaneseq
        %v1221 = vshrl.u32 %v1220, 7
        %v1222 = vsub.s32 %v1219, %v1221
        %v1223 = vrot.slane %v1215, %v1222
        %v1225 = vunpack.c.l.s4 1934713408
        %v1226 = vunpack.c.0.s8 %v1225
        %v1227 = vlaneseq
        %v1228 = vshrl.u32 %v1227, 7
        %v1229 = vsub.s32 %v1226, %v1228
        %v1230 = vrot.slane %v1216, %v1229
        %v1231 = vcombine.low %v1175, %v1207
        %v1232 = vcombine.high %v1175, %v1207
        %v1233 = vcombine.low %v1182, %v1214
        %v1234 = vcombine.high %v1182, %v1214
        %v1235 = vcombine.low %v1191, %v1223
        %v1236 = vcombine.high %v1191, %v1223
        %v1237 = vcombine.low %v1198, %v1230
        %v1238 = vcombine.high %v1198, %v1230
        %1240 = vrot.lane.b32.xlu0 %v1096, 16
        %v1241 = vpop.permute.xlu0 %1240
        %1244 = vrot.lane.b32.xlu0 %v1097, 32
        %v1245 = vpop.permute.xlu0 %1244
        %1248 = vrot.lane.b32.xlu0 %v1098, 48
        %v1249 = vpop.permute.xlu0 %1248
        %1252 = vrot.lane.b32.xlu0 %v1099, 64
        %v1253 = vpop.permute.xlu0 %1252
        %1256 = vrot.lane.b32.xlu0 %v1100, 80
        %v1257 = vpop.permute.xlu0 %1256
        %1260 = vrot.lane.b32.xlu0 %v1101, 96
        %v1261 = vpop.permute.xlu0 %1260
        %1264 = vrot.lane.b32.xlu0 %v1102, 112
        %v1265 = vpop.permute.xlu0 %1264
        %1268 = vrot.lane.b32.xlu0 %v1232, 16
        %v1269 = vpop.permute.xlu0 %1268
        %1272 = vrot.lane.b32.xlu0 %v1233, 32
        %v1273 = vpop.permute.xlu0 %1272
        %1276 = vrot.lane.b32.xlu0 %v1234, 48
        %v1277 = vpop.permute.xlu0 %1276
        %1280 = vrot.lane.b32.xlu0 %v1235, 64
        %v1281 = vpop.permute.xlu0 %1280
        %1284 = vrot.lane.b32.xlu0 %v1236, 80
        %v1285 = vpop.permute.xlu0 %1284
        %1288 = vrot.lane.b32.xlu0 %v1237, 96
        %v1289 = vpop.permute.xlu0 %1288
        %1292 = vrot.lane.b32.xlu0 %v1238, 112
        %v1293 = vpop.permute.xlu0 %1292
        %vm1295 = vcmask 130048
        %v1296 = vsel %vm1295, %v1095, %v1241
        %vm1297 = vcmask 261120
        %v1298 = vsel %vm1297, %v1296, %v1245
        %vm1299 = vcmask 392192
        %v1300 = vsel %vm1299, %v1298, %v1249
        %vm1301 = vcmask 523264
        %v1302 = vsel %vm1301, %v1300, %v1253
        %vm1303 = vcmask 654336
        %v1304 = vsel %vm1303, %v1302, %v1257
        %vm1305 = vcmask 785408
        %v1306 = vsel %vm1305, %v1304, %v1261
        %vm1307 = vcmask 916480
        %v1308 = vsel %vm1307, %v1306, %v1265
        %v1309 = vsel %vm1295, %v1231, %v1269
        %v1310 = vsel %vm1297, %v1309, %v1273
        %v1311 = vsel %vm1299, %v1310, %v1277
        %v1312 = vsel %vm1301, %v1311, %v1281
        %v1313 = vsel %vm1303, %v1312, %v1285
        %v1314 = vsel %vm1305, %v1313, %v1289
        %v1315 = vsel %vm1307, %v1314, %v1293
        %1316 = vst [vmem:[#allocation3] sm:$0xff] %v1308
        %1317 = vst [vmem:[#allocation3 + $0x8] sm:$0xff] %v1315
        %v1318 = vld [vmem:[#allocation2] sm:$0xff]
        %v1319 = vld [vmem:[#allocation2 + $0x8] sm:$0xff]
        %v1320 = vld [vmem:[#allocation2 + $0x18] sm:$0xff]
        %v1321 = vld [vmem:[#allocation2 + $0x20] sm:$0xff]
        %v1322 = vld [vmem:[#allocation2 + $0x30] sm:$0xff]
        %v1323 = vld [vmem:[#allocation2 + $0x38] sm:$0xff]
        %v1324 = vld [vmem:[#allocation2 + $0x48] sm:$0xff]
        %v1325 = vld [vmem:[#allocation2 + $0x50] sm:$0xff]
        %v1326 = vld [vmem:[#allocation2 + $0x60] sm:$0xff]
        %v1327 = vld [vmem:[#allocation2 + $0x68] sm:$0xff]
        %v1328 = vld [vmem:[#allocation2 + $0x78] sm:$0xff]
        %v1329 = vld [vmem:[#allocation2 + $0x80] sm:$0xff]
        %v1330 = vld [vmem:[#allocation2 + $0x90] sm:$0xff]
        %v1331 = vld [vmem:[#allocation2 + $0x98] sm:$0xff]
        %v1332 = vld [vmem:[#allocation2 + $0xa8] sm:$0xff]
        %v1333 = vld [vmem:[#allocation2 + $0xb0] sm:$0xff]
        %1350 = vrot.lane.b32.xlu0 %v1318, 127
        %v1351 = vpop.permute.xlu0 %1350
        %1352 = vrot.lane.b32.xlu0 %v1319, 127
        %v1353 = vpop.permute.xlu0 %1352
        %1354 = vrot.lane.b32.xlu0 %v1320, 127
        %v1355 = vpop.permute.xlu0 %1354
        %1356 = vrot.lane.b32.xlu0 %v1321, 127
        %v1357 = vpop.permute.xlu0 %1356
        %1358 = vrot.lane.b32.xlu0 %v1322, 127
        %v1359 = vpop.permute.xlu0 %1358
        %1360 = vrot.lane.b32.xlu0 %v1323, 127
        %v1361 = vpop.permute.xlu0 %1360
        %1362 = vrot.lane.b32.xlu0 %v1324, 127
        %v1363 = vpop.permute.xlu0 %1362
        %1364 = vrot.lane.b32.xlu0 %v1325, 127
        %v1365 = vpop.permute.xlu0 %1364
        %1366 = vrot.lane.b32.xlu0 %v1326, 127
        %v1367 = vpop.permute.xlu0 %1366
        %1368 = vrot.lane.b32.xlu0 %v1327, 127
        %v1369 = vpop.permute.xlu0 %1368
        %1370 = vrot.lane.b32.xlu0 %v1328, 127
        %v1371 = vpop.permute.xlu0 %1370
        %1372 = vrot.lane.b32.xlu0 %v1329, 127
        %v1373 = vpop.permute.xlu0 %1372
        %1374 = vrot.lane.b32.xlu0 %v1330, 127
        %v1375 = vpop.permute.xlu0 %1374
        %1376 = vrot.lane.b32.xlu0 %v1331, 127
        %v1377 = vpop.permute.xlu0 %1376
        %1378 = vrot.lane.b32.xlu0 %v1332, 127
        %v1379 = vpop.permute.xlu0 %1378
        %1380 = vrot.lane.b32.xlu0 %v1333, 127
        %v1381 = vpop.permute.xlu0 %1380
        %v1398 = vcombine.low %v1351, %v1359
        %v1399 = vcombine.high %v1351, %v1359
        %v1401 = vunpack.c.l.s4 1983009808
        %v1402 = vunpack.c.0.s8 %v1401
        %v1403 = vlaneseq
        %v1404 = vshrl.u32 %v1403, 7
        %v1405 = vsub.s32 %v1402, %v1404
        %v1406 = vrot.slane %v1398, %v1405
        %v1408 = vunpack.c.l.s4 1983009808
        %v1409 = vunpack.c.0.s8 %v1408
        %v1410 = vlaneseq
        %v1411 = vshrl.u32 %v1410, 7
        %v1412 = vsub.s32 %v1409, %v1411
        %v1413 = vrot.slane %v1399, %v1412
        %v1414 = vcombine.low %v1355, %v1363
        %v1415 = vcombine.high %v1355, %v1363
        %v1417 = vunpack.c.l.s4 1983009808
        %v1418 = vunpack.c.0.s8 %v1417
        %v1419 = vlaneseq
        %v1420 = vshrl.u32 %v1419, 7
        %v1421 = vsub.s32 %v1418, %v1420
        %v1422 = vrot.slane %v1414, %v1421
        %v1424 = vunpack.c.l.s4 1983009808
        %v1425 = vunpack.c.0.s8 %v1424
        %v1426 = vlaneseq
        %v1427 = vshrl.u32 %v1426, 7
        %v1428 = vsub.s32 %v1425, %v1427
        %v1429 = vrot.slane %v1415, %v1428
        %v1430 = vcombine.low %v1367, %v1375
        %v1431 = vcombine.high %v1367, %v1375
        %v1433 = vunpack.c.l.s4 1983009808
        %v1434 = vunpack.c.0.s8 %v1433
        %v1435 = vlaneseq
        %v1436 = vshrl.u32 %v1435, 7
        %v1437 = vsub.s32 %v1434, %v1436
        %v1438 = vrot.slane %v1430, %v1437
        %v1440 = vunpack.c.l.s4 1983009808
        %v1441 = vunpack.c.0.s8 %v1440
        %v1442 = vlaneseq
        %v1443 = vshrl.u32 %v1442, 7
        %v1444 = vsub.s32 %v1441, %v1443
        %v1445 = vrot.slane %v1431, %v1444
        %v1446 = vcombine.low %v1371, %v1379
        %v1447 = vcombine.high %v1371, %v1379
        %v1449 = vunpack.c.l.s4 1983009808
        %v1450 = vunpack.c.0.s8 %v1449
        %v1451 = vlaneseq
        %v1452 = vshrl.u32 %v1451, 7
        %v1453 = vsub.s32 %v1450, %v1452
        %v1454 = vrot.slane %v1446, %v1453
        %v1456 = vunpack.c.l.s4 1983009808
        %v1457 = vunpack.c.0.s8 %v1456
        %v1458 = vlaneseq
        %v1459 = vshrl.u32 %v1458, 7
        %v1460 = vsub.s32 %v1457, %v1459
        %v1461 = vrot.slane %v1447, %v1460
        %v1462 = vcombine.low %v1406, %v1422
        %v1463 = vcombine.high %v1406, %v1422
        %v1465 = vunpack.c.l.s4 1934713408
        %v1466 = vunpack.c.0.s8 %v1465
        %v1467 = vlaneseq
        %v1468 = vshrl.u32 %v1467, 7
        %v1469 = vsub.s32 %v1466, %v1468
        %v1470 = vrot.slane %v1462, %v1469
        %v1472 = vunpack.c.l.s4 1934713408
        %v1473 = vunpack.c.0.s8 %v1472
        %v1474 = vlaneseq
        %v1475 = vshrl.u32 %v1474, 7
        %v1476 = vsub.s32 %v1473, %v1475
        %v1477 = vrot.slane %v1463, %v1476
        %v1478 = vcombine.low %v1413, %v1429
        %v1479 = vcombine.high %v1413, %v1429
        %v1481 = vunpack.c.l.s4 1934713408
        %v1482 = vunpack.c.0.s8 %v1481
        %v1483 = vlaneseq
        %v1484 = vshrl.u32 %v1483, 7
        %v1485 = vsub.s32 %v1482, %v1484
        %v1486 = vrot.slane %v1478, %v1485
        %v1488 = vunpack.c.l.s4 1934713408
        %v1489 = vunpack.c.0.s8 %v1488
        %v1490 = vlaneseq
        %v1491 = vshrl.u32 %v1490, 7
        %v1492 = vsub.s32 %v1489, %v1491
        %v1493 = vrot.slane %v1479, %v1492
        %v1494 = vcombine.low %v1438, %v1454
        %v1495 = vcombine.high %v1438, %v1454
        %v1497 = vunpack.c.l.s4 1934713408
        %v1498 = vunpack.c.0.s8 %v1497
        %v1499 = vlaneseq
        %v1500 = vshrl.u32 %v1499, 7
        %v1501 = vsub.s32 %v1498, %v1500
        %v1502 = vrot.slane %v1494, %v1501
        %v1504 = vunpack.c.l.s4 1934713408
        %v1505 = vunpack.c.0.s8 %v1504
        %v1506 = vlaneseq
        %v1507 = vshrl.u32 %v1506, 7
        %v1508 = vsub.s32 %v1505, %v1507
        %v1509 = vrot.slane %v1495, %v1508
        %v1510 = vcombine.low %v1445, %v1461
        %v1511 = vcombine.high %v1445, %v1461
        %v1513 = vunpack.c.l.s4 1934713408
        %v1514 = vunpack.c.0.s8 %v1513
        %v1515 = vlaneseq
        %v1516 = vshrl.u32 %v1515, 7
        %v1517 = vsub.s32 %v1514, %v1516
        %v1518 = vrot.slane %v1510, %v1517
        %v1520 = vunpack.c.l.s4 1934713408
        %v1521 = vunpack.c.0.s8 %v1520
        %v1522 = vlaneseq
        %v1523 = vshrl.u32 %v1522, 7
        %v1524 = vsub.s32 %v1521, %v1523
        %v1525 = vrot.slane %v1511, %v1524
        %v1526 = vcombine.low %v1470, %v1502
        %v1527 = vcombine.high %v1470, %v1502
        %v1528 = vcombine.low %v1477, %v1509
        %v1529 = vcombine.high %v1477, %v1509
        %v1530 = vcombine.low %v1486, %v1518
        %v1531 = vcombine.high %v1486, %v1518
        %v1532 = vcombine.low %v1493, %v1525
        %v1533 = vcombine.high %v1493, %v1525
        %v1534 = vcombine.low %v1353, %v1361
        %v1535 = vcombine.high %v1353, %v1361
        %v1537 = vunpack.c.l.s4 1983009808
        %v1538 = vunpack.c.0.s8 %v1537
        %v1539 = vlaneseq
        %v1540 = vshrl.u32 %v1539, 7
        %v1541 = vsub.s32 %v1538, %v1540
        %v1542 = vrot.slane %v1534, %v1541
        %v1544 = vunpack.c.l.s4 1983009808
        %v1545 = vunpack.c.0.s8 %v1544
        %v1546 = vlaneseq
        %v1547 = vshrl.u32 %v1546, 7
        %v1548 = vsub.s32 %v1545, %v1547
        %v1549 = vrot.slane %v1535, %v1548
        %v1550 = vcombine.low %v1357, %v1365
        %v1551 = vcombine.high %v1357, %v1365
        %v1553 = vunpack.c.l.s4 1983009808
        %v1554 = vunpack.c.0.s8 %v1553
        %v1555 = vlaneseq
        %v1556 = vshrl.u32 %v1555, 7
        %v1557 = vsub.s32 %v1554, %v1556
        %v1558 = vrot.slane %v1550, %v1557
        %v1560 = vunpack.c.l.s4 1983009808
        %v1561 = vunpack.c.0.s8 %v1560
        %v1562 = vlaneseq
        %v1563 = vshrl.u32 %v1562, 7
        %v1564 = vsub.s32 %v1561, %v1563
        %v1565 = vrot.slane %v1551, %v1564
        %v1566 = vcombine.low %v1369, %v1377
        %v1567 = vcombine.high %v1369, %v1377
        %v1569 = vunpack.c.l.s4 1983009808
        %v1570 = vunpack.c.0.s8 %v1569
        %v1571 = vlaneseq
        %v1572 = vshrl.u32 %v1571, 7
        %v1573 = vsub.s32 %v1570, %v1572
        %v1574 = vrot.slane %v1566, %v1573
        %v1576 = vunpack.c.l.s4 1983009808
        %v1577 = vunpack.c.0.s8 %v1576
        %v1578 = vlaneseq
        %v1579 = vshrl.u32 %v1578, 7
        %v1580 = vsub.s32 %v1577, %v1579
        %v1581 = vrot.slane %v1567, %v1580
        %v1582 = vcombine.low %v1373, %v1381
        %v1583 = vcombine.high %v1373, %v1381
        %v1585 = vunpack.c.l.s4 1983009808
        %v1586 = vunpack.c.0.s8 %v1585
        %v1587 = vlaneseq
        %v1588 = vshrl.u32 %v1587, 7
        %v1589 = vsub.s32 %v1586, %v1588
        %v1590 = vrot.slane %v1582, %v1589
        %v1592 = vunpack.c.l.s4 1983009808
        %v1593 = vunpack.c.0.s8 %v1592
        %v1594 = vlaneseq
        %v1595 = vshrl.u32 %v1594, 7
        %v1596 = vsub.s32 %v1593, %v1595
        %v1597 = vrot.slane %v1583, %v1596
        %v1598 = vcombine.low %v1542, %v1558
        %v1599 = vcombine.high %v1542, %v1558
        %v1601 = vunpack.c.l.s4 1934713408
        %v1602 = vunpack.c.0.s8 %v1601
        %v1603 = vlaneseq
        %v1604 = vshrl.u32 %v1603, 7
        %v1605 = vsub.s32 %v1602, %v1604
        %v1606 = vrot.slane %v1598, %v1605
        %v1608 = vunpack.c.l.s4 1934713408
        %v1609 = vunpack.c.0.s8 %v1608
        %v1610 = vlaneseq
        %v1611 = vshrl.u32 %v1610, 7
        %v1612 = vsub.s32 %v1609, %v1611
        %v1613 = vrot.slane %v1599, %v1612
        %v1614 = vcombine.low %v1549, %v1565
        %v1615 = vcombine.high %v1549, %v1565
        %v1617 = vunpack.c.l.s4 1934713408
        %v1618 = vunpack.c.0.s8 %v1617
        %v1619 = vlaneseq
        %v1620 = vshrl.u32 %v1619, 7
        %v1621 = vsub.s32 %v1618, %v1620
        %v1622 = vrot.slane %v1614, %v1621
        %v1624 = vunpack.c.l.s4 1934713408
        %v1625 = vunpack.c.0.s8 %v1624
        %v1626 = vlaneseq
        %v1627 = vshrl.u32 %v1626, 7
        %v1628 = vsub.s32 %v1625, %v1627
        %v1629 = vrot.slane %v1615, %v1628
        %v1630 = vcombine.low %v1574, %v1590
        %v1631 = vcombine.high %v1574, %v1590
        %v1633 = vunpack.c.l.s4 1934713408
        %v1634 = vunpack.c.0.s8 %v1633
        %v1635 = vlaneseq
        %v1636 = vshrl.u32 %v1635, 7
        %v1637 = vsub.s32 %v1634, %v1636
        %v1638 = vrot.slane %v1630, %v1637
        %v1640 = vunpack.c.l.s4 1934713408
        %v1641 = vunpack.c.0.s8 %v1640
        %v1642 = vlaneseq
        %v1643 = vshrl.u32 %v1642, 7
        %v1644 = vsub.s32 %v1641, %v1643
        %v1645 = vrot.slane %v1631, %v1644
        %v1646 = vcombine.low %v1581, %v1597
        %v1647 = vcombine.high %v1581, %v1597
        %v1649 = vunpack.c.l.s4 1934713408
        %v1650 = vunpack.c.0.s8 %v1649
        %v1651 = vlaneseq
        %v1652 = vshrl.u32 %v1651, 7
        %v1653 = vsub.s32 %v1650, %v1652
        %v1654 = vrot.slane %v1646, %v1653
        %v1656 = vunpack.c.l.s4 1934713408
        %v1657 = vunpack.c.0.s8 %v1656
        %v1658 = vlaneseq
        %v1659 = vshrl.u32 %v1658, 7
        %v1660 = vsub.s32 %v1657, %v1659
        %v1661 = vrot.slane %v1647, %v1660
        %v1662 = vcombine.low %v1606, %v1638
        %v1663 = vcombine.high %v1606, %v1638
        %v1664 = vcombine.low %v1613, %v1645
        %v1665 = vcombine.high %v1613, %v1645
        %v1666 = vcombine.low %v1622, %v1654
        %v1667 = vcombine.high %v1622, %v1654
        %v1668 = vcombine.low %v1629, %v1661
        %v1669 = vcombine.high %v1629, %v1661
        %1671 = vrot.lane.b32.xlu0 %v1527, 16
        %v1672 = vpop.permute.xlu0 %1671
        %1675 = vrot.lane.b32.xlu0 %v1528, 32
        %v1676 = vpop.permute.xlu0 %1675
        %1679 = vrot.lane.b32.xlu0 %v1529, 48
        %v1680 = vpop.permute.xlu0 %1679
        %1683 = vrot.lane.b32.xlu0 %v1530, 64
        %v1684 = vpop.permute.xlu0 %1683
        %1687 = vrot.lane.b32.xlu0 %v1531, 80
        %v1688 = vpop.permute.xlu0 %1687
        %1691 = vrot.lane.b32.xlu0 %v1532, 96
        %v1692 = vpop.permute.xlu0 %1691
        %1695 = vrot.lane.b32.xlu0 %v1533, 112
        %v1696 = vpop.permute.xlu0 %1695
        %1699 = vrot.lane.b32.xlu0 %v1663, 16
        %v1700 = vpop.permute.xlu0 %1699
        %1703 = vrot.lane.b32.xlu0 %v1664, 32
        %v1704 = vpop.permute.xlu0 %1703
        %1707 = vrot.lane.b32.xlu0 %v1665, 48
        %v1708 = vpop.permute.xlu0 %1707
        %1711 = vrot.lane.b32.xlu0 %v1666, 64
        %v1712 = vpop.permute.xlu0 %1711
        %1715 = vrot.lane.b32.xlu0 %v1667, 80
        %v1716 = vpop.permute.xlu0 %1715
        %1719 = vrot.lane.b32.xlu0 %v1668, 96
        %v1720 = vpop.permute.xlu0 %1719
        %1723 = vrot.lane.b32.xlu0 %v1669, 112
        %v1724 = vpop.permute.xlu0 %1723
        %v1726 = vsel %vm1295, %v1526, %v1672
        %v1727 = vsel %vm1297, %v1726, %v1676
        %v1728 = vsel %vm1299, %v1727, %v1680
        %v1729 = vsel %vm1301, %v1728, %v1684
        %v1730 = vsel %vm1303, %v1729, %v1688
        %v1731 = vsel %vm1305, %v1730, %v1692
        %v1732 = vsel %vm1307, %v1731, %v1696
        %v1733 = vsel %vm1295, %v1662, %v1700
        %v1734 = vsel %vm1297, %v1733, %v1704
        %v1735 = vsel %vm1299, %v1734, %v1708
        %v1736 = vsel %vm1301, %v1735, %v1712
        %v1737 = vsel %vm1303, %v1736, %v1716
        %v1738 = vsel %vm1305, %v1737, %v1720
        %v1739 = vsel %vm1307, %v1738, %v1724
        %1740 = vst [vmem:[#allocation3 + $0x10] sm:$0xff] %v1732
        %1741 = vst [vmem:[#allocation3 + $0x18] sm:$0xff] %v1739
        %v1742 = vld [vmem:[#allocation2] sm:$0xff]
        %v1743 = vld [vmem:[#allocation2 + $0x8] sm:$0xff]
        %v1744 = vld [vmem:[#allocation2 + $0x18] sm:$0xff]
        %v1745 = vld [vmem:[#allocation2 + $0x20] sm:$0xff]
        %v1746 = vld [vmem:[#allocation2 + $0x30] sm:$0xff]
        %v1747 = vld [vmem:[#allocation2 + $0x38] sm:$0xff]
        %v1748 = vld [vmem:[#allocation2 + $0x48] sm:$0xff]
        %v1749 = vld [vmem:[#allocation2 + $0x50] sm:$0xff]
        %v1750 = vld [vmem:[#allocation2 + $0x60] sm:$0xff]
        %v1751 = vld [vmem:[#allocation2 + $0x68] sm:$0xff]
        %v1752 = vld [vmem:[#allocation2 + $0x78] sm:$0xff]
        %v1753 = vld [vmem:[#allocation2 + $0x80] sm:$0xff]
        %v1754 = vld [vmem:[#allocation2 + $0x90] sm:$0xff]
        %v1755 = vld [vmem:[#allocation2 + $0x98] sm:$0xff]
        %v1756 = vld [vmem:[#allocation2 + $0xa8] sm:$0xff]
        %v1757 = vld [vmem:[#allocation2 + $0xb0] sm:$0xff]
        %1774 = vrot.lane.b32.xlu0 %v1742, 126
        %v1775 = vpop.permute.xlu0 %1774
        %1776 = vrot.lane.b32.xlu0 %v1743, 126
        %v1777 = vpop.permute.xlu0 %1776
        %1778 = vrot.lane.b32.xlu0 %v1744, 126
        %v1779 = vpop.permute.xlu0 %1778
        %1780 = vrot.lane.b32.xlu0 %v1745, 126
        %v1781 = vpop.permute.xlu0 %1780
        %1782 = vrot.lane.b32.xlu0 %v1746, 126
        %v1783 = vpop.permute.xlu0 %1782
        %1784 = vrot.lane.b32.xlu0 %v1747, 126
        %v1785 = vpop.permute.xlu0 %1784
        %1786 = vrot.lane.b32.xlu0 %v1748, 126
        %v1787 = vpop.permute.xlu0 %1786
        %1788 = vrot.lane.b32.xlu0 %v1749, 126
        %v1789 = vpop.permute.xlu0 %1788
        %1790 = vrot.lane.b32.xlu0 %v1750, 126
        %v1791 = vpop.permute.xlu0 %1790
        %1792 = vrot.lane.b32.xlu0 %v1751, 126
        %v1793 = vpop.permute.xlu0 %1792
        %1794 = vrot.lane.b32.xlu0 %v1752, 126
        %v1795 = vpop.permute.xlu0 %1794
        %1796 = vrot.lane.b32.xlu0 %v1753, 126
        %v1797 = vpop.permute.xlu0 %1796
        %1798 = vrot.lane.b32.xlu0 %v1754, 126
        %v1799 = vpop.permute.xlu0 %1798
        %1800 = vrot.lane.b32.xlu0 %v1755, 126
        %v1801 = vpop.permute.xlu0 %1800
        %1802 = vrot.lane.b32.xlu0 %v1756, 126
        %v1803 = vpop.permute.xlu0 %1802
        %1804 = vrot.lane.b32.xlu0 %v1757, 126
        %v1805 = vpop.permute.xlu0 %1804
        %v1822 = vcombine.low %v1775, %v1783
        %v1823 = vcombine.high %v1775, %v1783
        %v1825 = vunpack.c.l.s4 1983009808
        %v1826 = vunpack.c.0.s8 %v1825
        %v1827 = vlaneseq
        %v1828 = vshrl.u32 %v1827, 7
        %v1829 = vsub.s32 %v1826, %v1828
        %v1830 = vrot.slane %v1822, %v1829
        %v1832 = vunpack.c.l.s4 1983009808
        %v1833 = vunpack.c.0.s8 %v1832
        %v1834 = vlaneseq
        %v1835 = vshrl.u32 %v1834, 7
        %v1836 = vsub.s32 %v1833, %v1835
        %v1837 = vrot.slane %v1823, %v1836
        %v1838 = vcombine.low %v1779, %v1787
        %v1839 = vcombine.high %v1779, %v1787
        %v1841 = vunpack.c.l.s4 1983009808
        %v1842 = vunpack.c.0.s8 %v1841
        %v1843 = vlaneseq
        %v1844 = vshrl.u32 %v1843, 7
        %v1845 = vsub.s32 %v1842, %v1844
        %v1846 = vrot.slane %v1838, %v1845
        %v1848 = vunpack.c.l.s4 1983009808
        %v1849 = vunpack.c.0.s8 %v1848
        %v1850 = vlaneseq
        %v1851 = vshrl.u32 %v1850, 7
        %v1852 = vsub.s32 %v1849, %v1851
        %v1853 = vrot.slane %v1839, %v1852
        %v1854 = vcombine.low %v1791, %v1799
        %v1855 = vcombine.high %v1791, %v1799
        %v1857 = vunpack.c.l.s4 1983009808
        %v1858 = vunpack.c.0.s8 %v1857
        %v1859 = vlaneseq
        %v1860 = vshrl.u32 %v1859, 7
        %v1861 = vsub.s32 %v1858, %v1860
        %v1862 = vrot.slane %v1854, %v1861
        %v1864 = vunpack.c.l.s4 1983009808
        %v1865 = vunpack.c.0.s8 %v1864
        %v1866 = vlaneseq
        %v1867 = vshrl.u32 %v1866, 7
        %v1868 = vsub.s32 %v1865, %v1867
        %v1869 = vrot.slane %v1855, %v1868
        %v1870 = vcombine.low %v1795, %v1803
        %v1871 = vcombine.high %v1795, %v1803
        %v1873 = vunpack.c.l.s4 1983009808
        %v1874 = vunpack.c.0.s8 %v1873
        %v1875 = vlaneseq
        %v1876 = vshrl.u32 %v1875, 7
        %v1877 = vsub.s32 %v1874, %v1876
        %v1878 = vrot.slane %v1870, %v1877
        %v1880 = vunpack.c.l.s4 1983009808
        %v1881 = vunpack.c.0.s8 %v1880
        %v1882 = vlaneseq
        %v1883 = vshrl.u32 %v1882, 7
        %v1884 = vsub.s32 %v1881, %v1883
        %v1885 = vrot.slane %v1871, %v1884
        %v1886 = vcombine.low %v1830, %v1846
        %v1887 = vcombine.high %v1830, %v1846
        %v1889 = vunpack.c.l.s4 1934713408
        %v1890 = vunpack.c.0.s8 %v1889
        %v1891 = vlaneseq
        %v1892 = vshrl.u32 %v1891, 7
        %v1893 = vsub.s32 %v1890, %v1892
        %v1894 = vrot.slane %v1886, %v1893
        %v1896 = vunpack.c.l.s4 1934713408
        %v1897 = vunpack.c.0.s8 %v1896
        %v1898 = vlaneseq
        %v1899 = vshrl.u32 %v1898, 7
        %v1900 = vsub.s32 %v1897, %v1899
        %v1901 = vrot.slane %v1887, %v1900
        %v1902 = vcombine.low %v1837, %v1853
        %v1903 = vcombine.high %v1837, %v1853
        %v1905 = vunpack.c.l.s4 1934713408
        %v1906 = vunpack.c.0.s8 %v1905
        %v1907 = vlaneseq
        %v1908 = vshrl.u32 %v1907, 7
        %v1909 = vsub.s32 %v1906, %v1908
        %v1910 = vrot.slane %v1902, %v1909
        %v1912 = vunpack.c.l.s4 1934713408
        %v1913 = vunpack.c.0.s8 %v1912
        %v1914 = vlaneseq
        %v1915 = vshrl.u32 %v1914, 7
        %v1916 = vsub.s32 %v1913, %v1915
        %v1917 = vrot.slane %v1903, %v1916
        %v1918 = vcombine.low %v1862, %v1878
        %v1919 = vcombine.high %v1862, %v1878
        %v1921 = vunpack.c.l.s4 1934713408
        %v1922 = vunpack.c.0.s8 %v1921
        %v1923 = vlaneseq
        %v1924 = vshrl.u32 %v1923, 7
        %v1925 = vsub.s32 %v1922, %v1924
        %v1926 = vrot.slane %v1918, %v1925
        %v1928 = vunpack.c.l.s4 1934713408
        %v1929 = vunpack.c.0.s8 %v1928
        %v1930 = vlaneseq
        %v1931 = vshrl.u32 %v1930, 7
        %v1932 = vsub.s32 %v1929, %v1931
        %v1933 = vrot.slane %v1919, %v1932
        %v1934 = vcombine.low %v1869, %v1885
        %v1935 = vcombine.high %v1869, %v1885
        %v1937 = vunpack.c.l.s4 1934713408
        %v1938 = vunpack.c.0.s8 %v1937
        %v1939 = vlaneseq
        %v1940 = vshrl.u32 %v1939, 7
        %v1941 = vsub.s32 %v1938, %v1940
        %v1942 = vrot.slane %v1934, %v1941
        %v1944 = vunpack.c.l.s4 1934713408
        %v1945 = vunpack.c.0.s8 %v1944
        %v1946 = vlaneseq
        %v1947 = vshrl.u32 %v1946, 7
        %v1948 = vsub.s32 %v1945, %v1947
        %v1949 = vrot.slane %v1935, %v1948
        %v1950 = vcombine.low %v1894, %v1926
        %v1951 = vcombine.high %v1894, %v1926
        %v1952 = vcombine.low %v1901, %v1933
        %v1953 = vcombine.high %v1901, %v1933
        %v1954 = vcombine.low %v1910, %v1942
        %v1955 = vcombine.high %v1910, %v1942
        %v1956 = vcombine.low %v1917, %v1949
        %v1957 = vcombine.high %v1917, %v1949
        %v1958 = vcombine.low %v1777, %v1785
        %v1959 = vcombine.high %v1777, %v1785
        %v1961 = vunpack.c.l.s4 1983009808
        %v1962 = vunpack.c.0.s8 %v1961
        %v1963 = vlaneseq
        %v1964 = vshrl.u32 %v1963, 7
        %v1965 = vsub.s32 %v1962, %v1964
        %v1966 = vrot.slane %v1958, %v1965
        %v1968 = vunpack.c.l.s4 1983009808
        %v1969 = vunpack.c.0.s8 %v1968
        %v1970 = vlaneseq
        %v1971 = vshrl.u32 %v1970, 7
        %v1972 = vsub.s32 %v1969, %v1971
        %v1973 = vrot.slane %v1959, %v1972
        %v1974 = vcombine.low %v1781, %v1789
        %v1975 = vcombine.high %v1781, %v1789
        %v1977 = vunpack.c.l.s4 1983009808
        %v1978 = vunpack.c.0.s8 %v1977
        %v1979 = vlaneseq
        %v1980 = vshrl.u32 %v1979, 7
        %v1981 = vsub.s32 %v1978, %v1980
        %v1982 = vrot.slane %v1974, %v1981
        %v1984 = vunpack.c.l.s4 1983009808
        %v1985 = vunpack.c.0.s8 %v1984
        %v1986 = vlaneseq
        %v1987 = vshrl.u32 %v1986, 7
        %v1988 = vsub.s32 %v1985, %v1987
        %v1989 = vrot.slane %v1975, %v1988
        %v1990 = vcombine.low %v1793, %v1801
        %v1991 = vcombine.high %v1793, %v1801
        %v1993 = vunpack.c.l.s4 1983009808
        %v1994 = vunpack.c.0.s8 %v1993
        %v1995 = vlaneseq
        %v1996 = vshrl.u32 %v1995, 7
        %v1997 = vsub.s32 %v1994, %v1996
        %v1998 = vrot.slane %v1990, %v1997
        %v2000 = vunpack.c.l.s4 1983009808
        %v2001 = vunpack.c.0.s8 %v2000
        %v2002 = vlaneseq
        %v2003 = vshrl.u32 %v2002, 7
        %v2004 = vsub.s32 %v2001, %v2003
        %v2005 = vrot.slane %v1991, %v2004
        %v2006 = vcombine.low %v1797, %v1805
        %v2007 = vcombine.high %v1797, %v1805
        %v2009 = vunpack.c.l.s4 1983009808
        %v2010 = vunpack.c.0.s8 %v2009
        %v2011 = vlaneseq
        %v2012 = vshrl.u32 %v2011, 7
        %v2013 = vsub.s32 %v2010, %v2012
        %v2014 = vrot.slane %v2006, %v2013
        %v2016 = vunpack.c.l.s4 1983009808
        %v2017 = vunpack.c.0.s8 %v2016
        %v2018 = vlaneseq
        %v2019 = vshrl.u32 %v2018, 7
        %v2020 = vsub.s32 %v2017, %v2019
        %v2021 = vrot.slane %v2007, %v2020
        %v2022 = vcombine.low %v1966, %v1982
        %v2023 = vcombine.high %v1966, %v1982
        %v2025 = vunpack.c.l.s4 1934713408
        %v2026 = vunpack.c.0.s8 %v2025
        %v2027 = vlaneseq
        %v2028 = vshrl.u32 %v2027, 7
        %v2029 = vsub.s32 %v2026, %v2028
        %v2030 = vrot.slane %v2022, %v2029
        %v2032 = vunpack.c.l.s4 1934713408
        %v2033 = vunpack.c.0.s8 %v2032
        %v2034 = vlaneseq
        %v2035 = vshrl.u32 %v2034, 7
        %v2036 = vsub.s32 %v2033, %v2035
        %v2037 = vrot.slane %v2023, %v2036
        %v2038 = vcombine.low %v1973, %v1989
        %v2039 = vcombine.high %v1973, %v1989
        %v2041 = vunpack.c.l.s4 1934713408
        %v2042 = vunpack.c.0.s8 %v2041
        %v2043 = vlaneseq
        %v2044 = vshrl.u32 %v2043, 7
        %v2045 = vsub.s32 %v2042, %v2044
        %v2046 = vrot.slane %v2038, %v2045
        %v2048 = vunpack.c.l.s4 1934713408
        %v2049 = vunpack.c.0.s8 %v2048
        %v2050 = vlaneseq
        %v2051 = vshrl.u32 %v2050, 7
        %v2052 = vsub.s32 %v2049, %v2051
        %v2053 = vrot.slane %v2039, %v2052
        %v2054 = vcombine.low %v1998, %v2014
        %v2055 = vcombine.high %v1998, %v2014
        %v2057 = vunpack.c.l.s4 1934713408
        %v2058 = vunpack.c.0.s8 %v2057
        %v2059 = vlaneseq
        %v2060 = vshrl.u32 %v2059, 7
        %v2061 = vsub.s32 %v2058, %v2060
        %v2062 = vrot.slane %v2054, %v2061
        %v2064 = vunpack.c.l.s4 1934713408
        %v2065 = vunpack.c.0.s8 %v2064
        %v2066 = vlaneseq
        %v2067 = vshrl.u32 %v2066, 7
        %v2068 = vsub.s32 %v2065, %v2067
        %v2069 = vrot.slane %v2055, %v2068
        %v2070 = vcombine.low %v2005, %v2021
        %v2071 = vcombine.high %v2005, %v2021
        %v2073 = vunpack.c.l.s4 1934713408
        %v2074 = vunpack.c.0.s8 %v2073
        %v2075 = vlaneseq
        %v2076 = vshrl.u32 %v2075, 7
        %v2077 = vsub.s32 %v2074, %v2076
        %v2078 = vrot.slane %v2070, %v2077
        %v2080 = vunpack.c.l.s4 1934713408
        %v2081 = vunpack.c.0.s8 %v2080
        %v2082 = vlaneseq
        %v2083 = vshrl.u32 %v2082, 7
        %v2084 = vsub.s32 %v2081, %v2083
        %v2085 = vrot.slane %v2071, %v2084
        %v2086 = vcombine.low %v2030, %v2062
        %v2087 = vcombine.high %v2030, %v2062
        %v2088 = vcombine.low %v2037, %v2069
        %v2089 = vcombine.high %v2037, %v2069
        %v2090 = vcombine.low %v2046, %v2078
        %v2091 = vcombine.high %v2046, %v2078
        %v2092 = vcombine.low %v2053, %v2085
        %v2093 = vcombine.high %v2053, %v2085
        %2095 = vrot.lane.b32.xlu0 %v1951, 16
        %v2096 = vpop.permute.xlu0 %2095
        %2099 = vrot.lane.b32.xlu0 %v1952, 32
        %v2100 = vpop.permute.xlu0 %2099
        %2103 = vrot.lane.b32.xlu0 %v1953, 48
        %v2104 = vpop.permute.xlu0 %2103
        %2107 = vrot.lane.b32.xlu0 %v1954, 64
        %v2108 = vpop.permute.xlu0 %2107
        %2111 = vrot.lane.b32.xlu0 %v1955, 80
        %v2112 = vpop.permute.xlu0 %2111
        %2115 = vrot.lane.b32.xlu0 %v1956, 96
        %v2116 = vpop.permute.xlu0 %2115
        %2119 = vrot.lane.b32.xlu0 %v1957, 112
        %v2120 = vpop.permute.xlu0 %2119
        %2123 = vrot.lane.b32.xlu0 %v2087, 16
        %v2124 = vpop.permute.xlu0 %2123
        %2127 = vrot.lane.b32.xlu0 %v2088, 32
        %v2128 = vpop.permute.xlu0 %2127
        %2131 = vrot.lane.b32.xlu0 %v2089, 48
        %v2132 = vpop.permute.xlu0 %2131
        %2135 = vrot.lane.b32.xlu0 %v2090, 64
        %v2136 = vpop.permute.xlu0 %2135
        %2139 = vrot.lane.b32.xlu0 %v2091, 80
        %v2140 = vpop.permute.xlu0 %2139
        %2143 = vrot.lane.b32.xlu0 %v2092, 96
        %v2144 = vpop.permute.xlu0 %2143
        %2147 = vrot.lane.b32.xlu0 %v2093, 112
        %v2148 = vpop.permute.xlu0 %2147
        %v2150 = vsel %vm1295, %v1950, %v2096
        %v2151 = vsel %vm1297, %v2150, %v2100
        %v2152 = vsel %vm1299, %v2151, %v2104
        %v2153 = vsel %vm1301, %v2152, %v2108
        %v2154 = vsel %vm1303, %v2153, %v2112
        %v2155 = vsel %vm1305, %v2154, %v2116
        %v2156 = vsel %vm1307, %v2155, %v2120
        %v2157 = vsel %vm1295, %v2086, %v2124
        %v2158 = vsel %vm1297, %v2157, %v2128
        %v2159 = vsel %vm1299, %v2158, %v2132
        %v2160 = vsel %vm1301, %v2159, %v2136
        %v2161 = vsel %vm1303, %v2160, %v2140
        %v2162 = vsel %vm1305, %v2161, %v2144
        %v2163 = vsel %vm1307, %v2162, %v2148
        %2164 = vst [vmem:[#allocation3 + $0x20] sm:$0xff] %v2156
        %2165 = vst [vmem:[#allocation3 + $0x28] sm:$0xff] %v2163
        %v2166 = vld [vmem:[#allocation2 + $0x1] sm:$0xff]
        %v2167 = vld [vmem:[#allocation2 + $0x9] sm:$0xff]
        %v2168 = vld [vmem:[#allocation2 + $0x19] sm:$0xff]
        %v2169 = vld [vmem:[#allocation2 + $0x21] sm:$0xff]
        %v2170 = vld [vmem:[#allocation2 + $0x31] sm:$0xff]
        %v2171 = vld [vmem:[#allocation2 + $0x39] sm:$0xff]
        %v2172 = vld [vmem:[#allocation2 + $0x49] sm:$0xff]
        %v2173 = vld [vmem:[#allocation2 + $0x51] sm:$0xff]
        %v2174 = vld [vmem:[#allocation2 + $0x61] sm:$0xff]
        %v2175 = vld [vmem:[#allocation2 + $0x69] sm:$0xff]
        %v2176 = vld [vmem:[#allocation2 + $0x79] sm:$0xff]
        %v2177 = vld [vmem:[#allocation2 + $0x81] sm:$0xff]
        %v2178 = vld [vmem:[#allocation2 + $0x91] sm:$0xff]
        %v2179 = vld [vmem:[#allocation2 + $0x99] sm:$0xff]
        %v2180 = vld [vmem:[#allocation2 + $0xa9] sm:$0xff]
        %v2181 = vld [vmem:[#allocation2 + $0xb1] sm:$0xff]
        %v2182 = vcombine.low %v2166, %v2170
        %v2183 = vcombine.high %v2166, %v2170
        %v2185 = vunpack.c.l.s4 1983009808
        %v2186 = vunpack.c.0.s8 %v2185
        %v2187 = vlaneseq
        %v2188 = vshrl.u32 %v2187, 7
        %v2189 = vsub.s32 %v2186, %v2188
        %v2190 = vrot.slane %v2182, %v2189
        %v2192 = vunpack.c.l.s4 1983009808
        %v2193 = vunpack.c.0.s8 %v2192
        %v2194 = vlaneseq
        %v2195 = vshrl.u32 %v2194, 7
        %v2196 = vsub.s32 %v2193, %v2195
        %v2197 = vrot.slane %v2183, %v2196
        %v2198 = vcombine.low %v2168, %v2172
        %v2199 = vcombine.high %v2168, %v2172
        %v2201 = vunpack.c.l.s4 1983009808
        %v2202 = vunpack.c.0.s8 %v2201
        %v2203 = vlaneseq
        %v2204 = vshrl.u32 %v2203, 7
        %v2205 = vsub.s32 %v2202, %v2204
        %v2206 = vrot.slane %v2198, %v2205
        %v2208 = vunpack.c.l.s4 1983009808
        %v2209 = vunpack.c.0.s8 %v2208
        %v2210 = vlaneseq
        %v2211 = vshrl.u32 %v2210, 7
        %v2212 = vsub.s32 %v2209, %v2211
        %v2213 = vrot.slane %v2199, %v2212
        %v2214 = vcombine.low %v2174, %v2178
        %v2215 = vcombine.high %v2174, %v2178
        %v2217 = vunpack.c.l.s4 1983009808
        %v2218 = vunpack.c.0.s8 %v2217
        %v2219 = vlaneseq
        %v2220 = vshrl.u32 %v2219, 7
        %v2221 = vsub.s32 %v2218, %v2220
        %v2222 = vrot.slane %v2214, %v2221
        %v2224 = vunpack.c.l.s4 1983009808
        %v2225 = vunpack.c.0.s8 %v2224
        %v2226 = vlaneseq
        %v2227 = vshrl.u32 %v2226, 7
        %v2228 = vsub.s32 %v2225, %v2227
        %v2229 = vrot.slane %v2215, %v2228
        %v2230 = vcombine.low %v2176, %v2180
        %v2231 = vcombine.high %v2176, %v2180
        %v2233 = vunpack.c.l.s4 1983009808
        %v2234 = vunpack.c.0.s8 %v2233
        %v2235 = vlaneseq
        %v2236 = vshrl.u32 %v2235, 7
        %v2237 = vsub.s32 %v2234, %v2236
        %v2238 = vrot.slane %v2230, %v2237
        %v2240 = vunpack.c.l.s4 1983009808
        %v2241 = vunpack.c.0.s8 %v2240
        %v2242 = vlaneseq
        %v2243 = vshrl.u32 %v2242, 7
        %v2244 = vsub.s32 %v2241, %v2243
        %v2245 = vrot.slane %v2231, %v2244
        %v2246 = vcombine.low %v2190, %v2206
        %v2247 = vcombine.high %v2190, %v2206
        %v2249 = vunpack.c.l.s4 1934713408
        %v2250 = vunpack.c.0.s8 %v2249
        %v2251 = vlaneseq
        %v2252 = vshrl.u32 %v2251, 7
        %v2253 = vsub.s32 %v2250, %v2252
        %v2254 = vrot.slane %v2246, %v2253
        %v2256 = vunpack.c.l.s4 1934713408
        %v2257 = vunpack.c.0.s8 %v2256
        %v2258 = vlaneseq
        %v2259 = vshrl.u32 %v2258, 7
        %v2260 = vsub.s32 %v2257, %v2259
        %v2261 = vrot.slane %v2247, %v2260
        %v2262 = vcombine.low %v2197, %v2213
        %v2263 = vcombine.high %v2197, %v2213
        %v2265 = vunpack.c.l.s4 1934713408
        %v2266 = vunpack.c.0.s8 %v2265
        %v2267 = vlaneseq
        %v2268 = vshrl.u32 %v2267, 7
        %v2269 = vsub.s32 %v2266, %v2268
        %v2270 = vrot.slane %v2262, %v2269
        %v2272 = vunpack.c.l.s4 1934713408
        %v2273 = vunpack.c.0.s8 %v2272
        %v2274 = vlaneseq
        %v2275 = vshrl.u32 %v2274, 7
        %v2276 = vsub.s32 %v2273, %v2275
        %v2277 = vrot.slane %v2263, %v2276
        %v2278 = vcombine.low %v2222, %v2238
        %v2279 = vcombine.high %v2222, %v2238
        %v2281 = vunpack.c.l.s4 1934713408
        %v2282 = vunpack.c.0.s8 %v2281
        %v2283 = vlaneseq
        %v2284 = vshrl.u32 %v2283, 7
        %v2285 = vsub.s32 %v2282, %v2284
        %v2286 = vrot.slane %v2278, %v2285
        %v2288 = vunpack.c.l.s4 1934713408
        %v2289 = vunpack.c.0.s8 %v2288
        %v2290 = vlaneseq
        %v2291 = vshrl.u32 %v2290, 7
        %v2292 = vsub.s32 %v2289, %v2291
        %v2293 = vrot.slane %v2279, %v2292
        %v2294 = vcombine.low %v2229, %v2245
        %v2295 = vcombine.high %v2229, %v2245
        %v2297 = vunpack.c.l.s4 1934713408
        %v2298 = vunpack.c.0.s8 %v2297
        %v2299 = vlaneseq
        %v2300 = vshrl.u32 %v2299, 7
        %v2301 = vsub.s32 %v2298, %v2300
        %v2302 = vrot.slane %v2294, %v2301
        %v2304 = vunpack.c.l.s4 1934713408
        %v2305 = vunpack.c.0.s8 %v2304
        %v2306 = vlaneseq
        %v2307 = vshrl.u32 %v2306, 7
        %v2308 = vsub.s32 %v2305, %v2307
        %v2309 = vrot.slane %v2295, %v2308
        %v2310 = vcombine.low %v2254, %v2286
        %v2311 = vcombine.high %v2254, %v2286
        %v2312 = vcombine.low %v2261, %v2293
        %v2313 = vcombine.high %v2261, %v2293
        %v2314 = vcombine.low %v2270, %v2302
        %v2315 = vcombine.high %v2270, %v2302
        %v2316 = vcombine.low %v2277, %v2309
        %v2317 = vcombine.high %v2277, %v2309
        %v2318 = vcombine.low %v2167, %v2171
        %v2319 = vcombine.high %v2167, %v2171
        %v2321 = vunpack.c.l.s4 1983009808
        %v2322 = vunpack.c.0.s8 %v2321
        %v2323 = vlaneseq
        %v2324 = vshrl.u32 %v2323, 7
        %v2325 = vsub.s32 %v2322, %v2324
        %v2326 = vrot.slane %v2318, %v2325
        %v2328 = vunpack.c.l.s4 1983009808
        %v2329 = vunpack.c.0.s8 %v2328
        %v2330 = vlaneseq
        %v2331 = vshrl.u32 %v2330, 7
        %v2332 = vsub.s32 %v2329, %v2331
        %v2333 = vrot.slane %v2319, %v2332
        %v2334 = vcombine.low %v2169, %v2173
        %v2335 = vcombine.high %v2169, %v2173
        %v2337 = vunpack.c.l.s4 1983009808
        %v2338 = vunpack.c.0.s8 %v2337
        %v2339 = vlaneseq
        %v2340 = vshrl.u32 %v2339, 7
        %v2341 = vsub.s32 %v2338, %v2340
        %v2342 = vrot.slane %v2334, %v2341
        %v2344 = vunpack.c.l.s4 1983009808
        %v2345 = vunpack.c.0.s8 %v2344
        %v2346 = vlaneseq
        %v2347 = vshrl.u32 %v2346, 7
        %v2348 = vsub.s32 %v2345, %v2347
        %v2349 = vrot.slane %v2335, %v2348
        %v2350 = vcombine.low %v2175, %v2179
        %v2351 = vcombine.high %v2175, %v2179
        %v2353 = vunpack.c.l.s4 1983009808
        %v2354 = vunpack.c.0.s8 %v2353
        %v2355 = vlaneseq
        %v2356 = vshrl.u32 %v2355, 7
        %v2357 = vsub.s32 %v2354, %v2356
        %v2358 = vrot.slane %v2350, %v2357
        %v2360 = vunpack.c.l.s4 1983009808
        %v2361 = vunpack.c.0.s8 %v2360
        %v2362 = vlaneseq
        %v2363 = vshrl.u32 %v2362, 7
        %v2364 = vsub.s32 %v2361, %v2363
        %v2365 = vrot.slane %v2351, %v2364
        %v2366 = vcombine.low %v2177, %v2181
        %v2367 = vcombine.high %v2177, %v2181
        %v2369 = vunpack.c.l.s4 1983009808
        %v2370 = vunpack.c.0.s8 %v2369
        %v2371 = vlaneseq
        %v2372 = vshrl.u32 %v2371, 7
        %v2373 = vsub.s32 %v2370, %v2372
        %v2374 = vrot.slane %v2366, %v2373
        %v2376 = vunpack.c.l.s4 1983009808
        %v2377 = vunpack.c.0.s8 %v2376
        %v2378 = vlaneseq
        %v2379 = vshrl.u32 %v2378, 7
        %v2380 = vsub.s32 %v2377, %v2379
        %v2381 = vrot.slane %v2367, %v2380
        %v2382 = vcombine.low %v2326, %v2342
        %v2383 = vcombine.high %v2326, %v2342
        %v2385 = vunpack.c.l.s4 1934713408
        %v2386 = vunpack.c.0.s8 %v2385
        %v2387 = vlaneseq
        %v2388 = vshrl.u32 %v2387, 7
        %v2389 = vsub.s32 %v2386, %v2388
        %v2390 = vrot.slane %v2382, %v2389
        %v2392 = vunpack.c.l.s4 1934713408
        %v2393 = vunpack.c.0.s8 %v2392
        %v2394 = vlaneseq
        %v2395 = vshrl.u32 %v2394, 7
        %v2396 = vsub.s32 %v2393, %v2395
        %v2397 = vrot.slane %v2383, %v2396
        %v2398 = vcombine.low %v2333, %v2349
        %v2399 = vcombine.high %v2333, %v2349
        %v2401 = vunpack.c.l.s4 1934713408
        %v2402 = vunpack.c.0.s8 %v2401
        %v2403 = vlaneseq
        %v2404 = vshrl.u32 %v2403, 7
        %v2405 = vsub.s32 %v2402, %v2404
        %v2406 = vrot.slane %v2398, %v2405
        %v2408 = vunpack.c.l.s4 1934713408
        %v2409 = vunpack.c.0.s8 %v2408
        %v2410 = vlaneseq
        %v2411 = vshrl.u32 %v2410, 7
        %v2412 = vsub.s32 %v2409, %v2411
        %v2413 = vrot.slane %v2399, %v2412
        %v2414 = vcombine.low %v2358, %v2374
        %v2415 = vcombine.high %v2358, %v2374
        %v2417 = vunpack.c.l.s4 1934713408
        %v2418 = vunpack.c.0.s8 %v2417
        %v2419 = vlaneseq
        %v2420 = vshrl.u32 %v2419, 7
        %v2421 = vsub.s32 %v2418, %v2420
        %v2422 = vrot.slane %v2414, %v2421
        %v2424 = vunpack.c.l.s4 1934713408
        %v2425 = vunpack.c.0.s8 %v2424
        %v2426 = vlaneseq
        %v2427 = vshrl.u32 %v2426, 7
        %v2428 = vsub.s32 %v2425, %v2427
        %v2429 = vrot.slane %v2415, %v2428
        %v2430 = vcombine.low %v2365, %v2381
        %v2431 = vcombine.high %v2365, %v2381
        %v2433 = vunpack.c.l.s4 1934713408
        %v2434 = vunpack.c.0.s8 %v2433
        %v2435 = vlaneseq
        %v2436 = vshrl.u32 %v2435, 7
        %v2437 = vsub.s32 %v2434, %v2436
        %v2438 = vrot.slane %v2430, %v2437
        %v2440 = vunpack.c.l.s4 1934713408
        %v2441 = vunpack.c.0.s8 %v2440
        %v2442 = vlaneseq
        %v2443 = vshrl.u32 %v2442, 7
        %v2444 = vsub.s32 %v2441, %v2443
        %v2445 = vrot.slane %v2431, %v2444
        %v2446 = vcombine.low %v2390, %v2422
        %v2447 = vcombine.high %v2390, %v2422
        %v2448 = vcombine.low %v2397, %v2429
        %v2449 = vcombine.high %v2397, %v2429
        %v2450 = vcombine.low %v2406, %v2438
        %v2451 = vcombine.high %v2406, %v2438
        %v2452 = vcombine.low %v2413, %v2445
        %v2453 = vcombine.high %v2413, %v2445
        %2455 = vrot.lane.b32.xlu0 %v2311, 16
        %v2456 = vpop.permute.xlu0 %2455
        %2459 = vrot.lane.b32.xlu0 %v2312, 32
        %v2460 = vpop.permute.xlu0 %2459
        %2463 = vrot.lane.b32.xlu0 %v2313, 48
        %v2464 = vpop.permute.xlu0 %2463
        %2467 = vrot.lane.b32.xlu0 %v2314, 64
        %v2468 = vpop.permute.xlu0 %2467
        %2471 = vrot.lane.b32.xlu0 %v2315, 80
        %v2472 = vpop.permute.xlu0 %2471
        %2475 = vrot.lane.b32.xlu0 %v2316, 96
        %v2476 = vpop.permute.xlu0 %2475
        %2479 = vrot.lane.b32.xlu0 %v2317, 112
        %v2480 = vpop.permute.xlu0 %2479
        %2483 = vrot.lane.b32.xlu0 %v2447, 16
        %v2484 = vpop.permute.xlu0 %2483
        %2487 = vrot.lane.b32.xlu0 %v2448, 32
        %v2488 = vpop.permute.xlu0 %2487
        %2491 = vrot.lane.b32.xlu0 %v2449, 48
        %v2492 = vpop.permute.xlu0 %2491
        %2495 = vrot.lane.b32.xlu0 %v2450, 64
        %v2496 = vpop.permute.xlu0 %2495
        %2499 = vrot.lane.b32.xlu0 %v2451, 80
        %v2500 = vpop.permute.xlu0 %2499
        %2503 = vrot.lane.b32.xlu0 %v2452, 96
        %v2504 = vpop.permute.xlu0 %2503
        %2507 = vrot.lane.b32.xlu0 %v2453, 112
        %v2508 = vpop.permute.xlu0 %2507
        %v2510 = vsel %vm1295, %v2310, %v2456
        %v2511 = vsel %vm1297, %v2510, %v2460
        %v2512 = vsel %vm1299, %v2511, %v2464
        %v2513 = vsel %vm1301, %v2512, %v2468
        %v2514 = vsel %vm1303, %v2513, %v2472
        %v2515 = vsel %vm1305, %v2514, %v2476
        %v2516 = vsel %vm1307, %v2515, %v2480
        %v2517 = vsel %vm1295, %v2446, %v2484
        %v2518 = vsel %vm1297, %v2517, %v2488
        %v2519 = vsel %vm1299, %v2518, %v2492
        %v2520 = vsel %vm1301, %v2519, %v2496
        %v2521 = vsel %vm1303, %v2520, %v2500
        %v2522 = vsel %vm1305, %v2521, %v2504
        %v2523 = vsel %vm1307, %v2522, %v2508
        %2524 = vst [vmem:[#allocation3 + $0x30] sm:$0xff] %v2516
        %2525 = vst [vmem:[#allocation3 + $0x38] sm:$0xff] %v2523
        %v2526 = vld [vmem:[#allocation2 + $0x1] sm:$0xff]
        %v2527 = vld [vmem:[#allocation2 + $0x9] sm:$0xff]
        %v2528 = vld [vmem:[#allocation2 + $0x19] sm:$0xff]
        %v2529 = vld [vmem:[#allocation2 + $0x21] sm:$0xff]
        %v2530 = vld [vmem:[#allocation2 + $0x31] sm:$0xff]
        %v2531 = vld [vmem:[#allocation2 + $0x39] sm:$0xff]
        %v2532 = vld [vmem:[#allocation2 + $0x49] sm:$0xff]
        %v2533 = vld [vmem:[#allocation2 + $0x51] sm:$0xff]
        %v2534 = vld [vmem:[#allocation2 + $0x61] sm:$0xff]
        %v2535 = vld [vmem:[#allocation2 + $0x69] sm:$0xff]
        %v2536 = vld [vmem:[#allocation2 + $0x79] sm:$0xff]
        %v2537 = vld [vmem:[#allocation2 + $0x81] sm:$0xff]
        %v2538 = vld [vmem:[#allocation2 + $0x91] sm:$0xff]
        %v2539 = vld [vmem:[#allocation2 + $0x99] sm:$0xff]
        %v2540 = vld [vmem:[#allocation2 + $0xa9] sm:$0xff]
        %v2541 = vld [vmem:[#allocation2 + $0xb1] sm:$0xff]
        %2558 = vrot.lane.b32.xlu0 %v2526, 127
        %v2559 = vpop.permute.xlu0 %2558
        %2560 = vrot.lane.b32.xlu0 %v2527, 127
        %v2561 = vpop.permute.xlu0 %2560
        %2562 = vrot.lane.b32.xlu0 %v2528, 127
        %v2563 = vpop.permute.xlu0 %2562
        %2564 = vrot.lane.b32.xlu0 %v2529, 127
        %v2565 = vpop.permute.xlu0 %2564
        %2566 = vrot.lane.b32.xlu0 %v2530, 127
        %v2567 = vpop.permute.xlu0 %2566
        %2568 = vrot.lane.b32.xlu0 %v2531, 127
        %v2569 = vpop.permute.xlu0 %2568
        %2570 = vrot.lane.b32.xlu0 %v2532, 127
        %v2571 = vpop.permute.xlu0 %2570
        %2572 = vrot.lane.b32.xlu0 %v2533, 127
        %v2573 = vpop.permute.xlu0 %2572
        %2574 = vrot.lane.b32.xlu0 %v2534, 127
        %v2575 = vpop.permute.xlu0 %2574
        %2576 = vrot.lane.b32.xlu0 %v2535, 127
        %v2577 = vpop.permute.xlu0 %2576
        %2578 = vrot.lane.b32.xlu0 %v2536, 127
        %v2579 = vpop.permute.xlu0 %2578
        %2580 = vrot.lane.b32.xlu0 %v2537, 127
        %v2581 = vpop.permute.xlu0 %2580
        %2582 = vrot.lane.b32.xlu0 %v2538, 127
        %v2583 = vpop.permute.xlu0 %2582
        %2584 = vrot.lane.b32.xlu0 %v2539, 127
        %v2585 = vpop.permute.xlu0 %2584
        %2586 = vrot.lane.b32.xlu0 %v2540, 127
        %v2587 = vpop.permute.xlu0 %2586
        %2588 = vrot.lane.b32.xlu0 %v2541, 127
        %v2589 = vpop.permute.xlu0 %2588
        %v2606 = vcombine.low %v2559, %v2567
        %v2607 = vcombine.high %v2559, %v2567
        %v2609 = vunpack.c.l.s4 1983009808
        %v2610 = vunpack.c.0.s8 %v2609
        %v2611 = vlaneseq
        %v2612 = vshrl.u32 %v2611, 7
        %v2613 = vsub.s32 %v2610, %v2612
        %v2614 = vrot.slane %v2606, %v2613
        %v2616 = vunpack.c.l.s4 1983009808
        %v2617 = vunpack.c.0.s8 %v2616
        %v2618 = vlaneseq
        %v2619 = vshrl.u32 %v2618, 7
        %v2620 = vsub.s32 %v2617, %v2619
        %v2621 = vrot.slane %v2607, %v2620
        %v2622 = vcombine.low %v2563, %v2571
        %v2623 = vcombine.high %v2563, %v2571
        %v2625 = vunpack.c.l.s4 1983009808
        %v2626 = vunpack.c.0.s8 %v2625
        %v2627 = vlaneseq
        %v2628 = vshrl.u32 %v2627, 7
        %v2629 = vsub.s32 %v2626, %v2628
        %v2630 = vrot.slane %v2622, %v2629
        %v2632 = vunpack.c.l.s4 1983009808
        %v2633 = vunpack.c.0.s8 %v2632
        %v2634 = vlaneseq
        %v2635 = vshrl.u32 %v2634, 7
        %v2636 = vsub.s32 %v2633, %v2635
        %v2637 = vrot.slane %v2623, %v2636
        %v2638 = vcombine.low %v2575, %v2583
        %v2639 = vcombine.high %v2575, %v2583
        %v2641 = vunpack.c.l.s4 1983009808
        %v2642 = vunpack.c.0.s8 %v2641
        %v2643 = vlaneseq
        %v2644 = vshrl.u32 %v2643, 7
        %v2645 = vsub.s32 %v2642, %v2644
        %v2646 = vrot.slane %v2638, %v2645
        %v2648 = vunpack.c.l.s4 1983009808
        %v2649 = vunpack.c.0.s8 %v2648
        %v2650 = vlaneseq
        %v2651 = vshrl.u32 %v2650, 7
        %v2652 = vsub.s32 %v2649, %v2651
        %v2653 = vrot.slane %v2639, %v2652
        %v2654 = vcombine.low %v2579, %v2587
        %v2655 = vcombine.high %v2579, %v2587
        %v2657 = vunpack.c.l.s4 1983009808
        %v2658 = vunpack.c.0.s8 %v2657
        %v2659 = vlaneseq
        %v2660 = vshrl.u32 %v2659, 7
        %v2661 = vsub.s32 %v2658, %v2660
        %v2662 = vrot.slane %v2654, %v2661
        %v2664 = vunpack.c.l.s4 1983009808
        %v2665 = vunpack.c.0.s8 %v2664
        %v2666 = vlaneseq
        %v2667 = vshrl.u32 %v2666, 7
        %v2668 = vsub.s32 %v2665, %v2667
        %v2669 = vrot.slane %v2655, %v2668
        %v2670 = vcombine.low %v2614, %v2630
        %v2671 = vcombine.high %v2614, %v2630
        %v2673 = vunpack.c.l.s4 1934713408
        %v2674 = vunpack.c.0.s8 %v2673
        %v2675 = vlaneseq
        %v2676 = vshrl.u32 %v2675, 7
        %v2677 = vsub.s32 %v2674, %v2676
        %v2678 = vrot.slane %v2670, %v2677
        %v2680 = vunpack.c.l.s4 1934713408
        %v2681 = vunpack.c.0.s8 %v2680
        %v2682 = vlaneseq
        %v2683 = vshrl.u32 %v2682, 7
        %v2684 = vsub.s32 %v2681, %v2683
        %v2685 = vrot.slane %v2671, %v2684
        %v2686 = vcombine.low %v2621, %v2637
        %v2687 = vcombine.high %v2621, %v2637
        %v2689 = vunpack.c.l.s4 1934713408
        %v2690 = vunpack.c.0.s8 %v2689
        %v2691 = vlaneseq
        %v2692 = vshrl.u32 %v2691, 7
        %v2693 = vsub.s32 %v2690, %v2692
        %v2694 = vrot.slane %v2686, %v2693
        %v2696 = vunpack.c.l.s4 1934713408
        %v2697 = vunpack.c.0.s8 %v2696
        %v2698 = vlaneseq
        %v2699 = vshrl.u32 %v2698, 7
        %v2700 = vsub.s32 %v2697, %v2699
        %v2701 = vrot.slane %v2687, %v2700
        %v2702 = vcombine.low %v2646, %v2662
        %v2703 = vcombine.high %v2646, %v2662
        %v2705 = vunpack.c.l.s4 1934713408
        %v2706 = vunpack.c.0.s8 %v2705
        %v2707 = vlaneseq
        %v2708 = vshrl.u32 %v2707, 7
        %v2709 = vsub.s32 %v2706, %v2708
        %v2710 = vrot.slane %v2702, %v2709
        %v2712 = vunpack.c.l.s4 1934713408
        %v2713 = vunpack.c.0.s8 %v2712
        %v2714 = vlaneseq
        %v2715 = vshrl.u32 %v2714, 7
        %v2716 = vsub.s32 %v2713, %v2715
        %v2717 = vrot.slane %v2703, %v2716
        %v2718 = vcombine.low %v2653, %v2669
        %v2719 = vcombine.high %v2653, %v2669
        %v2721 = vunpack.c.l.s4 1934713408
        %v2722 = vunpack.c.0.s8 %v2721
        %v2723 = vlaneseq
        %v2724 = vshrl.u32 %v2723, 7
        %v2725 = vsub.s32 %v2722, %v2724
        %v2726 = vrot.slane %v2718, %v2725
        %v2728 = vunpack.c.l.s4 1934713408
        %v2729 = vunpack.c.0.s8 %v2728
        %v2730 = vlaneseq
        %v2731 = vshrl.u32 %v2730, 7
        %v2732 = vsub.s32 %v2729, %v2731
        %v2733 = vrot.slane %v2719, %v2732
        %v2734 = vcombine.low %v2678, %v2710
        %v2735 = vcombine.high %v2678, %v2710
        %v2736 = vcombine.low %v2685, %v2717
        %v2737 = vcombine.high %v2685, %v2717
        %v2738 = vcombine.low %v2694, %v2726
        %v2739 = vcombine.high %v2694, %v2726
        %v2740 = vcombine.low %v2701, %v2733
        %v2741 = vcombine.high %v2701, %v2733
        %v2742 = vcombine.low %v2561, %v2569
        %v2743 = vcombine.high %v2561, %v2569
        %v2745 = vunpack.c.l.s4 1983009808
        %v2746 = vunpack.c.0.s8 %v2745
        %v2747 = vlaneseq
        %v2748 = vshrl.u32 %v2747, 7
        %v2749 = vsub.s32 %v2746, %v2748
        %v2750 = vrot.slane %v2742, %v2749
        %v2752 = vunpack.c.l.s4 1983009808
        %v2753 = vunpack.c.0.s8 %v2752
        %v2754 = vlaneseq
        %v2755 = vshrl.u32 %v2754, 7
        %v2756 = vsub.s32 %v2753, %v2755
        %v2757 = vrot.slane %v2743, %v2756
        %v2758 = vcombine.low %v2565, %v2573
        %v2759 = vcombine.high %v2565, %v2573
        %v2761 = vunpack.c.l.s4 1983009808
        %v2762 = vunpack.c.0.s8 %v2761
        %v2763 = vlaneseq
        %v2764 = vshrl.u32 %v2763, 7
        %v2765 = vsub.s32 %v2762, %v2764
        %v2766 = vrot.slane %v2758, %v2765
        %v2768 = vunpack.c.l.s4 1983009808
        %v2769 = vunpack.c.0.s8 %v2768
        %v2770 = vlaneseq
        %v2771 = vshrl.u32 %v2770, 7
        %v2772 = vsub.s32 %v2769, %v2771
        %v2773 = vrot.slane %v2759, %v2772
        %v2774 = vcombine.low %v2577, %v2585
        %v2775 = vcombine.high %v2577, %v2585
        %v2777 = vunpack.c.l.s4 1983009808
        %v2778 = vunpack.c.0.s8 %v2777
        %v2779 = vlaneseq
        %v2780 = vshrl.u32 %v2779, 7
        %v2781 = vsub.s32 %v2778, %v2780
        %v2782 = vrot.slane %v2774, %v2781
        %v2784 = vunpack.c.l.s4 1983009808
        %v2785 = vunpack.c.0.s8 %v2784
        %v2786 = vlaneseq
        %v2787 = vshrl.u32 %v2786, 7
        %v2788 = vsub.s32 %v2785, %v2787
        %v2789 = vrot.slane %v2775, %v2788
        %v2790 = vcombine.low %v2581, %v2589
        %v2791 = vcombine.high %v2581, %v2589
        %v2793 = vunpack.c.l.s4 1983009808
        %v2794 = vunpack.c.0.s8 %v2793
        %v2795 = vlaneseq
        %v2796 = vshrl.u32 %v2795, 7
        %v2797 = vsub.s32 %v2794, %v2796
        %v2798 = vrot.slane %v2790, %v2797
        %v2800 = vunpack.c.l.s4 1983009808
        %v2801 = vunpack.c.0.s8 %v2800
        %v2802 = vlaneseq
        %v2803 = vshrl.u32 %v2802, 7
        %v2804 = vsub.s32 %v2801, %v2803
        %v2805 = vrot.slane %v2791, %v2804
        %v2806 = vcombine.low %v2750, %v2766
        %v2807 = vcombine.high %v2750, %v2766
        %v2809 = vunpack.c.l.s4 1934713408
        %v2810 = vunpack.c.0.s8 %v2809
        %v2811 = vlaneseq
        %v2812 = vshrl.u32 %v2811, 7
        %v2813 = vsub.s32 %v2810, %v2812
        %v2814 = vrot.slane %v2806, %v2813
        %v2816 = vunpack.c.l.s4 1934713408
        %v2817 = vunpack.c.0.s8 %v2816
        %v2818 = vlaneseq
        %v2819 = vshrl.u32 %v2818, 7
        %v2820 = vsub.s32 %v2817, %v2819
        %v2821 = vrot.slane %v2807, %v2820
        %v2822 = vcombine.low %v2757, %v2773
        %v2823 = vcombine.high %v2757, %v2773
        %v2825 = vunpack.c.l.s4 1934713408
        %v2826 = vunpack.c.0.s8 %v2825
        %v2827 = vlaneseq
        %v2828 = vshrl.u32 %v2827, 7
        %v2829 = vsub.s32 %v2826, %v2828
        %v2830 = vrot.slane %v2822, %v2829
        %v2832 = vunpack.c.l.s4 1934713408
        %v2833 = vunpack.c.0.s8 %v2832
        %v2834 = vlaneseq
        %v2835 = vshrl.u32 %v2834, 7
        %v2836 = vsub.s32 %v2833, %v2835
        %v2837 = vrot.slane %v2823, %v2836
        %v2838 = vcombine.low %v2782, %v2798
        %v2839 = vcombine.high %v2782, %v2798
        %v2841 = vunpack.c.l.s4 1934713408
        %v2842 = vunpack.c.0.s8 %v2841
        %v2843 = vlaneseq
        %v2844 = vshrl.u32 %v2843, 7
        %v2845 = vsub.s32 %v2842, %v2844
        %v2846 = vrot.slane %v2838, %v2845
        %v2848 = vunpack.c.l.s4 1934713408
        %v2849 = vunpack.c.0.s8 %v2848
        %v2850 = vlaneseq
        %v2851 = vshrl.u32 %v2850, 7
        %v2852 = vsub.s32 %v2849, %v2851
        %v2853 = vrot.slane %v2839, %v2852
        %v2854 = vcombine.low %v2789, %v2805
        %v2855 = vcombine.high %v2789, %v2805
        %v2857 = vunpack.c.l.s4 1934713408
        %v2858 = vunpack.c.0.s8 %v2857
        %v2859 = vlaneseq
        %v2860 = vshrl.u32 %v2859, 7
        %v2861 = vsub.s32 %v2858, %v2860
        %v2862 = vrot.slane %v2854, %v2861
        %v2864 = vunpack.c.l.s4 1934713408
        %v2865 = vunpack.c.0.s8 %v2864
        %v2866 = vlaneseq
        %v2867 = vshrl.u32 %v2866, 7
        %v2868 = vsub.s32 %v2865, %v2867
        %v2869 = vrot.slane %v2855, %v2868
        %v2870 = vcombine.low %v2814, %v2846
        %v2871 = vcombine.high %v2814, %v2846
        %v2872 = vcombine.low %v2821, %v2853
        %v2873 = vcombine.high %v2821, %v2853
        %v2874 = vcombine.low %v2830, %v2862
        %v2875 = vcombine.high %v2830, %v2862
        %v2876 = vcombine.low %v2837, %v2869
        %v2877 = vcombine.high %v2837, %v2869
        %2879 = vrot.lane.b32.xlu0 %v2735, 16
        %v2880 = vpop.permute.xlu0 %2879
        %2883 = vrot.lane.b32.xlu0 %v2736, 32
        %v2884 = vpop.permute.xlu0 %2883
        %2887 = vrot.lane.b32.xlu0 %v2737, 48
        %v2888 = vpop.permute.xlu0 %2887
        %2891 = vrot.lane.b32.xlu0 %v2738, 64
        %v2892 = vpop.permute.xlu0 %2891
        %2895 = vrot.lane.b32.xlu0 %v2739, 80
        %v2896 = vpop.permute.xlu0 %2895
        %2899 = vrot.lane.b32.xlu0 %v2740, 96
        %v2900 = vpop.permute.xlu0 %2899
        %2903 = vrot.lane.b32.xlu0 %v2741, 112
        %v2904 = vpop.permute.xlu0 %2903
        %2907 = vrot.lane.b32.xlu0 %v2871, 16
        %v2908 = vpop.permute.xlu0 %2907
        %2911 = vrot.lane.b32.xlu0 %v2872, 32
        %v2912 = vpop.permute.xlu0 %2911
        %2915 = vrot.lane.b32.xlu0 %v2873, 48
        %v2916 = vpop.permute.xlu0 %2915
        %2919 = vrot.lane.b32.xlu0 %v2874, 64
        %v2920 = vpop.permute.xlu0 %2919
        %2923 = vrot.lane.b32.xlu0 %v2875, 80
        %v2924 = vpop.permute.xlu0 %2923
        %2927 = vrot.lane.b32.xlu0 %v2876, 96
        %v2928 = vpop.permute.xlu0 %2927
        %2931 = vrot.lane.b32.xlu0 %v2877, 112
        %v2932 = vpop.permute.xlu0 %2931
        %v2934 = vsel %vm1295, %v2734, %v2880
        %v2935 = vsel %vm1297, %v2934, %v2884
        %v2936 = vsel %vm1299, %v2935, %v2888
        %v2937 = vsel %vm1301, %v2936, %v2892
        %v2938 = vsel %vm1303, %v2937, %v2896
        %v2939 = vsel %vm1305, %v2938, %v2900
        %v2940 = vsel %vm1307, %v2939, %v2904
        %v2941 = vsel %vm1295, %v2870, %v2908
        %v2942 = vsel %vm1297, %v2941, %v2912
        %v2943 = vsel %vm1299, %v2942, %v2916
        %v2944 = vsel %vm1301, %v2943, %v2920
        %v2945 = vsel %vm1303, %v2944, %v2924
        %v2946 = vsel %vm1305, %v2945, %v2928
        %v2947 = vsel %vm1307, %v2946, %v2932
        %2948 = vst [vmem:[#allocation3 + $0x40] sm:$0xff] %v2940
        %2949 = vst [vmem:[#allocation3 + $0x48] sm:$0xff] %v2947
        %v2950 = vld [vmem:[#allocation2 + $0x1] sm:$0xff]
        %v2951 = vld [vmem:[#allocation2 + $0x9] sm:$0xff]
        %v2952 = vld [vmem:[#allocation2 + $0x19] sm:$0xff]
        %v2953 = vld [vmem:[#allocation2 + $0x21] sm:$0xff]
        %v2954 = vld [vmem:[#allocation2 + $0x31] sm:$0xff]
        %v2955 = vld [vmem:[#allocation2 + $0x39] sm:$0xff]
        %v2956 = vld [vmem:[#allocation2 + $0x49] sm:$0xff]
        %v2957 = vld [vmem:[#allocation2 + $0x51] sm:$0xff]
        %v2958 = vld [vmem:[#allocation2 + $0x61] sm:$0xff]
        %v2959 = vld [vmem:[#allocation2 + $0x69] sm:$0xff]
        %v2960 = vld [vmem:[#allocation2 + $0x79] sm:$0xff]
        %v2961 = vld [vmem:[#allocation2 + $0x81] sm:$0xff]
        %v2962 = vld [vmem:[#allocation2 + $0x91] sm:$0xff]
        %v2963 = vld [vmem:[#allocation2 + $0x99] sm:$0xff]
        %v2964 = vld [vmem:[#allocation2 + $0xa9] sm:$0xff]
        %v2965 = vld [vmem:[#allocation2 + $0xb1] sm:$0xff]
        %2982 = vrot.lane.b32.xlu0 %v2950, 126
        %v2983 = vpop.permute.xlu0 %2982
        %2984 = vrot.lane.b32.xlu0 %v2951, 126
        %v2985 = vpop.permute.xlu0 %2984
        %2986 = vrot.lane.b32.xlu0 %v2952, 126
        %v2987 = vpop.permute.xlu0 %2986
        %2988 = vrot.lane.b32.xlu0 %v2953, 126
        %v2989 = vpop.permute.xlu0 %2988
        %2990 = vrot.lane.b32.xlu0 %v2954, 126
        %v2991 = vpop.permute.xlu0 %2990
        %2992 = vrot.lane.b32.xlu0 %v2955, 126
        %v2993 = vpop.permute.xlu0 %2992
        %2994 = vrot.lane.b32.xlu0 %v2956, 126
        %v2995 = vpop.permute.xlu0 %2994
        %2996 = vrot.lane.b32.xlu0 %v2957, 126
        %v2997 = vpop.permute.xlu0 %2996
        %2998 = vrot.lane.b32.xlu0 %v2958, 126
        %v2999 = vpop.permute.xlu0 %2998
        %3000 = vrot.lane.b32.xlu0 %v2959, 126
        %v3001 = vpop.permute.xlu0 %3000
        %3002 = vrot.lane.b32.xlu0 %v2960, 126
        %v3003 = vpop.permute.xlu0 %3002
        %3004 = vrot.lane.b32.xlu0 %v2961, 126
        %v3005 = vpop.permute.xlu0 %3004
        %3006 = vrot.lane.b32.xlu0 %v2962, 126
        %v3007 = vpop.permute.xlu0 %3006
        %3008 = vrot.lane.b32.xlu0 %v2963, 126
        %v3009 = vpop.permute.xlu0 %3008
        %3010 = vrot.lane.b32.xlu0 %v2964, 126
        %v3011 = vpop.permute.xlu0 %3010
        %3012 = vrot.lane.b32.xlu0 %v2965, 126
        %v3013 = vpop.permute.xlu0 %3012
        %v3030 = vcombine.low %v2983, %v2991
        %v3031 = vcombine.high %v2983, %v2991
        %v3033 = vunpack.c.l.s4 1983009808
        %v3034 = vunpack.c.0.s8 %v3033
        %v3035 = vlaneseq
        %v3036 = vshrl.u32 %v3035, 7
        %v3037 = vsub.s32 %v3034, %v3036
        %v3038 = vrot.slane %v3030, %v3037
        %v3040 = vunpack.c.l.s4 1983009808
        %v3041 = vunpack.c.0.s8 %v3040
        %v3042 = vlaneseq
        %v3043 = vshrl.u32 %v3042, 7
        %v3044 = vsub.s32 %v3041, %v3043
        %v3045 = vrot.slane %v3031, %v3044
        %v3046 = vcombine.low %v2987, %v2995
        %v3047 = vcombine.high %v2987, %v2995
        %v3049 = vunpack.c.l.s4 1983009808
        %v3050 = vunpack.c.0.s8 %v3049
        %v3051 = vlaneseq
        %v3052 = vshrl.u32 %v3051, 7
        %v3053 = vsub.s32 %v3050, %v3052
        %v3054 = vrot.slane %v3046, %v3053
        %v3056 = vunpack.c.l.s4 1983009808
        %v3057 = vunpack.c.0.s8 %v3056
        %v3058 = vlaneseq
        %v3059 = vshrl.u32 %v3058, 7
        %v3060 = vsub.s32 %v3057, %v3059
        %v3061 = vrot.slane %v3047, %v3060
        %v3062 = vcombine.low %v2999, %v3007
        %v3063 = vcombine.high %v2999, %v3007
        %v3065 = vunpack.c.l.s4 1983009808
        %v3066 = vunpack.c.0.s8 %v3065
        %v3067 = vlaneseq
        %v3068 = vshrl.u32 %v3067, 7
        %v3069 = vsub.s32 %v3066, %v3068
        %v3070 = vrot.slane %v3062, %v3069
        %v3072 = vunpack.c.l.s4 1983009808
        %v3073 = vunpack.c.0.s8 %v3072
        %v3074 = vlaneseq
        %v3075 = vshrl.u32 %v3074, 7
        %v3076 = vsub.s32 %v3073, %v3075
        %v3077 = vrot.slane %v3063, %v3076
        %v3078 = vcombine.low %v3003, %v3011
        %v3079 = vcombine.high %v3003, %v3011
        %v3081 = vunpack.c.l.s4 1983009808
        %v3082 = vunpack.c.0.s8 %v3081
        %v3083 = vlaneseq
        %v3084 = vshrl.u32 %v3083, 7
        %v3085 = vsub.s32 %v3082, %v3084
        %v3086 = vrot.slane %v3078, %v3085
        %v3088 = vunpack.c.l.s4 1983009808
        %v3089 = vunpack.c.0.s8 %v3088
        %v3090 = vlaneseq
        %v3091 = vshrl.u32 %v3090, 7
        %v3092 = vsub.s32 %v3089, %v3091
        %v3093 = vrot.slane %v3079, %v3092
        %v3094 = vcombine.low %v3038, %v3054
        %v3095 = vcombine.high %v3038, %v3054
        %v3097 = vunpack.c.l.s4 1934713408
        %v3098 = vunpack.c.0.s8 %v3097
        %v3099 = vlaneseq
        %v3100 = vshrl.u32 %v3099, 7
        %v3101 = vsub.s32 %v3098, %v3100
        %v3102 = vrot.slane %v3094, %v3101
        %v3104 = vunpack.c.l.s4 1934713408
        %v3105 = vunpack.c.0.s8 %v3104
        %v3106 = vlaneseq
        %v3107 = vshrl.u32 %v3106, 7
        %v3108 = vsub.s32 %v3105, %v3107
        %v3109 = vrot.slane %v3095, %v3108
        %v3110 = vcombine.low %v3045, %v3061
        %v3111 = vcombine.high %v3045, %v3061
        %v3113 = vunpack.c.l.s4 1934713408
        %v3114 = vunpack.c.0.s8 %v3113
        %v3115 = vlaneseq
        %v3116 = vshrl.u32 %v3115, 7
        %v3117 = vsub.s32 %v3114, %v3116
        %v3118 = vrot.slane %v3110, %v3117
        %v3120 = vunpack.c.l.s4 1934713408
        %v3121 = vunpack.c.0.s8 %v3120
        %v3122 = vlaneseq
        %v3123 = vshrl.u32 %v3122, 7
        %v3124 = vsub.s32 %v3121, %v3123
        %v3125 = vrot.slane %v3111, %v3124
        %v3126 = vcombine.low %v3070, %v3086
        %v3127 = vcombine.high %v3070, %v3086
        %v3129 = vunpack.c.l.s4 1934713408
        %v3130 = vunpack.c.0.s8 %v3129
        %v3131 = vlaneseq
        %v3132 = vshrl.u32 %v3131, 7
        %v3133 = vsub.s32 %v3130, %v3132
        %v3134 = vrot.slane %v3126, %v3133
        %v3136 = vunpack.c.l.s4 1934713408
        %v3137 = vunpack.c.0.s8 %v3136
        %v3138 = vlaneseq
        %v3139 = vshrl.u32 %v3138, 7
        %v3140 = vsub.s32 %v3137, %v3139
        %v3141 = vrot.slane %v3127, %v3140
        %v3142 = vcombine.low %v3077, %v3093
        %v3143 = vcombine.high %v3077, %v3093
        %v3145 = vunpack.c.l.s4 1934713408
        %v3146 = vunpack.c.0.s8 %v3145
        %v3147 = vlaneseq
        %v3148 = vshrl.u32 %v3147, 7
        %v3149 = vsub.s32 %v3146, %v3148
        %v3150 = vrot.slane %v3142, %v3149
        %v3152 = vunpack.c.l.s4 1934713408
        %v3153 = vunpack.c.0.s8 %v3152
        %v3154 = vlaneseq
        %v3155 = vshrl.u32 %v3154, 7
        %v3156 = vsub.s32 %v3153, %v3155
        %v3157 = vrot.slane %v3143, %v3156
        %v3158 = vcombine.low %v3102, %v3134
        %v3159 = vcombine.high %v3102, %v3134
        %v3160 = vcombine.low %v3109, %v3141
        %v3161 = vcombine.high %v3109, %v3141
        %v3162 = vcombine.low %v3118, %v3150
        %v3163 = vcombine.high %v3118, %v3150
        %v3164 = vcombine.low %v3125, %v3157
        %v3165 = vcombine.high %v3125, %v3157
        %v3166 = vcombine.low %v2985, %v2993
        %v3167 = vcombine.high %v2985, %v2993
        %v3169 = vunpack.c.l.s4 1983009808
        %v3170 = vunpack.c.0.s8 %v3169
        %v3171 = vlaneseq
        %v3172 = vshrl.u32 %v3171, 7
        %v3173 = vsub.s32 %v3170, %v3172
        %v3174 = vrot.slane %v3166, %v3173
        %v3176 = vunpack.c.l.s4 1983009808
        %v3177 = vunpack.c.0.s8 %v3176
        %v3178 = vlaneseq
        %v3179 = vshrl.u32 %v3178, 7
        %v3180 = vsub.s32 %v3177, %v3179
        %v3181 = vrot.slane %v3167, %v3180
        %v3182 = vcombine.low %v2989, %v2997
        %v3183 = vcombine.high %v2989, %v2997
        %v3185 = vunpack.c.l.s4 1983009808
        %v3186 = vunpack.c.0.s8 %v3185
        %v3187 = vlaneseq
        %v3188 = vshrl.u32 %v3187, 7
        %v3189 = vsub.s32 %v3186, %v3188
        %v3190 = vrot.slane %v3182, %v3189
        %v3192 = vunpack.c.l.s4 1983009808
        %v3193 = vunpack.c.0.s8 %v3192
        %v3194 = vlaneseq
        %v3195 = vshrl.u32 %v3194, 7
        %v3196 = vsub.s32 %v3193, %v3195
        %v3197 = vrot.slane %v3183, %v3196
        %v3198 = vcombine.low %v3001, %v3009
        %v3199 = vcombine.high %v3001, %v3009
        %v3201 = vunpack.c.l.s4 1983009808
        %v3202 = vunpack.c.0.s8 %v3201
        %v3203 = vlaneseq
        %v3204 = vshrl.u32 %v3203, 7
        %v3205 = vsub.s32 %v3202, %v3204
        %v3206 = vrot.slane %v3198, %v3205
        %v3208 = vunpack.c.l.s4 1983009808
        %v3209 = vunpack.c.0.s8 %v3208
        %v3210 = vlaneseq
        %v3211 = vshrl.u32 %v3210, 7
        %v3212 = vsub.s32 %v3209, %v3211
        %v3213 = vrot.slane %v3199, %v3212
        %v3214 = vcombine.low %v3005, %v3013
        %v3215 = vcombine.high %v3005, %v3013
        %v3217 = vunpack.c.l.s4 1983009808
        %v3218 = vunpack.c.0.s8 %v3217
        %v3219 = vlaneseq
        %v3220 = vshrl.u32 %v3219, 7
        %v3221 = vsub.s32 %v3218, %v3220
        %v3222 = vrot.slane %v3214, %v3221
        %v3224 = vunpack.c.l.s4 1983009808
        %v3225 = vunpack.c.0.s8 %v3224
        %v3226 = vlaneseq
        %v3227 = vshrl.u32 %v3226, 7
        %v3228 = vsub.s32 %v3225, %v3227
        %v3229 = vrot.slane %v3215, %v3228
        %v3230 = vcombine.low %v3174, %v3190
        %v3231 = vcombine.high %v3174, %v3190
        %v3233 = vunpack.c.l.s4 1934713408
        %v3234 = vunpack.c.0.s8 %v3233
        %v3235 = vlaneseq
        %v3236 = vshrl.u32 %v3235, 7
        %v3237 = vsub.s32 %v3234, %v3236
        %v3238 = vrot.slane %v3230, %v3237
        %v3240 = vunpack.c.l.s4 1934713408
        %v3241 = vunpack.c.0.s8 %v3240
        %v3242 = vlaneseq
        %v3243 = vshrl.u32 %v3242, 7
        %v3244 = vsub.s32 %v3241, %v3243
        %v3245 = vrot.slane %v3231, %v3244
        %v3246 = vcombine.low %v3181, %v3197
        %v3247 = vcombine.high %v3181, %v3197
        %v3249 = vunpack.c.l.s4 1934713408
        %v3250 = vunpack.c.0.s8 %v3249
        %v3251 = vlaneseq
        %v3252 = vshrl.u32 %v3251, 7
        %v3253 = vsub.s32 %v3250, %v3252
        %v3254 = vrot.slane %v3246, %v3253
        %v3256 = vunpack.c.l.s4 1934713408
        %v3257 = vunpack.c.0.s8 %v3256
        %v3258 = vlaneseq
        %v3259 = vshrl.u32 %v3258, 7
        %v3260 = vsub.s32 %v3257, %v3259
        %v3261 = vrot.slane %v3247, %v3260
        %v3262 = vcombine.low %v3206, %v3222
        %v3263 = vcombine.high %v3206, %v3222
        %v3265 = vunpack.c.l.s4 1934713408
        %v3266 = vunpack.c.0.s8 %v3265
        %v3267 = vlaneseq
        %v3268 = vshrl.u32 %v3267, 7
        %v3269 = vsub.s32 %v3266, %v3268
        %v3270 = vrot.slane %v3262, %v3269
        %v3272 = vunpack.c.l.s4 1934713408
        %v3273 = vunpack.c.0.s8 %v3272
        %v3274 = vlaneseq
        %v3275 = vshrl.u32 %v3274, 7
        %v3276 = vsub.s32 %v3273, %v3275
        %v3277 = vrot.slane %v3263, %v3276
        %v3278 = vcombine.low %v3213, %v3229
        %v3279 = vcombine.high %v3213, %v3229
        %v3281 = vunpack.c.l.s4 1934713408
        %v3282 = vunpack.c.0.s8 %v3281
        %v3283 = vlaneseq
        %v3284 = vshrl.u32 %v3283, 7
        %v3285 = vsub.s32 %v3282, %v3284
        %v3286 = vrot.slane %v3278, %v3285
        %v3288 = vunpack.c.l.s4 1934713408
        %v3289 = vunpack.c.0.s8 %v3288
        %v3290 = vlaneseq
        %v3291 = vshrl.u32 %v3290, 7
        %v3292 = vsub.s32 %v3289, %v3291
        %v3293 = vrot.slane %v3279, %v3292
        %v3294 = vcombine.low %v3238, %v3270
        %v3295 = vcombine.high %v3238, %v3270
        %v3296 = vcombine.low %v3245, %v3277
        %v3297 = vcombine.high %v3245, %v3277
        %v3298 = vcombine.low %v3254, %v3286
        %v3299 = vcombine.high %v3254, %v3286
        %v3300 = vcombine.low %v3261, %v3293
        %v3301 = vcombine.high %v3261, %v3293
        %3303 = vrot.lane.b32.xlu0 %v3159, 16
        %v3304 = vpop.permute.xlu0 %3303
        %3307 = vrot.lane.b32.xlu0 %v3160, 32
        %v3308 = vpop.permute.xlu0 %3307
        %3311 = vrot.lane.b32.xlu0 %v3161, 48
        %v3312 = vpop.permute.xlu0 %3311
        %3315 = vrot.lane.b32.xlu0 %v3162, 64
        %v3316 = vpop.permute.xlu0 %3315
        %3319 = vrot.lane.b32.xlu0 %v3163, 80
        %v3320 = vpop.permute.xlu0 %3319
        %3323 = vrot.lane.b32.xlu0 %v3164, 96
        %v3324 = vpop.permute.xlu0 %3323
        %3327 = vrot.lane.b32.xlu0 %v3165, 112
        %v3328 = vpop.permute.xlu0 %3327
        %3331 = vrot.lane.b32.xlu0 %v3295, 16
        %v3332 = vpop.permute.xlu0 %3331
        %3335 = vrot.lane.b32.xlu0 %v3296, 32
        %v3336 = vpop.permute.xlu0 %3335
        %3339 = vrot.lane.b32.xlu0 %v3297, 48
        %v3340 = vpop.permute.xlu0 %3339
        %3343 = vrot.lane.b32.xlu0 %v3298, 64
        %v3344 = vpop.permute.xlu0 %3343
        %3347 = vrot.lane.b32.xlu0 %v3299, 80
        %v3348 = vpop.permute.xlu0 %3347
        %3351 = vrot.lane.b32.xlu0 %v3300, 96
        %v3352 = vpop.permute.xlu0 %3351
        %3355 = vrot.lane.b32.xlu0 %v3301, 112
        %v3356 = vpop.permute.xlu0 %3355
        %v3358 = vsel %vm1295, %v3158, %v3304
        %v3359 = vsel %vm1297, %v3358, %v3308
        %v3360 = vsel %vm1299, %v3359, %v3312
        %v3361 = vsel %vm1301, %v3360, %v3316
        %v3362 = vsel %vm1303, %v3361, %v3320
        %v3363 = vsel %vm1305, %v3362, %v3324
        %v3364 = vsel %vm1307, %v3363, %v3328
        %v3365 = vsel %vm1295, %v3294, %v3332
        %v3366 = vsel %vm1297, %v3365, %v3336
        %v3367 = vsel %vm1299, %v3366, %v3340
        %v3368 = vsel %vm1301, %v3367, %v3344
        %v3369 = vsel %vm1303, %v3368, %v3348
        %v3370 = vsel %vm1305, %v3369, %v3352
        %v3371 = vsel %vm1307, %v3370, %v3356
        %3372 = vst [vmem:[#allocation3 + $0x50] sm:$0xff] %v3364
        %3373 = vst [vmem:[#allocation3 + $0x58] sm:$0xff] %v3371
        %v3374 = vld [vmem:[#allocation2 + $0x2] sm:$0xff]
        %v3375 = vld [vmem:[#allocation2 + $0xa] sm:$0xff]
        %v3376 = vld [vmem:[#allocation2 + $0x1a] sm:$0xff]
        %v3377 = vld [vmem:[#allocation2 + $0x22] sm:$0xff]
        %v3378 = vld [vmem:[#allocation2 + $0x32] sm:$0xff]
        %v3379 = vld [vmem:[#allocation2 + $0x3a] sm:$0xff]
        %v3380 = vld [vmem:[#allocation2 + $0x4a] sm:$0xff]
        %v3381 = vld [vmem:[#allocation2 + $0x52] sm:$0xff]
        %v3382 = vld [vmem:[#allocation2 + $0x62] sm:$0xff]
        %v3383 = vld [vmem:[#allocation2 + $0x6a] sm:$0xff]
        %v3384 = vld [vmem:[#allocation2 + $0x7a] sm:$0xff]
        %v3385 = vld [vmem:[#allocation2 + $0x82] sm:$0xff]
        %v3386 = vld [vmem:[#allocation2 + $0x92] sm:$0xff]
        %v3387 = vld [vmem:[#allocation2 + $0x9a] sm:$0xff]
        %v3388 = vld [vmem:[#allocation2 + $0xaa] sm:$0xff]
        %v3389 = vld [vmem:[#allocation2 + $0xb2] sm:$0xff]
        %v3390 = vcombine.low %v3374, %v3378
        %v3391 = vcombine.high %v3374, %v3378
        %v3393 = vunpack.c.l.s4 1983009808
        %v3394 = vunpack.c.0.s8 %v3393
        %v3395 = vlaneseq
        %v3396 = vshrl.u32 %v3395, 7
        %v3397 = vsub.s32 %v3394, %v3396
        %v3398 = vrot.slane %v3390, %v3397
        %v3400 = vunpack.c.l.s4 1983009808
        %v3401 = vunpack.c.0.s8 %v3400
        %v3402 = vlaneseq
        %v3403 = vshrl.u32 %v3402, 7
        %v3404 = vsub.s32 %v3401, %v3403
        %v3405 = vrot.slane %v3391, %v3404
        %v3406 = vcombine.low %v3376, %v3380
        %v3407 = vcombine.high %v3376, %v3380
        %v3409 = vunpack.c.l.s4 1983009808
        %v3410 = vunpack.c.0.s8 %v3409
        %v3411 = vlaneseq
        %v3412 = vshrl.u32 %v3411, 7
        %v3413 = vsub.s32 %v3410, %v3412
        %v3414 = vrot.slane %v3406, %v3413
        %v3416 = vunpack.c.l.s4 1983009808
        %v3417 = vunpack.c.0.s8 %v3416
        %v3418 = vlaneseq
        %v3419 = vshrl.u32 %v3418, 7
        %v3420 = vsub.s32 %v3417, %v3419
        %v3421 = vrot.slane %v3407, %v3420
        %v3422 = vcombine.low %v3382, %v3386
        %v3423 = vcombine.high %v3382, %v3386
        %v3425 = vunpack.c.l.s4 1983009808
        %v3426 = vunpack.c.0.s8 %v3425
        %v3427 = vlaneseq
        %v3428 = vshrl.u32 %v3427, 7
        %v3429 = vsub.s32 %v3426, %v3428
        %v3430 = vrot.slane %v3422, %v3429
        %v3432 = vunpack.c.l.s4 1983009808
        %v3433 = vunpack.c.0.s8 %v3432
        %v3434 = vlaneseq
        %v3435 = vshrl.u32 %v3434, 7
        %v3436 = vsub.s32 %v3433, %v3435
        %v3437 = vrot.slane %v3423, %v3436
        %v3438 = vcombine.low %v3384, %v3388
        %v3439 = vcombine.high %v3384, %v3388
        %v3441 = vunpack.c.l.s4 1983009808
        %v3442 = vunpack.c.0.s8 %v3441
        %v3443 = vlaneseq
        %v3444 = vshrl.u32 %v3443, 7
        %v3445 = vsub.s32 %v3442, %v3444
        %v3446 = vrot.slane %v3438, %v3445
        %v3448 = vunpack.c.l.s4 1983009808
        %v3449 = vunpack.c.0.s8 %v3448
        %v3450 = vlaneseq
        %v3451 = vshrl.u32 %v3450, 7
        %v3452 = vsub.s32 %v3449, %v3451
        %v3453 = vrot.slane %v3439, %v3452
        %v3454 = vcombine.low %v3398, %v3414
        %v3455 = vcombine.high %v3398, %v3414
        %v3457 = vunpack.c.l.s4 1934713408
        %v3458 = vunpack.c.0.s8 %v3457
        %v3459 = vlaneseq
        %v3460 = vshrl.u32 %v3459, 7
        %v3461 = vsub.s32 %v3458, %v3460
        %v3462 = vrot.slane %v3454, %v3461
        %v3464 = vunpack.c.l.s4 1934713408
        %v3465 = vunpack.c.0.s8 %v3464
        %v3466 = vlaneseq
        %v3467 = vshrl.u32 %v3466, 7
        %v3468 = vsub.s32 %v3465, %v3467
        %v3469 = vrot.slane %v3455, %v3468
        %v3470 = vcombine.low %v3405, %v3421
        %v3471 = vcombine.high %v3405, %v3421
        %v3473 = vunpack.c.l.s4 1934713408
        %v3474 = vunpack.c.0.s8 %v3473
        %v3475 = vlaneseq
        %v3476 = vshrl.u32 %v3475, 7
        %v3477 = vsub.s32 %v3474, %v3476
        %v3478 = vrot.slane %v3470, %v3477
        %v3480 = vunpack.c.l.s4 1934713408
        %v3481 = vunpack.c.0.s8 %v3480
        %v3482 = vlaneseq
        %v3483 = vshrl.u32 %v3482, 7
        %v3484 = vsub.s32 %v3481, %v3483
        %v3485 = vrot.slane %v3471, %v3484
        %v3486 = vcombine.low %v3430, %v3446
        %v3487 = vcombine.high %v3430, %v3446
        %v3489 = vunpack.c.l.s4 1934713408
        %v3490 = vunpack.c.0.s8 %v3489
        %v3491 = vlaneseq
        %v3492 = vshrl.u32 %v3491, 7
        %v3493 = vsub.s32 %v3490, %v3492
        %v3494 = vrot.slane %v3486, %v3493
        %v3496 = vunpack.c.l.s4 1934713408
        %v3497 = vunpack.c.0.s8 %v3496
        %v3498 = vlaneseq
        %v3499 = vshrl.u32 %v3498, 7
        %v3500 = vsub.s32 %v3497, %v3499
        %v3501 = vrot.slane %v3487, %v3500
        %v3502 = vcombine.low %v3437, %v3453
        %v3503 = vcombine.high %v3437, %v3453
        %v3505 = vunpack.c.l.s4 1934713408
        %v3506 = vunpack.c.0.s8 %v3505
        %v3507 = vlaneseq
        %v3508 = vshrl.u32 %v3507, 7
        %v3509 = vsub.s32 %v3506, %v3508
        %v3510 = vrot.slane %v3502, %v3509
        %v3512 = vunpack.c.l.s4 1934713408
        %v3513 = vunpack.c.0.s8 %v3512
        %v3514 = vlaneseq
        %v3515 = vshrl.u32 %v3514, 7
        %v3516 = vsub.s32 %v3513, %v3515
        %v3517 = vrot.slane %v3503, %v3516
        %v3518 = vcombine.low %v3462, %v3494
        %v3519 = vcombine.high %v3462, %v3494
        %v3520 = vcombine.low %v3469, %v3501
        %v3521 = vcombine.high %v3469, %v3501
        %v3522 = vcombine.low %v3478, %v3510
        %v3523 = vcombine.high %v3478, %v3510
        %v3524 = vcombine.low %v3485, %v3517
        %v3525 = vcombine.high %v3485, %v3517
        %v3526 = vcombine.low %v3375, %v3379
        %v3527 = vcombine.high %v3375, %v3379
        %v3529 = vunpack.c.l.s4 1983009808
        %v3530 = vunpack.c.0.s8 %v3529
        %v3531 = vlaneseq
        %v3532 = vshrl.u32 %v3531, 7
        %v3533 = vsub.s32 %v3530, %v3532
        %v3534 = vrot.slane %v3526, %v3533
        %v3536 = vunpack.c.l.s4 1983009808
        %v3537 = vunpack.c.0.s8 %v3536
        %v3538 = vlaneseq
        %v3539 = vshrl.u32 %v3538, 7
        %v3540 = vsub.s32 %v3537, %v3539
        %v3541 = vrot.slane %v3527, %v3540
        %v3542 = vcombine.low %v3377, %v3381
        %v3543 = vcombine.high %v3377, %v3381
        %v3545 = vunpack.c.l.s4 1983009808
        %v3546 = vunpack.c.0.s8 %v3545
        %v3547 = vlaneseq
        %v3548 = vshrl.u32 %v3547, 7
        %v3549 = vsub.s32 %v3546, %v3548
        %v3550 = vrot.slane %v3542, %v3549
        %v3552 = vunpack.c.l.s4 1983009808
        %v3553 = vunpack.c.0.s8 %v3552
        %v3554 = vlaneseq
        %v3555 = vshrl.u32 %v3554, 7
        %v3556 = vsub.s32 %v3553, %v3555
        %v3557 = vrot.slane %v3543, %v3556
        %v3558 = vcombine.low %v3383, %v3387
        %v3559 = vcombine.high %v3383, %v3387
        %v3561 = vunpack.c.l.s4 1983009808
        %v3562 = vunpack.c.0.s8 %v3561
        %v3563 = vlaneseq
        %v3564 = vshrl.u32 %v3563, 7
        %v3565 = vsub.s32 %v3562, %v3564
        %v3566 = vrot.slane %v3558, %v3565
        %v3568 = vunpack.c.l.s4 1983009808
        %v3569 = vunpack.c.0.s8 %v3568
        %v3570 = vlaneseq
        %v3571 = vshrl.u32 %v3570, 7
        %v3572 = vsub.s32 %v3569, %v3571
        %v3573 = vrot.slane %v3559, %v3572
        %v3574 = vcombine.low %v3385, %v3389
        %v3575 = vcombine.high %v3385, %v3389
        %v3577 = vunpack.c.l.s4 1983009808
        %v3578 = vunpack.c.0.s8 %v3577
        %v3579 = vlaneseq
        %v3580 = vshrl.u32 %v3579, 7
        %v3581 = vsub.s32 %v3578, %v3580
        %v3582 = vrot.slane %v3574, %v3581
        %v3584 = vunpack.c.l.s4 1983009808
        %v3585 = vunpack.c.0.s8 %v3584
        %v3586 = vlaneseq
        %v3587 = vshrl.u32 %v3586, 7
        %v3588 = vsub.s32 %v3585, %v3587
        %v3589 = vrot.slane %v3575, %v3588
        %v3590 = vcombine.low %v3534, %v3550
        %v3591 = vcombine.high %v3534, %v3550
        %v3593 = vunpack.c.l.s4 1934713408
        %v3594 = vunpack.c.0.s8 %v3593
        %v3595 = vlaneseq
        %v3596 = vshrl.u32 %v3595, 7
        %v3597 = vsub.s32 %v3594, %v3596
        %v3598 = vrot.slane %v3590, %v3597
        %v3600 = vunpack.c.l.s4 1934713408
        %v3601 = vunpack.c.0.s8 %v3600
        %v3602 = vlaneseq
        %v3603 = vshrl.u32 %v3602, 7
        %v3604 = vsub.s32 %v3601, %v3603
        %v3605 = vrot.slane %v3591, %v3604
        %v3606 = vcombine.low %v3541, %v3557
        %v3607 = vcombine.high %v3541, %v3557
        %v3609 = vunpack.c.l.s4 1934713408
        %v3610 = vunpack.c.0.s8 %v3609
        %v3611 = vlaneseq
        %v3612 = vshrl.u32 %v3611, 7
        %v3613 = vsub.s32 %v3610, %v3612
        %v3614 = vrot.slane %v3606, %v3613
        %v3616 = vunpack.c.l.s4 1934713408
        %v3617 = vunpack.c.0.s8 %v3616
        %v3618 = vlaneseq
        %v3619 = vshrl.u32 %v3618, 7
        %v3620 = vsub.s32 %v3617, %v3619
        %v3621 = vrot.slane %v3607, %v3620
        %v3622 = vcombine.low %v3566, %v3582
        %v3623 = vcombine.high %v3566, %v3582
        %v3625 = vunpack.c.l.s4 1934713408
        %v3626 = vunpack.c.0.s8 %v3625
        %v3627 = vlaneseq
        %v3628 = vshrl.u32 %v3627, 7
        %v3629 = vsub.s32 %v3626, %v3628
        %v3630 = vrot.slane %v3622, %v3629
        %v3632 = vunpack.c.l.s4 1934713408
        %v3633 = vunpack.c.0.s8 %v3632
        %v3634 = vlaneseq
        %v3635 = vshrl.u32 %v3634, 7
        %v3636 = vsub.s32 %v3633, %v3635
        %v3637 = vrot.slane %v3623, %v3636
        %v3638 = vcombine.low %v3573, %v3589
        %v3639 = vcombine.high %v3573, %v3589
        %v3641 = vunpack.c.l.s4 1934713408
        %v3642 = vunpack.c.0.s8 %v3641
        %v3643 = vlaneseq
        %v3644 = vshrl.u32 %v3643, 7
        %v3645 = vsub.s32 %v3642, %v3644
        %v3646 = vrot.slane %v3638, %v3645
        %v3648 = vunpack.c.l.s4 1934713408
        %v3649 = vunpack.c.0.s8 %v3648
        %v3650 = vlaneseq
        %v3651 = vshrl.u32 %v3650, 7
        %v3652 = vsub.s32 %v3649, %v3651
        %v3653 = vrot.slane %v3639, %v3652
        %v3654 = vcombine.low %v3598, %v3630
        %v3655 = vcombine.high %v3598, %v3630
        %v3656 = vcombine.low %v3605, %v3637
        %v3657 = vcombine.high %v3605, %v3637
        %v3658 = vcombine.low %v3614, %v3646
        %v3659 = vcombine.high %v3614, %v3646
        %v3660 = vcombine.low %v3621, %v3653
        %v3661 = vcombine.high %v3621, %v3653
        %3663 = vrot.lane.b32.xlu0 %v3519, 16
        %v3664 = vpop.permute.xlu0 %3663
        %3667 = vrot.lane.b32.xlu0 %v3520, 32
        %v3668 = vpop.permute.xlu0 %3667
        %3671 = vrot.lane.b32.xlu0 %v3521, 48
        %v3672 = vpop.permute.xlu0 %3671
        %3675 = vrot.lane.b32.xlu0 %v3522, 64
        %v3676 = vpop.permute.xlu0 %3675
        %3679 = vrot.lane.b32.xlu0 %v3523, 80
        %v3680 = vpop.permute.xlu0 %3679
        %3683 = vrot.lane.b32.xlu0 %v3524, 96
        %v3684 = vpop.permute.xlu0 %3683
        %3687 = vrot.lane.b32.xlu0 %v3525, 112
        %v3688 = vpop.permute.xlu0 %3687
        %3691 = vrot.lane.b32.xlu0 %v3655, 16
        %v3692 = vpop.permute.xlu0 %3691
        %3695 = vrot.lane.b32.xlu0 %v3656, 32
        %v3696 = vpop.permute.xlu0 %3695
        %3699 = vrot.lane.b32.xlu0 %v3657, 48
        %v3700 = vpop.permute.xlu0 %3699
        %3703 = vrot.lane.b32.xlu0 %v3658, 64
        %v3704 = vpop.permute.xlu0 %3703
        %3707 = vrot.lane.b32.xlu0 %v3659, 80
        %v3708 = vpop.permute.xlu0 %3707
        %3711 = vrot.lane.b32.xlu0 %v3660, 96
        %v3712 = vpop.permute.xlu0 %3711
        %3715 = vrot.lane.b32.xlu0 %v3661, 112
        %v3716 = vpop.permute.xlu0 %3715
        %v3718 = vsel %vm1295, %v3518, %v3664
        %v3719 = vsel %vm1297, %v3718, %v3668
        %v3720 = vsel %vm1299, %v3719, %v3672
        %v3721 = vsel %vm1301, %v3720, %v3676
        %v3722 = vsel %vm1303, %v3721, %v3680
        %v3723 = vsel %vm1305, %v3722, %v3684
        %v3724 = vsel %vm1307, %v3723, %v3688
        %v3725 = vsel %vm1295, %v3654, %v3692
        %v3726 = vsel %vm1297, %v3725, %v3696
        %v3727 = vsel %vm1299, %v3726, %v3700
        %v3728 = vsel %vm1301, %v3727, %v3704
        %v3729 = vsel %vm1303, %v3728, %v3708
        %v3730 = vsel %vm1305, %v3729, %v3712
        %v3731 = vsel %vm1307, %v3730, %v3716
        %3732 = vst [vmem:[#allocation3 + $0x60] sm:$0xff] %v3724
        %3733 = vst [vmem:[#allocation3 + $0x68] sm:$0xff] %v3731
        %v3734 = vld [vmem:[#allocation2 + $0x2] sm:$0xff]
        %v3735 = vld [vmem:[#allocation2 + $0xa] sm:$0xff]
        %v3736 = vld [vmem:[#allocation2 + $0x1a] sm:$0xff]
        %v3737 = vld [vmem:[#allocation2 + $0x22] sm:$0xff]
        %v3738 = vld [vmem:[#allocation2 + $0x32] sm:$0xff]
        %v3739 = vld [vmem:[#allocation2 + $0x3a] sm:$0xff]
        %v3740 = vld [vmem:[#allocation2 + $0x4a] sm:$0xff]
        %v3741 = vld [vmem:[#allocation2 + $0x52] sm:$0xff]
        %v3742 = vld [vmem:[#allocation2 + $0x62] sm:$0xff]
        %v3743 = vld [vmem:[#allocation2 + $0x6a] sm:$0xff]
        %v3744 = vld [vmem:[#allocation2 + $0x7a] sm:$0xff]
        %v3745 = vld [vmem:[#allocation2 + $0x82] sm:$0xff]
        %v3746 = vld [vmem:[#allocation2 + $0x92] sm:$0xff]
        %v3747 = vld [vmem:[#allocation2 + $0x9a] sm:$0xff]
        %v3748 = vld [vmem:[#allocation2 + $0xaa] sm:$0xff]
        %v3749 = vld [vmem:[#allocation2 + $0xb2] sm:$0xff]
        %3766 = vrot.lane.b32.xlu0 %v3734, 127
        %v3767 = vpop.permute.xlu0 %3766
        %3768 = vrot.lane.b32.xlu0 %v3735, 127
        %v3769 = vpop.permute.xlu0 %3768
        %3770 = vrot.lane.b32.xlu0 %v3736, 127
        %v3771 = vpop.permute.xlu0 %3770
        %3772 = vrot.lane.b32.xlu0 %v3737, 127
        %v3773 = vpop.permute.xlu0 %3772
        %3774 = vrot.lane.b32.xlu0 %v3738, 127
        %v3775 = vpop.permute.xlu0 %3774
        %3776 = vrot.lane.b32.xlu0 %v3739, 127
        %v3777 = vpop.permute.xlu0 %3776
        %3778 = vrot.lane.b32.xlu0 %v3740, 127
        %v3779 = vpop.permute.xlu0 %3778
        %3780 = vrot.lane.b32.xlu0 %v3741, 127
        %v3781 = vpop.permute.xlu0 %3780
        %3782 = vrot.lane.b32.xlu0 %v3742, 127
        %v3783 = vpop.permute.xlu0 %3782
        %3784 = vrot.lane.b32.xlu0 %v3743, 127
        %v3785 = vpop.permute.xlu0 %3784
        %3786 = vrot.lane.b32.xlu0 %v3744, 127
        %v3787 = vpop.permute.xlu0 %3786
        %3788 = vrot.lane.b32.xlu0 %v3745, 127
        %v3789 = vpop.permute.xlu0 %3788
        %3790 = vrot.lane.b32.xlu0 %v3746, 127
        %v3791 = vpop.permute.xlu0 %3790
        %3792 = vrot.lane.b32.xlu0 %v3747, 127
        %v3793 = vpop.permute.xlu0 %3792
        %3794 = vrot.lane.b32.xlu0 %v3748, 127
        %v3795 = vpop.permute.xlu0 %3794
        %3796 = vrot.lane.b32.xlu0 %v3749, 127
        %v3797 = vpop.permute.xlu0 %3796
        %v3814 = vcombine.low %v3767, %v3775
        %v3815 = vcombine.high %v3767, %v3775
        %v3817 = vunpack.c.l.s4 1983009808
        %v3818 = vunpack.c.0.s8 %v3817
        %v3819 = vlaneseq
        %v3820 = vshrl.u32 %v3819, 7
        %v3821 = vsub.s32 %v3818, %v3820
        %v3822 = vrot.slane %v3814, %v3821
        %v3824 = vunpack.c.l.s4 1983009808
        %v3825 = vunpack.c.0.s8 %v3824
        %v3826 = vlaneseq
        %v3827 = vshrl.u32 %v3826, 7
        %v3828 = vsub.s32 %v3825, %v3827
        %v3829 = vrot.slane %v3815, %v3828
        %v3830 = vcombine.low %v3771, %v3779
        %v3831 = vcombine.high %v3771, %v3779
        %v3833 = vunpack.c.l.s4 1983009808
        %v3834 = vunpack.c.0.s8 %v3833
        %v3835 = vlaneseq
        %v3836 = vshrl.u32 %v3835, 7
        %v3837 = vsub.s32 %v3834, %v3836
        %v3838 = vrot.slane %v3830, %v3837
        %v3840 = vunpack.c.l.s4 1983009808
        %v3841 = vunpack.c.0.s8 %v3840
        %v3842 = vlaneseq
        %v3843 = vshrl.u32 %v3842, 7
        %v3844 = vsub.s32 %v3841, %v3843
        %v3845 = vrot.slane %v3831, %v3844
        %v3846 = vcombine.low %v3783, %v3791
        %v3847 = vcombine.high %v3783, %v3791
        %v3849 = vunpack.c.l.s4 1983009808
        %v3850 = vunpack.c.0.s8 %v3849
        %v3851 = vlaneseq
        %v3852 = vshrl.u32 %v3851, 7
        %v3853 = vsub.s32 %v3850, %v3852
        %v3854 = vrot.slane %v3846, %v3853
        %v3856 = vunpack.c.l.s4 1983009808
        %v3857 = vunpack.c.0.s8 %v3856
        %v3858 = vlaneseq
        %v3859 = vshrl.u32 %v3858, 7
        %v3860 = vsub.s32 %v3857, %v3859
        %v3861 = vrot.slane %v3847, %v3860
        %v3862 = vcombine.low %v3787, %v3795
        %v3863 = vcombine.high %v3787, %v3795
        %v3865 = vunpack.c.l.s4 1983009808
        %v3866 = vunpack.c.0.s8 %v3865
        %v3867 = vlaneseq
        %v3868 = vshrl.u32 %v3867, 7
        %v3869 = vsub.s32 %v3866, %v3868
        %v3870 = vrot.slane %v3862, %v3869
        %v3872 = vunpack.c.l.s4 1983009808
        %v3873 = vunpack.c.0.s8 %v3872
        %v3874 = vlaneseq
        %v3875 = vshrl.u32 %v3874, 7
        %v3876 = vsub.s32 %v3873, %v3875
        %v3877 = vrot.slane %v3863, %v3876
        %v3878 = vcombine.low %v3822, %v3838
        %v3879 = vcombine.high %v3822, %v3838
        %v3881 = vunpack.c.l.s4 1934713408
        %v3882 = vunpack.c.0.s8 %v3881
        %v3883 = vlaneseq
        %v3884 = vshrl.u32 %v3883, 7
        %v3885 = vsub.s32 %v3882, %v3884
        %v3886 = vrot.slane %v3878, %v3885
        %v3888 = vunpack.c.l.s4 1934713408
        %v3889 = vunpack.c.0.s8 %v3888
        %v3890 = vlaneseq
        %v3891 = vshrl.u32 %v3890, 7
        %v3892 = vsub.s32 %v3889, %v3891
        %v3893 = vrot.slane %v3879, %v3892
        %v3894 = vcombine.low %v3829, %v3845
        %v3895 = vcombine.high %v3829, %v3845
        %v3897 = vunpack.c.l.s4 1934713408
        %v3898 = vunpack.c.0.s8 %v3897
        %v3899 = vlaneseq
        %v3900 = vshrl.u32 %v3899, 7
        %v3901 = vsub.s32 %v3898, %v3900
        %v3902 = vrot.slane %v3894, %v3901
        %v3904 = vunpack.c.l.s4 1934713408
        %v3905 = vunpack.c.0.s8 %v3904
        %v3906 = vlaneseq
        %v3907 = vshrl.u32 %v3906, 7
        %v3908 = vsub.s32 %v3905, %v3907
        %v3909 = vrot.slane %v3895, %v3908
        %v3910 = vcombine.low %v3854, %v3870
        %v3911 = vcombine.high %v3854, %v3870
        %v3913 = vunpack.c.l.s4 1934713408
        %v3914 = vunpack.c.0.s8 %v3913
        %v3915 = vlaneseq
        %v3916 = vshrl.u32 %v3915, 7
        %v3917 = vsub.s32 %v3914, %v3916
        %v3918 = vrot.slane %v3910, %v3917
        %v3920 = vunpack.c.l.s4 1934713408
        %v3921 = vunpack.c.0.s8 %v3920
        %v3922 = vlaneseq
        %v3923 = vshrl.u32 %v3922, 7
        %v3924 = vsub.s32 %v3921, %v3923
        %v3925 = vrot.slane %v3911, %v3924
        %v3926 = vcombine.low %v3861, %v3877
        %v3927 = vcombine.high %v3861, %v3877
        %v3929 = vunpack.c.l.s4 1934713408
        %v3930 = vunpack.c.0.s8 %v3929
        %v3931 = vlaneseq
        %v3932 = vshrl.u32 %v3931, 7
        %v3933 = vsub.s32 %v3930, %v3932
        %v3934 = vrot.slane %v3926, %v3933
        %v3936 = vunpack.c.l.s4 1934713408
        %v3937 = vunpack.c.0.s8 %v3936
        %v3938 = vlaneseq
        %v3939 = vshrl.u32 %v3938, 7
        %v3940 = vsub.s32 %v3937, %v3939
        %v3941 = vrot.slane %v3927, %v3940
        %v3942 = vcombine.low %v3886, %v3918
        %v3943 = vcombine.high %v3886, %v3918
        %v3944 = vcombine.low %v3893, %v3925
        %v3945 = vcombine.high %v3893, %v3925
        %v3946 = vcombine.low %v3902, %v3934
        %v3947 = vcombine.high %v3902, %v3934
        %v3948 = vcombine.low %v3909, %v3941
        %v3949 = vcombine.high %v3909, %v3941
        %v3950 = vcombine.low %v3769, %v3777
        %v3951 = vcombine.high %v3769, %v3777
        %v3953 = vunpack.c.l.s4 1983009808
        %v3954 = vunpack.c.0.s8 %v3953
        %v3955 = vlaneseq
        %v3956 = vshrl.u32 %v3955, 7
        %v3957 = vsub.s32 %v3954, %v3956
        %v3958 = vrot.slane %v3950, %v3957
        %v3960 = vunpack.c.l.s4 1983009808
        %v3961 = vunpack.c.0.s8 %v3960
        %v3962 = vlaneseq
        %v3963 = vshrl.u32 %v3962, 7
        %v3964 = vsub.s32 %v3961, %v3963
        %v3965 = vrot.slane %v3951, %v3964
        %v3966 = vcombine.low %v3773, %v3781
        %v3967 = vcombine.high %v3773, %v3781
        %v3969 = vunpack.c.l.s4 1983009808
        %v3970 = vunpack.c.0.s8 %v3969
        %v3971 = vlaneseq
        %v3972 = vshrl.u32 %v3971, 7
        %v3973 = vsub.s32 %v3970, %v3972
        %v3974 = vrot.slane %v3966, %v3973
        %v3976 = vunpack.c.l.s4 1983009808
        %v3977 = vunpack.c.0.s8 %v3976
        %v3978 = vlaneseq
        %v3979 = vshrl.u32 %v3978, 7
        %v3980 = vsub.s32 %v3977, %v3979
        %v3981 = vrot.slane %v3967, %v3980
        %v3982 = vcombine.low %v3785, %v3793
        %v3983 = vcombine.high %v3785, %v3793
        %v3985 = vunpack.c.l.s4 1983009808
        %v3986 = vunpack.c.0.s8 %v3985
        %v3987 = vlaneseq
        %v3988 = vshrl.u32 %v3987, 7
        %v3989 = vsub.s32 %v3986, %v3988
        %v3990 = vrot.slane %v3982, %v3989
        %v3992 = vunpack.c.l.s4 1983009808
        %v3993 = vunpack.c.0.s8 %v3992
        %v3994 = vlaneseq
        %v3995 = vshrl.u32 %v3994, 7
        %v3996 = vsub.s32 %v3993, %v3995
        %v3997 = vrot.slane %v3983, %v3996
        %v3998 = vcombine.low %v3789, %v3797
        %v3999 = vcombine.high %v3789, %v3797
        %v4001 = vunpack.c.l.s4 1983009808
        %v4002 = vunpack.c.0.s8 %v4001
        %v4003 = vlaneseq
        %v4004 = vshrl.u32 %v4003, 7
        %v4005 = vsub.s32 %v4002, %v4004
        %v4006 = vrot.slane %v3998, %v4005
        %v4008 = vunpack.c.l.s4 1983009808
        %v4009 = vunpack.c.0.s8 %v4008
        %v4010 = vlaneseq
        %v4011 = vshrl.u32 %v4010, 7
        %v4012 = vsub.s32 %v4009, %v4011
        %v4013 = vrot.slane %v3999, %v4012
        %v4014 = vcombine.low %v3958, %v3974
        %v4015 = vcombine.high %v3958, %v3974
        %v4017 = vunpack.c.l.s4 1934713408
        %v4018 = vunpack.c.0.s8 %v4017
        %v4019 = vlaneseq
        %v4020 = vshrl.u32 %v4019, 7
        %v4021 = vsub.s32 %v4018, %v4020
        %v4022 = vrot.slane %v4014, %v4021
        %v4024 = vunpack.c.l.s4 1934713408
        %v4025 = vunpack.c.0.s8 %v4024
        %v4026 = vlaneseq
        %v4027 = vshrl.u32 %v4026, 7
        %v4028 = vsub.s32 %v4025, %v4027
        %v4029 = vrot.slane %v4015, %v4028
        %v4030 = vcombine.low %v3965, %v3981
        %v4031 = vcombine.high %v3965, %v3981
        %v4033 = vunpack.c.l.s4 1934713408
        %v4034 = vunpack.c.0.s8 %v4033
        %v4035 = vlaneseq
        %v4036 = vshrl.u32 %v4035, 7
        %v4037 = vsub.s32 %v4034, %v4036
        %v4038 = vrot.slane %v4030, %v4037
        %v4040 = vunpack.c.l.s4 1934713408
        %v4041 = vunpack.c.0.s8 %v4040
        %v4042 = vlaneseq
        %v4043 = vshrl.u32 %v4042, 7
        %v4044 = vsub.s32 %v4041, %v4043
        %v4045 = vrot.slane %v4031, %v4044
        %v4046 = vcombine.low %v3990, %v4006
        %v4047 = vcombine.high %v3990, %v4006
        %v4049 = vunpack.c.l.s4 1934713408
        %v4050 = vunpack.c.0.s8 %v4049
        %v4051 = vlaneseq
        %v4052 = vshrl.u32 %v4051, 7
        %v4053 = vsub.s32 %v4050, %v4052
        %v4054 = vrot.slane %v4046, %v4053
        %v4056 = vunpack.c.l.s4 1934713408
        %v4057 = vunpack.c.0.s8 %v4056
        %v4058 = vlaneseq
        %v4059 = vshrl.u32 %v4058, 7
        %v4060 = vsub.s32 %v4057, %v4059
        %v4061 = vrot.slane %v4047, %v4060
        %v4062 = vcombine.low %v3997, %v4013
        %v4063 = vcombine.high %v3997, %v4013
        %v4065 = vunpack.c.l.s4 1934713408
        %v4066 = vunpack.c.0.s8 %v4065
        %v4067 = vlaneseq
        %v4068 = vshrl.u32 %v4067, 7
        %v4069 = vsub.s32 %v4066, %v4068
        %v4070 = vrot.slane %v4062, %v4069
        %v4072 = vunpack.c.l.s4 1934713408
        %v4073 = vunpack.c.0.s8 %v4072
        %v4074 = vlaneseq
        %v4075 = vshrl.u32 %v4074, 7
        %v4076 = vsub.s32 %v4073, %v4075
        %v4077 = vrot.slane %v4063, %v4076
        %v4078 = vcombine.low %v4022, %v4054
        %v4079 = vcombine.high %v4022, %v4054
        %v4080 = vcombine.low %v4029, %v4061
        %v4081 = vcombine.high %v4029, %v4061
        %v4082 = vcombine.low %v4038, %v4070
        %v4083 = vcombine.high %v4038, %v4070
        %v4084 = vcombine.low %v4045, %v4077
        %v4085 = vcombine.high %v4045, %v4077
        %4087 = vrot.lane.b32.xlu0 %v3943, 16
        %v4088 = vpop.permute.xlu0 %4087
        %4091 = vrot.lane.b32.xlu0 %v3944, 32
        %v4092 = vpop.permute.xlu0 %4091
        %4095 = vrot.lane.b32.xlu0 %v3945, 48
        %v4096 = vpop.permute.xlu0 %4095
        %4099 = vrot.lane.b32.xlu0 %v3946, 64
        %v4100 = vpop.permute.xlu0 %4099
        %4103 = vrot.lane.b32.xlu0 %v3947, 80
        %v4104 = vpop.permute.xlu0 %4103
        %4107 = vrot.lane.b32.xlu0 %v3948, 96
        %v4108 = vpop.permute.xlu0 %4107
        %4111 = vrot.lane.b32.xlu0 %v3949, 112
        %v4112 = vpop.permute.xlu0 %4111
        %4115 = vrot.lane.b32.xlu0 %v4079, 16
        %v4116 = vpop.permute.xlu0 %4115
        %4119 = vrot.lane.b32.xlu0 %v4080, 32
        %v4120 = vpop.permute.xlu0 %4119
        %4123 = vrot.lane.b32.xlu0 %v4081, 48
        %v4124 = vpop.permute.xlu0 %4123
        %4127 = vrot.lane.b32.xlu0 %v4082, 64
        %v4128 = vpop.permute.xlu0 %4127
        %4131 = vrot.lane.b32.xlu0 %v4083, 80
        %v4132 = vpop.permute.xlu0 %4131
        %4135 = vrot.lane.b32.xlu0 %v4084, 96
        %v4136 = vpop.permute.xlu0 %4135
        %4139 = vrot.lane.b32.xlu0 %v4085, 112
        %v4140 = vpop.permute.xlu0 %4139
        %v4142 = vsel %vm1295, %v3942, %v4088
        %v4143 = vsel %vm1297, %v4142, %v4092
        %v4144 = vsel %vm1299, %v4143, %v4096
        %v4145 = vsel %vm1301, %v4144, %v4100
        %v4146 = vsel %vm1303, %v4145, %v4104
        %v4147 = vsel %vm1305, %v4146, %v4108
        %v4148 = vsel %vm1307, %v4147, %v4112
        %v4149 = vsel %vm1295, %v4078, %v4116
        %v4150 = vsel %vm1297, %v4149, %v4120
        %v4151 = vsel %vm1299, %v4150, %v4124
        %v4152 = vsel %vm1301, %v4151, %v4128
        %v4153 = vsel %vm1303, %v4152, %v4132
        %v4154 = vsel %vm1305, %v4153, %v4136
        %v4155 = vsel %vm1307, %v4154, %v4140
        %4156 = vst [vmem:[#allocation3 + $0x70] sm:$0xff] %v4148
        %4157 = vst [vmem:[#allocation3 + $0x78] sm:$0xff] %v4155
        %v4158 = vld [vmem:[#allocation2 + $0x2] sm:$0xff]
        %v4159 = vld [vmem:[#allocation2 + $0xa] sm:$0xff]
        %v4160 = vld [vmem:[#allocation2 + $0x1a] sm:$0xff]
        %v4161 = vld [vmem:[#allocation2 + $0x22] sm:$0xff]
        %v4162 = vld [vmem:[#allocation2 + $0x32] sm:$0xff]
        %v4163 = vld [vmem:[#allocation2 + $0x3a] sm:$0xff]
        %v4164 = vld [vmem:[#allocation2 + $0x4a] sm:$0xff]
        %v4165 = vld [vmem:[#allocation2 + $0x52] sm:$0xff]
        %v4166 = vld [vmem:[#allocation2 + $0x62] sm:$0xff]
        %v4167 = vld [vmem:[#allocation2 + $0x6a] sm:$0xff]
        %v4168 = vld [vmem:[#allocation2 + $0x7a] sm:$0xff]
        %v4169 = vld [vmem:[#allocation2 + $0x82] sm:$0xff]
        %v4170 = vld [vmem:[#allocation2 + $0x92] sm:$0xff]
        %v4171 = vld [vmem:[#allocation2 + $0x9a] sm:$0xff]
        %v4172 = vld [vmem:[#allocation2 + $0xaa] sm:$0xff]
        %v4173 = vld [vmem:[#allocation2 + $0xb2] sm:$0xff]
        %4190 = vrot.lane.b32.xlu0 %v4158, 126
        %v4191 = vpop.permute.xlu0 %4190
        %4192 = vrot.lane.b32.xlu0 %v4159, 126
        %v4193 = vpop.permute.xlu0 %4192
        %4194 = vrot.lane.b32.xlu0 %v4160, 126
        %v4195 = vpop.permute.xlu0 %4194
        %4196 = vrot.lane.b32.xlu0 %v4161, 126
        %v4197 = vpop.permute.xlu0 %4196
        %4198 = vrot.lane.b32.xlu0 %v4162, 126
        %v4199 = vpop.permute.xlu0 %4198
        %4200 = vrot.lane.b32.xlu0 %v4163, 126
        %v4201 = vpop.permute.xlu0 %4200
        %4202 = vrot.lane.b32.xlu0 %v4164, 126
        %v4203 = vpop.permute.xlu0 %4202
        %4204 = vrot.lane.b32.xlu0 %v4165, 126
        %v4205 = vpop.permute.xlu0 %4204
        %4206 = vrot.lane.b32.xlu0 %v4166, 126
        %v4207 = vpop.permute.xlu0 %4206
        %4208 = vrot.lane.b32.xlu0 %v4167, 126
        %v4209 = vpop.permute.xlu0 %4208
        %4210 = vrot.lane.b32.xlu0 %v4168, 126
        %v4211 = vpop.permute.xlu0 %4210
        %4212 = vrot.lane.b32.xlu0 %v4169, 126
        %v4213 = vpop.permute.xlu0 %4212
        %4214 = vrot.lane.b32.xlu0 %v4170, 126
        %v4215 = vpop.permute.xlu0 %4214
        %4216 = vrot.lane.b32.xlu0 %v4171, 126
        %v4217 = vpop.permute.xlu0 %4216
        %4218 = vrot.lane.b32.xlu0 %v4172, 126
        %v4219 = vpop.permute.xlu0 %4218
        %4220 = vrot.lane.b32.xlu0 %v4173, 126
        %v4221 = vpop.permute.xlu0 %4220
        %v4238 = vcombine.low %v4191, %v4199
        %v4239 = vcombine.high %v4191, %v4199
        %v4241 = vunpack.c.l.s4 1983009808
        %v4242 = vunpack.c.0.s8 %v4241
        %v4243 = vlaneseq
        %v4244 = vshrl.u32 %v4243, 7
        %v4245 = vsub.s32 %v4242, %v4244
        %v4246 = vrot.slane %v4238, %v4245
        %v4248 = vunpack.c.l.s4 1983009808
        %v4249 = vunpack.c.0.s8 %v4248
        %v4250 = vlaneseq
        %v4251 = vshrl.u32 %v4250, 7
        %v4252 = vsub.s32 %v4249, %v4251
        %v4253 = vrot.slane %v4239, %v4252
        %v4254 = vcombine.low %v4195, %v4203
        %v4255 = vcombine.high %v4195, %v4203
        %v4257 = vunpack.c.l.s4 1983009808
        %v4258 = vunpack.c.0.s8 %v4257
        %v4259 = vlaneseq
        %v4260 = vshrl.u32 %v4259, 7
        %v4261 = vsub.s32 %v4258, %v4260
        %v4262 = vrot.slane %v4254, %v4261
        %v4264 = vunpack.c.l.s4 1983009808
        %v4265 = vunpack.c.0.s8 %v4264
        %v4266 = vlaneseq
        %v4267 = vshrl.u32 %v4266, 7
        %v4268 = vsub.s32 %v4265, %v4267
        %v4269 = vrot.slane %v4255, %v4268
        %v4270 = vcombine.low %v4207, %v4215
        %v4271 = vcombine.high %v4207, %v4215
        %v4273 = vunpack.c.l.s4 1983009808
        %v4274 = vunpack.c.0.s8 %v4273
        %v4275 = vlaneseq
        %v4276 = vshrl.u32 %v4275, 7
        %v4277 = vsub.s32 %v4274, %v4276
        %v4278 = vrot.slane %v4270, %v4277
        %v4280 = vunpack.c.l.s4 1983009808
        %v4281 = vunpack.c.0.s8 %v4280
        %v4282 = vlaneseq
        %v4283 = vshrl.u32 %v4282, 7
        %v4284 = vsub.s32 %v4281, %v4283
        %v4285 = vrot.slane %v4271, %v4284
        %v4286 = vcombine.low %v4211, %v4219
        %v4287 = vcombine.high %v4211, %v4219
        %v4289 = vunpack.c.l.s4 1983009808
        %v4290 = vunpack.c.0.s8 %v4289
        %v4291 = vlaneseq
        %v4292 = vshrl.u32 %v4291, 7
        %v4293 = vsub.s32 %v4290, %v4292
        %v4294 = vrot.slane %v4286, %v4293
        %v4296 = vunpack.c.l.s4 1983009808
        %v4297 = vunpack.c.0.s8 %v4296
        %v4298 = vlaneseq
        %v4299 = vshrl.u32 %v4298, 7
        %v4300 = vsub.s32 %v4297, %v4299
        %v4301 = vrot.slane %v4287, %v4300
        %v4302 = vcombine.low %v4246, %v4262
        %v4303 = vcombine.high %v4246, %v4262
        %v4305 = vunpack.c.l.s4 1934713408
        %v4306 = vunpack.c.0.s8 %v4305
        %v4307 = vlaneseq
        %v4308 = vshrl.u32 %v4307, 7
        %v4309 = vsub.s32 %v4306, %v4308
        %v4310 = vrot.slane %v4302, %v4309
        %v4312 = vunpack.c.l.s4 1934713408
        %v4313 = vunpack.c.0.s8 %v4312
        %v4314 = vlaneseq
        %v4315 = vshrl.u32 %v4314, 7
        %v4316 = vsub.s32 %v4313, %v4315
        %v4317 = vrot.slane %v4303, %v4316
        %v4318 = vcombine.low %v4253, %v4269
        %v4319 = vcombine.high %v4253, %v4269
        %v4321 = vunpack.c.l.s4 1934713408
        %v4322 = vunpack.c.0.s8 %v4321
        %v4323 = vlaneseq
        %v4324 = vshrl.u32 %v4323, 7
        %v4325 = vsub.s32 %v4322, %v4324
        %v4326 = vrot.slane %v4318, %v4325
        %v4328 = vunpack.c.l.s4 1934713408
        %v4329 = vunpack.c.0.s8 %v4328
        %v4330 = vlaneseq
        %v4331 = vshrl.u32 %v4330, 7
        %v4332 = vsub.s32 %v4329, %v4331
        %v4333 = vrot.slane %v4319, %v4332
        %v4334 = vcombine.low %v4278, %v4294
        %v4335 = vcombine.high %v4278, %v4294
        %v4337 = vunpack.c.l.s4 1934713408
        %v4338 = vunpack.c.0.s8 %v4337
        %v4339 = vlaneseq
        %v4340 = vshrl.u32 %v4339, 7
        %v4341 = vsub.s32 %v4338, %v4340
        %v4342 = vrot.slane %v4334, %v4341
        %v4344 = vunpack.c.l.s4 1934713408
        %v4345 = vunpack.c.0.s8 %v4344
        %v4346 = vlaneseq
        %v4347 = vshrl.u32 %v4346, 7
        %v4348 = vsub.s32 %v4345, %v4347
        %v4349 = vrot.slane %v4335, %v4348
        %v4350 = vcombine.low %v4285, %v4301
        %v4351 = vcombine.high %v4285, %v4301
        %v4353 = vunpack.c.l.s4 1934713408
        %v4354 = vunpack.c.0.s8 %v4353
        %v4355 = vlaneseq
        %v4356 = vshrl.u32 %v4355, 7
        %v4357 = vsub.s32 %v4354, %v4356
        %v4358 = vrot.slane %v4350, %v4357
        %v4360 = vunpack.c.l.s4 1934713408
        %v4361 = vunpack.c.0.s8 %v4360
        %v4362 = vlaneseq
        %v4363 = vshrl.u32 %v4362, 7
        %v4364 = vsub.s32 %v4361, %v4363
        %v4365 = vrot.slane %v4351, %v4364
        %v4366 = vcombine.low %v4310, %v4342
        %v4367 = vcombine.high %v4310, %v4342
        %v4368 = vcombine.low %v4317, %v4349
        %v4369 = vcombine.high %v4317, %v4349
        %v4370 = vcombine.low %v4326, %v4358
        %v4371 = vcombine.high %v4326, %v4358
        %v4372 = vcombine.low %v4333, %v4365
        %v4373 = vcombine.high %v4333, %v4365
        %v4374 = vcombine.low %v4193, %v4201
        %v4375 = vcombine.high %v4193, %v4201
        %v4377 = vunpack.c.l.s4 1983009808
        %v4378 = vunpack.c.0.s8 %v4377
        %v4379 = vlaneseq
        %v4380 = vshrl.u32 %v4379, 7
        %v4381 = vsub.s32 %v4378, %v4380
        %v4382 = vrot.slane %v4374, %v4381
        %v4384 = vunpack.c.l.s4 1983009808
        %v4385 = vunpack.c.0.s8 %v4384
        %v4386 = vlaneseq
        %v4387 = vshrl.u32 %v4386, 7
        %v4388 = vsub.s32 %v4385, %v4387
        %v4389 = vrot.slane %v4375, %v4388
        %v4390 = vcombine.low %v4197, %v4205
        %v4391 = vcombine.high %v4197, %v4205
        %v4393 = vunpack.c.l.s4 1983009808
        %v4394 = vunpack.c.0.s8 %v4393
        %v4395 = vlaneseq
        %v4396 = vshrl.u32 %v4395, 7
        %v4397 = vsub.s32 %v4394, %v4396
        %v4398 = vrot.slane %v4390, %v4397
        %v4400 = vunpack.c.l.s4 1983009808
        %v4401 = vunpack.c.0.s8 %v4400
        %v4402 = vlaneseq
        %v4403 = vshrl.u32 %v4402, 7
        %v4404 = vsub.s32 %v4401, %v4403
        %v4405 = vrot.slane %v4391, %v4404
        %v4406 = vcombine.low %v4209, %v4217
        %v4407 = vcombine.high %v4209, %v4217
        %v4409 = vunpack.c.l.s4 1983009808
        %v4410 = vunpack.c.0.s8 %v4409
        %v4411 = vlaneseq
        %v4412 = vshrl.u32 %v4411, 7
        %v4413 = vsub.s32 %v4410, %v4412
        %v4414 = vrot.slane %v4406, %v4413
        %v4416 = vunpack.c.l.s4 1983009808
        %v4417 = vunpack.c.0.s8 %v4416
        %v4418 = vlaneseq
        %v4419 = vshrl.u32 %v4418, 7
        %v4420 = vsub.s32 %v4417, %v4419
        %v4421 = vrot.slane %v4407, %v4420
        %v4422 = vcombine.low %v4213, %v4221
        %v4423 = vcombine.high %v4213, %v4221
        %v4425 = vunpack.c.l.s4 1983009808
        %v4426 = vunpack.c.0.s8 %v4425
        %v4427 = vlaneseq
        %v4428 = vshrl.u32 %v4427, 7
        %v4429 = vsub.s32 %v4426, %v4428
        %v4430 = vrot.slane %v4422, %v4429
        %v4432 = vunpack.c.l.s4 1983009808
        %v4433 = vunpack.c.0.s8 %v4432
        %v4434 = vlaneseq
        %v4435 = vshrl.u32 %v4434, 7
        %v4436 = vsub.s32 %v4433, %v4435
        %v4437 = vrot.slane %v4423, %v4436
        %v4438 = vcombine.low %v4382, %v4398
        %v4439 = vcombine.high %v4382, %v4398
        %v4441 = vunpack.c.l.s4 1934713408
        %v4442 = vunpack.c.0.s8 %v4441
        %v4443 = vlaneseq
        %v4444 = vshrl.u32 %v4443, 7
        %v4445 = vsub.s32 %v4442, %v4444
        %v4446 = vrot.slane %v4438, %v4445
        %v4448 = vunpack.c.l.s4 1934713408
        %v4449 = vunpack.c.0.s8 %v4448
        %v4450 = vlaneseq
        %v4451 = vshrl.u32 %v4450, 7
        %v4452 = vsub.s32 %v4449, %v4451
        %v4453 = vrot.slane %v4439, %v4452
        %v4454 = vcombine.low %v4389, %v4405
        %v4455 = vcombine.high %v4389, %v4405
        %v4457 = vunpack.c.l.s4 1934713408
        %v4458 = vunpack.c.0.s8 %v4457
        %v4459 = vlaneseq
        %v4460 = vshrl.u32 %v4459, 7
        %v4461 = vsub.s32 %v4458, %v4460
        %v4462 = vrot.slane %v4454, %v4461
        %v4464 = vunpack.c.l.s4 1934713408
        %v4465 = vunpack.c.0.s8 %v4464
        %v4466 = vlaneseq
        %v4467 = vshrl.u32 %v4466, 7
        %v4468 = vsub.s32 %v4465, %v4467
        %v4469 = vrot.slane %v4455, %v4468
        %v4470 = vcombine.low %v4414, %v4430
        %v4471 = vcombine.high %v4414, %v4430
        %v4473 = vunpack.c.l.s4 1934713408
        %v4474 = vunpack.c.0.s8 %v4473
        %v4475 = vlaneseq
        %v4476 = vshrl.u32 %v4475, 7
        %v4477 = vsub.s32 %v4474, %v4476
        %v4478 = vrot.slane %v4470, %v4477
        %v4480 = vunpack.c.l.s4 1934713408
        %v4481 = vunpack.c.0.s8 %v4480
        %v4482 = vlaneseq
        %v4483 = vshrl.u32 %v4482, 7
        %v4484 = vsub.s32 %v4481, %v4483
        %v4485 = vrot.slane %v4471, %v4484
        %v4486 = vcombine.low %v4421, %v4437
        %v4487 = vcombine.high %v4421, %v4437
        %v4489 = vunpack.c.l.s4 1934713408
        %v4490 = vunpack.c.0.s8 %v4489
        %v4491 = vlaneseq
        %v4492 = vshrl.u32 %v4491, 7
        %v4493 = vsub.s32 %v4490, %v4492
        %v4494 = vrot.slane %v4486, %v4493
        %v4496 = vunpack.c.l.s4 1934713408
        %v4497 = vunpack.c.0.s8 %v4496
        %v4498 = vlaneseq
        %v4499 = vshrl.u32 %v4498, 7
        %v4500 = vsub.s32 %v4497, %v4499
        %v4501 = vrot.slane %v4487, %v4500
        %v4502 = vcombine.low %v4446, %v4478
        %v4503 = vcombine.high %v4446, %v4478
        %v4504 = vcombine.low %v4453, %v4485
        %v4505 = vcombine.high %v4453, %v4485
        %v4506 = vcombine.low %v4462, %v4494
        %v4507 = vcombine.high %v4462, %v4494
        %v4508 = vcombine.low %v4469, %v4501
        %v4509 = vcombine.high %v4469, %v4501
        %4511 = vrot.lane.b32.xlu0 %v4367, 16
        %v4512 = vpop.permute.xlu0 %4511
        %4515 = vrot.lane.b32.xlu0 %v4368, 32
        %v4516 = vpop.permute.xlu0 %4515
        %4519 = vrot.lane.b32.xlu0 %v4369, 48
        %v4520 = vpop.permute.xlu0 %4519
        %4523 = vrot.lane.b32.xlu0 %v4370, 64
        %v4524 = vpop.permute.xlu0 %4523
        %4527 = vrot.lane.b32.xlu0 %v4371, 80
        %v4528 = vpop.permute.xlu0 %4527
        %4531 = vrot.lane.b32.xlu0 %v4372, 96
        %v4532 = vpop.permute.xlu0 %4531
        %4535 = vrot.lane.b32.xlu0 %v4373, 112
        %v4536 = vpop.permute.xlu0 %4535
        %4539 = vrot.lane.b32.xlu0 %v4503, 16
        %v4540 = vpop.permute.xlu0 %4539
        %4543 = vrot.lane.b32.xlu0 %v4504, 32
        %v4544 = vpop.permute.xlu0 %4543
        %4547 = vrot.lane.b32.xlu0 %v4505, 48
        %v4548 = vpop.permute.xlu0 %4547
        %4551 = vrot.lane.b32.xlu0 %v4506, 64
        %v4552 = vpop.permute.xlu0 %4551
        %4555 = vrot.lane.b32.xlu0 %v4507, 80
        %v4556 = vpop.permute.xlu0 %4555
        %4559 = vrot.lane.b32.xlu0 %v4508, 96
        %v4560 = vpop.permute.xlu0 %4559
        %4563 = vrot.lane.b32.xlu0 %v4509, 112
        %v4564 = vpop.permute.xlu0 %4563
        %v4566 = vsel %vm1295, %v4366, %v4512
        %v4567 = vsel %vm1297, %v4566, %v4516
        %v4568 = vsel %vm1299, %v4567, %v4520
        %v4569 = vsel %vm1301, %v4568, %v4524
        %v4570 = vsel %vm1303, %v4569, %v4528
        %v4571 = vsel %vm1305, %v4570, %v4532
        %v4572 = vsel %vm1307, %v4571, %v4536
        %v4573 = vsel %vm1295, %v4502, %v4540
        %v4574 = vsel %vm1297, %v4573, %v4544
        %v4575 = vsel %vm1299, %v4574, %v4548
        %v4576 = vsel %vm1301, %v4575, %v4552
        %v4577 = vsel %vm1303, %v4576, %v4556
        %v4578 = vsel %vm1305, %v4577, %v4560
        %v4579 = vsel %vm1307, %v4578, %v4564
        %4580 = vst [vmem:[#allocation3 + $0x80] sm:$0xff] %v4572
        %4581 = vst [vmem:[#allocation3 + $0x88] sm:$0xff] %v4579
        %v4582 = vld [vmem:[#allocation3] sm:$0xff]
        %v4583 = vld [vmem:[#allocation3 + $0x8] sm:$0xff]
        %v4584 = vld [vmem:[#allocation3 + $0x10] sm:$0xff]
        %v4585 = vld [vmem:[#allocation3 + $0x18] sm:$0xff]
        %v4586 = vld [vmem:[#allocation3 + $0x20] sm:$0xff]
        %v4587 = vld [vmem:[#allocation3 + $0x28] sm:$0xff]
        %v4588 = vld [vmem:[#allocation3 + $0x30] sm:$0xff]
        %v4589 = vld [vmem:[#allocation3 + $0x38] sm:$0xff]
        %v4590 = vld [vmem:[#allocation3 + $0x40] sm:$0xff]
        %v4591 = vld [vmem:[#allocation3 + $0x48] sm:$0xff]
        %v4592 = vld [vmem:[#allocation3 + $0x50] sm:$0xff]
        %v4593 = vld [vmem:[#allocation3 + $0x58] sm:$0xff]
        %v4594 = vld [vmem:[#allocation3 + $0x60] sm:$0xff]
        %v4595 = vld [vmem:[#allocation3 + $0x68] sm:$0xff]
        %v4596 = vld [vmem:[#allocation3 + $0x70] sm:$0xff]
        %v4597 = vld [vmem:[#allocation3 + $0x78] sm:$0xff]
        %v4598 = vld [vmem:[#allocation3 + $0x80] sm:$0xff]
        %v4599 = vld [vmem:[#allocation3 + $0x88] sm:$0xff]
        %v4600 = vpack.c.bf16 %v4584, %v4582
        %v4601 = vpack.c.bf16 %v4585, %v4583
        %v4602 = vpack.c.bf16 %v4588, %v4586
        %v4603 = vpack.c.bf16 %v4589, %v4587
        %v4604 = vpack.c.bf16 %v4592, %v4590
        %v4605 = vpack.c.bf16 %v4593, %v4591
        %v4606 = vpack.c.bf16 %v4596, %v4594
        %v4607 = vpack.c.bf16 %v4597, %v4595
        %v4608 = vpack.c.bf16 %v4598, %v4598
        %v4609 = vpack.c.bf16 %v4599, %v4599
        %v4610 = vld [vmem:[%s1] sm:$0xff]
        %v4611 = vpack.c.bf16 %v4610, %v4610
        %v4612 = vld [vmem:[%s2] sm:$0xff]
        %4614 = vset.pattern.permute.xlu0 0
        %4615 = vperm.xlu0 %4614, %v4612
        %v4616 = vpop.permute.xlu0 %4615
        %vm4618 = vcmask 588800
        %v4620 = vsel %vm4618, %v4611, 0
        %vm4622 = vcmask 1043456
        %v4624 = vsel %vm4622, %v4608, 0
        %v4627 = vsel %vm4622, %v4609, 0
        %4629 = vmatprep.subr.bf16.mxu0 %v4601
        %4630 = vmatpush1.bf16.msra.mxu0 %v4600
        %4631 = vmatprep.subr.bf16.mxu0 %v4603
        %4632 = vmatpush1.bf16.msra.mxu0 %v4602
        %4633 = vmatprep.subr.bf16.mxu0 %v4605
        %4634 = vmatpush1.bf16.msra.mxu0 %v4604
        %4635 = vmatprep.subr.bf16.mxu0 %v4607
        %4636 = vmatpush1.bf16.msra.mxu0 %v4606
        %4637 = vmatprep.subr.bf16.mxu0 %v4627
        %4638 = vmatpush1.bf16.msra.mxu0 %v4624
        %4639 = vmatprep.subr.bf16.mxu0 0
        %4640 = vmatpush1.bf16.msra.mxu0 0
        %4641 = vmatprep.subr.bf16.mxu0 0
        %4642 = vmatpush1.bf16.msra.mxu0 0
        %4643 = vmatprep.subr.bf16.mxu0 0
        %4644 = vmatpush1.bf16.msra.mxu0 0
        %4645 = vmatprep.subr.bf16.mxu0 0
        %4646 = vmatpush1.bf16.msra.mxu0 0
        %4647 = vmatprep.subr.bf16.mxu0 0
        %4648 = vmatpush1.bf16.msra.mxu0 0
        %4649 = vmatprep.subr.bf16.mxu0 0
        %4650 = vmatpush1.bf16.msra.mxu0 0
        %4651 = vmatprep.subr.bf16.mxu0 0
        %4652 = vmatpush1.bf16.msra.mxu0 0
        %4653 = vmatprep.subr.bf16.mxu0 0
        %4654 = vmatpush1.bf16.msra.mxu0 0
        %4655 = vmatprep.subr.bf16.mxu0 0
        %4656 = vmatpush1.bf16.msra.mxu0 0
        %4657 = vmatprep.subr.bf16.mxu0 0
        %4658 = vmatpush1.bf16.msra.mxu0 0
        %4659 = vmatprep.subr.bf16.mxu0 0
        %4660 = vmatpush1.bf16.msra.mxu0 0
        %4661 = vmatprep.mubr.bf16.mxu0 0
        %4662 = vmatmul.mubr.bf16.gmra.mrb[0].mxu0 %v4620
        %v4663 = vpop.f32.mrb[0].mxu0
        %v4664 = vadd.f32 %v4616, %v4663
        %v4665 = vpop.f32.mrb[0].mxu0
        %v4666 = vadd.f32 %v4616, %v4665
        %v4667 = vpop.f32.mrb[0].mxu0
        %v4668 = vpop.f32.mrb[0].mxu0
        %4669 = vdwg.mxu0
        %v4670 = vadd.f32 %v4664, %v4666
        %4671 = vadd.xlane.f32.xlu0 %v4670
        %v4672 = vpop.xlane.xlu0 %4671
        %v4673 = vmul.f32 %v4672, 0.00390625
        %v4674 = vmul.f32 %v4664, %v4664
        %v4675 = vmul.f32 %v4666, %v4666
        %v4676 = vadd.f32 %v4674, %v4675
        %4677 = vadd.xlane.f32.xlu0 %v4676
        %v4678 = vpop.xlane.xlu0 %4677
        %v4679 = vmul.f32 %v4678, 0.00390625
        %v4680 = vmul.f32 %v4673, %v4673
        %v4681 = vsub.f32 %v4679, %v4680
        %v4682 = vsub.f32 %v4664, %v4673
        %v4683 = vsub.f32 %v4666, %v4673
        %v4684 = vadd.f32 %v4681, 1e-05
        %v4685 = vrsqrt.pop %v4684
        %v4686 = vmul.f32 %v4682, %v4685
        %v4687 = vmul.f32 %v4683, %v4685
        %v4688 = vmax.f32 %v4686, 0.0
        %v4689 = vmax.f32 %v4687, 0.0
        %4691 = vrot.lane.b32.xlu0 %v4688, 112
        %v4692 = vpop.permute.xlu0 %4691
        %4694 = vrot.lane.b32.xlu0 %v4688, 96
        %v4695 = vpop.permute.xlu0 %4694
        %4697 = vrot.lane.b32.xlu0 %v4688, 80
        %v4698 = vpop.permute.xlu0 %4697
        %4700 = vrot.lane.b32.xlu0 %v4688, 64
        %v4701 = vpop.permute.xlu0 %4700
        %4703 = vrot.lane.b32.xlu0 %v4688, 48
        %v4704 = vpop.permute.xlu0 %4703
        %4706 = vrot.lane.b32.xlu0 %v4688, 32
        %v4707 = vpop.permute.xlu0 %4706
        %4709 = vrot.lane.b32.xlu0 %v4688, 16
        %v4710 = vpop.permute.xlu0 %4709
        %4713 = vrot.lane.b32.xlu0 %v4689, 112
        %v4714 = vpop.permute.xlu0 %4713
        %4716 = vrot.lane.b32.xlu0 %v4689, 96
        %v4717 = vpop.permute.xlu0 %4716
        %4719 = vrot.lane.b32.xlu0 %v4689, 80
        %v4720 = vpop.permute.xlu0 %4719
        %4722 = vrot.lane.b32.xlu0 %v4689, 64
        %v4723 = vpop.permute.xlu0 %4722
        %4725 = vrot.lane.b32.xlu0 %v4689, 48
        %v4726 = vpop.permute.xlu0 %4725
        %4728 = vrot.lane.b32.xlu0 %v4689, 32
        %v4729 = vpop.permute.xlu0 %4728
        %4731 = vrot.lane.b32.xlu0 %v4689, 16
        %v4732 = vpop.permute.xlu0 %4731
        %v4734 = vcombine.low %v4688, %v4695
        %v4735 = vcombine.high %v4688, %v4695
        %v4737 = vunpack.c.l.s4 1983009808
        %v4738 = vunpack.c.0.s8 %v4737
        %v4739 = vlaneseq
        %v4740 = vshrl.u32 %v4739, 7
        %v4741 = vsub.s32 %v4738, %v4740
        %v4742 = vrot.slane %v4734, %v4741
        %v4744 = vunpack.c.l.s4 1983009808
        %v4745 = vunpack.c.0.s8 %v4744
        %v4746 = vlaneseq
        %v4747 = vshrl.u32 %v4746, 7
        %v4748 = vsub.s32 %v4745, %v4747
        %v4749 = vrot.slane %v4735, %v4748
        %v4750 = vcombine.low %v4692, %v4698
        %v4751 = vcombine.high %v4692, %v4698
        %v4753 = vunpack.c.l.s4 1983009808
        %v4754 = vunpack.c.0.s8 %v4753
        %v4755 = vlaneseq
        %v4756 = vshrl.u32 %v4755, 7
        %v4757 = vsub.s32 %v4754, %v4756
        %v4758 = vrot.slane %v4750, %v4757
        %v4760 = vunpack.c.l.s4 1983009808
        %v4761 = vunpack.c.0.s8 %v4760
        %v4762 = vlaneseq
        %v4763 = vshrl.u32 %v4762, 7
        %v4764 = vsub.s32 %v4761, %v4763
        %v4765 = vrot.slane %v4751, %v4764
        %v4766 = vcombine.low %v4701, %v4707
        %v4767 = vcombine.high %v4701, %v4707
        %v4769 = vunpack.c.l.s4 1983009808
        %v4770 = vunpack.c.0.s8 %v4769
        %v4771 = vlaneseq
        %v4772 = vshrl.u32 %v4771, 7
        %v4773 = vsub.s32 %v4770, %v4772
        %v4774 = vrot.slane %v4766, %v4773
        %v4776 = vunpack.c.l.s4 1983009808
        %v4777 = vunpack.c.0.s8 %v4776
        %v4778 = vlaneseq
        %v4779 = vshrl.u32 %v4778, 7
        %v4780 = vsub.s32 %v4777, %v4779
        %v4781 = vrot.slane %v4767, %v4780
        %v4782 = vcombine.low %v4704, %v4710
        %v4783 = vcombine.high %v4704, %v4710
        %v4785 = vunpack.c.l.s4 1983009808
        %v4786 = vunpack.c.0.s8 %v4785
        %v4787 = vlaneseq
        %v4788 = vshrl.u32 %v4787, 7
        %v4789 = vsub.s32 %v4786, %v4788
        %v4790 = vrot.slane %v4782, %v4789
        %v4792 = vunpack.c.l.s4 1983009808
        %v4793 = vunpack.c.0.s8 %v4792
        %v4794 = vlaneseq
        %v4795 = vshrl.u32 %v4794, 7
        %v4796 = vsub.s32 %v4793, %v4795
        %v4797 = vrot.slane %v4783, %v4796
        %v4798 = vcombine.low %v4742, %v4758
        %v4799 = vcombine.high %v4742, %v4758
        %v4801 = vunpack.c.l.s4 1934713408
        %v4802 = vunpack.c.0.s8 %v4801
        %v4803 = vlaneseq
        %v4804 = vshrl.u32 %v4803, 7
        %v4805 = vsub.s32 %v4802, %v4804
        %v4806 = vrot.slane %v4798, %v4805
        %v4808 = vunpack.c.l.s4 1934713408
        %v4809 = vunpack.c.0.s8 %v4808
        %v4810 = vlaneseq
        %v4811 = vshrl.u32 %v4810, 7
        %v4812 = vsub.s32 %v4809, %v4811
        %v4813 = vrot.slane %v4799, %v4812
        %v4814 = vcombine.low %v4749, %v4765
        %v4815 = vcombine.high %v4749, %v4765
        %v4817 = vunpack.c.l.s4 1934713408
        %v4818 = vunpack.c.0.s8 %v4817
        %v4819 = vlaneseq
        %v4820 = vshrl.u32 %v4819, 7
        %v4821 = vsub.s32 %v4818, %v4820
        %v4822 = vrot.slane %v4814, %v4821
        %v4824 = vunpack.c.l.s4 1934713408
        %v4825 = vunpack.c.0.s8 %v4824
        %v4826 = vlaneseq
        %v4827 = vshrl.u32 %v4826, 7
        %v4828 = vsub.s32 %v4825, %v4827
        %v4829 = vrot.slane %v4815, %v4828
        %v4830 = vcombine.low %v4774, %v4790
        %v4831 = vcombine.high %v4774, %v4790
        %v4833 = vunpack.c.l.s4 1934713408
        %v4834 = vunpack.c.0.s8 %v4833
        %v4835 = vlaneseq
        %v4836 = vshrl.u32 %v4835, 7
        %v4837 = vsub.s32 %v4834, %v4836
        %v4838 = vrot.slane %v4830, %v4837
        %v4840 = vunpack.c.l.s4 1934713408
        %v4841 = vunpack.c.0.s8 %v4840
        %v4842 = vlaneseq
        %v4843 = vshrl.u32 %v4842, 7
        %v4844 = vsub.s32 %v4841, %v4843
        %v4845 = vrot.slane %v4831, %v4844
        %v4846 = vcombine.low %v4781, %v4797
        %v4847 = vcombine.high %v4781, %v4797
        %v4849 = vunpack.c.l.s4 1934713408
        %v4850 = vunpack.c.0.s8 %v4849
        %v4851 = vlaneseq
        %v4852 = vshrl.u32 %v4851, 7
        %v4853 = vsub.s32 %v4850, %v4852
        %v4854 = vrot.slane %v4846, %v4853
        %v4856 = vunpack.c.l.s4 1934713408
        %v4857 = vunpack.c.0.s8 %v4856
        %v4858 = vlaneseq
        %v4859 = vshrl.u32 %v4858, 7
        %v4860 = vsub.s32 %v4857, %v4859
        %v4861 = vrot.slane %v4847, %v4860
        %v4862 = vcombine.low %v4806, %v4838
        %v4863 = vcombine.high %v4806, %v4838
        %v4864 = vcombine.low %v4813, %v4845
        %v4865 = vcombine.high %v4813, %v4845
        %v4866 = vcombine.low %v4822, %v4854
        %v4867 = vcombine.high %v4822, %v4854
        %v4868 = vcombine.low %v4829, %v4861
        %v4869 = vcombine.high %v4829, %v4861
        %v4870 = vcombine.low %v4689, %v4717
        %v4871 = vcombine.high %v4689, %v4717
        %v4873 = vunpack.c.l.s4 1983009808
        %v4874 = vunpack.c.0.s8 %v4873
        %v4875 = vlaneseq
        %v4876 = vshrl.u32 %v4875, 7
        %v4877 = vsub.s32 %v4874, %v4876
        %v4878 = vrot.slane %v4870, %v4877
        %v4880 = vunpack.c.l.s4 1983009808
        %v4881 = vunpack.c.0.s8 %v4880
        %v4882 = vlaneseq
        %v4883 = vshrl.u32 %v4882, 7
        %v4884 = vsub.s32 %v4881, %v4883
        %v4885 = vrot.slane %v4871, %v4884
        %v4886 = vcombine.low %v4714, %v4720
        %v4887 = vcombine.high %v4714, %v4720
        %v4889 = vunpack.c.l.s4 1983009808
        %v4890 = vunpack.c.0.s8 %v4889
        %v4891 = vlaneseq
        %v4892 = vshrl.u32 %v4891, 7
        %v4893 = vsub.s32 %v4890, %v4892
        %v4894 = vrot.slane %v4886, %v4893
        %v4896 = vunpack.c.l.s4 1983009808
        %v4897 = vunpack.c.0.s8 %v4896
        %v4898 = vlaneseq
        %v4899 = vshrl.u32 %v4898, 7
        %v4900 = vsub.s32 %v4897, %v4899
        %v4901 = vrot.slane %v4887, %v4900
        %v4902 = vcombine.low %v4723, %v4729
        %v4903 = vcombine.high %v4723, %v4729
        %v4905 = vunpack.c.l.s4 1983009808
        %v4906 = vunpack.c.0.s8 %v4905
        %v4907 = vlaneseq
        %v4908 = vshrl.u32 %v4907, 7
        %v4909 = vsub.s32 %v4906, %v4908
        %v4910 = vrot.slane %v4902, %v4909
        %v4912 = vunpack.c.l.s4 1983009808
        %v4913 = vunpack.c.0.s8 %v4912
        %v4914 = vlaneseq
        %v4915 = vshrl.u32 %v4914, 7
        %v4916 = vsub.s32 %v4913, %v4915
        %v4917 = vrot.slane %v4903, %v4916
        %v4918 = vcombine.low %v4726, %v4732
        %v4919 = vcombine.high %v4726, %v4732
        %v4921 = vunpack.c.l.s4 1983009808
        %v4922 = vunpack.c.0.s8 %v4921
        %v4923 = vlaneseq
        %v4924 = vshrl.u32 %v4923, 7
        %v4925 = vsub.s32 %v4922, %v4924
        %v4926 = vrot.slane %v4918, %v4925
        %v4928 = vunpack.c.l.s4 1983009808
        %v4929 = vunpack.c.0.s8 %v4928
        %v4930 = vlaneseq
        %v4931 = vshrl.u32 %v4930, 7
        %v4932 = vsub.s32 %v4929, %v4931
        %v4933 = vrot.slane %v4919, %v4932
        %v4934 = vcombine.low %v4878, %v4894
        %v4935 = vcombine.high %v4878, %v4894
        %v4937 = vunpack.c.l.s4 1934713408
        %v4938 = vunpack.c.0.s8 %v4937
        %v4939 = vlaneseq
        %v4940 = vshrl.u32 %v4939, 7
        %v4941 = vsub.s32 %v4938, %v4940
        %v4942 = vrot.slane %v4934, %v4941
        %v4944 = vunpack.c.l.s4 1934713408
        %v4945 = vunpack.c.0.s8 %v4944
        %v4946 = vlaneseq
        %v4947 = vshrl.u32 %v4946, 7
        %v4948 = vsub.s32 %v4945, %v4947
        %v4949 = vrot.slane %v4935, %v4948
        %v4950 = vcombine.low %v4885, %v4901
        %v4951 = vcombine.high %v4885, %v4901
        %v4953 = vunpack.c.l.s4 1934713408
        %v4954 = vunpack.c.0.s8 %v4953
        %v4955 = vlaneseq
        %v4956 = vshrl.u32 %v4955, 7
        %v4957 = vsub.s32 %v4954, %v4956
        %v4958 = vrot.slane %v4950, %v4957
        %v4960 = vunpack.c.l.s4 1934713408
        %v4961 = vunpack.c.0.s8 %v4960
        %v4962 = vlaneseq
        %v4963 = vshrl.u32 %v4962, 7
        %v4964 = vsub.s32 %v4961, %v4963
        %v4965 = vrot.slane %v4951, %v4964
        %v4966 = vcombine.low %v4910, %v4926
        %v4967 = vcombine.high %v4910, %v4926
        %v4969 = vunpack.c.l.s4 1934713408
        %v4970 = vunpack.c.0.s8 %v4969
        %v4971 = vlaneseq
        %v4972 = vshrl.u32 %v4971, 7
        %v4973 = vsub.s32 %v4970, %v4972
        %v4974 = vrot.slane %v4966, %v4973
        %v4976 = vunpack.c.l.s4 1934713408
        %v4977 = vunpack.c.0.s8 %v4976
        %v4978 = vlaneseq
        %v4979 = vshrl.u32 %v4978, 7
        %v4980 = vsub.s32 %v4977, %v4979
        %v4981 = vrot.slane %v4967, %v4980
        %v4982 = vcombine.low %v4917, %v4933
        %v4983 = vcombine.high %v4917, %v4933
        %v4985 = vunpack.c.l.s4 1934713408
        %v4986 = vunpack.c.0.s8 %v4985
        %v4987 = vlaneseq
        %v4988 = vshrl.u32 %v4987, 7
        %v4989 = vsub.s32 %v4986, %v4988
        %v4990 = vrot.slane %v4982, %v4989
        %v4992 = vunpack.c.l.s4 1934713408
        %v4993 = vunpack.c.0.s8 %v4992
        %v4994 = vlaneseq
        %v4995 = vshrl.u32 %v4994, 7
        %v4996 = vsub.s32 %v4993, %v4995
        %v4997 = vrot.slane %v4983, %v4996
        %v4998 = vcombine.low %v4942, %v4974
        %v4999 = vcombine.high %v4942, %v4974
        %v5000 = vcombine.low %v4949, %v4981
        %v5001 = vcombine.high %v4949, %v4981
        %v5002 = vcombine.low %v4958, %v4990
        %v5003 = vcombine.high %v4958, %v4990
        %v5004 = vcombine.low %v4965, %v4997
        %v5005 = vcombine.high %v4965, %v4997
        %5022 = vrot.lane.b32.xlu0 %v4862, 1
        %v5023 = vpop.permute.xlu0 %5022
        %5024 = vrot.lane.b32.xlu0 %v4998, 1
        %v5025 = vpop.permute.xlu0 %5024
        %5026 = vrot.lane.b32.xlu0 %v4863, 1
        %v5027 = vpop.permute.xlu0 %5026
        %5028 = vrot.lane.b32.xlu0 %v4999, 1
        %v5029 = vpop.permute.xlu0 %5028
        %5030 = vrot.lane.b32.xlu0 %v4864, 1
        %v5031 = vpop.permute.xlu0 %5030
        %5032 = vrot.lane.b32.xlu0 %v5000, 1
        %v5033 = vpop.permute.xlu0 %5032
        %5034 = vrot.lane.b32.xlu0 %v4865, 1
        %v5035 = vpop.permute.xlu0 %5034
        %5036 = vrot.lane.b32.xlu0 %v5001, 1
        %v5037 = vpop.permute.xlu0 %5036
        %5038 = vrot.lane.b32.xlu0 %v4866, 1
        %v5039 = vpop.permute.xlu0 %5038
        %5040 = vrot.lane.b32.xlu0 %v5002, 1
        %v5041 = vpop.permute.xlu0 %5040
        %5042 = vrot.lane.b32.xlu0 %v4867, 1
        %v5043 = vpop.permute.xlu0 %5042
        %5044 = vrot.lane.b32.xlu0 %v5003, 1
        %v5045 = vpop.permute.xlu0 %5044
        %5046 = vrot.lane.b32.xlu0 %v4868, 1
        %v5047 = vpop.permute.xlu0 %5046
        %5048 = vrot.lane.b32.xlu0 %v5004, 1
        %v5049 = vpop.permute.xlu0 %5048
        %5050 = vrot.lane.b32.xlu0 %v4869, 1
        %v5051 = vpop.permute.xlu0 %5050
        %5052 = vrot.lane.b32.xlu0 %v5005, 1
        %v5053 = vpop.permute.xlu0 %5052
        %5070 = vst.msk [vmem:[#allocation2 + $0x1] sm:$0xff] %vm624, %v5023
        %5071 = vst.msk [vmem:[#allocation2 + $0x9] sm:$0xff] %vm624, %v5025
        %5072 = vst.msk [vmem:[#allocation2 + $0x19] sm:$0xff] %vm624, %v5027
        %5073 = vst.msk [vmem:[#allocation2 + $0x21] sm:$0xff] %vm624, %v5029
        %5074 = vst.msk [vmem:[#allocation2 + $0x31] sm:$0xff] %vm624, %v5031
        %5075 = vst.msk [vmem:[#allocation2 + $0x39] sm:$0xff] %vm624, %v5033
        %5076 = vst.msk [vmem:[#allocation2 + $0x49] sm:$0xff] %vm624, %v5035
        %5077 = vst.msk [vmem:[#allocation2 + $0x51] sm:$0xff] %vm624, %v5037
        %5078 = vst.msk [vmem:[#allocation2 + $0x61] sm:$0xff] %vm624, %v5039
        %5079 = vst.msk [vmem:[#allocation2 + $0x69] sm:$0xff] %vm624, %v5041
        %5080 = vst.msk [vmem:[#allocation2 + $0x79] sm:$0xff] %vm624, %v5043
        %5081 = vst.msk [vmem:[#allocation2 + $0x81] sm:$0xff] %vm624, %v5045
        %5082 = vst.msk [vmem:[#allocation2 + $0x91] sm:$0xff] %vm624, %v5047
        %5083 = vst.msk [vmem:[#allocation2 + $0x99] sm:$0xff] %vm624, %v5049
        %5084 = vst.msk [vmem:[#allocation2 + $0xa9] sm:$0xff] %vm624, %v5051
        %5085 = vst.msk [vmem:[#allocation2 + $0xb1] sm:$0xff] %vm624, %v5053
        %5086 = vst.msk [vmem:[#allocation2 - $0x1] sm:$0x2] %vm641, %v5023
        %5087 = vst.msk [vmem:[#allocation2 + $0x17] sm:$0x2] %vm641, %v5027
        %5088 = vst.msk [vmem:[#allocation2 + $0x2f] sm:$0x2] %vm641, %v5031
        %5089 = vst.msk [vmem:[#allocation2 + $0x47] sm:$0x2] %vm641, %v5035
        %5090 = vst.msk [vmem:[#allocation2 + $0x5f] sm:$0x2] %vm641, %v5039
        %5091 = vst.msk [vmem:[#allocation2 + $0x77] sm:$0x2] %vm641, %v5043
        %5092 = vst.msk [vmem:[#allocation2 + $0x8f] sm:$0x2] %vm641, %v5047
        %5093 = vst.msk [vmem:[#allocation2 + $0xa7] sm:$0x2] %vm641, %v5051
        %5094 = vst.msk [vmem:[#allocation2 + $0xb] sm:$0x40] %vm650, %v5025
        %5095 = vst.msk [vmem:[#allocation2 + $0x23] sm:$0x40] %vm650, %v5029
        %5096 = vst.msk [vmem:[#allocation2 + $0x3b] sm:$0x40] %vm650, %v5033
        %5097 = vst.msk [vmem:[#allocation2 + $0x53] sm:$0x40] %vm650, %v5037
        %5098 = vst.msk [vmem:[#allocation2 + $0x6b] sm:$0x40] %vm650, %v5041
        %5099 = vst.msk [vmem:[#allocation2 + $0x83] sm:$0x40] %vm650, %v5045
        %5100 = vst.msk [vmem:[#allocation2 + $0x9b] sm:$0x40] %vm650, %v5049
        %5101 = vst.msk [vmem:[#allocation2 + $0xb3] sm:$0x40] %vm650, %v5053
        %v5102 = vld [vmem:[#allocation2] sm:$0xff]
        %v5103 = vld [vmem:[#allocation2 + $0x8] sm:$0xff]
        %v5104 = vld [vmem:[#allocation2 + $0x10] sm:$0x3]
        %v5105 = vld [vmem:[#allocation2 + $0x18] sm:$0xff]
        %v5106 = vld [vmem:[#allocation2 + $0x20] sm:$0xff]
        %v5107 = vld [vmem:[#allocation2 + $0x28] sm:$0x3]
        %v5108 = vld [vmem:[#allocation2 + $0x30] sm:$0xff]
        %v5109 = vld [vmem:[#allocation2 + $0x38] sm:$0xff]
        %v5110 = vld [vmem:[#allocation2 + $0x40] sm:$0x3]
        %v5111 = vld [vmem:[#allocation2 + $0x48] sm:$0xff]
        %v5112 = vld [vmem:[#allocation2 + $0x50] sm:$0xff]
        %v5113 = vld [vmem:[#allocation2 + $0x58] sm:$0x3]
        %v5114 = vld [vmem:[#allocation2 + $0x60] sm:$0xff]
        %v5115 = vld [vmem:[#allocation2 + $0x68] sm:$0xff]
        %v5116 = vld [vmem:[#allocation2 + $0x70] sm:$0x3]
        %v5117 = vld [vmem:[#allocation2 + $0x78] sm:$0xff]
        %v5118 = vld [vmem:[#allocation2 + $0x80] sm:$0xff]
        %v5119 = vld [vmem:[#allocation2 + $0x88] sm:$0x3]
        %v5120 = vld [vmem:[#allocation2 + $0x90] sm:$0xff]
        %v5121 = vld [vmem:[#allocation2 + $0x98] sm:$0xff]
        %v5122 = vld [vmem:[#allocation2 + $0xa0] sm:$0x3]
        %v5123 = vld [vmem:[#allocation2 + $0xa8] sm:$0xff]
        %v5124 = vld [vmem:[#allocation2 + $0xb0] sm:$0xff]
        %v5125 = vld [vmem:[#allocation2 + $0xb8] sm:$0x3]
        %5150 = vrot.lane.b32.xlu0 %v5102, 126
        %v5151 = vpop.permute.xlu0 %5150
        %5152 = vrot.lane.b32.xlu0 %v5103, 126
        %v5153 = vpop.permute.xlu0 %5152
        %5154 = vrot.lane.b32.xlu0 %v5104, 126
        %v5155 = vpop.permute.xlu0 %5154
        %5156 = vrot.lane.b32.xlu0 %v5105, 126
        %v5157 = vpop.permute.xlu0 %5156
        %5158 = vrot.lane.b32.xlu0 %v5106, 126
        %v5159 = vpop.permute.xlu0 %5158
        %5160 = vrot.lane.b32.xlu0 %v5107, 126
        %v5161 = vpop.permute.xlu0 %5160
        %5162 = vrot.lane.b32.xlu0 %v5108, 126
        %v5163 = vpop.permute.xlu0 %5162
        %5164 = vrot.lane.b32.xlu0 %v5109, 126
        %v5165 = vpop.permute.xlu0 %5164
        %5166 = vrot.lane.b32.xlu0 %v5110, 126
        %v5167 = vpop.permute.xlu0 %5166
        %5168 = vrot.lane.b32.xlu0 %v5111, 126
        %v5169 = vpop.permute.xlu0 %5168
        %5170 = vrot.lane.b32.xlu0 %v5112, 126
        %v5171 = vpop.permute.xlu0 %5170
        %5172 = vrot.lane.b32.xlu0 %v5113, 126
        %v5173 = vpop.permute.xlu0 %5172
        %5174 = vrot.lane.b32.xlu0 %v5114, 126
        %v5175 = vpop.permute.xlu0 %5174
        %5176 = vrot.lane.b32.xlu0 %v5115, 126
        %v5177 = vpop.permute.xlu0 %5176
        %5178 = vrot.lane.b32.xlu0 %v5116, 126
        %v5179 = vpop.permute.xlu0 %5178
        %5180 = vrot.lane.b32.xlu0 %v5117, 126
        %v5181 = vpop.permute.xlu0 %5180
        %5182 = vrot.lane.b32.xlu0 %v5118, 126
        %v5183 = vpop.permute.xlu0 %5182
        %5184 = vrot.lane.b32.xlu0 %v5119, 126
        %v5185 = vpop.permute.xlu0 %5184
        %5186 = vrot.lane.b32.xlu0 %v5120, 126
        %v5187 = vpop.permute.xlu0 %5186
        %5188 = vrot.lane.b32.xlu0 %v5121, 126
        %v5189 = vpop.permute.xlu0 %5188
        %5190 = vrot.lane.b32.xlu0 %v5122, 126
        %v5191 = vpop.permute.xlu0 %5190
        %5192 = vrot.lane.b32.xlu0 %v5123, 126
        %v5193 = vpop.permute.xlu0 %5192
        %5194 = vrot.lane.b32.xlu0 %v5124, 126
        %v5195 = vpop.permute.xlu0 %5194
        %5196 = vrot.lane.b32.xlu0 %v5125, 126
        %v5197 = vpop.permute.xlu0 %5196
        %5222 = vst.msk [vmem:[#allocation2] sm:$0xff] %vm779, %v5151
        %5223 = vst.msk [vmem:[#allocation2 + $0x8] sm:$0xff] %vm779, %v5153
        %5224 = vst.msk [vmem:[#allocation2 + $0x10] sm:$0x3] %vm782, %v5155
        %5225 = vst.msk [vmem:[#allocation2 + $0x18] sm:$0xff] %vm779, %v5157
        %5226 = vst.msk [vmem:[#allocation2 + $0x20] sm:$0xff] %vm779, %v5159
        %5227 = vst.msk [vmem:[#allocation2 + $0x28] sm:$0x3] %vm782, %v5161
        %5228 = vst.msk [vmem:[#allocation2 + $0x30] sm:$0xff] %vm779, %v5163
        %5229 = vst.msk [vmem:[#allocation2 + $0x38] sm:$0xff] %vm779, %v5165
        %5230 = vst.msk [vmem:[#allocation2 + $0x40] sm:$0x3] %vm782, %v5167
        %5231 = vst.msk [vmem:[#allocation2 + $0x48] sm:$0xff] %vm779, %v5169
        %5232 = vst.msk [vmem:[#allocation2 + $0x50] sm:$0xff] %vm779, %v5171
        %5233 = vst.msk [vmem:[#allocation2 + $0x58] sm:$0x3] %vm782, %v5173
        %5234 = vst.msk [vmem:[#allocation2 + $0x60] sm:$0xff] %vm779, %v5175
        %5235 = vst.msk [vmem:[#allocation2 + $0x68] sm:$0xff] %vm779, %v5177
        %5236 = vst.msk [vmem:[#allocation2 + $0x70] sm:$0x3] %vm782, %v5179
        %5237 = vst.msk [vmem:[#allocation2 + $0x78] sm:$0xff] %vm779, %v5181
        %5238 = vst.msk [vmem:[#allocation2 + $0x80] sm:$0xff] %vm779, %v5183
        %5239 = vst.msk [vmem:[#allocation2 + $0x88] sm:$0x3] %vm782, %v5185
        %5240 = vst.msk [vmem:[#allocation2 + $0x90] sm:$0xff] %vm779, %v5187
        %5241 = vst.msk [vmem:[#allocation2 + $0x98] sm:$0xff] %vm779, %v5189
        %5242 = vst.msk [vmem:[#allocation2 + $0xa0] sm:$0x3] %vm782, %v5191
        %5243 = vst.msk [vmem:[#allocation2 + $0xa8] sm:$0xff] %vm779, %v5193
        %5244 = vst.msk [vmem:[#allocation2 + $0xb0] sm:$0xff] %vm779, %v5195
        %5245 = vst.msk [vmem:[#allocation2 + $0xb8] sm:$0x3] %vm782, %v5197
        %v5246 = vld [vmem:[#allocation2] sm:$0xff]
        %v5247 = vld [vmem:[#allocation2 + $0x8] sm:$0xff]
        %v5248 = vld [vmem:[#allocation2 + $0x10] sm:$0x3]
        %v5249 = vld [vmem:[#allocation2 + $0x18] sm:$0xff]
        %v5250 = vld [vmem:[#allocation2 + $0x20] sm:$0xff]
        %v5251 = vld [vmem:[#allocation2 + $0x28] sm:$0x3]
        %v5252 = vld [vmem:[#allocation2 + $0x30] sm:$0xff]
        %v5253 = vld [vmem:[#allocation2 + $0x38] sm:$0xff]
        %v5254 = vld [vmem:[#allocation2 + $0x40] sm:$0x3]
        %v5255 = vld [vmem:[#allocation2 + $0x48] sm:$0xff]
        %v5256 = vld [vmem:[#allocation2 + $0x50] sm:$0xff]
        %v5257 = vld [vmem:[#allocation2 + $0x58] sm:$0x3]
        %v5258 = vld [vmem:[#allocation2 + $0x60] sm:$0xff]
        %v5259 = vld [vmem:[#allocation2 + $0x68] sm:$0xff]
        %v5260 = vld [vmem:[#allocation2 + $0x70] sm:$0x3]
        %v5261 = vld [vmem:[#allocation2 + $0x78] sm:$0xff]
        %v5262 = vld [vmem:[#allocation2 + $0x80] sm:$0xff]
        %v5263 = vld [vmem:[#allocation2 + $0x88] sm:$0x3]
        %v5264 = vld [vmem:[#allocation2 + $0x90] sm:$0xff]
        %v5265 = vld [vmem:[#allocation2 + $0x98] sm:$0xff]
        %v5266 = vld [vmem:[#allocation2 + $0xa0] sm:$0x3]
        %v5267 = vld [vmem:[#allocation2 + $0xa8] sm:$0xff]
        %v5268 = vld [vmem:[#allocation2 + $0xb0] sm:$0xff]
        %v5269 = vld [vmem:[#allocation2 + $0xb8] sm:$0x3]
        %5294 = vrot.lane.b32.xlu0 %v5246, 2
        %v5295 = vpop.permute.xlu0 %5294
        %5296 = vrot.lane.b32.xlu0 %v5247, 2
        %v5297 = vpop.permute.xlu0 %5296
        %5298 = vrot.lane.b32.xlu0 %v5248, 2
        %v5299 = vpop.permute.xlu0 %5298
        %5300 = vrot.lane.b32.xlu0 %v5249, 2
        %v5301 = vpop.permute.xlu0 %5300
        %5302 = vrot.lane.b32.xlu0 %v5250, 2
        %v5303 = vpop.permute.xlu0 %5302
        %5304 = vrot.lane.b32.xlu0 %v5251, 2
        %v5305 = vpop.permute.xlu0 %5304
        %5306 = vrot.lane.b32.xlu0 %v5252, 2
        %v5307 = vpop.permute.xlu0 %5306
        %5308 = vrot.lane.b32.xlu0 %v5253, 2
        %v5309 = vpop.permute.xlu0 %5308
        %5310 = vrot.lane.b32.xlu0 %v5254, 2
        %v5311 = vpop.permute.xlu0 %5310
        %5312 = vrot.lane.b32.xlu0 %v5255, 2
        %v5313 = vpop.permute.xlu0 %5312
        %5314 = vrot.lane.b32.xlu0 %v5256, 2
        %v5315 = vpop.permute.xlu0 %5314
        %5316 = vrot.lane.b32.xlu0 %v5257, 2
        %v5317 = vpop.permute.xlu0 %5316
        %5318 = vrot.lane.b32.xlu0 %v5258, 2
        %v5319 = vpop.permute.xlu0 %5318
        %5320 = vrot.lane.b32.xlu0 %v5259, 2
        %v5321 = vpop.permute.xlu0 %5320
        %5322 = vrot.lane.b32.xlu0 %v5260, 2
        %v5323 = vpop.permute.xlu0 %5322
        %5324 = vrot.lane.b32.xlu0 %v5261, 2
        %v5325 = vpop.permute.xlu0 %5324
        %5326 = vrot.lane.b32.xlu0 %v5262, 2
        %v5327 = vpop.permute.xlu0 %5326
        %5328 = vrot.lane.b32.xlu0 %v5263, 2
        %v5329 = vpop.permute.xlu0 %5328
        %5330 = vrot.lane.b32.xlu0 %v5264, 2
        %v5331 = vpop.permute.xlu0 %5330
        %5332 = vrot.lane.b32.xlu0 %v5265, 2
        %v5333 = vpop.permute.xlu0 %5332
        %5334 = vrot.lane.b32.xlu0 %v5266, 2
        %v5335 = vpop.permute.xlu0 %5334
        %5336 = vrot.lane.b32.xlu0 %v5267, 2
        %v5337 = vpop.permute.xlu0 %5336
        %5338 = vrot.lane.b32.xlu0 %v5268, 2
        %v5339 = vpop.permute.xlu0 %5338
        %5340 = vrot.lane.b32.xlu0 %v5269, 2
        %v5341 = vpop.permute.xlu0 %5340
        %5366 = vst.msk [vmem:[#allocation2] sm:$0xff] %vm925, %v5295
        %5367 = vst.msk [vmem:[#allocation2 + $0x8] sm:$0xff] %vm925, %v5297
        %5368 = vst.msk [vmem:[#allocation2 + $0x10] sm:$0x3] %vm928, %v5299
        %5369 = vst.msk [vmem:[#allocation2 + $0x18] sm:$0xff] %vm925, %v5301
        %5370 = vst.msk [vmem:[#allocation2 + $0x20] sm:$0xff] %vm925, %v5303
        %5371 = vst.msk [vmem:[#allocation2 + $0x28] sm:$0x3] %vm928, %v5305
        %5372 = vst.msk [vmem:[#allocation2 + $0x30] sm:$0xff] %vm925, %v5307
        %5373 = vst.msk [vmem:[#allocation2 + $0x38] sm:$0xff] %vm925, %v5309
        %5374 = vst.msk [vmem:[#allocation2 + $0x40] sm:$0x3] %vm928, %v5311
        %5375 = vst.msk [vmem:[#allocation2 + $0x48] sm:$0xff] %vm925, %v5313
        %5376 = vst.msk [vmem:[#allocation2 + $0x50] sm:$0xff] %vm925, %v5315
        %5377 = vst.msk [vmem:[#allocation2 + $0x58] sm:$0x3] %vm928, %v5317
        %5378 = vst.msk [vmem:[#allocation2 + $0x60] sm:$0xff] %vm925, %v5319
        %5379 = vst.msk [vmem:[#allocation2 + $0x68] sm:$0xff] %vm925, %v5321
        %5380 = vst.msk [vmem:[#allocation2 + $0x70] sm:$0x3] %vm928, %v5323
        %5381 = vst.msk [vmem:[#allocation2 + $0x78] sm:$0xff] %vm925, %v5325
        %5382 = vst.msk [vmem:[#allocation2 + $0x80] sm:$0xff] %vm925, %v5327
        %5383 = vst.msk [vmem:[#allocation2 + $0x88] sm:$0x3] %vm928, %v5329
        %5384 = vst.msk [vmem:[#allocation2 + $0x90] sm:$0xff] %vm925, %v5331
        %5385 = vst.msk [vmem:[#allocation2 + $0x98] sm:$0xff] %vm925, %v5333
        %5386 = vst.msk [vmem:[#allocation2 + $0xa0] sm:$0x3] %vm928, %v5335
        %5387 = vst.msk [vmem:[#allocation2 + $0xa8] sm:$0xff] %vm925, %v5337
        %5388 = vst.msk [vmem:[#allocation2 + $0xb0] sm:$0xff] %vm925, %v5339
        %5389 = vst.msk [vmem:[#allocation2 + $0xb8] sm:$0x3] %vm928, %v5341
        %v5390 = vld [vmem:[#allocation2] sm:$0xff]
        %v5391 = vld [vmem:[#allocation2 + $0x8] sm:$0xff]
        %v5392 = vld [vmem:[#allocation2 + $0x18] sm:$0xff]
        %v5393 = vld [vmem:[#allocation2 + $0x20] sm:$0xff]
        %v5394 = vld [vmem:[#allocation2 + $0x30] sm:$0xff]
        %v5395 = vld [vmem:[#allocation2 + $0x38] sm:$0xff]
        %v5396 = vld [vmem:[#allocation2 + $0x48] sm:$0xff]
        %v5397 = vld [vmem:[#allocation2 + $0x50] sm:$0xff]
        %v5398 = vld [vmem:[#allocation2 + $0x60] sm:$0xff]
        %v5399 = vld [vmem:[#allocation2 + $0x68] sm:$0xff]
        %v5400 = vld [vmem:[#allocation2 + $0x78] sm:$0xff]
        %v5401 = vld [vmem:[#allocation2 + $0x80] sm:$0xff]
        %v5402 = vld [vmem:[#allocation2 + $0x90] sm:$0xff]
        %v5403 = vld [vmem:[#allocation2 + $0x98] sm:$0xff]
        %v5404 = vld [vmem:[#allocation2 + $0xa8] sm:$0xff]
        %v5405 = vld [vmem:[#allocation2 + $0xb0] sm:$0xff]
        %v5406 = vcombine.low %v5390, %v5394
        %v5407 = vcombine.high %v5390, %v5394
        %v5409 = vunpack.c.l.s4 1983009808
        %v5410 = vunpack.c.0.s8 %v5409
        %v5411 = vlaneseq
        %v5412 = vshrl.u32 %v5411, 7
        %v5413 = vsub.s32 %v5410, %v5412
        %v5414 = vrot.slane %v5406, %v5413
        %v5416 = vunpack.c.l.s4 1983009808
        %v5417 = vunpack.c.0.s8 %v5416
        %v5418 = vlaneseq
        %v5419 = vshrl.u32 %v5418, 7
        %v5420 = vsub.s32 %v5417, %v5419
        %v5421 = vrot.slane %v5407, %v5420
        %v5422 = vcombine.low %v5392, %v5396
        %v5423 = vcombine.high %v5392, %v5396
        %v5425 = vunpack.c.l.s4 1983009808
        %v5426 = vunpack.c.0.s8 %v5425
        %v5427 = vlaneseq
        %v5428 = vshrl.u32 %v5427, 7
        %v5429 = vsub.s32 %v5426, %v5428
        %v5430 = vrot.slane %v5422, %v5429
        %v5432 = vunpack.c.l.s4 1983009808
        %v5433 = vunpack.c.0.s8 %v5432
        %v5434 = vlaneseq
        %v5435 = vshrl.u32 %v5434, 7
        %v5436 = vsub.s32 %v5433, %v5435
        %v5437 = vrot.slane %v5423, %v5436
        %v5438 = vcombine.low %v5398, %v5402
        %v5439 = vcombine.high %v5398, %v5402
        %v5441 = vunpack.c.l.s4 1983009808
        %v5442 = vunpack.c.0.s8 %v5441
        %v5443 = vlaneseq
        %v5444 = vshrl.u32 %v5443, 7
        %v5445 = vsub.s32 %v5442, %v5444
        %v5446 = vrot.slane %v5438, %v5445
        %v5448 = vunpack.c.l.s4 1983009808
        %v5449 = vunpack.c.0.s8 %v5448
        %v5450 = vlaneseq
        %v5451 = vshrl.u32 %v5450, 7
        %v5452 = vsub.s32 %v5449, %v5451
        %v5453 = vrot.slane %v5439, %v5452
        %v5454 = vcombine.low %v5400, %v5404
        %v5455 = vcombine.high %v5400, %v5404
        %v5457 = vunpack.c.l.s4 1983009808
        %v5458 = vunpack.c.0.s8 %v5457
        %v5459 = vlaneseq
        %v5460 = vshrl.u32 %v5459, 7
        %v5461 = vsub.s32 %v5458, %v5460
        %v5462 = vrot.slane %v5454, %v5461
        %v5464 = vunpack.c.l.s4 1983009808
        %v5465 = vunpack.c.0.s8 %v5464
        %v5466 = vlaneseq
        %v5467 = vshrl.u32 %v5466, 7
        %v5468 = vsub.s32 %v5465, %v5467
        %v5469 = vrot.slane %v5455, %v5468
        %v5470 = vcombine.low %v5414, %v5430
        %v5471 = vcombine.high %v5414, %v5430
        %v5473 = vunpack.c.l.s4 1934713408
        %v5474 = vunpack.c.0.s8 %v5473
        %v5475 = vlaneseq
        %v5476 = vshrl.u32 %v5475, 7
        %v5477 = vsub.s32 %v5474, %v5476
        %v5478 = vrot.slane %v5470, %v5477
        %v5480 = vunpack.c.l.s4 1934713408
        %v5481 = vunpack.c.0.s8 %v5480
        %v5482 = vlaneseq
        %v5483 = vshrl.u32 %v5482, 7
        %v5484 = vsub.s32 %v5481, %v5483
        %v5485 = vrot.slane %v5471, %v5484
        %v5486 = vcombine.low %v5421, %v5437
        %v5487 = vcombine.high %v5421, %v5437
        %v5489 = vunpack.c.l.s4 1934713408
        %v5490 = vunpack.c.0.s8 %v5489
        %v5491 = vlaneseq
        %v5492 = vshrl.u32 %v5491, 7
        %v5493 = vsub.s32 %v5490, %v5492
        %v5494 = vrot.slane %v5486, %v5493
        %v5496 = vunpack.c.l.s4 1934713408
        %v5497 = vunpack.c.0.s8 %v5496
        %v5498 = vlaneseq
        %v5499 = vshrl.u32 %v5498, 7
        %v5500 = vsub.s32 %v5497, %v5499
        %v5501 = vrot.slane %v5487, %v5500
        %v5502 = vcombine.low %v5446, %v5462
        %v5503 = vcombine.high %v5446, %v5462
        %v5505 = vunpack.c.l.s4 1934713408
        %v5506 = vunpack.c.0.s8 %v5505
        %v5507 = vlaneseq
        %v5508 = vshrl.u32 %v5507, 7
        %v5509 = vsub.s32 %v5506, %v5508
        %v5510 = vrot.slane %v5502, %v5509
        %v5512 = vunpack.c.l.s4 1934713408
        %v5513 = vunpack.c.0.s8 %v5512
        %v5514 = vlaneseq
        %v5515 = vshrl.u32 %v5514, 7
        %v5516 = vsub.s32 %v5513, %v5515
        %v5517 = vrot.slane %v5503, %v5516
        %v5518 = vcombine.low %v5453, %v5469
        %v5519 = vcombine.high %v5453, %v5469
        %v5521 = vunpack.c.l.s4 1934713408
        %v5522 = vunpack.c.0.s8 %v5521
        %v5523 = vlaneseq
        %v5524 = vshrl.u32 %v5523, 7
        %v5525 = vsub.s32 %v5522, %v5524
        %v5526 = vrot.slane %v5518, %v5525
        %v5528 = vunpack.c.l.s4 1934713408
        %v5529 = vunpack.c.0.s8 %v5528
        %v5530 = vlaneseq
        %v5531 = vshrl.u32 %v5530, 7
        %v5532 = vsub.s32 %v5529, %v5531
        %v5533 = vrot.slane %v5519, %v5532
        %v5534 = vcombine.low %v5478, %v5510
        %v5535 = vcombine.high %v5478, %v5510
        %v5536 = vcombine.low %v5485, %v5517
        %v5537 = vcombine.high %v5485, %v5517
        %v5538 = vcombine.low %v5494, %v5526
        %v5539 = vcombine.high %v5494, %v5526
        %v5540 = vcombine.low %v5501, %v5533
        %v5541 = vcombine.high %v5501, %v5533
        %v5542 = vcombine.low %v5391, %v5395
        %v5543 = vcombine.high %v5391, %v5395
        %v5545 = vunpack.c.l.s4 1983009808
        %v5546 = vunpack.c.0.s8 %v5545
        %v5547 = vlaneseq
        %v5548 = vshrl.u32 %v5547, 7
        %v5549 = vsub.s32 %v5546, %v5548
        %v5550 = vrot.slane %v5542, %v5549
        %v5552 = vunpack.c.l.s4 1983009808
        %v5553 = vunpack.c.0.s8 %v5552
        %v5554 = vlaneseq
        %v5555 = vshrl.u32 %v5554, 7
        %v5556 = vsub.s32 %v5553, %v5555
        %v5557 = vrot.slane %v5543, %v5556
        %v5558 = vcombine.low %v5393, %v5397
        %v5559 = vcombine.high %v5393, %v5397
        %v5561 = vunpack.c.l.s4 1983009808
        %v5562 = vunpack.c.0.s8 %v5561
        %v5563 = vlaneseq
        %v5564 = vshrl.u32 %v5563, 7
        %v5565 = vsub.s32 %v5562, %v5564
        %v5566 = vrot.slane %v5558, %v5565
        %v5568 = vunpack.c.l.s4 1983009808
        %v5569 = vunpack.c.0.s8 %v5568
        %v5570 = vlaneseq
        %v5571 = vshrl.u32 %v5570, 7
        %v5572 = vsub.s32 %v5569, %v5571
        %v5573 = vrot.slane %v5559, %v5572
        %v5574 = vcombine.low %v5399, %v5403
        %v5575 = vcombine.high %v5399, %v5403
        %v5577 = vunpack.c.l.s4 1983009808
        %v5578 = vunpack.c.0.s8 %v5577
        %v5579 = vlaneseq
        %v5580 = vshrl.u32 %v5579, 7
        %v5581 = vsub.s32 %v5578, %v5580
        %v5582 = vrot.slane %v5574, %v5581
        %v5584 = vunpack.c.l.s4 1983009808
        %v5585 = vunpack.c.0.s8 %v5584
        %v5586 = vlaneseq
        %v5587 = vshrl.u32 %v5586, 7
        %v5588 = vsub.s32 %v5585, %v5587
        %v5589 = vrot.slane %v5575, %v5588
        %v5590 = vcombine.low %v5401, %v5405
        %v5591 = vcombine.high %v5401, %v5405
        %v5593 = vunpack.c.l.s4 1983009808
        %v5594 = vunpack.c.0.s8 %v5593
        %v5595 = vlaneseq
        %v5596 = vshrl.u32 %v5595, 7
        %v5597 = vsub.s32 %v5594, %v5596
        %v5598 = vrot.slane %v5590, %v5597
        %v5600 = vunpack.c.l.s4 1983009808
        %v5601 = vunpack.c.0.s8 %v5600
        %v5602 = vlaneseq
        %v5603 = vshrl.u32 %v5602, 7
        %v5604 = vsub.s32 %v5601, %v5603
        %v5605 = vrot.slane %v5591, %v5604
        %v5606 = vcombine.low %v5550, %v5566
        %v5607 = vcombine.high %v5550, %v5566
        %v5609 = vunpack.c.l.s4 1934713408
        %v5610 = vunpack.c.0.s8 %v5609
        %v5611 = vlaneseq
        %v5612 = vshrl.u32 %v5611, 7
        %v5613 = vsub.s32 %v5610, %v5612
        %v5614 = vrot.slane %v5606, %v5613
        %v5616 = vunpack.c.l.s4 1934713408
        %v5617 = vunpack.c.0.s8 %v5616
        %v5618 = vlaneseq
        %v5619 = vshrl.u32 %v5618, 7
        %v5620 = vsub.s32 %v5617, %v5619
        %v5621 = vrot.slane %v5607, %v5620
        %v5622 = vcombine.low %v5557, %v5573
        %v5623 = vcombine.high %v5557, %v5573
        %v5625 = vunpack.c.l.s4 1934713408
        %v5626 = vunpack.c.0.s8 %v5625
        %v5627 = vlaneseq
        %v5628 = vshrl.u32 %v5627, 7
        %v5629 = vsub.s32 %v5626, %v5628
        %v5630 = vrot.slane %v5622, %v5629
        %v5632 = vunpack.c.l.s4 1934713408
        %v5633 = vunpack.c.0.s8 %v5632
        %v5634 = vlaneseq
        %v5635 = vshrl.u32 %v5634, 7
        %v5636 = vsub.s32 %v5633, %v5635
        %v5637 = vrot.slane %v5623, %v5636
        %v5638 = vcombine.low %v5582, %v5598
        %v5639 = vcombine.high %v5582, %v5598
        %v5641 = vunpack.c.l.s4 1934713408
        %v5642 = vunpack.c.0.s8 %v5641
        %v5643 = vlaneseq
        %v5644 = vshrl.u32 %v5643, 7
        %v5645 = vsub.s32 %v5642, %v5644
        %v5646 = vrot.slane %v5638, %v5645
        %v5648 = vunpack.c.l.s4 1934713408
        %v5649 = vunpack.c.0.s8 %v5648
        %v5650 = vlaneseq
        %v5651 = vshrl.u32 %v5650, 7
        %v5652 = vsub.s32 %v5649, %v5651
        %v5653 = vrot.slane %v5639, %v5652
        %v5654 = vcombine.low %v5589, %v5605
        %v5655 = vcombine.high %v5589, %v5605
        %v5657 = vunpack.c.l.s4 1934713408
        %v5658 = vunpack.c.0.s8 %v5657
        %v5659 = vlaneseq
        %v5660 = vshrl.u32 %v5659, 7
        %v5661 = vsub.s32 %v5658, %v5660
        %v5662 = vrot.slane %v5654, %v5661
        %v5664 = vunpack.c.l.s4 1934713408
        %v5665 = vunpack.c.0.s8 %v5664
        %v5666 = vlaneseq
        %v5667 = vshrl.u32 %v5666, 7
        %v5668 = vsub.s32 %v5665, %v5667
        %v5669 = vrot.slane %v5655, %v5668
        %v5670 = vcombine.low %v5614, %v5646
        %v5671 = vcombine.high %v5614, %v5646
        %v5672 = vcombine.low %v5621, %v5653
        %v5673 = vcombine.high %v5621, %v5653
        %v5674 = vcombine.low %v5630, %v5662
        %v5675 = vcombine.high %v5630, %v5662
        %v5676 = vcombine.low %v5637, %v5669
        %v5677 = vcombine.high %v5637, %v5669
        %5679 = vrot.lane.b32.xlu0 %v5535, 16
        %v5680 = vpop.permute.xlu0 %5679
        %5683 = vrot.lane.b32.xlu0 %v5536, 32
        %v5684 = vpop.permute.xlu0 %5683
        %5687 = vrot.lane.b32.xlu0 %v5537, 48
        %v5688 = vpop.permute.xlu0 %5687
        %5691 = vrot.lane.b32.xlu0 %v5538, 64
        %v5692 = vpop.permute.xlu0 %5691
        %5695 = vrot.lane.b32.xlu0 %v5539, 80
        %v5696 = vpop.permute.xlu0 %5695
        %5699 = vrot.lane.b32.xlu0 %v5540, 96
        %v5700 = vpop.permute.xlu0 %5699
        %5703 = vrot.lane.b32.xlu0 %v5541, 112
        %v5704 = vpop.permute.xlu0 %5703
        %5707 = vrot.lane.b32.xlu0 %v5671, 16
        %v5708 = vpop.permute.xlu0 %5707
        %5711 = vrot.lane.b32.xlu0 %v5672, 32
        %v5712 = vpop.permute.xlu0 %5711
        %5715 = vrot.lane.b32.xlu0 %v5673, 48
        %v5716 = vpop.permute.xlu0 %5715
        %5719 = vrot.lane.b32.xlu0 %v5674, 64
        %v5720 = vpop.permute.xlu0 %5719
        %5723 = vrot.lane.b32.xlu0 %v5675, 80
        %v5724 = vpop.permute.xlu0 %5723
        %5727 = vrot.lane.b32.xlu0 %v5676, 96
        %v5728 = vpop.permute.xlu0 %5727
        %5731 = vrot.lane.b32.xlu0 %v5677, 112
        %v5732 = vpop.permute.xlu0 %5731
        %v5734 = vsel %vm1295, %v5534, %v5680
        %v5735 = vsel %vm1297, %v5734, %v5684
        %v5736 = vsel %vm1299, %v5735, %v5688
        %v5737 = vsel %vm1301, %v5736, %v5692
        %v5738 = vsel %vm1303, %v5737, %v5696
        %v5739 = vsel %vm1305, %v5738, %v5700
        %v5740 = vsel %vm1307, %v5739, %v5704
        %v5741 = vsel %vm1295, %v5670, %v5708
        %v5742 = vsel %vm1297, %v5741, %v5712
        %v5743 = vsel %vm1299, %v5742, %v5716
        %v5744 = vsel %vm1301, %v5743, %v5720
        %v5745 = vsel %vm1303, %v5744, %v5724
        %v5746 = vsel %vm1305, %v5745, %v5728
        %v5747 = vsel %vm1307, %v5746, %v5732
        %5748 = vst [vmem:[#allocation3] sm:$0xff] %v5740
        %5749 = vst [vmem:[#allocation3 + $0x8] sm:$0xff] %v5747
        %v5750 = vld [vmem:[#allocation2] sm:$0xff]
        %v5751 = vld [vmem:[#allocation2 + $0x8] sm:$0xff]
        %v5752 = vld [vmem:[#allocation2 + $0x18] sm:$0xff]
        %v5753 = vld [vmem:[#allocation2 + $0x20] sm:$0xff]
        %v5754 = vld [vmem:[#allocation2 + $0x30] sm:$0xff]
        %v5755 = vld [vmem:[#allocation2 + $0x38] sm:$0xff]
        %v5756 = vld [vmem:[#allocation2 + $0x48] sm:$0xff]
        %v5757 = vld [vmem:[#allocation2 + $0x50] sm:$0xff]
        %v5758 = vld [vmem:[#allocation2 + $0x60] sm:$0xff]
        %v5759 = vld [vmem:[#allocation2 + $0x68] sm:$0xff]
        %v5760 = vld [vmem:[#allocation2 + $0x78] sm:$0xff]
        %v5761 = vld [vmem:[#allocation2 + $0x80] sm:$0xff]
        %v5762 = vld [vmem:[#allocation2 + $0x90] sm:$0xff]
        %v5763 = vld [vmem:[#allocation2 + $0x98] sm:$0xff]
        %v5764 = vld [vmem:[#allocation2 + $0xa8] sm:$0xff]
        %v5765 = vld [vmem:[#allocation2 + $0xb0] sm:$0xff]
        %5782 = vrot.lane.b32.xlu0 %v5750, 127
        %v5783 = vpop.permute.xlu0 %5782
        %5784 = vrot.lane.b32.xlu0 %v5751, 127
        %v5785 = vpop.permute.xlu0 %5784
        %5786 = vrot.lane.b32.xlu0 %v5752, 127
        %v5787 = vpop.permute.xlu0 %5786
        %5788 = vrot.lane.b32.xlu0 %v5753, 127
        %v5789 = vpop.permute.xlu0 %5788
        %5790 = vrot.lane.b32.xlu0 %v5754, 127
        %v5791 = vpop.permute.xlu0 %5790
        %5792 = vrot.lane.b32.xlu0 %v5755, 127
        %v5793 = vpop.permute.xlu0 %5792
        %5794 = vrot.lane.b32.xlu0 %v5756, 127
        %v5795 = vpop.permute.xlu0 %5794
        %5796 = vrot.lane.b32.xlu0 %v5757, 127
        %v5797 = vpop.permute.xlu0 %5796
        %5798 = vrot.lane.b32.xlu0 %v5758, 127
        %v5799 = vpop.permute.xlu0 %5798
        %5800 = vrot.lane.b32.xlu0 %v5759, 127
        %v5801 = vpop.permute.xlu0 %5800
        %5802 = vrot.lane.b32.xlu0 %v5760, 127
        %v5803 = vpop.permute.xlu0 %5802
        %5804 = vrot.lane.b32.xlu0 %v5761, 127
        %v5805 = vpop.permute.xlu0 %5804
        %5806 = vrot.lane.b32.xlu0 %v5762, 127
        %v5807 = vpop.permute.xlu0 %5806
        %5808 = vrot.lane.b32.xlu0 %v5763, 127
        %v5809 = vpop.permute.xlu0 %5808
        %5810 = vrot.lane.b32.xlu0 %v5764, 127
        %v5811 = vpop.permute.xlu0 %5810
        %5812 = vrot.lane.b32.xlu0 %v5765, 127
        %v5813 = vpop.permute.xlu0 %5812
        %v5830 = vcombine.low %v5783, %v5791
        %v5831 = vcombine.high %v5783, %v5791
        %v5833 = vunpack.c.l.s4 1983009808
        %v5834 = vunpack.c.0.s8 %v5833
        %v5835 = vlaneseq
        %v5836 = vshrl.u32 %v5835, 7
        %v5837 = vsub.s32 %v5834, %v5836
        %v5838 = vrot.slane %v5830, %v5837
        %v5840 = vunpack.c.l.s4 1983009808
        %v5841 = vunpack.c.0.s8 %v5840
        %v5842 = vlaneseq
        %v5843 = vshrl.u32 %v5842, 7
        %v5844 = vsub.s32 %v5841, %v5843
        %v5845 = vrot.slane %v5831, %v5844
        %v5846 = vcombine.low %v5787, %v5795
        %v5847 = vcombine.high %v5787, %v5795
        %v5849 = vunpack.c.l.s4 1983009808
        %v5850 = vunpack.c.0.s8 %v5849
        %v5851 = vlaneseq
        %v5852 = vshrl.u32 %v5851, 7
        %v5853 = vsub.s32 %v5850, %v5852
        %v5854 = vrot.slane %v5846, %v5853
        %v5856 = vunpack.c.l.s4 1983009808
        %v5857 = vunpack.c.0.s8 %v5856
        %v5858 = vlaneseq
        %v5859 = vshrl.u32 %v5858, 7
        %v5860 = vsub.s32 %v5857, %v5859
        %v5861 = vrot.slane %v5847, %v5860
        %v5862 = vcombine.low %v5799, %v5807
        %v5863 = vcombine.high %v5799, %v5807
        %v5865 = vunpack.c.l.s4 1983009808
        %v5866 = vunpack.c.0.s8 %v5865
        %v5867 = vlaneseq
        %v5868 = vshrl.u32 %v5867, 7
        %v5869 = vsub.s32 %v5866, %v5868
        %v5870 = vrot.slane %v5862, %v5869
        %v5872 = vunpack.c.l.s4 1983009808
        %v5873 = vunpack.c.0.s8 %v5872
        %v5874 = vlaneseq
        %v5875 = vshrl.u32 %v5874, 7
        %v5876 = vsub.s32 %v5873, %v5875
        %v5877 = vrot.slane %v5863, %v5876
        %v5878 = vcombine.low %v5803, %v5811
        %v5879 = vcombine.high %v5803, %v5811
        %v5881 = vunpack.c.l.s4 1983009808
        %v5882 = vunpack.c.0.s8 %v5881
        %v5883 = vlaneseq
        %v5884 = vshrl.u32 %v5883, 7
        %v5885 = vsub.s32 %v5882, %v5884
        %v5886 = vrot.slane %v5878, %v5885
        %v5888 = vunpack.c.l.s4 1983009808
        %v5889 = vunpack.c.0.s8 %v5888
        %v5890 = vlaneseq
        %v5891 = vshrl.u32 %v5890, 7
        %v5892 = vsub.s32 %v5889, %v5891
        %v5893 = vrot.slane %v5879, %v5892
        %v5894 = vcombine.low %v5838, %v5854
        %v5895 = vcombine.high %v5838, %v5854
        %v5897 = vunpack.c.l.s4 1934713408
        %v5898 = vunpack.c.0.s8 %v5897
        %v5899 = vlaneseq
        %v5900 = vshrl.u32 %v5899, 7
        %v5901 = vsub.s32 %v5898, %v5900
        %v5902 = vrot.slane %v5894, %v5901
        %v5904 = vunpack.c.l.s4 1934713408
        %v5905 = vunpack.c.0.s8 %v5904
        %v5906 = vlaneseq
        %v5907 = vshrl.u32 %v5906, 7
        %v5908 = vsub.s32 %v5905, %v5907
        %v5909 = vrot.slane %v5895, %v5908
        %v5910 = vcombine.low %v5845, %v5861
        %v5911 = vcombine.high %v5845, %v5861
        %v5913 = vunpack.c.l.s4 1934713408
        %v5914 = vunpack.c.0.s8 %v5913
        %v5915 = vlaneseq
        %v5916 = vshrl.u32 %v5915, 7
        %v5917 = vsub.s32 %v5914, %v5916
        %v5918 = vrot.slane %v5910, %v5917
        %v5920 = vunpack.c.l.s4 1934713408
        %v5921 = vunpack.c.0.s8 %v5920
        %v5922 = vlaneseq
        %v5923 = vshrl.u32 %v5922, 7
        %v5924 = vsub.s32 %v5921, %v5923
        %v5925 = vrot.slane %v5911, %v5924
        %v5926 = vcombine.low %v5870, %v5886
        %v5927 = vcombine.high %v5870, %v5886
        %v5929 = vunpack.c.l.s4 1934713408
        %v5930 = vunpack.c.0.s8 %v5929
        %v5931 = vlaneseq
        %v5932 = vshrl.u32 %v5931, 7
        %v5933 = vsub.s32 %v5930, %v5932
        %v5934 = vrot.slane %v5926, %v5933
        %v5936 = vunpack.c.l.s4 1934713408
        %v5937 = vunpack.c.0.s8 %v5936
        %v5938 = vlaneseq
        %v5939 = vshrl.u32 %v5938, 7
        %v5940 = vsub.s32 %v5937, %v5939
        %v5941 = vrot.slane %v5927, %v5940
        %v5942 = vcombine.low %v5877, %v5893
        %v5943 = vcombine.high %v5877, %v5893
        %v5945 = vunpack.c.l.s4 1934713408
        %v5946 = vunpack.c.0.s8 %v5945
        %v5947 = vlaneseq
        %v5948 = vshrl.u32 %v5947, 7
        %v5949 = vsub.s32 %v5946, %v5948
        %v5950 = vrot.slane %v5942, %v5949
        %v5952 = vunpack.c.l.s4 1934713408
        %v5953 = vunpack.c.0.s8 %v5952
        %v5954 = vlaneseq
        %v5955 = vshrl.u32 %v5954, 7
        %v5956 = vsub.s32 %v5953, %v5955
        %v5957 = vrot.slane %v5943, %v5956
        %v5958 = vcombine.low %v5902, %v5934
        %v5959 = vcombine.high %v5902, %v5934
        %v5960 = vcombine.low %v5909, %v5941
        %v5961 = vcombine.high %v5909, %v5941
        %v5962 = vcombine.low %v5918, %v5950
        %v5963 = vcombine.high %v5918, %v5950
        %v5964 = vcombine.low %v5925, %v5957
        %v5965 = vcombine.high %v5925, %v5957
        %v5966 = vcombine.low %v5785, %v5793
        %v5967 = vcombine.high %v5785, %v5793
        %v5969 = vunpack.c.l.s4 1983009808
        %v5970 = vunpack.c.0.s8 %v5969
        %v5971 = vlaneseq
        %v5972 = vshrl.u32 %v5971, 7
        %v5973 = vsub.s32 %v5970, %v5972
        %v5974 = vrot.slane %v5966, %v5973
        %v5976 = vunpack.c.l.s4 1983009808
        %v5977 = vunpack.c.0.s8 %v5976
        %v5978 = vlaneseq
        %v5979 = vshrl.u32 %v5978, 7
        %v5980 = vsub.s32 %v5977, %v5979
        %v5981 = vrot.slane %v5967, %v5980
        %v5982 = vcombine.low %v5789, %v5797
        %v5983 = vcombine.high %v5789, %v5797
        %v5985 = vunpack.c.l.s4 1983009808
        %v5986 = vunpack.c.0.s8 %v5985
        %v5987 = vlaneseq
        %v5988 = vshrl.u32 %v5987, 7
        %v5989 = vsub.s32 %v5986, %v5988
        %v5990 = vrot.slane %v5982, %v5989
        %v5992 = vunpack.c.l.s4 1983009808
        %v5993 = vunpack.c.0.s8 %v5992
        %v5994 = vlaneseq
        %v5995 = vshrl.u32 %v5994, 7
        %v5996 = vsub.s32 %v5993, %v5995
        %v5997 = vrot.slane %v5983, %v5996
        %v5998 = vcombine.low %v5801, %v5809
        %v5999 = vcombine.high %v5801, %v5809
        %v6001 = vunpack.c.l.s4 1983009808
        %v6002 = vunpack.c.0.s8 %v6001
        %v6003 = vlaneseq
        %v6004 = vshrl.u32 %v6003, 7
        %v6005 = vsub.s32 %v6002, %v6004
        %v6006 = vrot.slane %v5998, %v6005
        %v6008 = vunpack.c.l.s4 1983009808
        %v6009 = vunpack.c.0.s8 %v6008
        %v6010 = vlaneseq
        %v6011 = vshrl.u32 %v6010, 7
        %v6012 = vsub.s32 %v6009, %v6011
        %v6013 = vrot.slane %v5999, %v6012
        %v6014 = vcombine.low %v5805, %v5813
        %v6015 = vcombine.high %v5805, %v5813
        %v6017 = vunpack.c.l.s4 1983009808
        %v6018 = vunpack.c.0.s8 %v6017
        %v6019 = vlaneseq
        %v6020 = vshrl.u32 %v6019, 7
        %v6021 = vsub.s32 %v6018, %v6020
        %v6022 = vrot.slane %v6014, %v6021
        %v6024 = vunpack.c.l.s4 1983009808
        %v6025 = vunpack.c.0.s8 %v6024
        %v6026 = vlaneseq
        %v6027 = vshrl.u32 %v6026, 7
        %v6028 = vsub.s32 %v6025, %v6027
        %v6029 = vrot.slane %v6015, %v6028
        %v6030 = vcombine.low %v5974, %v5990
        %v6031 = vcombine.high %v5974, %v5990
        %v6033 = vunpack.c.l.s4 1934713408
        %v6034 = vunpack.c.0.s8 %v6033
        %v6035 = vlaneseq
        %v6036 = vshrl.u32 %v6035, 7
        %v6037 = vsub.s32 %v6034, %v6036
        %v6038 = vrot.slane %v6030, %v6037
        %v6040 = vunpack.c.l.s4 1934713408
        %v6041 = vunpack.c.0.s8 %v6040
        %v6042 = vlaneseq
        %v6043 = vshrl.u32 %v6042, 7
        %v6044 = vsub.s32 %v6041, %v6043
        %v6045 = vrot.slane %v6031, %v6044
        %v6046 = vcombine.low %v5981, %v5997
        %v6047 = vcombine.high %v5981, %v5997
        %v6049 = vunpack.c.l.s4 1934713408
        %v6050 = vunpack.c.0.s8 %v6049
        %v6051 = vlaneseq
        %v6052 = vshrl.u32 %v6051, 7
        %v6053 = vsub.s32 %v6050, %v6052
        %v6054 = vrot.slane %v6046, %v6053
        %v6056 = vunpack.c.l.s4 1934713408
        %v6057 = vunpack.c.0.s8 %v6056
        %v6058 = vlaneseq
        %v6059 = vshrl.u32 %v6058, 7
        %v6060 = vsub.s32 %v6057, %v6059
        %v6061 = vrot.slane %v6047, %v6060
        %v6062 = vcombine.low %v6006, %v6022
        %v6063 = vcombine.high %v6006, %v6022
        %v6065 = vunpack.c.l.s4 1934713408
        %v6066 = vunpack.c.0.s8 %v6065
        %v6067 = vlaneseq
        %v6068 = vshrl.u32 %v6067, 7
        %v6069 = vsub.s32 %v6066, %v6068
        %v6070 = vrot.slane %v6062, %v6069
        %v6072 = vunpack.c.l.s4 1934713408
        %v6073 = vunpack.c.0.s8 %v6072
        %v6074 = vlaneseq
        %v6075 = vshrl.u32 %v6074, 7
        %v6076 = vsub.s32 %v6073, %v6075
        %v6077 = vrot.slane %v6063, %v6076
        %v6078 = vcombine.low %v6013, %v6029
        %v6079 = vcombine.high %v6013, %v6029
        %v6081 = vunpack.c.l.s4 1934713408
        %v6082 = vunpack.c.0.s8 %v6081
        %v6083 = vlaneseq
        %v6084 = vshrl.u32 %v6083, 7
        %v6085 = vsub.s32 %v6082, %v6084
        %v6086 = vrot.slane %v6078, %v6085
        %v6088 = vunpack.c.l.s4 1934713408
        %v6089 = vunpack.c.0.s8 %v6088
        %v6090 = vlaneseq
        %v6091 = vshrl.u32 %v6090, 7
        %v6092 = vsub.s32 %v6089, %v6091
        %v6093 = vrot.slane %v6079, %v6092
        %v6094 = vcombine.low %v6038, %v6070
        %v6095 = vcombine.high %v6038, %v6070
        %v6096 = vcombine.low %v6045, %v6077
        %v6097 = vcombine.high %v6045, %v6077
        %v6098 = vcombine.low %v6054, %v6086
        %v6099 = vcombine.high %v6054, %v6086
        %v6100 = vcombine.low %v6061, %v6093
        %v6101 = vcombine.high %v6061, %v6093
        %6103 = vrot.lane.b32.xlu0 %v5959, 16
        %v6104 = vpop.permute.xlu0 %6103
        %6107 = vrot.lane.b32.xlu0 %v5960, 32
        %v6108 = vpop.permute.xlu0 %6107
        %6111 = vrot.lane.b32.xlu0 %v5961, 48
        %v6112 = vpop.permute.xlu0 %6111
        %6115 = vrot.lane.b32.xlu0 %v5962, 64
        %v6116 = vpop.permute.xlu0 %6115
        %6119 = vrot.lane.b32.xlu0 %v5963, 80
        %v6120 = vpop.permute.xlu0 %6119
        %6123 = vrot.lane.b32.xlu0 %v5964, 96
        %v6124 = vpop.permute.xlu0 %6123
        %6127 = vrot.lane.b32.xlu0 %v5965, 112
        %v6128 = vpop.permute.xlu0 %6127
        %6131 = vrot.lane.b32.xlu0 %v6095, 16
        %v6132 = vpop.permute.xlu0 %6131
        %6135 = vrot.lane.b32.xlu0 %v6096, 32
        %v6136 = vpop.permute.xlu0 %6135
        %6139 = vrot.lane.b32.xlu0 %v6097, 48
        %v6140 = vpop.permute.xlu0 %6139
        %6143 = vrot.lane.b32.xlu0 %v6098, 64
        %v6144 = vpop.permute.xlu0 %6143
        %6147 = vrot.lane.b32.xlu0 %v6099, 80
        %v6148 = vpop.permute.xlu0 %6147
        %6151 = vrot.lane.b32.xlu0 %v6100, 96
        %v6152 = vpop.permute.xlu0 %6151
        %6155 = vrot.lane.b32.xlu0 %v6101, 112
        %v6156 = vpop.permute.xlu0 %6155
        %v6158 = vsel %vm1295, %v5958, %v6104
        %v6159 = vsel %vm1297, %v6158, %v6108
        %v6160 = vsel %vm1299, %v6159, %v6112
        %v6161 = vsel %vm1301, %v6160, %v6116
        %v6162 = vsel %vm1303, %v6161, %v6120
        %v6163 = vsel %vm1305, %v6162, %v6124
        %v6164 = vsel %vm1307, %v6163, %v6128
        %v6165 = vsel %vm1295, %v6094, %v6132
        %v6166 = vsel %vm1297, %v6165, %v6136
        %v6167 = vsel %vm1299, %v6166, %v6140
        %v6168 = vsel %vm1301, %v6167, %v6144
        %v6169 = vsel %vm1303, %v6168, %v6148
        %v6170 = vsel %vm1305, %v6169, %v6152
        %v6171 = vsel %vm1307, %v6170, %v6156
        %6172 = vst [vmem:[#allocation3 + $0x10] sm:$0xff] %v6164
        %6173 = vst [vmem:[#allocation3 + $0x18] sm:$0xff] %v6171
        %v6174 = vld [vmem:[#allocation2] sm:$0xff]
        %v6175 = vld [vmem:[#allocation2 + $0x8] sm:$0xff]
        %v6176 = vld [vmem:[#allocation2 + $0x18] sm:$0xff]
        %v6177 = vld [vmem:[#allocation2 + $0x20] sm:$0xff]
        %v6178 = vld [vmem:[#allocation2 + $0x30] sm:$0xff]
        %v6179 = vld [vmem:[#allocation2 + $0x38] sm:$0xff]
        %v6180 = vld [vmem:[#allocation2 + $0x48] sm:$0xff]
        %v6181 = vld [vmem:[#allocation2 + $0x50] sm:$0xff]
        %v6182 = vld [vmem:[#allocation2 + $0x60] sm:$0xff]
        %v6183 = vld [vmem:[#allocation2 + $0x68] sm:$0xff]
        %v6184 = vld [vmem:[#allocation2 + $0x78] sm:$0xff]
        %v6185 = vld [vmem:[#allocation2 + $0x80] sm:$0xff]
        %v6186 = vld [vmem:[#allocation2 + $0x90] sm:$0xff]
        %v6187 = vld [vmem:[#allocation2 + $0x98] sm:$0xff]
        %v6188 = vld [vmem:[#allocation2 + $0xa8] sm:$0xff]
        %v6189 = vld [vmem:[#allocation2 + $0xb0] sm:$0xff]
        %6206 = vrot.lane.b32.xlu0 %v6174, 126
        %v6207 = vpop.permute.xlu0 %6206
        %6208 = vrot.lane.b32.xlu0 %v6175, 126
        %v6209 = vpop.permute.xlu0 %6208
        %6210 = vrot.lane.b32.xlu0 %v6176, 126
        %v6211 = vpop.permute.xlu0 %6210
        %6212 = vrot.lane.b32.xlu0 %v6177, 126
        %v6213 = vpop.permute.xlu0 %6212
        %6214 = vrot.lane.b32.xlu0 %v6178, 126
        %v6215 = vpop.permute.xlu0 %6214
        %6216 = vrot.lane.b32.xlu0 %v6179, 126
        %v6217 = vpop.permute.xlu0 %6216
        %6218 = vrot.lane.b32.xlu0 %v6180, 126
        %v6219 = vpop.permute.xlu0 %6218
        %6220 = vrot.lane.b32.xlu0 %v6181, 126
        %v6221 = vpop.permute.xlu0 %6220
        %6222 = vrot.lane.b32.xlu0 %v6182, 126
        %v6223 = vpop.permute.xlu0 %6222
        %6224 = vrot.lane.b32.xlu0 %v6183, 126
        %v6225 = vpop.permute.xlu0 %6224
        %6226 = vrot.lane.b32.xlu0 %v6184, 126
        %v6227 = vpop.permute.xlu0 %6226
        %6228 = vrot.lane.b32.xlu0 %v6185, 126
        %v6229 = vpop.permute.xlu0 %6228
        %6230 = vrot.lane.b32.xlu0 %v6186, 126
        %v6231 = vpop.permute.xlu0 %6230
        %6232 = vrot.lane.b32.xlu0 %v6187, 126
        %v6233 = vpop.permute.xlu0 %6232
        %6234 = vrot.lane.b32.xlu0 %v6188, 126
        %v6235 = vpop.permute.xlu0 %6234
        %6236 = vrot.lane.b32.xlu0 %v6189, 126
        %v6237 = vpop.permute.xlu0 %6236
        %v6254 = vcombine.low %v6207, %v6215
        %v6255 = vcombine.high %v6207, %v6215
        %v6257 = vunpack.c.l.s4 1983009808
        %v6258 = vunpack.c.0.s8 %v6257
        %v6259 = vlaneseq
        %v6260 = vshrl.u32 %v6259, 7
        %v6261 = vsub.s32 %v6258, %v6260
        %v6262 = vrot.slane %v6254, %v6261
        %v6264 = vunpack.c.l.s4 1983009808
        %v6265 = vunpack.c.0.s8 %v6264
        %v6266 = vlaneseq
        %v6267 = vshrl.u32 %v6266, 7
        %v6268 = vsub.s32 %v6265, %v6267
        %v6269 = vrot.slane %v6255, %v6268
        %v6270 = vcombine.low %v6211, %v6219
        %v6271 = vcombine.high %v6211, %v6219
        %v6273 = vunpack.c.l.s4 1983009808
        %v6274 = vunpack.c.0.s8 %v6273
        %v6275 = vlaneseq
        %v6276 = vshrl.u32 %v6275, 7
        %v6277 = vsub.s32 %v6274, %v6276
        %v6278 = vrot.slane %v6270, %v6277
        %v6280 = vunpack.c.l.s4 1983009808
        %v6281 = vunpack.c.0.s8 %v6280
        %v6282 = vlaneseq
        %v6283 = vshrl.u32 %v6282, 7
        %v6284 = vsub.s32 %v6281, %v6283
        %v6285 = vrot.slane %v6271, %v6284
        %v6286 = vcombine.low %v6223, %v6231
        %v6287 = vcombine.high %v6223, %v6231
        %v6289 = vunpack.c.l.s4 1983009808
        %v6290 = vunpack.c.0.s8 %v6289
        %v6291 = vlaneseq
        %v6292 = vshrl.u32 %v6291, 7
        %v6293 = vsub.s32 %v6290, %v6292
        %v6294 = vrot.slane %v6286, %v6293
        %v6296 = vunpack.c.l.s4 1983009808
        %v6297 = vunpack.c.0.s8 %v6296
        %v6298 = vlaneseq
        %v6299 = vshrl.u32 %v6298, 7
        %v6300 = vsub.s32 %v6297, %v6299
        %v6301 = vrot.slane %v6287, %v6300
        %v6302 = vcombine.low %v6227, %v6235
        %v6303 = vcombine.high %v6227, %v6235
        %v6305 = vunpack.c.l.s4 1983009808
        %v6306 = vunpack.c.0.s8 %v6305
        %v6307 = vlaneseq
        %v6308 = vshrl.u32 %v6307, 7
        %v6309 = vsub.s32 %v6306, %v6308
        %v6310 = vrot.slane %v6302, %v6309
        %v6312 = vunpack.c.l.s4 1983009808
        %v6313 = vunpack.c.0.s8 %v6312
        %v6314 = vlaneseq
        %v6315 = vshrl.u32 %v6314, 7
        %v6316 = vsub.s32 %v6313, %v6315
        %v6317 = vrot.slane %v6303, %v6316
        %v6318 = vcombine.low %v6262, %v6278
        %v6319 = vcombine.high %v6262, %v6278
        %v6321 = vunpack.c.l.s4 1934713408
        %v6322 = vunpack.c.0.s8 %v6321
        %v6323 = vlaneseq
        %v6324 = vshrl.u32 %v6323, 7
        %v6325 = vsub.s32 %v6322, %v6324
        %v6326 = vrot.slane %v6318, %v6325
        %v6328 = vunpack.c.l.s4 1934713408
        %v6329 = vunpack.c.0.s8 %v6328
        %v6330 = vlaneseq
        %v6331 = vshrl.u32 %v6330, 7
        %v6332 = vsub.s32 %v6329, %v6331
        %v6333 = vrot.slane %v6319, %v6332
        %v6334 = vcombine.low %v6269, %v6285
        %v6335 = vcombine.high %v6269, %v6285
        %v6337 = vunpack.c.l.s4 1934713408
        %v6338 = vunpack.c.0.s8 %v6337
        %v6339 = vlaneseq
        %v6340 = vshrl.u32 %v6339, 7
        %v6341 = vsub.s32 %v6338, %v6340
        %v6342 = vrot.slane %v6334, %v6341
        %v6344 = vunpack.c.l.s4 1934713408
        %v6345 = vunpack.c.0.s8 %v6344
        %v6346 = vlaneseq
        %v6347 = vshrl.u32 %v6346, 7
        %v6348 = vsub.s32 %v6345, %v6347
        %v6349 = vrot.slane %v6335, %v6348
        %v6350 = vcombine.low %v6294, %v6310
        %v6351 = vcombine.high %v6294, %v6310
        %v6353 = vunpack.c.l.s4 1934713408
        %v6354 = vunpack.c.0.s8 %v6353
        %v6355 = vlaneseq
        %v6356 = vshrl.u32 %v6355, 7
        %v6357 = vsub.s32 %v6354, %v6356
        %v6358 = vrot.slane %v6350, %v6357
        %v6360 = vunpack.c.l.s4 1934713408
        %v6361 = vunpack.c.0.s8 %v6360
        %v6362 = vlaneseq
        %v6363 = vshrl.u32 %v6362, 7
        %v6364 = vsub.s32 %v6361, %v6363
        %v6365 = vrot.slane %v6351, %v6364
        %v6366 = vcombine.low %v6301, %v6317
        %v6367 = vcombine.high %v6301, %v6317
        %v6369 = vunpack.c.l.s4 1934713408
        %v6370 = vunpack.c.0.s8 %v6369
        %v6371 = vlaneseq
        %v6372 = vshrl.u32 %v6371, 7
        %v6373 = vsub.s32 %v6370, %v6372
        %v6374 = vrot.slane %v6366, %v6373
        %v6376 = vunpack.c.l.s4 1934713408
        %v6377 = vunpack.c.0.s8 %v6376
        %v6378 = vlaneseq
        %v6379 = vshrl.u32 %v6378, 7
        %v6380 = vsub.s32 %v6377, %v6379
        %v6381 = vrot.slane %v6367, %v6380
        %v6382 = vcombine.low %v6326, %v6358
        %v6383 = vcombine.high %v6326, %v6358
        %v6384 = vcombine.low %v6333, %v6365
        %v6385 = vcombine.high %v6333, %v6365
        %v6386 = vcombine.low %v6342, %v6374
        %v6387 = vcombine.high %v6342, %v6374
        %v6388 = vcombine.low %v6349, %v6381
        %v6389 = vcombine.high %v6349, %v6381
        %v6390 = vcombine.low %v6209, %v6217
        %v6391 = vcombine.high %v6209, %v6217
        %v6393 = vunpack.c.l.s4 1983009808
        %v6394 = vunpack.c.0.s8 %v6393
        %v6395 = vlaneseq
        %v6396 = vshrl.u32 %v6395, 7
        %v6397 = vsub.s32 %v6394, %v6396
        %v6398 = vrot.slane %v6390, %v6397
        %v6400 = vunpack.c.l.s4 1983009808
        %v6401 = vunpack.c.0.s8 %v6400
        %v6402 = vlaneseq
        %v6403 = vshrl.u32 %v6402, 7
        %v6404 = vsub.s32 %v6401, %v6403
        %v6405 = vrot.slane %v6391, %v6404
        %v6406 = vcombine.low %v6213, %v6221
        %v6407 = vcombine.high %v6213, %v6221
        %v6409 = vunpack.c.l.s4 1983009808
        %v6410 = vunpack.c.0.s8 %v6409
        %v6411 = vlaneseq
        %v6412 = vshrl.u32 %v6411, 7
        %v6413 = vsub.s32 %v6410, %v6412
        %v6414 = vrot.slane %v6406, %v6413
        %v6416 = vunpack.c.l.s4 1983009808
        %v6417 = vunpack.c.0.s8 %v6416
        %v6418 = vlaneseq
        %v6419 = vshrl.u32 %v6418, 7
        %v6420 = vsub.s32 %v6417, %v6419
        %v6421 = vrot.slane %v6407, %v6420
        %v6422 = vcombine.low %v6225, %v6233
        %v6423 = vcombine.high %v6225, %v6233
        %v6425 = vunpack.c.l.s4 1983009808
        %v6426 = vunpack.c.0.s8 %v6425
        %v6427 = vlaneseq
        %v6428 = vshrl.u32 %v6427, 7
        %v6429 = vsub.s32 %v6426, %v6428
        %v6430 = vrot.slane %v6422, %v6429
        %v6432 = vunpack.c.l.s4 1983009808
        %v6433 = vunpack.c.0.s8 %v6432
        %v6434 = vlaneseq
        %v6435 = vshrl.u32 %v6434, 7
        %v6436 = vsub.s32 %v6433, %v6435
        %v6437 = vrot.slane %v6423, %v6436
        %v6438 = vcombine.low %v6229, %v6237
        %v6439 = vcombine.high %v6229, %v6237
        %v6441 = vunpack.c.l.s4 1983009808
        %v6442 = vunpack.c.0.s8 %v6441
        %v6443 = vlaneseq
        %v6444 = vshrl.u32 %v6443, 7
        %v6445 = vsub.s32 %v6442, %v6444
        %v6446 = vrot.slane %v6438, %v6445
        %v6448 = vunpack.c.l.s4 1983009808
        %v6449 = vunpack.c.0.s8 %v6448
        %v6450 = vlaneseq
        %v6451 = vshrl.u32 %v6450, 7
        %v6452 = vsub.s32 %v6449, %v6451
        %v6453 = vrot.slane %v6439, %v6452
        %v6454 = vcombine.low %v6398, %v6414
        %v6455 = vcombine.high %v6398, %v6414
        %v6457 = vunpack.c.l.s4 1934713408
        %v6458 = vunpack.c.0.s8 %v6457
        %v6459 = vlaneseq
        %v6460 = vshrl.u32 %v6459, 7
        %v6461 = vsub.s32 %v6458, %v6460
        %v6462 = vrot.slane %v6454, %v6461
        %v6464 = vunpack.c.l.s4 1934713408
        %v6465 = vunpack.c.0.s8 %v6464
        %v6466 = vlaneseq
        %v6467 = vshrl.u32 %v6466, 7
        %v6468 = vsub.s32 %v6465, %v6467
        %v6469 = vrot.slane %v6455, %v6468
        %v6470 = vcombine.low %v6405, %v6421
        %v6471 = vcombine.high %v6405, %v6421
        %v6473 = vunpack.c.l.s4 1934713408
        %v6474 = vunpack.c.0.s8 %v6473
        %v6475 = vlaneseq
        %v6476 = vshrl.u32 %v6475, 7
        %v6477 = vsub.s32 %v6474, %v6476
        %v6478 = vrot.slane %v6470, %v6477
        %v6480 = vunpack.c.l.s4 1934713408
        %v6481 = vunpack.c.0.s8 %v6480
        %v6482 = vlaneseq
        %v6483 = vshrl.u32 %v6482, 7
        %v6484 = vsub.s32 %v6481, %v6483
        %v6485 = vrot.slane %v6471, %v6484
        %v6486 = vcombine.low %v6430, %v6446
        %v6487 = vcombine.high %v6430, %v6446
        %v6489 = vunpack.c.l.s4 1934713408
        %v6490 = vunpack.c.0.s8 %v6489
        %v6491 = vlaneseq
        %v6492 = vshrl.u32 %v6491, 7
        %v6493 = vsub.s32 %v6490, %v6492
        %v6494 = vrot.slane %v6486, %v6493
        %v6496 = vunpack.c.l.s4 1934713408
        %v6497 = vunpack.c.0.s8 %v6496
        %v6498 = vlaneseq
        %v6499 = vshrl.u32 %v6498, 7
        %v6500 = vsub.s32 %v6497, %v6499
        %v6501 = vrot.slane %v6487, %v6500
        %v6502 = vcombine.low %v6437, %v6453
        %v6503 = vcombine.high %v6437, %v6453
        %v6505 = vunpack.c.l.s4 1934713408
        %v6506 = vunpack.c.0.s8 %v6505
        %v6507 = vlaneseq
        %v6508 = vshrl.u32 %v6507, 7
        %v6509 = vsub.s32 %v6506, %v6508
        %v6510 = vrot.slane %v6502, %v6509
        %v6512 = vunpack.c.l.s4 1934713408
        %v6513 = vunpack.c.0.s8 %v6512
        %v6514 = vlaneseq
        %v6515 = vshrl.u32 %v6514, 7
        %v6516 = vsub.s32 %v6513, %v6515
        %v6517 = vrot.slane %v6503, %v6516
        %v6518 = vcombine.low %v6462, %v6494
        %v6519 = vcombine.high %v6462, %v6494
        %v6520 = vcombine.low %v6469, %v6501
        %v6521 = vcombine.high %v6469, %v6501
        %v6522 = vcombine.low %v6478, %v6510
        %v6523 = vcombine.high %v6478, %v6510
        %v6524 = vcombine.low %v6485, %v6517
        %v6525 = vcombine.high %v6485, %v6517
        %6527 = vrot.lane.b32.xlu0 %v6383, 16
        %v6528 = vpop.permute.xlu0 %6527
        %6531 = vrot.lane.b32.xlu0 %v6384, 32
        %v6532 = vpop.permute.xlu0 %6531
        %6535 = vrot.lane.b32.xlu0 %v6385, 48
        %v6536 = vpop.permute.xlu0 %6535
        %6539 = vrot.lane.b32.xlu0 %v6386, 64
        %v6540 = vpop.permute.xlu0 %6539
        %6543 = vrot.lane.b32.xlu0 %v6387, 80
        %v6544 = vpop.permute.xlu0 %6543
        %6547 = vrot.lane.b32.xlu0 %v6388, 96
        %v6548 = vpop.permute.xlu0 %6547
        %6551 = vrot.lane.b32.xlu0 %v6389, 112
        %v6552 = vpop.permute.xlu0 %6551
        %6555 = vrot.lane.b32.xlu0 %v6519, 16
        %v6556 = vpop.permute.xlu0 %6555
        %6559 = vrot.lane.b32.xlu0 %v6520, 32
        %v6560 = vpop.permute.xlu0 %6559
        %6563 = vrot.lane.b32.xlu0 %v6521, 48
        %v6564 = vpop.permute.xlu0 %6563
        %6567 = vrot.lane.b32.xlu0 %v6522, 64
        %v6568 = vpop.permute.xlu0 %6567
        %6571 = vrot.lane.b32.xlu0 %v6523, 80
        %v6572 = vpop.permute.xlu0 %6571
        %6575 = vrot.lane.b32.xlu0 %v6524, 96
        %v6576 = vpop.permute.xlu0 %6575
        %6579 = vrot.lane.b32.xlu0 %v6525, 112
        %v6580 = vpop.permute.xlu0 %6579
        %v6582 = vsel %vm1295, %v6382, %v6528
        %v6583 = vsel %vm1297, %v6582, %v6532
        %v6584 = vsel %vm1299, %v6583, %v6536
        %v6585 = vsel %vm1301, %v6584, %v6540
        %v6586 = vsel %vm1303, %v6585, %v6544
        %v6587 = vsel %vm1305, %v6586, %v6548
        %v6588 = vsel %vm1307, %v6587, %v6552
        %v6589 = vsel %vm1295, %v6518, %v6556
        %v6590 = vsel %vm1297, %v6589, %v6560
        %v6591 = vsel %vm1299, %v6590, %v6564
        %v6592 = vsel %vm1301, %v6591, %v6568
        %v6593 = vsel %vm1303, %v6592, %v6572
        %v6594 = vsel %vm1305, %v6593, %v6576
        %v6595 = vsel %vm1307, %v6594, %v6580
        %6596 = vst [vmem:[#allocation3 + $0x20] sm:$0xff] %v6588
        %6597 = vst [vmem:[#allocation3 + $0x28] sm:$0xff] %v6595
        %v6598 = vld [vmem:[#allocation2 + $0x1] sm:$0xff]
        %v6599 = vld [vmem:[#allocation2 + $0x9] sm:$0xff]
        %v6600 = vld [vmem:[#allocation2 + $0x19] sm:$0xff]
        %v6601 = vld [vmem:[#allocation2 + $0x21] sm:$0xff]
        %v6602 = vld [vmem:[#allocation2 + $0x31] sm:$0xff]
        %v6603 = vld [vmem:[#allocation2 + $0x39] sm:$0xff]
        %v6604 = vld [vmem:[#allocation2 + $0x49] sm:$0xff]
        %v6605 = vld [vmem:[#allocation2 + $0x51] sm:$0xff]
        %v6606 = vld [vmem:[#allocation2 + $0x61] sm:$0xff]
        %v6607 = vld [vmem:[#allocation2 + $0x69] sm:$0xff]
        %v6608 = vld [vmem:[#allocation2 + $0x79] sm:$0xff]
        %v6609 = vld [vmem:[#allocation2 + $0x81] sm:$0xff]
        %v6610 = vld [vmem:[#allocation2 + $0x91] sm:$0xff]
        %v6611 = vld [vmem:[#allocation2 + $0x99] sm:$0xff]
        %v6612 = vld [vmem:[#allocation2 + $0xa9] sm:$0xff]
        %v6613 = vld [vmem:[#allocation2 + $0xb1] sm:$0xff]
        %v6614 = vcombine.low %v6598, %v6602
        %v6615 = vcombine.high %v6598, %v6602
        %v6617 = vunpack.c.l.s4 1983009808
        %v6618 = vunpack.c.0.s8 %v6617
        %v6619 = vlaneseq
        %v6620 = vshrl.u32 %v6619, 7
        %v6621 = vsub.s32 %v6618, %v6620
        %v6622 = vrot.slane %v6614, %v6621
        %v6624 = vunpack.c.l.s4 1983009808
        %v6625 = vunpack.c.0.s8 %v6624
        %v6626 = vlaneseq
        %v6627 = vshrl.u32 %v6626, 7
        %v6628 = vsub.s32 %v6625, %v6627
        %v6629 = vrot.slane %v6615, %v6628
        %v6630 = vcombine.low %v6600, %v6604
        %v6631 = vcombine.high %v6600, %v6604
        %v6633 = vunpack.c.l.s4 1983009808
        %v6634 = vunpack.c.0.s8 %v6633
        %v6635 = vlaneseq
        %v6636 = vshrl.u32 %v6635, 7
        %v6637 = vsub.s32 %v6634, %v6636
        %v6638 = vrot.slane %v6630, %v6637
        %v6640 = vunpack.c.l.s4 1983009808
        %v6641 = vunpack.c.0.s8 %v6640
        %v6642 = vlaneseq
        %v6643 = vshrl.u32 %v6642, 7
        %v6644 = vsub.s32 %v6641, %v6643
        %v6645 = vrot.slane %v6631, %v6644
        %v6646 = vcombine.low %v6606, %v6610
        %v6647 = vcombine.high %v6606, %v6610
        %v6649 = vunpack.c.l.s4 1983009808
        %v6650 = vunpack.c.0.s8 %v6649
        %v6651 = vlaneseq
        %v6652 = vshrl.u32 %v6651, 7
        %v6653 = vsub.s32 %v6650, %v6652
        %v6654 = vrot.slane %v6646, %v6653
        %v6656 = vunpack.c.l.s4 1983009808
        %v6657 = vunpack.c.0.s8 %v6656
        %v6658 = vlaneseq
        %v6659 = vshrl.u32 %v6658, 7
        %v6660 = vsub.s32 %v6657, %v6659
        %v6661 = vrot.slane %v6647, %v6660
        %v6662 = vcombine.low %v6608, %v6612
        %v6663 = vcombine.high %v6608, %v6612
        %v6665 = vunpack.c.l.s4 1983009808
        %v6666 = vunpack.c.0.s8 %v6665
        %v6667 = vlaneseq
        %v6668 = vshrl.u32 %v6667, 7
        %v6669 = vsub.s32 %v6666, %v6668
        %v6670 = vrot.slane %v6662, %v6669
        %v6672 = vunpack.c.l.s4 1983009808
        %v6673 = vunpack.c.0.s8 %v6672
        %v6674 = vlaneseq
        %v6675 = vshrl.u32 %v6674, 7
        %v6676 = vsub.s32 %v6673, %v6675
        %v6677 = vrot.slane %v6663, %v6676
        %v6678 = vcombine.low %v6622, %v6638
        %v6679 = vcombine.high %v6622, %v6638
        %v6681 = vunpack.c.l.s4 1934713408
        %v6682 = vunpack.c.0.s8 %v6681
        %v6683 = vlaneseq
        %v6684 = vshrl.u32 %v6683, 7
        %v6685 = vsub.s32 %v6682, %v6684
        %v6686 = vrot.slane %v6678, %v6685
        %v6688 = vunpack.c.l.s4 1934713408
        %v6689 = vunpack.c.0.s8 %v6688
        %v6690 = vlaneseq
        %v6691 = vshrl.u32 %v6690, 7
        %v6692 = vsub.s32 %v6689, %v6691
        %v6693 = vrot.slane %v6679, %v6692
        %v6694 = vcombine.low %v6629, %v6645
        %v6695 = vcombine.high %v6629, %v6645
        %v6697 = vunpack.c.l.s4 1934713408
        %v6698 = vunpack.c.0.s8 %v6697
        %v6699 = vlaneseq
        %v6700 = vshrl.u32 %v6699, 7
        %v6701 = vsub.s32 %v6698, %v6700
        %v6702 = vrot.slane %v6694, %v6701
        %v6704 = vunpack.c.l.s4 1934713408
        %v6705 = vunpack.c.0.s8 %v6704
        %v6706 = vlaneseq
        %v6707 = vshrl.u32 %v6706, 7
        %v6708 = vsub.s32 %v6705, %v6707
        %v6709 = vrot.slane %v6695, %v6708
        %v6710 = vcombine.low %v6654, %v6670
        %v6711 = vcombine.high %v6654, %v6670
        %v6713 = vunpack.c.l.s4 1934713408
        %v6714 = vunpack.c.0.s8 %v6713
        %v6715 = vlaneseq
        %v6716 = vshrl.u32 %v6715, 7
        %v6717 = vsub.s32 %v6714, %v6716
        %v6718 = vrot.slane %v6710, %v6717
        %v6720 = vunpack.c.l.s4 1934713408
        %v6721 = vunpack.c.0.s8 %v6720
        %v6722 = vlaneseq
        %v6723 = vshrl.u32 %v6722, 7
        %v6724 = vsub.s32 %v6721, %v6723
        %v6725 = vrot.slane %v6711, %v6724
        %v6726 = vcombine.low %v6661, %v6677
        %v6727 = vcombine.high %v6661, %v6677
        %v6729 = vunpack.c.l.s4 1934713408
        %v6730 = vunpack.c.0.s8 %v6729
        %v6731 = vlaneseq
        %v6732 = vshrl.u32 %v6731, 7
        %v6733 = vsub.s32 %v6730, %v6732
        %v6734 = vrot.slane %v6726, %v6733
        %v6736 = vunpack.c.l.s4 1934713408
        %v6737 = vunpack.c.0.s8 %v6736
        %v6738 = vlaneseq
        %v6739 = vshrl.u32 %v6738, 7
        %v6740 = vsub.s32 %v6737, %v6739
        %v6741 = vrot.slane %v6727, %v6740
        %v6742 = vcombine.low %v6686, %v6718
        %v6743 = vcombine.high %v6686, %v6718
        %v6744 = vcombine.low %v6693, %v6725
        %v6745 = vcombine.high %v6693, %v6725
        %v6746 = vcombine.low %v6702, %v6734
        %v6747 = vcombine.high %v6702, %v6734
        %v6748 = vcombine.low %v6709, %v6741
        %v6749 = vcombine.high %v6709, %v6741
        %v6750 = vcombine.low %v6599, %v6603
        %v6751 = vcombine.high %v6599, %v6603
        %v6753 = vunpack.c.l.s4 1983009808
        %v6754 = vunpack.c.0.s8 %v6753
        %v6755 = vlaneseq
        %v6756 = vshrl.u32 %v6755, 7
        %v6757 = vsub.s32 %v6754, %v6756
        %v6758 = vrot.slane %v6750, %v6757
        %v6760 = vunpack.c.l.s4 1983009808
        %v6761 = vunpack.c.0.s8 %v6760
        %v6762 = vlaneseq
        %v6763 = vshrl.u32 %v6762, 7
        %v6764 = vsub.s32 %v6761, %v6763
        %v6765 = vrot.slane %v6751, %v6764
        %v6766 = vcombine.low %v6601, %v6605
        %v6767 = vcombine.high %v6601, %v6605
        %v6769 = vunpack.c.l.s4 1983009808
        %v6770 = vunpack.c.0.s8 %v6769
        %v6771 = vlaneseq
        %v6772 = vshrl.u32 %v6771, 7
        %v6773 = vsub.s32 %v6770, %v6772
        %v6774 = vrot.slane %v6766, %v6773
        %v6776 = vunpack.c.l.s4 1983009808
        %v6777 = vunpack.c.0.s8 %v6776
        %v6778 = vlaneseq
        %v6779 = vshrl.u32 %v6778, 7
        %v6780 = vsub.s32 %v6777, %v6779
        %v6781 = vrot.slane %v6767, %v6780
        %v6782 = vcombine.low %v6607, %v6611
        %v6783 = vcombine.high %v6607, %v6611
        %v6785 = vunpack.c.l.s4 1983009808
        %v6786 = vunpack.c.0.s8 %v6785
        %v6787 = vlaneseq
        %v6788 = vshrl.u32 %v6787, 7
        %v6789 = vsub.s32 %v6786, %v6788
        %v6790 = vrot.slane %v6782, %v6789
        %v6792 = vunpack.c.l.s4 1983009808
        %v6793 = vunpack.c.0.s8 %v6792
        %v6794 = vlaneseq
        %v6795 = vshrl.u32 %v6794, 7
        %v6796 = vsub.s32 %v6793, %v6795
        %v6797 = vrot.slane %v6783, %v6796
        %v6798 = vcombine.low %v6609, %v6613
        %v6799 = vcombine.high %v6609, %v6613
        %v6801 = vunpack.c.l.s4 1983009808
        %v6802 = vunpack.c.0.s8 %v6801
        %v6803 = vlaneseq
        %v6804 = vshrl.u32 %v6803, 7
        %v6805 = vsub.s32 %v6802, %v6804
        %v6806 = vrot.slane %v6798, %v6805
        %v6808 = vunpack.c.l.s4 1983009808
        %v6809 = vunpack.c.0.s8 %v6808
        %v6810 = vlaneseq
        %v6811 = vshrl.u32 %v6810, 7
        %v6812 = vsub.s32 %v6809, %v6811
        %v6813 = vrot.slane %v6799, %v6812
        %v6814 = vcombine.low %v6758, %v6774
        %v6815 = vcombine.high %v6758, %v6774
        %v6817 = vunpack.c.l.s4 1934713408
        %v6818 = vunpack.c.0.s8 %v6817
        %v6819 = vlaneseq
        %v6820 = vshrl.u32 %v6819, 7
        %v6821 = vsub.s32 %v6818, %v6820
        %v6822 = vrot.slane %v6814, %v6821
        %v6824 = vunpack.c.l.s4 1934713408
        %v6825 = vunpack.c.0.s8 %v6824
        %v6826 = vlaneseq
        %v6827 = vshrl.u32 %v6826, 7
        %v6828 = vsub.s32 %v6825, %v6827
        %v6829 = vrot.slane %v6815, %v6828
        %v6830 = vcombine.low %v6765, %v6781
        %v6831 = vcombine.high %v6765, %v6781
        %v6833 = vunpack.c.l.s4 1934713408
        %v6834 = vunpack.c.0.s8 %v6833
        %v6835 = vlaneseq
        %v6836 = vshrl.u32 %v6835, 7
        %v6837 = vsub.s32 %v6834, %v6836
        %v6838 = vrot.slane %v6830, %v6837
        %v6840 = vunpack.c.l.s4 1934713408
        %v6841 = vunpack.c.0.s8 %v6840
        %v6842 = vlaneseq
        %v6843 = vshrl.u32 %v6842, 7
        %v6844 = vsub.s32 %v6841, %v6843
        %v6845 = vrot.slane %v6831, %v6844
        %v6846 = vcombine.low %v6790, %v6806
        %v6847 = vcombine.high %v6790, %v6806
        %v6849 = vunpack.c.l.s4 1934713408
        %v6850 = vunpack.c.0.s8 %v6849
        %v6851 = vlaneseq
        %v6852 = vshrl.u32 %v6851, 7
        %v6853 = vsub.s32 %v6850, %v6852
        %v6854 = vrot.slane %v6846, %v6853
        %v6856 = vunpack.c.l.s4 1934713408
        %v6857 = vunpack.c.0.s8 %v6856
        %v6858 = vlaneseq
        %v6859 = vshrl.u32 %v6858, 7
        %v6860 = vsub.s32 %v6857, %v6859
        %v6861 = vrot.slane %v6847, %v6860
        %v6862 = vcombine.low %v6797, %v6813
        %v6863 = vcombine.high %v6797, %v6813
        %v6865 = vunpack.c.l.s4 1934713408
        %v6866 = vunpack.c.0.s8 %v6865
        %v6867 = vlaneseq
        %v6868 = vshrl.u32 %v6867, 7
        %v6869 = vsub.s32 %v6866, %v6868
        %v6870 = vrot.slane %v6862, %v6869
        %v6872 = vunpack.c.l.s4 1934713408
        %v6873 = vunpack.c.0.s8 %v6872
        %v6874 = vlaneseq
        %v6875 = vshrl.u32 %v6874, 7
        %v6876 = vsub.s32 %v6873, %v6875
        %v6877 = vrot.slane %v6863, %v6876
        %v6878 = vcombine.low %v6822, %v6854
        %v6879 = vcombine.high %v6822, %v6854
        %v6880 = vcombine.low %v6829, %v6861
        %v6881 = vcombine.high %v6829, %v6861
        %v6882 = vcombine.low %v6838, %v6870
        %v6883 = vcombine.high %v6838, %v6870
        %v6884 = vcombine.low %v6845, %v6877
        %v6885 = vcombine.high %v6845, %v6877
        %6887 = vrot.lane.b32.xlu0 %v6743, 16
        %v6888 = vpop.permute.xlu0 %6887
        %6891 = vrot.lane.b32.xlu0 %v6744, 32
        %v6892 = vpop.permute.xlu0 %6891
        %6895 = vrot.lane.b32.xlu0 %v6745, 48
        %v6896 = vpop.permute.xlu0 %6895
        %6899 = vrot.lane.b32.xlu0 %v6746, 64
        %v6900 = vpop.permute.xlu0 %6899
        %6903 = vrot.lane.b32.xlu0 %v6747, 80
        %v6904 = vpop.permute.xlu0 %6903
        %6907 = vrot.lane.b32.xlu0 %v6748, 96
        %v6908 = vpop.permute.xlu0 %6907
        %6911 = vrot.lane.b32.xlu0 %v6749, 112
        %v6912 = vpop.permute.xlu0 %6911
        %6915 = vrot.lane.b32.xlu0 %v6879, 16
        %v6916 = vpop.permute.xlu0 %6915
        %6919 = vrot.lane.b32.xlu0 %v6880, 32
        %v6920 = vpop.permute.xlu0 %6919
        %6923 = vrot.lane.b32.xlu0 %v6881, 48
        %v6924 = vpop.permute.xlu0 %6923
        %6927 = vrot.lane.b32.xlu0 %v6882, 64
        %v6928 = vpop.permute.xlu0 %6927
        %6931 = vrot.lane.b32.xlu0 %v6883, 80
        %v6932 = vpop.permute.xlu0 %6931
        %6935 = vrot.lane.b32.xlu0 %v6884, 96
        %v6936 = vpop.permute.xlu0 %6935
        %6939 = vrot.lane.b32.xlu0 %v6885, 112
        %v6940 = vpop.permute.xlu0 %6939
        %v6942 = vsel %vm1295, %v6742, %v6888
        %v6943 = vsel %vm1297, %v6942, %v6892
        %v6944 = vsel %vm1299, %v6943, %v6896
        %v6945 = vsel %vm1301, %v6944, %v6900
        %v6946 = vsel %vm1303, %v6945, %v6904
        %v6947 = vsel %vm1305, %v6946, %v6908
        %v6948 = vsel %vm1307, %v6947, %v6912
        %v6949 = vsel %vm1295, %v6878, %v6916
        %v6950 = vsel %vm1297, %v6949, %v6920
        %v6951 = vsel %vm1299, %v6950, %v6924
        %v6952 = vsel %vm1301, %v6951, %v6928
        %v6953 = vsel %vm1303, %v6952, %v6932
        %v6954 = vsel %vm1305, %v6953, %v6936
        %v6955 = vsel %vm1307, %v6954, %v6940
        %6956 = vst [vmem:[#allocation3 + $0x30] sm:$0xff] %v6948
        %6957 = vst [vmem:[#allocation3 + $0x38] sm:$0xff] %v6955
        %v6958 = vld [vmem:[#allocation2 + $0x1] sm:$0xff]
        %v6959 = vld [vmem:[#allocation2 + $0x9] sm:$0xff]
        %v6960 = vld [vmem:[#allocation2 + $0x19] sm:$0xff]
        %v6961 = vld [vmem:[#allocation2 + $0x21] sm:$0xff]
        %v6962 = vld [vmem:[#allocation2 + $0x31] sm:$0xff]
        %v6963 = vld [vmem:[#allocation2 + $0x39] sm:$0xff]
        %v6964 = vld [vmem:[#allocation2 + $0x49] sm:$0xff]
        %v6965 = vld [vmem:[#allocation2 + $0x51] sm:$0xff]
        %v6966 = vld [vmem:[#allocation2 + $0x61] sm:$0xff]
        %v6967 = vld [vmem:[#allocation2 + $0x69] sm:$0xff]
        %v6968 = vld [vmem:[#allocation2 + $0x79] sm:$0xff]
        %v6969 = vld [vmem:[#allocation2 + $0x81] sm:$0xff]
        %v6970 = vld [vmem:[#allocation2 + $0x91] sm:$0xff]
        %v6971 = vld [vmem:[#allocation2 + $0x99] sm:$0xff]
        %v6972 = vld [vmem:[#allocation2 + $0xa9] sm:$0xff]
        %v6973 = vld [vmem:[#allocation2 + $0xb1] sm:$0xff]
        %6990 = vrot.lane.b32.xlu0 %v6958, 127
        %v6991 = vpop.permute.xlu0 %6990
        %6992 = vrot.lane.b32.xlu0 %v6959, 127
        %v6993 = vpop.permute.xlu0 %6992
        %6994 = vrot.lane.b32.xlu0 %v6960, 127
        %v6995 = vpop.permute.xlu0 %6994
        %6996 = vrot.lane.b32.xlu0 %v6961, 127
        %v6997 = vpop.permute.xlu0 %6996
        %6998 = vrot.lane.b32.xlu0 %v6962, 127
        %v6999 = vpop.permute.xlu0 %6998
        %7000 = vrot.lane.b32.xlu0 %v6963, 127
        %v7001 = vpop.permute.xlu0 %7000
        %7002 = vrot.lane.b32.xlu0 %v6964, 127
        %v7003 = vpop.permute.xlu0 %7002
        %7004 = vrot.lane.b32.xlu0 %v6965, 127
        %v7005 = vpop.permute.xlu0 %7004
        %7006 = vrot.lane.b32.xlu0 %v6966, 127
        %v7007 = vpop.permute.xlu0 %7006
        %7008 = vrot.lane.b32.xlu0 %v6967, 127
        %v7009 = vpop.permute.xlu0 %7008
        %7010 = vrot.lane.b32.xlu0 %v6968, 127
        %v7011 = vpop.permute.xlu0 %7010
        %7012 = vrot.lane.b32.xlu0 %v6969, 127
        %v7013 = vpop.permute.xlu0 %7012
        %7014 = vrot.lane.b32.xlu0 %v6970, 127
        %v7015 = vpop.permute.xlu0 %7014
        %7016 = vrot.lane.b32.xlu0 %v6971, 127
        %v7017 = vpop.permute.xlu0 %7016
        %7018 = vrot.lane.b32.xlu0 %v6972, 127
        %v7019 = vpop.permute.xlu0 %7018
        %7020 = vrot.lane.b32.xlu0 %v6973, 127
        %v7021 = vpop.permute.xlu0 %7020
        %v7038 = vcombine.low %v6991, %v6999
        %v7039 = vcombine.high %v6991, %v6999
        %v7041 = vunpack.c.l.s4 1983009808
        %v7042 = vunpack.c.0.s8 %v7041
        %v7043 = vlaneseq
        %v7044 = vshrl.u32 %v7043, 7
        %v7045 = vsub.s32 %v7042, %v7044
        %v7046 = vrot.slane %v7038, %v7045
        %v7048 = vunpack.c.l.s4 1983009808
        %v7049 = vunpack.c.0.s8 %v7048
        %v7050 = vlaneseq
        %v7051 = vshrl.u32 %v7050, 7
        %v7052 = vsub.s32 %v7049, %v7051
        %v7053 = vrot.slane %v7039, %v7052
        %v7054 = vcombine.low %v6995, %v7003
        %v7055 = vcombine.high %v6995, %v7003
        %v7057 = vunpack.c.l.s4 1983009808
        %v7058 = vunpack.c.0.s8 %v7057
        %v7059 = vlaneseq
        %v7060 = vshrl.u32 %v7059, 7
        %v7061 = vsub.s32 %v7058, %v7060
        %v7062 = vrot.slane %v7054, %v7061
        %v7064 = vunpack.c.l.s4 1983009808
        %v7065 = vunpack.c.0.s8 %v7064
        %v7066 = vlaneseq
        %v7067 = vshrl.u32 %v7066, 7
        %v7068 = vsub.s32 %v7065, %v7067
        %v7069 = vrot.slane %v7055, %v7068
        %v7070 = vcombine.low %v7007, %v7015
        %v7071 = vcombine.high %v7007, %v7015
        %v7073 = vunpack.c.l.s4 1983009808
        %v7074 = vunpack.c.0.s8 %v7073
        %v7075 = vlaneseq
        %v7076 = vshrl.u32 %v7075, 7
        %v7077 = vsub.s32 %v7074, %v7076
        %v7078 = vrot.slane %v7070, %v7077
        %v7080 = vunpack.c.l.s4 1983009808
        %v7081 = vunpack.c.0.s8 %v7080
        %v7082 = vlaneseq
        %v7083 = vshrl.u32 %v7082, 7
        %v7084 = vsub.s32 %v7081, %v7083
        %v7085 = vrot.slane %v7071, %v7084
        %v7086 = vcombine.low %v7011, %v7019
        %v7087 = vcombine.high %v7011, %v7019
        %v7089 = vunpack.c.l.s4 1983009808
        %v7090 = vunpack.c.0.s8 %v7089
        %v7091 = vlaneseq
        %v7092 = vshrl.u32 %v7091, 7
        %v7093 = vsub.s32 %v7090, %v7092
        %v7094 = vrot.slane %v7086, %v7093
        %v7096 = vunpack.c.l.s4 1983009808
        %v7097 = vunpack.c.0.s8 %v7096
        %v7098 = vlaneseq
        %v7099 = vshrl.u32 %v7098, 7
        %v7100 = vsub.s32 %v7097, %v7099
        %v7101 = vrot.slane %v7087, %v7100
        %v7102 = vcombine.low %v7046, %v7062
        %v7103 = vcombine.high %v7046, %v7062
        %v7105 = vunpack.c.l.s4 1934713408
        %v7106 = vunpack.c.0.s8 %v7105
        %v7107 = vlaneseq
        %v7108 = vshrl.u32 %v7107, 7
        %v7109 = vsub.s32 %v7106, %v7108
        %v7110 = vrot.slane %v7102, %v7109
        %v7112 = vunpack.c.l.s4 1934713408
        %v7113 = vunpack.c.0.s8 %v7112
        %v7114 = vlaneseq
        %v7115 = vshrl.u32 %v7114, 7
        %v7116 = vsub.s32 %v7113, %v7115
        %v7117 = vrot.slane %v7103, %v7116
        %v7118 = vcombine.low %v7053, %v7069
        %v7119 = vcombine.high %v7053, %v7069
        %v7121 = vunpack.c.l.s4 1934713408
        %v7122 = vunpack.c.0.s8 %v7121
        %v7123 = vlaneseq
        %v7124 = vshrl.u32 %v7123, 7
        %v7125 = vsub.s32 %v7122, %v7124
        %v7126 = vrot.slane %v7118, %v7125
        %v7128 = vunpack.c.l.s4 1934713408
        %v7129 = vunpack.c.0.s8 %v7128
        %v7130 = vlaneseq
        %v7131 = vshrl.u32 %v7130, 7
        %v7132 = vsub.s32 %v7129, %v7131
        %v7133 = vrot.slane %v7119, %v7132
        %v7134 = vcombine.low %v7078, %v7094
        %v7135 = vcombine.high %v7078, %v7094
        %v7137 = vunpack.c.l.s4 1934713408
        %v7138 = vunpack.c.0.s8 %v7137
        %v7139 = vlaneseq
        %v7140 = vshrl.u32 %v7139, 7
        %v7141 = vsub.s32 %v7138, %v7140
        %v7142 = vrot.slane %v7134, %v7141
        %v7144 = vunpack.c.l.s4 1934713408
        %v7145 = vunpack.c.0.s8 %v7144
        %v7146 = vlaneseq
        %v7147 = vshrl.u32 %v7146, 7
        %v7148 = vsub.s32 %v7145, %v7147
        %v7149 = vrot.slane %v7135, %v7148
        %v7150 = vcombine.low %v7085, %v7101
        %v7151 = vcombine.high %v7085, %v7101
        %v7153 = vunpack.c.l.s4 1934713408
        %v7154 = vunpack.c.0.s8 %v7153
        %v7155 = vlaneseq
        %v7156 = vshrl.u32 %v7155, 7
        %v7157 = vsub.s32 %v7154, %v7156
        %v7158 = vrot.slane %v7150, %v7157
        %v7160 = vunpack.c.l.s4 1934713408
        %v7161 = vunpack.c.0.s8 %v7160
        %v7162 = vlaneseq
        %v7163 = vshrl.u32 %v7162, 7
        %v7164 = vsub.s32 %v7161, %v7163
        %v7165 = vrot.slane %v7151, %v7164
        %v7166 = vcombine.low %v7110, %v7142
        %v7167 = vcombine.high %v7110, %v7142
        %v7168 = vcombine.low %v7117, %v7149
        %v7169 = vcombine.high %v7117, %v7149
        %v7170 = vcombine.low %v7126, %v7158
        %v7171 = vcombine.high %v7126, %v7158
        %v7172 = vcombine.low %v7133, %v7165
        %v7173 = vcombine.high %v7133, %v7165
        %v7174 = vcombine.low %v6993, %v7001
        %v7175 = vcombine.high %v6993, %v7001
        %v7177 = vunpack.c.l.s4 1983009808
        %v7178 = vunpack.c.0.s8 %v7177
        %v7179 = vlaneseq
        %v7180 = vshrl.u32 %v7179, 7
        %v7181 = vsub.s32 %v7178, %v7180
        %v7182 = vrot.slane %v7174, %v7181
        %v7184 = vunpack.c.l.s4 1983009808
        %v7185 = vunpack.c.0.s8 %v7184
        %v7186 = vlaneseq
        %v7187 = vshrl.u32 %v7186, 7
        %v7188 = vsub.s32 %v7185, %v7187
        %v7189 = vrot.slane %v7175, %v7188
        %v7190 = vcombine.low %v6997, %v7005
        %v7191 = vcombine.high %v6997, %v7005
        %v7193 = vunpack.c.l.s4 1983009808
        %v7194 = vunpack.c.0.s8 %v7193
        %v7195 = vlaneseq
        %v7196 = vshrl.u32 %v7195, 7
        %v7197 = vsub.s32 %v7194, %v7196
        %v7198 = vrot.slane %v7190, %v7197
        %v7200 = vunpack.c.l.s4 1983009808
        %v7201 = vunpack.c.0.s8 %v7200
        %v7202 = vlaneseq
        %v7203 = vshrl.u32 %v7202, 7
        %v7204 = vsub.s32 %v7201, %v7203
        %v7205 = vrot.slane %v7191, %v7204
        %v7206 = vcombine.low %v7009, %v7017
        %v7207 = vcombine.high %v7009, %v7017
        %v7209 = vunpack.c.l.s4 1983009808
        %v7210 = vunpack.c.0.s8 %v7209
        %v7211 = vlaneseq
        %v7212 = vshrl.u32 %v7211, 7
        %v7213 = vsub.s32 %v7210, %v7212
        %v7214 = vrot.slane %v7206, %v7213
        %v7216 = vunpack.c.l.s4 1983009808
        %v7217 = vunpack.c.0.s8 %v7216
        %v7218 = vlaneseq
        %v7219 = vshrl.u32 %v7218, 7
        %v7220 = vsub.s32 %v7217, %v7219
        %v7221 = vrot.slane %v7207, %v7220
        %v7222 = vcombine.low %v7013, %v7021
        %v7223 = vcombine.high %v7013, %v7021
        %v7225 = vunpack.c.l.s4 1983009808
        %v7226 = vunpack.c.0.s8 %v7225
        %v7227 = vlaneseq
        %v7228 = vshrl.u32 %v7227, 7
        %v7229 = vsub.s32 %v7226, %v7228
        %v7230 = vrot.slane %v7222, %v7229
        %v7232 = vunpack.c.l.s4 1983009808
        %v7233 = vunpack.c.0.s8 %v7232
        %v7234 = vlaneseq
        %v7235 = vshrl.u32 %v7234, 7
        %v7236 = vsub.s32 %v7233, %v7235
        %v7237 = vrot.slane %v7223, %v7236
        %v7238 = vcombine.low %v7182, %v7198
        %v7239 = vcombine.high %v7182, %v7198
        %v7241 = vunpack.c.l.s4 1934713408
        %v7242 = vunpack.c.0.s8 %v7241
        %v7243 = vlaneseq
        %v7244 = vshrl.u32 %v7243, 7
        %v7245 = vsub.s32 %v7242, %v7244
        %v7246 = vrot.slane %v7238, %v7245
        %v7248 = vunpack.c.l.s4 1934713408
        %v7249 = vunpack.c.0.s8 %v7248
        %v7250 = vlaneseq
        %v7251 = vshrl.u32 %v7250, 7
        %v7252 = vsub.s32 %v7249, %v7251
        %v7253 = vrot.slane %v7239, %v7252
        %v7254 = vcombine.low %v7189, %v7205
        %v7255 = vcombine.high %v7189, %v7205
        %v7257 = vunpack.c.l.s4 1934713408
        %v7258 = vunpack.c.0.s8 %v7257
        %v7259 = vlaneseq
        %v7260 = vshrl.u32 %v7259, 7
        %v7261 = vsub.s32 %v7258, %v7260
        %v7262 = vrot.slane %v7254, %v7261
        %v7264 = vunpack.c.l.s4 1934713408
        %v7265 = vunpack.c.0.s8 %v7264
        %v7266 = vlaneseq
        %v7267 = vshrl.u32 %v7266, 7
        %v7268 = vsub.s32 %v7265, %v7267
        %v7269 = vrot.slane %v7255, %v7268
        %v7270 = vcombine.low %v7214, %v7230
        %v7271 = vcombine.high %v7214, %v7230
        %v7273 = vunpack.c.l.s4 1934713408
        %v7274 = vunpack.c.0.s8 %v7273
        %v7275 = vlaneseq
        %v7276 = vshrl.u32 %v7275, 7
        %v7277 = vsub.s32 %v7274, %v7276
        %v7278 = vrot.slane %v7270, %v7277
        %v7280 = vunpack.c.l.s4 1934713408
        %v7281 = vunpack.c.0.s8 %v7280
        %v7282 = vlaneseq
        %v7283 = vshrl.u32 %v7282, 7
        %v7284 = vsub.s32 %v7281, %v7283
        %v7285 = vrot.slane %v7271, %v7284
        %v7286 = vcombine.low %v7221, %v7237
        %v7287 = vcombine.high %v7221, %v7237
        %v7289 = vunpack.c.l.s4 1934713408
        %v7290 = vunpack.c.0.s8 %v7289
        %v7291 = vlaneseq
        %v7292 = vshrl.u32 %v7291, 7
        %v7293 = vsub.s32 %v7290, %v7292
        %v7294 = vrot.slane %v7286, %v7293
        %v7296 = vunpack.c.l.s4 1934713408
        %v7297 = vunpack.c.0.s8 %v7296
        %v7298 = vlaneseq
        %v7299 = vshrl.u32 %v7298, 7
        %v7300 = vsub.s32 %v7297, %v7299
        %v7301 = vrot.slane %v7287, %v7300
        %v7302 = vcombine.low %v7246, %v7278
        %v7303 = vcombine.high %v7246, %v7278
        %v7304 = vcombine.low %v7253, %v7285
        %v7305 = vcombine.high %v7253, %v7285
        %v7306 = vcombine.low %v7262, %v7294
        %v7307 = vcombine.high %v7262, %v7294
        %v7308 = vcombine.low %v7269, %v7301
        %v7309 = vcombine.high %v7269, %v7301
        %7311 = vrot.lane.b32.xlu0 %v7167, 16
        %v7312 = vpop.permute.xlu0 %7311
        %7315 = vrot.lane.b32.xlu0 %v7168, 32
        %v7316 = vpop.permute.xlu0 %7315
        %7319 = vrot.lane.b32.xlu0 %v7169, 48
        %v7320 = vpop.permute.xlu0 %7319
        %7323 = vrot.lane.b32.xlu0 %v7170, 64
        %v7324 = vpop.permute.xlu0 %7323
        %7327 = vrot.lane.b32.xlu0 %v7171, 80
        %v7328 = vpop.permute.xlu0 %7327
        %7331 = vrot.lane.b32.xlu0 %v7172, 96
        %v7332 = vpop.permute.xlu0 %7331
        %7335 = vrot.lane.b32.xlu0 %v7173, 112
        %v7336 = vpop.permute.xlu0 %7335
        %7339 = vrot.lane.b32.xlu0 %v7303, 16
        %v7340 = vpop.permute.xlu0 %7339
        %7343 = vrot.lane.b32.xlu0 %v7304, 32
        %v7344 = vpop.permute.xlu0 %7343
        %7347 = vrot.lane.b32.xlu0 %v7305, 48
        %v7348 = vpop.permute.xlu0 %7347
        %7351 = vrot.lane.b32.xlu0 %v7306, 64
        %v7352 = vpop.permute.xlu0 %7351
        %7355 = vrot.lane.b32.xlu0 %v7307, 80
        %v7356 = vpop.permute.xlu0 %7355
        %7359 = vrot.lane.b32.xlu0 %v7308, 96
        %v7360 = vpop.permute.xlu0 %7359
        %7363 = vrot.lane.b32.xlu0 %v7309, 112
        %v7364 = vpop.permute.xlu0 %7363
        %v7366 = vsel %vm1295, %v7166, %v7312
        %v7367 = vsel %vm1297, %v7366, %v7316
        %v7368 = vsel %vm1299, %v7367, %v7320
        %v7369 = vsel %vm1301, %v7368, %v7324
        %v7370 = vsel %vm1303, %v7369, %v7328
        %v7371 = vsel %vm1305, %v7370, %v7332
        %v7372 = vsel %vm1307, %v7371, %v7336
        %v7373 = vsel %vm1295, %v7302, %v7340
        %v7374 = vsel %vm1297, %v7373, %v7344
        %v7375 = vsel %vm1299, %v7374, %v7348
        %v7376 = vsel %vm1301, %v7375, %v7352
        %v7377 = vsel %vm1303, %v7376, %v7356
        %v7378 = vsel %vm1305, %v7377, %v7360
        %v7379 = vsel %vm1307, %v7378, %v7364
        %7380 = vst [vmem:[#allocation3 + $0x40] sm:$0xff] %v7372
        %7381 = vst [vmem:[#allocation3 + $0x48] sm:$0xff] %v7379
        %v7382 = vld [vmem:[#allocation2 + $0x1] sm:$0xff]
        %v7383 = vld [vmem:[#allocation2 + $0x9] sm:$0xff]
        %v7384 = vld [vmem:[#allocation2 + $0x19] sm:$0xff]
        %v7385 = vld [vmem:[#allocation2 + $0x21] sm:$0xff]
        %v7386 = vld [vmem:[#allocation2 + $0x31] sm:$0xff]
        %v7387 = vld [vmem:[#allocation2 + $0x39] sm:$0xff]
        %v7388 = vld [vmem:[#allocation2 + $0x49] sm:$0xff]
        %v7389 = vld [vmem:[#allocation2 + $0x51] sm:$0xff]
        %v7390 = vld [vmem:[#allocation2 + $0x61] sm:$0xff]
        %v7391 = vld [vmem:[#allocation2 + $0x69] sm:$0xff]
        %v7392 = vld [vmem:[#allocation2 + $0x79] sm:$0xff]
        %v7393 = vld [vmem:[#allocation2 + $0x81] sm:$0xff]
        %v7394 = vld [vmem:[#allocation2 + $0x91] sm:$0xff]
        %v7395 = vld [vmem:[#allocation2 + $0x99] sm:$0xff]
        %v7396 = vld [vmem:[#allocation2 + $0xa9] sm:$0xff]
        %v7397 = vld [vmem:[#allocation2 + $0xb1] sm:$0xff]
        %7414 = vrot.lane.b32.xlu0 %v7382, 126
        %v7415 = vpop.permute.xlu0 %7414
        %7416 = vrot.lane.b32.xlu0 %v7383, 126
        %v7417 = vpop.permute.xlu0 %7416
        %7418 = vrot.lane.b32.xlu0 %v7384, 126
        %v7419 = vpop.permute.xlu0 %7418
        %7420 = vrot.lane.b32.xlu0 %v7385, 126
        %v7421 = vpop.permute.xlu0 %7420
        %7422 = vrot.lane.b32.xlu0 %v7386, 126
        %v7423 = vpop.permute.xlu0 %7422
        %7424 = vrot.lane.b32.xlu0 %v7387, 126
        %v7425 = vpop.permute.xlu0 %7424
        %7426 = vrot.lane.b32.xlu0 %v7388, 126
        %v7427 = vpop.permute.xlu0 %7426
        %7428 = vrot.lane.b32.xlu0 %v7389, 126
        %v7429 = vpop.permute.xlu0 %7428
        %7430 = vrot.lane.b32.xlu0 %v7390, 126
        %v7431 = vpop.permute.xlu0 %7430
        %7432 = vrot.lane.b32.xlu0 %v7391, 126
        %v7433 = vpop.permute.xlu0 %7432
        %7434 = vrot.lane.b32.xlu0 %v7392, 126
        %v7435 = vpop.permute.xlu0 %7434
        %7436 = vrot.lane.b32.xlu0 %v7393, 126
        %v7437 = vpop.permute.xlu0 %7436
        %7438 = vrot.lane.b32.xlu0 %v7394, 126
        %v7439 = vpop.permute.xlu0 %7438
        %7440 = vrot.lane.b32.xlu0 %v7395, 126
        %v7441 = vpop.permute.xlu0 %7440
        %7442 = vrot.lane.b32.xlu0 %v7396, 126
        %v7443 = vpop.permute.xlu0 %7442
        %7444 = vrot.lane.b32.xlu0 %v7397, 126
        %v7445 = vpop.permute.xlu0 %7444
        %v7462 = vcombine.low %v7415, %v7423
        %v7463 = vcombine.high %v7415, %v7423
        %v7465 = vunpack.c.l.s4 1983009808
        %v7466 = vunpack.c.0.s8 %v7465
        %v7467 = vlaneseq
        %v7468 = vshrl.u32 %v7467, 7
        %v7469 = vsub.s32 %v7466, %v7468
        %v7470 = vrot.slane %v7462, %v7469
        %v7472 = vunpack.c.l.s4 1983009808
        %v7473 = vunpack.c.0.s8 %v7472
        %v7474 = vlaneseq
        %v7475 = vshrl.u32 %v7474, 7
        %v7476 = vsub.s32 %v7473, %v7475
        %v7477 = vrot.slane %v7463, %v7476
        %v7478 = vcombine.low %v7419, %v7427
        %v7479 = vcombine.high %v7419, %v7427
        %v7481 = vunpack.c.l.s4 1983009808
        %v7482 = vunpack.c.0.s8 %v7481
        %v7483 = vlaneseq
        %v7484 = vshrl.u32 %v7483, 7
        %v7485 = vsub.s32 %v7482, %v7484
        %v7486 = vrot.slane %v7478, %v7485
        %v7488 = vunpack.c.l.s4 1983009808
        %v7489 = vunpack.c.0.s8 %v7488
        %v7490 = vlaneseq
        %v7491 = vshrl.u32 %v7490, 7
        %v7492 = vsub.s32 %v7489, %v7491
        %v7493 = vrot.slane %v7479, %v7492
        %v7494 = vcombine.low %v7431, %v7439
        %v7495 = vcombine.high %v7431, %v7439
        %v7497 = vunpack.c.l.s4 1983009808
        %v7498 = vunpack.c.0.s8 %v7497
        %v7499 = vlaneseq
        %v7500 = vshrl.u32 %v7499, 7
        %v7501 = vsub.s32 %v7498, %v7500
        %v7502 = vrot.slane %v7494, %v7501
        %v7504 = vunpack.c.l.s4 1983009808
        %v7505 = vunpack.c.0.s8 %v7504
        %v7506 = vlaneseq
        %v7507 = vshrl.u32 %v7506, 7
        %v7508 = vsub.s32 %v7505, %v7507
        %v7509 = vrot.slane %v7495, %v7508
        %v7510 = vcombine.low %v7435, %v7443
        %v7511 = vcombine.high %v7435, %v7443
        %v7513 = vunpack.c.l.s4 1983009808
        %v7514 = vunpack.c.0.s8 %v7513
        %v7515 = vlaneseq
        %v7516 = vshrl.u32 %v7515, 7
        %v7517 = vsub.s32 %v7514, %v7516
        %v7518 = vrot.slane %v7510, %v7517
        %v7520 = vunpack.c.l.s4 1983009808
        %v7521 = vunpack.c.0.s8 %v7520
        %v7522 = vlaneseq
        %v7523 = vshrl.u32 %v7522, 7
        %v7524 = vsub.s32 %v7521, %v7523
        %v7525 = vrot.slane %v7511, %v7524
        %v7526 = vcombine.low %v7470, %v7486
        %v7527 = vcombine.high %v7470, %v7486
        %v7529 = vunpack.c.l.s4 1934713408
        %v7530 = vunpack.c.0.s8 %v7529
        %v7531 = vlaneseq
        %v7532 = vshrl.u32 %v7531, 7
        %v7533 = vsub.s32 %v7530, %v7532
        %v7534 = vrot.slane %v7526, %v7533
        %v7536 = vunpack.c.l.s4 1934713408
        %v7537 = vunpack.c.0.s8 %v7536
        %v7538 = vlaneseq
        %v7539 = vshrl.u32 %v7538, 7
        %v7540 = vsub.s32 %v7537, %v7539
        %v7541 = vrot.slane %v7527, %v7540
        %v7542 = vcombine.low %v7477, %v7493
        %v7543 = vcombine.high %v7477, %v7493
        %v7545 = vunpack.c.l.s4 1934713408
        %v7546 = vunpack.c.0.s8 %v7545
        %v7547 = vlaneseq
        %v7548 = vshrl.u32 %v7547, 7
        %v7549 = vsub.s32 %v7546, %v7548
        %v7550 = vrot.slane %v7542, %v7549
        %v7552 = vunpack.c.l.s4 1934713408
        %v7553 = vunpack.c.0.s8 %v7552
        %v7554 = vlaneseq
        %v7555 = vshrl.u32 %v7554, 7
        %v7556 = vsub.s32 %v7553, %v7555
        %v7557 = vrot.slane %v7543, %v7556
        %v7558 = vcombine.low %v7502, %v7518
        %v7559 = vcombine.high %v7502, %v7518
        %v7561 = vunpack.c.l.s4 1934713408
        %v7562 = vunpack.c.0.s8 %v7561
        %v7563 = vlaneseq
        %v7564 = vshrl.u32 %v7563, 7
        %v7565 = vsub.s32 %v7562, %v7564
        %v7566 = vrot.slane %v7558, %v7565
        %v7568 = vunpack.c.l.s4 1934713408
        %v7569 = vunpack.c.0.s8 %v7568
        %v7570 = vlaneseq
        %v7571 = vshrl.u32 %v7570, 7
        %v7572 = vsub.s32 %v7569, %v7571
        %v7573 = vrot.slane %v7559, %v7572
        %v7574 = vcombine.low %v7509, %v7525
        %v7575 = vcombine.high %v7509, %v7525
        %v7577 = vunpack.c.l.s4 1934713408
        %v7578 = vunpack.c.0.s8 %v7577
        %v7579 = vlaneseq
        %v7580 = vshrl.u32 %v7579, 7
        %v7581 = vsub.s32 %v7578, %v7580
        %v7582 = vrot.slane %v7574, %v7581
        %v7584 = vunpack.c.l.s4 1934713408
        %v7585 = vunpack.c.0.s8 %v7584
        %v7586 = vlaneseq
        %v7587 = vshrl.u32 %v7586, 7
        %v7588 = vsub.s32 %v7585, %v7587
        %v7589 = vrot.slane %v7575, %v7588
        %v7590 = vcombine.low %v7534, %v7566
        %v7591 = vcombine.high %v7534, %v7566
        %v7592 = vcombine.low %v7541, %v7573
        %v7593 = vcombine.high %v7541, %v7573
        %v7594 = vcombine.low %v7550, %v7582
        %v7595 = vcombine.high %v7550, %v7582
        %v7596 = vcombine.low %v7557, %v7589
        %v7597 = vcombine.high %v7557, %v7589
        %v7598 = vcombine.low %v7417, %v7425
        %v7599 = vcombine.high %v7417, %v7425
        %v7601 = vunpack.c.l.s4 1983009808
        %v7602 = vunpack.c.0.s8 %v7601
        %v7603 = vlaneseq
        %v7604 = vshrl.u32 %v7603, 7
        %v7605 = vsub.s32 %v7602, %v7604
        %v7606 = vrot.slane %v7598, %v7605
        %v7608 = vunpack.c.l.s4 1983009808
        %v7609 = vunpack.c.0.s8 %v7608
        %v7610 = vlaneseq
        %v7611 = vshrl.u32 %v7610, 7
        %v7612 = vsub.s32 %v7609, %v7611
        %v7613 = vrot.slane %v7599, %v7612
        %v7614 = vcombine.low %v7421, %v7429
        %v7615 = vcombine.high %v7421, %v7429
        %v7617 = vunpack.c.l.s4 1983009808
        %v7618 = vunpack.c.0.s8 %v7617
        %v7619 = vlaneseq
        %v7620 = vshrl.u32 %v7619, 7
        %v7621 = vsub.s32 %v7618, %v7620
        %v7622 = vrot.slane %v7614, %v7621
        %v7624 = vunpack.c.l.s4 1983009808
        %v7625 = vunpack.c.0.s8 %v7624
        %v7626 = vlaneseq
        %v7627 = vshrl.u32 %v7626, 7
        %v7628 = vsub.s32 %v7625, %v7627
        %v7629 = vrot.slane %v7615, %v7628
        %v7630 = vcombine.low %v7433, %v7441
        %v7631 = vcombine.high %v7433, %v7441
        %v7633 = vunpack.c.l.s4 1983009808
        %v7634 = vunpack.c.0.s8 %v7633
        %v7635 = vlaneseq
        %v7636 = vshrl.u32 %v7635, 7
        %v7637 = vsub.s32 %v7634, %v7636
        %v7638 = vrot.slane %v7630, %v7637
        %v7640 = vunpack.c.l.s4 1983009808
        %v7641 = vunpack.c.0.s8 %v7640
        %v7642 = vlaneseq
        %v7643 = vshrl.u32 %v7642, 7
        %v7644 = vsub.s32 %v7641, %v7643
        %v7645 = vrot.slane %v7631, %v7644
        %v7646 = vcombine.low %v7437, %v7445
        %v7647 = vcombine.high %v7437, %v7445
        %v7649 = vunpack.c.l.s4 1983009808
        %v7650 = vunpack.c.0.s8 %v7649
        %v7651 = vlaneseq
        %v7652 = vshrl.u32 %v7651, 7
        %v7653 = vsub.s32 %v7650, %v7652
        %v7654 = vrot.slane %v7646, %v7653
        %v7656 = vunpack.c.l.s4 1983009808
        %v7657 = vunpack.c.0.s8 %v7656
        %v7658 = vlaneseq
        %v7659 = vshrl.u32 %v7658, 7
        %v7660 = vsub.s32 %v7657, %v7659
        %v7661 = vrot.slane %v7647, %v7660
        %v7662 = vcombine.low %v7606, %v7622
        %v7663 = vcombine.high %v7606, %v7622
        %v7665 = vunpack.c.l.s4 1934713408
        %v7666 = vunpack.c.0.s8 %v7665
        %v7667 = vlaneseq
        %v7668 = vshrl.u32 %v7667, 7
        %v7669 = vsub.s32 %v7666, %v7668
        %v7670 = vrot.slane %v7662, %v7669
        %v7672 = vunpack.c.l.s4 1934713408
        %v7673 = vunpack.c.0.s8 %v7672
        %v7674 = vlaneseq
        %v7675 = vshrl.u32 %v7674, 7
        %v7676 = vsub.s32 %v7673, %v7675
        %v7677 = vrot.slane %v7663, %v7676
        %v7678 = vcombine.low %v7613, %v7629
        %v7679 = vcombine.high %v7613, %v7629
        %v7681 = vunpack.c.l.s4 1934713408
        %v7682 = vunpack.c.0.s8 %v7681
        %v7683 = vlaneseq
        %v7684 = vshrl.u32 %v7683, 7
        %v7685 = vsub.s32 %v7682, %v7684
        %v7686 = vrot.slane %v7678, %v7685
        %v7688 = vunpack.c.l.s4 1934713408
        %v7689 = vunpack.c.0.s8 %v7688
        %v7690 = vlaneseq
        %v7691 = vshrl.u32 %v7690, 7
        %v7692 = vsub.s32 %v7689, %v7691
        %v7693 = vrot.slane %v7679, %v7692
        %v7694 = vcombine.low %v7638, %v7654
        %v7695 = vcombine.high %v7638, %v7654
        %v7697 = vunpack.c.l.s4 1934713408
        %v7698 = vunpack.c.0.s8 %v7697
        %v7699 = vlaneseq
        %v7700 = vshrl.u32 %v7699, 7
        %v7701 = vsub.s32 %v7698, %v7700
        %v7702 = vrot.slane %v7694, %v7701
        %v7704 = vunpack.c.l.s4 1934713408
        %v7705 = vunpack.c.0.s8 %v7704
        %v7706 = vlaneseq
        %v7707 = vshrl.u32 %v7706, 7
        %v7708 = vsub.s32 %v7705, %v7707
        %v7709 = vrot.slane %v7695, %v7708
        %v7710 = vcombine.low %v7645, %v7661
        %v7711 = vcombine.high %v7645, %v7661
        %v7713 = vunpack.c.l.s4 1934713408
        %v7714 = vunpack.c.0.s8 %v7713
        %v7715 = vlaneseq
        %v7716 = vshrl.u32 %v7715, 7
        %v7717 = vsub.s32 %v7714, %v7716
        %v7718 = vrot.slane %v7710, %v7717
        %v7720 = vunpack.c.l.s4 1934713408
        %v7721 = vunpack.c.0.s8 %v7720
        %v7722 = vlaneseq
        %v7723 = vshrl.u32 %v7722, 7
        %v7724 = vsub.s32 %v7721, %v7723
        %v7725 = vrot.slane %v7711, %v7724
        %v7726 = vcombine.low %v7670, %v7702
        %v7727 = vcombine.high %v7670, %v7702
        %v7728 = vcombine.low %v7677, %v7709
        %v7729 = vcombine.high %v7677, %v7709
        %v7730 = vcombine.low %v7686, %v7718
        %v7731 = vcombine.high %v7686, %v7718
        %v7732 = vcombine.low %v7693, %v7725
        %v7733 = vcombine.high %v7693, %v7725
        %7735 = vrot.lane.b32.xlu0 %v7591, 16
        %v7736 = vpop.permute.xlu0 %7735
        %7739 = vrot.lane.b32.xlu0 %v7592, 32
        %v7740 = vpop.permute.xlu0 %7739
        %7743 = vrot.lane.b32.xlu0 %v7593, 48
        %v7744 = vpop.permute.xlu0 %7743
        %7747 = vrot.lane.b32.xlu0 %v7594, 64
        %v7748 = vpop.permute.xlu0 %7747
        %7751 = vrot.lane.b32.xlu0 %v7595, 80
        %v7752 = vpop.permute.xlu0 %7751
        %7755 = vrot.lane.b32.xlu0 %v7596, 96
        %v7756 = vpop.permute.xlu0 %7755
        %7759 = vrot.lane.b32.xlu0 %v7597, 112
        %v7760 = vpop.permute.xlu0 %7759
        %7763 = vrot.lane.b32.xlu0 %v7727, 16
        %v7764 = vpop.permute.xlu0 %7763
        %7767 = vrot.lane.b32.xlu0 %v7728, 32
        %v7768 = vpop.permute.xlu0 %7767
        %7771 = vrot.lane.b32.xlu0 %v7729, 48
        %v7772 = vpop.permute.xlu0 %7771
        %7775 = vrot.lane.b32.xlu0 %v7730, 64
        %v7776 = vpop.permute.xlu0 %7775
        %7779 = vrot.lane.b32.xlu0 %v7731, 80
        %v7780 = vpop.permute.xlu0 %7779
        %7783 = vrot.lane.b32.xlu0 %v7732, 96
        %v7784 = vpop.permute.xlu0 %7783
        %7787 = vrot.lane.b32.xlu0 %v7733, 112
        %v7788 = vpop.permute.xlu0 %7787
        %v7790 = vsel %vm1295, %v7590, %v7736
        %v7791 = vsel %vm1297, %v7790, %v7740
        %v7792 = vsel %vm1299, %v7791, %v7744
        %v7793 = vsel %vm1301, %v7792, %v7748
        %v7794 = vsel %vm1303, %v7793, %v7752
        %v7795 = vsel %vm1305, %v7794, %v7756
        %v7796 = vsel %vm1307, %v7795, %v7760
        %v7797 = vsel %vm1295, %v7726, %v7764
        %v7798 = vsel %vm1297, %v7797, %v7768
        %v7799 = vsel %vm1299, %v7798, %v7772
        %v7800 = vsel %vm1301, %v7799, %v7776
        %v7801 = vsel %vm1303, %v7800, %v7780
        %v7802 = vsel %vm1305, %v7801, %v7784
        %v7803 = vsel %vm1307, %v7802, %v7788
        %7804 = vst [vmem:[#allocation3 + $0x50] sm:$0xff] %v7796
        %7805 = vst [vmem:[#allocation3 + $0x58] sm:$0xff] %v7803
        %v7806 = vld [vmem:[#allocation2 + $0x2] sm:$0xff]
        %v7807 = vld [vmem:[#allocation2 + $0xa] sm:$0xff]
        %v7808 = vld [vmem:[#allocation2 + $0x1a] sm:$0xff]
        %v7809 = vld [vmem:[#allocation2 + $0x22] sm:$0xff]
        %v7810 = vld [vmem:[#allocation2 + $0x32] sm:$0xff]
        %v7811 = vld [vmem:[#allocation2 + $0x3a] sm:$0xff]
        %v7812 = vld [vmem:[#allocation2 + $0x4a] sm:$0xff]
        %v7813 = vld [vmem:[#allocation2 + $0x52] sm:$0xff]
        %v7814 = vld [vmem:[#allocation2 + $0x62] sm:$0xff]
        %v7815 = vld [vmem:[#allocation2 + $0x6a] sm:$0xff]
        %v7816 = vld [vmem:[#allocation2 + $0x7a] sm:$0xff]
        %v7817 = vld [vmem:[#allocation2 + $0x82] sm:$0xff]
        %v7818 = vld [vmem:[#allocation2 + $0x92] sm:$0xff]
        %v7819 = vld [vmem:[#allocation2 + $0x9a] sm:$0xff]
        %v7820 = vld [vmem:[#allocation2 + $0xaa] sm:$0xff]
        %v7821 = vld [vmem:[#allocation2 + $0xb2] sm:$0xff]
        %v7822 = vcombine.low %v7806, %v7810
        %v7823 = vcombine.high %v7806, %v7810
        %v7825 = vunpack.c.l.s4 1983009808
        %v7826 = vunpack.c.0.s8 %v7825
        %v7827 = vlaneseq
        %v7828 = vshrl.u32 %v7827, 7
        %v7829 = vsub.s32 %v7826, %v7828
        %v7830 = vrot.slane %v7822, %v7829
        %v7832 = vunpack.c.l.s4 1983009808
        %v7833 = vunpack.c.0.s8 %v7832
        %v7834 = vlaneseq
        %v7835 = vshrl.u32 %v7834, 7
        %v7836 = vsub.s32 %v7833, %v7835
        %v7837 = vrot.slane %v7823, %v7836
        %v7838 = vcombine.low %v7808, %v7812
        %v7839 = vcombine.high %v7808, %v7812
        %v7841 = vunpack.c.l.s4 1983009808
        %v7842 = vunpack.c.0.s8 %v7841
        %v7843 = vlaneseq
        %v7844 = vshrl.u32 %v7843, 7
        %v7845 = vsub.s32 %v7842, %v7844
        %v7846 = vrot.slane %v7838, %v7845
        %v7848 = vunpack.c.l.s4 1983009808
        %v7849 = vunpack.c.0.s8 %v7848
        %v7850 = vlaneseq
        %v7851 = vshrl.u32 %v7850, 7
        %v7852 = vsub.s32 %v7849, %v7851
        %v7853 = vrot.slane %v7839, %v7852
        %v7854 = vcombine.low %v7814, %v7818
        %v7855 = vcombine.high %v7814, %v7818
        %v7857 = vunpack.c.l.s4 1983009808
        %v7858 = vunpack.c.0.s8 %v7857
        %v7859 = vlaneseq
        %v7860 = vshrl.u32 %v7859, 7
        %v7861 = vsub.s32 %v7858, %v7860
        %v7862 = vrot.slane %v7854, %v7861
        %v7864 = vunpack.c.l.s4 1983009808
        %v7865 = vunpack.c.0.s8 %v7864
        %v7866 = vlaneseq
        %v7867 = vshrl.u32 %v7866, 7
        %v7868 = vsub.s32 %v7865, %v7867
        %v7869 = vrot.slane %v7855, %v7868
        %v7870 = vcombine.low %v7816, %v7820
        %v7871 = vcombine.high %v7816, %v7820
        %v7873 = vunpack.c.l.s4 1983009808
        %v7874 = vunpack.c.0.s8 %v7873
        %v7875 = vlaneseq
        %v7876 = vshrl.u32 %v7875, 7
        %v7877 = vsub.s32 %v7874, %v7876
        %v7878 = vrot.slane %v7870, %v7877
        %v7880 = vunpack.c.l.s4 1983009808
        %v7881 = vunpack.c.0.s8 %v7880
        %v7882 = vlaneseq
        %v7883 = vshrl.u32 %v7882, 7
        %v7884 = vsub.s32 %v7881, %v7883
        %v7885 = vrot.slane %v7871, %v7884
        %v7886 = vcombine.low %v7830, %v7846
        %v7887 = vcombine.high %v7830, %v7846
        %v7889 = vunpack.c.l.s4 1934713408
        %v7890 = vunpack.c.0.s8 %v7889
        %v7891 = vlaneseq
        %v7892 = vshrl.u32 %v7891, 7
        %v7893 = vsub.s32 %v7890, %v7892
        %v7894 = vrot.slane %v7886, %v7893
        %v7896 = vunpack.c.l.s4 1934713408
        %v7897 = vunpack.c.0.s8 %v7896
        %v7898 = vlaneseq
        %v7899 = vshrl.u32 %v7898, 7
        %v7900 = vsub.s32 %v7897, %v7899
        %v7901 = vrot.slane %v7887, %v7900
        %v7902 = vcombine.low %v7837, %v7853
        %v7903 = vcombine.high %v7837, %v7853
        %v7905 = vunpack.c.l.s4 1934713408
        %v7906 = vunpack.c.0.s8 %v7905
        %v7907 = vlaneseq
        %v7908 = vshrl.u32 %v7907, 7
        %v7909 = vsub.s32 %v7906, %v7908
        %v7910 = vrot.slane %v7902, %v7909
        %v7912 = vunpack.c.l.s4 1934713408
        %v7913 = vunpack.c.0.s8 %v7912
        %v7914 = vlaneseq
        %v7915 = vshrl.u32 %v7914, 7
        %v7916 = vsub.s32 %v7913, %v7915
        %v7917 = vrot.slane %v7903, %v7916
        %v7918 = vcombine.low %v7862, %v7878
        %v7919 = vcombine.high %v7862, %v7878
        %v7921 = vunpack.c.l.s4 1934713408
        %v7922 = vunpack.c.0.s8 %v7921
        %v7923 = vlaneseq
        %v7924 = vshrl.u32 %v7923, 7
        %v7925 = vsub.s32 %v7922, %v7924
        %v7926 = vrot.slane %v7918, %v7925
        %v7928 = vunpack.c.l.s4 1934713408
        %v7929 = vunpack.c.0.s8 %v7928
        %v7930 = vlaneseq
        %v7931 = vshrl.u32 %v7930, 7
        %v7932 = vsub.s32 %v7929, %v7931
        %v7933 = vrot.slane %v7919, %v7932
        %v7934 = vcombine.low %v7869, %v7885
        %v7935 = vcombine.high %v7869, %v7885
        %v7937 = vunpack.c.l.s4 1934713408
        %v7938 = vunpack.c.0.s8 %v7937
        %v7939 = vlaneseq
        %v7940 = vshrl.u32 %v7939, 7
        %v7941 = vsub.s32 %v7938, %v7940
        %v7942 = vrot.slane %v7934, %v7941
        %v7944 = vunpack.c.l.s4 1934713408
        %v7945 = vunpack.c.0.s8 %v7944
        %v7946 = vlaneseq
        %v7947 = vshrl.u32 %v7946, 7
        %v7948 = vsub.s32 %v7945, %v7947
        %v7949 = vrot.slane %v7935, %v7948
        %v7950 = vcombine.low %v7894, %v7926
        %v7951 = vcombine.high %v7894, %v7926
        %v7952 = vcombine.low %v7901, %v7933
        %v7953 = vcombine.high %v7901, %v7933
        %v7954 = vcombine.low %v7910, %v7942
        %v7955 = vcombine.high %v7910, %v7942
        %v7956 = vcombine.low %v7917, %v7949
        %v7957 = vcombine.high %v7917, %v7949
        %v7958 = vcombine.low %v7807, %v7811
        %v7959 = vcombine.high %v7807, %v7811
        %v7961 = vunpack.c.l.s4 1983009808
        %v7962 = vunpack.c.0.s8 %v7961
        %v7963 = vlaneseq
        %v7964 = vshrl.u32 %v7963, 7
        %v7965 = vsub.s32 %v7962, %v7964
        %v7966 = vrot.slane %v7958, %v7965
        %v7968 = vunpack.c.l.s4 1983009808
        %v7969 = vunpack.c.0.s8 %v7968
        %v7970 = vlaneseq
        %v7971 = vshrl.u32 %v7970, 7
        %v7972 = vsub.s32 %v7969, %v7971
        %v7973 = vrot.slane %v7959, %v7972
        %v7974 = vcombine.low %v7809, %v7813
        %v7975 = vcombine.high %v7809, %v7813
        %v7977 = vunpack.c.l.s4 1983009808
        %v7978 = vunpack.c.0.s8 %v7977
        %v7979 = vlaneseq
        %v7980 = vshrl.u32 %v7979, 7
        %v7981 = vsub.s32 %v7978, %v7980
        %v7982 = vrot.slane %v7974, %v7981
        %v7984 = vunpack.c.l.s4 1983009808
        %v7985 = vunpack.c.0.s8 %v7984
        %v7986 = vlaneseq
        %v7987 = vshrl.u32 %v7986, 7
        %v7988 = vsub.s32 %v7985, %v7987
        %v7989 = vrot.slane %v7975, %v7988
        %v7990 = vcombine.low %v7815, %v7819
        %v7991 = vcombine.high %v7815, %v7819
        %v7993 = vunpack.c.l.s4 1983009808
        %v7994 = vunpack.c.0.s8 %v7993
        %v7995 = vlaneseq
        %v7996 = vshrl.u32 %v7995, 7
        %v7997 = vsub.s32 %v7994, %v7996
        %v7998 = vrot.slane %v7990, %v7997
        %v8000 = vunpack.c.l.s4 1983009808
        %v8001 = vunpack.c.0.s8 %v8000
        %v8002 = vlaneseq
        %v8003 = vshrl.u32 %v8002, 7
        %v8004 = vsub.s32 %v8001, %v8003
        %v8005 = vrot.slane %v7991, %v8004
        %v8006 = vcombine.low %v7817, %v7821
        %v8007 = vcombine.high %v7817, %v7821
        %v8009 = vunpack.c.l.s4 1983009808
        %v8010 = vunpack.c.0.s8 %v8009
        %v8011 = vlaneseq
        %v8012 = vshrl.u32 %v8011, 7
        %v8013 = vsub.s32 %v8010, %v8012
        %v8014 = vrot.slane %v8006, %v8013
        %v8016 = vunpack.c.l.s4 1983009808
        %v8017 = vunpack.c.0.s8 %v8016
        %v8018 = vlaneseq
        %v8019 = vshrl.u32 %v8018, 7
        %v8020 = vsub.s32 %v8017, %v8019
        %v8021 = vrot.slane %v8007, %v8020
        %v8022 = vcombine.low %v7966, %v7982
        %v8023 = vcombine.high %v7966, %v7982
        %v8025 = vunpack.c.l.s4 1934713408
        %v8026 = vunpack.c.0.s8 %v8025
        %v8027 = vlaneseq
        %v8028 = vshrl.u32 %v8027, 7
        %v8029 = vsub.s32 %v8026, %v8028
        %v8030 = vrot.slane %v8022, %v8029
        %v8032 = vunpack.c.l.s4 1934713408
        %v8033 = vunpack.c.0.s8 %v8032
        %v8034 = vlaneseq
        %v8035 = vshrl.u32 %v8034, 7
        %v8036 = vsub.s32 %v8033, %v8035
        %v8037 = vrot.slane %v8023, %v8036
        %v8038 = vcombine.low %v7973, %v7989
        %v8039 = vcombine.high %v7973, %v7989
        %v8041 = vunpack.c.l.s4 1934713408
        %v8042 = vunpack.c.0.s8 %v8041
        %v8043 = vlaneseq
        %v8044 = vshrl.u32 %v8043, 7
        %v8045 = vsub.s32 %v8042, %v8044
        %v8046 = vrot.slane %v8038, %v8045
        %v8048 = vunpack.c.l.s4 1934713408
        %v8049 = vunpack.c.0.s8 %v8048
        %v8050 = vlaneseq
        %v8051 = vshrl.u32 %v8050, 7
        %v8052 = vsub.s32 %v8049, %v8051
        %v8053 = vrot.slane %v8039, %v8052
        %v8054 = vcombine.low %v7998, %v8014
        %v8055 = vcombine.high %v7998, %v8014
        %v8057 = vunpack.c.l.s4 1934713408
        %v8058 = vunpack.c.0.s8 %v8057
        %v8059 = vlaneseq
        %v8060 = vshrl.u32 %v8059, 7
        %v8061 = vsub.s32 %v8058, %v8060
        %v8062 = vrot.slane %v8054, %v8061
        %v8064 = vunpack.c.l.s4 1934713408
        %v8065 = vunpack.c.0.s8 %v8064
        %v8066 = vlaneseq
        %v8067 = vshrl.u32 %v8066, 7
        %v8068 = vsub.s32 %v8065, %v8067
        %v8069 = vrot.slane %v8055, %v8068
        %v8070 = vcombine.low %v8005, %v8021
        %v8071 = vcombine.high %v8005, %v8021
        %v8073 = vunpack.c.l.s4 1934713408
        %v8074 = vunpack.c.0.s8 %v8073
        %v8075 = vlaneseq
        %v8076 = vshrl.u32 %v8075, 7
        %v8077 = vsub.s32 %v8074, %v8076
        %v8078 = vrot.slane %v8070, %v8077
        %v8080 = vunpack.c.l.s4 1934713408
        %v8081 = vunpack.c.0.s8 %v8080
        %v8082 = vlaneseq
        %v8083 = vshrl.u32 %v8082, 7
        %v8084 = vsub.s32 %v8081, %v8083
        %v8085 = vrot.slane %v8071, %v8084
        %v8086 = vcombine.low %v8030, %v8062
        %v8087 = vcombine.high %v8030, %v8062
        %v8088 = vcombine.low %v8037, %v8069
        %v8089 = vcombine.high %v8037, %v8069
        %v8090 = vcombine.low %v8046, %v8078
        %v8091 = vcombine.high %v8046, %v8078
        %v8092 = vcombine.low %v8053, %v8085
        %v8093 = vcombine.high %v8053, %v8085
        %8095 = vrot.lane.b32.xlu0 %v7951, 16
        %v8096 = vpop.permute.xlu0 %8095
        %8099 = vrot.lane.b32.xlu0 %v7952, 32
        %v8100 = vpop.permute.xlu0 %8099
        %8103 = vrot.lane.b32.xlu0 %v7953, 48
        %v8104 = vpop.permute.xlu0 %8103
        %8107 = vrot.lane.b32.xlu0 %v7954, 64
        %v8108 = vpop.permute.xlu0 %8107
        %8111 = vrot.lane.b32.xlu0 %v7955, 80
        %v8112 = vpop.permute.xlu0 %8111
        %8115 = vrot.lane.b32.xlu0 %v7956, 96
        %v8116 = vpop.permute.xlu0 %8115
        %8119 = vrot.lane.b32.xlu0 %v7957, 112
        %v8120 = vpop.permute.xlu0 %8119
        %8123 = vrot.lane.b32.xlu0 %v8087, 16
        %v8124 = vpop.permute.xlu0 %8123
        %8127 = vrot.lane.b32.xlu0 %v8088, 32
        %v8128 = vpop.permute.xlu0 %8127
        %8131 = vrot.lane.b32.xlu0 %v8089, 48
        %v8132 = vpop.permute.xlu0 %8131
        %8135 = vrot.lane.b32.xlu0 %v8090, 64
        %v8136 = vpop.permute.xlu0 %8135
        %8139 = vrot.lane.b32.xlu0 %v8091, 80
        %v8140 = vpop.permute.xlu0 %8139
        %8143 = vrot.lane.b32.xlu0 %v8092, 96
        %v8144 = vpop.permute.xlu0 %8143
        %8147 = vrot.lane.b32.xlu0 %v8093, 112
        %v8148 = vpop.permute.xlu0 %8147
        %v8150 = vsel %vm1295, %v7950, %v8096
        %v8151 = vsel %vm1297, %v8150, %v8100
        %v8152 = vsel %vm1299, %v8151, %v8104
        %v8153 = vsel %vm1301, %v8152, %v8108
        %v8154 = vsel %vm1303, %v8153, %v8112
        %v8155 = vsel %vm1305, %v8154, %v8116
        %v8156 = vsel %vm1307, %v8155, %v8120
        %v8157 = vsel %vm1295, %v8086, %v8124
        %v8158 = vsel %vm1297, %v8157, %v8128
        %v8159 = vsel %vm1299, %v8158, %v8132
        %v8160 = vsel %vm1301, %v8159, %v8136
        %v8161 = vsel %vm1303, %v8160, %v8140
        %v8162 = vsel %vm1305, %v8161, %v8144
        %v8163 = vsel %vm1307, %v8162, %v8148
        %8164 = vst [vmem:[#allocation3 + $0x60] sm:$0xff] %v8156
        %8165 = vst [vmem:[#allocation3 + $0x68] sm:$0xff] %v8163
        %v8166 = vld [vmem:[#allocation2 + $0x2] sm:$0xff]
        %v8167 = vld [vmem:[#allocation2 + $0xa] sm:$0xff]
        %v8168 = vld [vmem:[#allocation2 + $0x1a] sm:$0xff]
        %v8169 = vld [vmem:[#allocation2 + $0x22] sm:$0xff]
        %v8170 = vld [vmem:[#allocation2 + $0x32] sm:$0xff]
        %v8171 = vld [vmem:[#allocation2 + $0x3a] sm:$0xff]
        %v8172 = vld [vmem:[#allocation2 + $0x4a] sm:$0xff]
        %v8173 = vld [vmem:[#allocation2 + $0x52] sm:$0xff]
        %v8174 = vld [vmem:[#allocation2 + $0x62] sm:$0xff]
        %v8175 = vld [vmem:[#allocation2 + $0x6a] sm:$0xff]
        %v8176 = vld [vmem:[#allocation2 + $0x7a] sm:$0xff]
        %v8177 = vld [vmem:[#allocation2 + $0x82] sm:$0xff]
        %v8178 = vld [vmem:[#allocation2 + $0x92] sm:$0xff]
        %v8179 = vld [vmem:[#allocation2 + $0x9a] sm:$0xff]
        %v8180 = vld [vmem:[#allocation2 + $0xaa] sm:$0xff]
        %v8181 = vld [vmem:[#allocation2 + $0xb2] sm:$0xff]
        %8198 = vrot.lane.b32.xlu0 %v8166, 127
        %v8199 = vpop.permute.xlu0 %8198
        %8200 = vrot.lane.b32.xlu0 %v8167, 127
        %v8201 = vpop.permute.xlu0 %8200
        %8202 = vrot.lane.b32.xlu0 %v8168, 127
        %v8203 = vpop.permute.xlu0 %8202
        %8204 = vrot.lane.b32.xlu0 %v8169, 127
        %v8205 = vpop.permute.xlu0 %8204
        %8206 = vrot.lane.b32.xlu0 %v8170, 127
        %v8207 = vpop.permute.xlu0 %8206
        %8208 = vrot.lane.b32.xlu0 %v8171, 127
        %v8209 = vpop.permute.xlu0 %8208
        %8210 = vrot.lane.b32.xlu0 %v8172, 127
        %v8211 = vpop.permute.xlu0 %8210
        %8212 = vrot.lane.b32.xlu0 %v8173, 127
        %v8213 = vpop.permute.xlu0 %8212
        %8214 = vrot.lane.b32.xlu0 %v8174, 127
        %v8215 = vpop.permute.xlu0 %8214
        %8216 = vrot.lane.b32.xlu0 %v8175, 127
        %v8217 = vpop.permute.xlu0 %8216
        %8218 = vrot.lane.b32.xlu0 %v8176, 127
        %v8219 = vpop.permute.xlu0 %8218
        %8220 = vrot.lane.b32.xlu0 %v8177, 127
        %v8221 = vpop.permute.xlu0 %8220
        %8222 = vrot.lane.b32.xlu0 %v8178, 127
        %v8223 = vpop.permute.xlu0 %8222
        %8224 = vrot.lane.b32.xlu0 %v8179, 127
        %v8225 = vpop.permute.xlu0 %8224
        %8226 = vrot.lane.b32.xlu0 %v8180, 127
        %v8227 = vpop.permute.xlu0 %8226
        %8228 = vrot.lane.b32.xlu0 %v8181, 127
        %v8229 = vpop.permute.xlu0 %8228
        %v8246 = vcombine.low %v8199, %v8207
        %v8247 = vcombine.high %v8199, %v8207
        %v8249 = vunpack.c.l.s4 1983009808
        %v8250 = vunpack.c.0.s8 %v8249
        %v8251 = vlaneseq
        %v8252 = vshrl.u32 %v8251, 7
        %v8253 = vsub.s32 %v8250, %v8252
        %v8254 = vrot.slane %v8246, %v8253
        %v8256 = vunpack.c.l.s4 1983009808
        %v8257 = vunpack.c.0.s8 %v8256
        %v8258 = vlaneseq
        %v8259 = vshrl.u32 %v8258, 7
        %v8260 = vsub.s32 %v8257, %v8259
        %v8261 = vrot.slane %v8247, %v8260
        %v8262 = vcombine.low %v8203, %v8211
        %v8263 = vcombine.high %v8203, %v8211
        %v8265 = vunpack.c.l.s4 1983009808
        %v8266 = vunpack.c.0.s8 %v8265
        %v8267 = vlaneseq
        %v8268 = vshrl.u32 %v8267, 7
        %v8269 = vsub.s32 %v8266, %v8268
        %v8270 = vrot.slane %v8262, %v8269
        %v8272 = vunpack.c.l.s4 1983009808
        %v8273 = vunpack.c.0.s8 %v8272
        %v8274 = vlaneseq
        %v8275 = vshrl.u32 %v8274, 7
        %v8276 = vsub.s32 %v8273, %v8275
        %v8277 = vrot.slane %v8263, %v8276
        %v8278 = vcombine.low %v8215, %v8223
        %v8279 = vcombine.high %v8215, %v8223
        %v8281 = vunpack.c.l.s4 1983009808
        %v8282 = vunpack.c.0.s8 %v8281
        %v8283 = vlaneseq
        %v8284 = vshrl.u32 %v8283, 7
        %v8285 = vsub.s32 %v8282, %v8284
        %v8286 = vrot.slane %v8278, %v8285
        %v8288 = vunpack.c.l.s4 1983009808
        %v8289 = vunpack.c.0.s8 %v8288
        %v8290 = vlaneseq
        %v8291 = vshrl.u32 %v8290, 7
        %v8292 = vsub.s32 %v8289, %v8291
        %v8293 = vrot.slane %v8279, %v8292
        %v8294 = vcombine.low %v8219, %v8227
        %v8295 = vcombine.high %v8219, %v8227
        %v8297 = vunpack.c.l.s4 1983009808
        %v8298 = vunpack.c.0.s8 %v8297
        %v8299 = vlaneseq
        %v8300 = vshrl.u32 %v8299, 7
        %v8301 = vsub.s32 %v8298, %v8300
        %v8302 = vrot.slane %v8294, %v8301
        %v8304 = vunpack.c.l.s4 1983009808
        %v8305 = vunpack.c.0.s8 %v8304
        %v8306 = vlaneseq
        %v8307 = vshrl.u32 %v8306, 7
        %v8308 = vsub.s32 %v8305, %v8307
        %v8309 = vrot.slane %v8295, %v8308
        %v8310 = vcombine.low %v8254, %v8270
        %v8311 = vcombine.high %v8254, %v8270
        %v8313 = vunpack.c.l.s4 1934713408
        %v8314 = vunpack.c.0.s8 %v8313
        %v8315 = vlaneseq
        %v8316 = vshrl.u32 %v8315, 7
        %v8317 = vsub.s32 %v8314, %v8316
        %v8318 = vrot.slane %v8310, %v8317
        %v8320 = vunpack.c.l.s4 1934713408
        %v8321 = vunpack.c.0.s8 %v8320
        %v8322 = vlaneseq
        %v8323 = vshrl.u32 %v8322, 7
        %v8324 = vsub.s32 %v8321, %v8323
        %v8325 = vrot.slane %v8311, %v8324
        %v8326 = vcombine.low %v8261, %v8277
        %v8327 = vcombine.high %v8261, %v8277
        %v8329 = vunpack.c.l.s4 1934713408
        %v8330 = vunpack.c.0.s8 %v8329
        %v8331 = vlaneseq
        %v8332 = vshrl.u32 %v8331, 7
        %v8333 = vsub.s32 %v8330, %v8332
        %v8334 = vrot.slane %v8326, %v8333
        %v8336 = vunpack.c.l.s4 1934713408
        %v8337 = vunpack.c.0.s8 %v8336
        %v8338 = vlaneseq
        %v8339 = vshrl.u32 %v8338, 7
        %v8340 = vsub.s32 %v8337, %v8339
        %v8341 = vrot.slane %v8327, %v8340
        %v8342 = vcombine.low %v8286, %v8302
        %v8343 = vcombine.high %v8286, %v8302
        %v8345 = vunpack.c.l.s4 1934713408
        %v8346 = vunpack.c.0.s8 %v8345
        %v8347 = vlaneseq
        %v8348 = vshrl.u32 %v8347, 7
        %v8349 = vsub.s32 %v8346, %v8348
        %v8350 = vrot.slane %v8342, %v8349
        %v8352 = vunpack.c.l.s4 1934713408
        %v8353 = vunpack.c.0.s8 %v8352
        %v8354 = vlaneseq
        %v8355 = vshrl.u32 %v8354, 7
        %v8356 = vsub.s32 %v8353, %v8355
        %v8357 = vrot.slane %v8343, %v8356
        %v8358 = vcombine.low %v8293, %v8309
        %v8359 = vcombine.high %v8293, %v8309
        %v8361 = vunpack.c.l.s4 1934713408
        %v8362 = vunpack.c.0.s8 %v8361
        %v8363 = vlaneseq
        %v8364 = vshrl.u32 %v8363, 7
        %v8365 = vsub.s32 %v8362, %v8364
        %v8366 = vrot.slane %v8358, %v8365
        %v8368 = vunpack.c.l.s4 1934713408
        %v8369 = vunpack.c.0.s8 %v8368
        %v8370 = vlaneseq
        %v8371 = vshrl.u32 %v8370, 7
        %v8372 = vsub.s32 %v8369, %v8371
        %v8373 = vrot.slane %v8359, %v8372
        %v8374 = vcombine.low %v8318, %v8350
        %v8375 = vcombine.high %v8318, %v8350
        %v8376 = vcombine.low %v8325, %v8357
        %v8377 = vcombine.high %v8325, %v8357
        %v8378 = vcombine.low %v8334, %v8366
        %v8379 = vcombine.high %v8334, %v8366
        %v8380 = vcombine.low %v8341, %v8373
        %v8381 = vcombine.high %v8341, %v8373
        %v8382 = vcombine.low %v8201, %v8209
        %v8383 = vcombine.high %v8201, %v8209
        %v8385 = vunpack.c.l.s4 1983009808
        %v8386 = vunpack.c.0.s8 %v8385
        %v8387 = vlaneseq
        %v8388 = vshrl.u32 %v8387, 7
        %v8389 = vsub.s32 %v8386, %v8388
        %v8390 = vrot.slane %v8382, %v8389
        %v8392 = vunpack.c.l.s4 1983009808
        %v8393 = vunpack.c.0.s8 %v8392
        %v8394 = vlaneseq
        %v8395 = vshrl.u32 %v8394, 7
        %v8396 = vsub.s32 %v8393, %v8395
        %v8397 = vrot.slane %v8383, %v8396
        %v8398 = vcombine.low %v8205, %v8213
        %v8399 = vcombine.high %v8205, %v8213
        %v8401 = vunpack.c.l.s4 1983009808
        %v8402 = vunpack.c.0.s8 %v8401
        %v8403 = vlaneseq
        %v8404 = vshrl.u32 %v8403, 7
        %v8405 = vsub.s32 %v8402, %v8404
        %v8406 = vrot.slane %v8398, %v8405
        %v8408 = vunpack.c.l.s4 1983009808
        %v8409 = vunpack.c.0.s8 %v8408
        %v8410 = vlaneseq
        %v8411 = vshrl.u32 %v8410, 7
        %v8412 = vsub.s32 %v8409, %v8411
        %v8413 = vrot.slane %v8399, %v8412
        %v8414 = vcombine.low %v8217, %v8225
        %v8415 = vcombine.high %v8217, %v8225
        %v8417 = vunpack.c.l.s4 1983009808
        %v8418 = vunpack.c.0.s8 %v8417
        %v8419 = vlaneseq
        %v8420 = vshrl.u32 %v8419, 7
        %v8421 = vsub.s32 %v8418, %v8420
        %v8422 = vrot.slane %v8414, %v8421
        %v8424 = vunpack.c.l.s4 1983009808
        %v8425 = vunpack.c.0.s8 %v8424
        %v8426 = vlaneseq
        %v8427 = vshrl.u32 %v8426, 7
        %v8428 = vsub.s32 %v8425, %v8427
        %v8429 = vrot.slane %v8415, %v8428
        %v8430 = vcombine.low %v8221, %v8229
        %v8431 = vcombine.high %v8221, %v8229
        %v8433 = vunpack.c.l.s4 1983009808
        %v8434 = vunpack.c.0.s8 %v8433
        %v8435 = vlaneseq
        %v8436 = vshrl.u32 %v8435, 7
        %v8437 = vsub.s32 %v8434, %v8436
        %v8438 = vrot.slane %v8430, %v8437
        %v8440 = vunpack.c.l.s4 1983009808
        %v8441 = vunpack.c.0.s8 %v8440
        %v8442 = vlaneseq
        %v8443 = vshrl.u32 %v8442, 7
        %v8444 = vsub.s32 %v8441, %v8443
        %v8445 = vrot.slane %v8431, %v8444
        %v8446 = vcombine.low %v8390, %v8406
        %v8447 = vcombine.high %v8390, %v8406
        %v8449 = vunpack.c.l.s4 1934713408
        %v8450 = vunpack.c.0.s8 %v8449
        %v8451 = vlaneseq
        %v8452 = vshrl.u32 %v8451, 7
        %v8453 = vsub.s32 %v8450, %v8452
        %v8454 = vrot.slane %v8446, %v8453
        %v8456 = vunpack.c.l.s4 1934713408
        %v8457 = vunpack.c.0.s8 %v8456
        %v8458 = vlaneseq
        %v8459 = vshrl.u32 %v8458, 7
        %v8460 = vsub.s32 %v8457, %v8459
        %v8461 = vrot.slane %v8447, %v8460
        %v8462 = vcombine.low %v8397, %v8413
        %v8463 = vcombine.high %v8397, %v8413
        %v8465 = vunpack.c.l.s4 1934713408
        %v8466 = vunpack.c.0.s8 %v8465
        %v8467 = vlaneseq
        %v8468 = vshrl.u32 %v8467, 7
        %v8469 = vsub.s32 %v8466, %v8468
        %v8470 = vrot.slane %v8462, %v8469
        %v8472 = vunpack.c.l.s4 1934713408
        %v8473 = vunpack.c.0.s8 %v8472
        %v8474 = vlaneseq
        %v8475 = vshrl.u32 %v8474, 7
        %v8476 = vsub.s32 %v8473, %v8475
        %v8477 = vrot.slane %v8463, %v8476
        %v8478 = vcombine.low %v8422, %v8438
        %v8479 = vcombine.high %v8422, %v8438
        %v8481 = vunpack.c.l.s4 1934713408
        %v8482 = vunpack.c.0.s8 %v8481
        %v8483 = vlaneseq
        %v8484 = vshrl.u32 %v8483, 7
        %v8485 = vsub.s32 %v8482, %v8484
        %v8486 = vrot.slane %v8478, %v8485
        %v8488 = vunpack.c.l.s4 1934713408
        %v8489 = vunpack.c.0.s8 %v8488
        %v8490 = vlaneseq
        %v8491 = vshrl.u32 %v8490, 7
        %v8492 = vsub.s32 %v8489, %v8491
        %v8493 = vrot.slane %v8479, %v8492
        %v8494 = vcombine.low %v8429, %v8445
        %v8495 = vcombine.high %v8429, %v8445
        %v8497 = vunpack.c.l.s4 1934713408
        %v8498 = vunpack.c.0.s8 %v8497
        %v8499 = vlaneseq
        %v8500 = vshrl.u32 %v8499, 7
        %v8501 = vsub.s32 %v8498, %v8500
        %v8502 = vrot.slane %v8494, %v8501
        %v8504 = vunpack.c.l.s4 1934713408
        %v8505 = vunpack.c.0.s8 %v8504
        %v8506 = vlaneseq
        %v8507 = vshrl.u32 %v8506, 7
        %v8508 = vsub.s32 %v8505, %v8507
        %v8509 = vrot.slane %v8495, %v8508
        %v8510 = vcombine.low %v8454, %v8486
        %v8511 = vcombine.high %v8454, %v8486
        %v8512 = vcombine.low %v8461, %v8493
        %v8513 = vcombine.high %v8461, %v8493
        %v8514 = vcombine.low %v8470, %v8502
        %v8515 = vcombine.high %v8470, %v8502
        %v8516 = vcombine.low %v8477, %v8509
        %v8517 = vcombine.high %v8477, %v8509
        %8519 = vrot.lane.b32.xlu0 %v8375, 16
        %v8520 = vpop.permute.xlu0 %8519
        %8523 = vrot.lane.b32.xlu0 %v8376, 32
        %v8524 = vpop.permute.xlu0 %8523
        %8527 = vrot.lane.b32.xlu0 %v8377, 48
        %v8528 = vpop.permute.xlu0 %8527
        %8531 = vrot.lane.b32.xlu0 %v8378, 64
        %v8532 = vpop.permute.xlu0 %8531
        %8535 = vrot.lane.b32.xlu0 %v8379, 80
        %v8536 = vpop.permute.xlu0 %8535
        %8539 = vrot.lane.b32.xlu0 %v8380, 96
        %v8540 = vpop.permute.xlu0 %8539
        %8543 = vrot.lane.b32.xlu0 %v8381, 112
        %v8544 = vpop.permute.xlu0 %8543
        %8547 = vrot.lane.b32.xlu0 %v8511, 16
        %v8548 = vpop.permute.xlu0 %8547
        %8551 = vrot.lane.b32.xlu0 %v8512, 32
        %v8552 = vpop.permute.xlu0 %8551
        %8555 = vrot.lane.b32.xlu0 %v8513, 48
        %v8556 = vpop.permute.xlu0 %8555
        %8559 = vrot.lane.b32.xlu0 %v8514, 64
        %v8560 = vpop.permute.xlu0 %8559
        %8563 = vrot.lane.b32.xlu0 %v8515, 80
        %v8564 = vpop.permute.xlu0 %8563
        %8567 = vrot.lane.b32.xlu0 %v8516, 96
        %v8568 = vpop.permute.xlu0 %8567
        %8571 = vrot.lane.b32.xlu0 %v8517, 112
        %v8572 = vpop.permute.xlu0 %8571
        %v8574 = vsel %vm1295, %v8374, %v8520
        %v8575 = vsel %vm1297, %v8574, %v8524
        %v8576 = vsel %vm1299, %v8575, %v8528
        %v8577 = vsel %vm1301, %v8576, %v8532
        %v8578 = vsel %vm1303, %v8577, %v8536
        %v8579 = vsel %vm1305, %v8578, %v8540
        %v8580 = vsel %vm1307, %v8579, %v8544
        %v8581 = vsel %vm1295, %v8510, %v8548
        %v8582 = vsel %vm1297, %v8581, %v8552
        %v8583 = vsel %vm1299, %v8582, %v8556
        %v8584 = vsel %vm1301, %v8583, %v8560
        %v8585 = vsel %vm1303, %v8584, %v8564
        %v8586 = vsel %vm1305, %v8585, %v8568
        %v8587 = vsel %vm1307, %v8586, %v8572
        %8588 = vst [vmem:[#allocation3 + $0x70] sm:$0xff] %v8580
        %8589 = vst [vmem:[#allocation3 + $0x78] sm:$0xff] %v8587
        %v8590 = vld [vmem:[#allocation2 + $0x2] sm:$0xff]
        %v8591 = vld [vmem:[#allocation2 + $0xa] sm:$0xff]
        %v8592 = vld [vmem:[#allocation2 + $0x1a] sm:$0xff]
        %v8593 = vld [vmem:[#allocation2 + $0x22] sm:$0xff]
        %v8594 = vld [vmem:[#allocation2 + $0x32] sm:$0xff]
        %v8595 = vld [vmem:[#allocation2 + $0x3a] sm:$0xff]
        %v8596 = vld [vmem:[#allocation2 + $0x4a] sm:$0xff]
        %v8597 = vld [vmem:[#allocation2 + $0x52] sm:$0xff]
        %v8598 = vld [vmem:[#allocation2 + $0x62] sm:$0xff]
        %v8599 = vld [vmem:[#allocation2 + $0x6a] sm:$0xff]
        %v8600 = vld [vmem:[#allocation2 + $0x7a] sm:$0xff]
        %v8601 = vld [vmem:[#allocation2 + $0x82] sm:$0xff]
        %v8602 = vld [vmem:[#allocation2 + $0x92] sm:$0xff]
        %v8603 = vld [vmem:[#allocation2 + $0x9a] sm:$0xff]
        %v8604 = vld [vmem:[#allocation2 + $0xaa] sm:$0xff]
        %v8605 = vld [vmem:[#allocation2 + $0xb2] sm:$0xff]
        %8622 = vrot.lane.b32.xlu0 %v8590, 126
        %v8623 = vpop.permute.xlu0 %8622
        %8624 = vrot.lane.b32.xlu0 %v8591, 126
        %v8625 = vpop.permute.xlu0 %8624
        %8626 = vrot.lane.b32.xlu0 %v8592, 126
        %v8627 = vpop.permute.xlu0 %8626
        %8628 = vrot.lane.b32.xlu0 %v8593, 126
        %v8629 = vpop.permute.xlu0 %8628
        %8630 = vrot.lane.b32.xlu0 %v8594, 126
        %v8631 = vpop.permute.xlu0 %8630
        %8632 = vrot.lane.b32.xlu0 %v8595, 126
        %v8633 = vpop.permute.xlu0 %8632
        %8634 = vrot.lane.b32.xlu0 %v8596, 126
        %v8635 = vpop.permute.xlu0 %8634
        %8636 = vrot.lane.b32.xlu0 %v8597, 126
        %v8637 = vpop.permute.xlu0 %8636
        %8638 = vrot.lane.b32.xlu0 %v8598, 126
        %v8639 = vpop.permute.xlu0 %8638
        %8640 = vrot.lane.b32.xlu0 %v8599, 126
        %v8641 = vpop.permute.xlu0 %8640
        %8642 = vrot.lane.b32.xlu0 %v8600, 126
        %v8643 = vpop.permute.xlu0 %8642
        %8644 = vrot.lane.b32.xlu0 %v8601, 126
        %v8645 = vpop.permute.xlu0 %8644
        %8646 = vrot.lane.b32.xlu0 %v8602, 126
        %v8647 = vpop.permute.xlu0 %8646
        %8648 = vrot.lane.b32.xlu0 %v8603, 126
        %v8649 = vpop.permute.xlu0 %8648
        %8650 = vrot.lane.b32.xlu0 %v8604, 126
        %v8651 = vpop.permute.xlu0 %8650
        %8652 = vrot.lane.b32.xlu0 %v8605, 126
        %v8653 = vpop.permute.xlu0 %8652
        %v8670 = vcombine.low %v8623, %v8631
        %v8671 = vcombine.high %v8623, %v8631
        %v8673 = vunpack.c.l.s4 1983009808
        %v8674 = vunpack.c.0.s8 %v8673
        %v8675 = vlaneseq
        %v8676 = vshrl.u32 %v8675, 7
        %v8677 = vsub.s32 %v8674, %v8676
        %v8678 = vrot.slane %v8670, %v8677
        %v8680 = vunpack.c.l.s4 1983009808
        %v8681 = vunpack.c.0.s8 %v8680
        %v8682 = vlaneseq
        %v8683 = vshrl.u32 %v8682, 7
        %v8684 = vsub.s32 %v8681, %v8683
        %v8685 = vrot.slane %v8671, %v8684
        %v8686 = vcombine.low %v8627, %v8635
        %v8687 = vcombine.high %v8627, %v8635
        %v8689 = vunpack.c.l.s4 1983009808
        %v8690 = vunpack.c.0.s8 %v8689
        %v8691 = vlaneseq
        %v8692 = vshrl.u32 %v8691, 7
        %v8693 = vsub.s32 %v8690, %v8692
        %v8694 = vrot.slane %v8686, %v8693
        %v8696 = vunpack.c.l.s4 1983009808
        %v8697 = vunpack.c.0.s8 %v8696
        %v8698 = vlaneseq
        %v8699 = vshrl.u32 %v8698, 7
        %v8700 = vsub.s32 %v8697, %v8699
        %v8701 = vrot.slane %v8687, %v8700
        %v8702 = vcombine.low %v8639, %v8647
        %v8703 = vcombine.high %v8639, %v8647
        %v8705 = vunpack.c.l.s4 1983009808
        %v8706 = vunpack.c.0.s8 %v8705
        %v8707 = vlaneseq
        %v8708 = vshrl.u32 %v8707, 7
        %v8709 = vsub.s32 %v8706, %v8708
        %v8710 = vrot.slane %v8702, %v8709
        %v8712 = vunpack.c.l.s4 1983009808
        %v8713 = vunpack.c.0.s8 %v8712
        %v8714 = vlaneseq
        %v8715 = vshrl.u32 %v8714, 7
        %v8716 = vsub.s32 %v8713, %v8715
        %v8717 = vrot.slane %v8703, %v8716
        %v8718 = vcombine.low %v8643, %v8651
        %v8719 = vcombine.high %v8643, %v8651
        %v8721 = vunpack.c.l.s4 1983009808
        %v8722 = vunpack.c.0.s8 %v8721
        %v8723 = vlaneseq
        %v8724 = vshrl.u32 %v8723, 7
        %v8725 = vsub.s32 %v8722, %v8724
        %v8726 = vrot.slane %v8718, %v8725
        %v8728 = vunpack.c.l.s4 1983009808
        %v8729 = vunpack.c.0.s8 %v8728
        %v8730 = vlaneseq
        %v8731 = vshrl.u32 %v8730, 7
        %v8732 = vsub.s32 %v8729, %v8731
        %v8733 = vrot.slane %v8719, %v8732
        %v8734 = vcombine.low %v8678, %v8694
        %v8735 = vcombine.high %v8678, %v8694
        %v8737 = vunpack.c.l.s4 1934713408
        %v8738 = vunpack.c.0.s8 %v8737
        %v8739 = vlaneseq
        %v8740 = vshrl.u32 %v8739, 7
        %v8741 = vsub.s32 %v8738, %v8740
        %v8742 = vrot.slane %v8734, %v8741
        %v8744 = vunpack.c.l.s4 1934713408
        %v8745 = vunpack.c.0.s8 %v8744
        %v8746 = vlaneseq
        %v8747 = vshrl.u32 %v8746, 7
        %v8748 = vsub.s32 %v8745, %v8747
        %v8749 = vrot.slane %v8735, %v8748
        %v8750 = vcombine.low %v8685, %v8701
        %v8751 = vcombine.high %v8685, %v8701
        %v8753 = vunpack.c.l.s4 1934713408
        %v8754 = vunpack.c.0.s8 %v8753
        %v8755 = vlaneseq
        %v8756 = vshrl.u32 %v8755, 7
        %v8757 = vsub.s32 %v8754, %v8756
        %v8758 = vrot.slane %v8750, %v8757
        %v8760 = vunpack.c.l.s4 1934713408
        %v8761 = vunpack.c.0.s8 %v8760
        %v8762 = vlaneseq
        %v8763 = vshrl.u32 %v8762, 7
        %v8764 = vsub.s32 %v8761, %v8763
        %v8765 = vrot.slane %v8751, %v8764
        %v8766 = vcombine.low %v8710, %v8726
        %v8767 = vcombine.high %v8710, %v8726
        %v8769 = vunpack.c.l.s4 1934713408
        %v8770 = vunpack.c.0.s8 %v8769
        %v8771 = vlaneseq
        %v8772 = vshrl.u32 %v8771, 7
        %v8773 = vsub.s32 %v8770, %v8772
        %v8774 = vrot.slane %v8766, %v8773
        %v8776 = vunpack.c.l.s4 1934713408
        %v8777 = vunpack.c.0.s8 %v8776
        %v8778 = vlaneseq
        %v8779 = vshrl.u32 %v8778, 7
        %v8780 = vsub.s32 %v8777, %v8779
        %v8781 = vrot.slane %v8767, %v8780
        %v8782 = vcombine.low %v8717, %v8733
        %v8783 = vcombine.high %v8717, %v8733
        %v8785 = vunpack.c.l.s4 1934713408
        %v8786 = vunpack.c.0.s8 %v8785
        %v8787 = vlaneseq
        %v8788 = vshrl.u32 %v8787, 7
        %v8789 = vsub.s32 %v8786, %v8788
        %v8790 = vrot.slane %v8782, %v8789
        %v8792 = vunpack.c.l.s4 1934713408
        %v8793 = vunpack.c.0.s8 %v8792
        %v8794 = vlaneseq
        %v8795 = vshrl.u32 %v8794, 7
        %v8796 = vsub.s32 %v8793, %v8795
        %v8797 = vrot.slane %v8783, %v8796
        %v8798 = vcombine.low %v8742, %v8774
        %v8799 = vcombine.high %v8742, %v8774
        %v8800 = vcombine.low %v8749, %v8781
        %v8801 = vcombine.high %v8749, %v8781
        %v8802 = vcombine.low %v8758, %v8790
        %v8803 = vcombine.high %v8758, %v8790
        %v8804 = vcombine.low %v8765, %v8797
        %v8805 = vcombine.high %v8765, %v8797
        %v8806 = vcombine.low %v8625, %v8633
        %v8807 = vcombine.high %v8625, %v8633
        %v8809 = vunpack.c.l.s4 1983009808
        %v8810 = vunpack.c.0.s8 %v8809
        %v8811 = vlaneseq
        %v8812 = vshrl.u32 %v8811, 7
        %v8813 = vsub.s32 %v8810, %v8812
        %v8814 = vrot.slane %v8806, %v8813
        %v8816 = vunpack.c.l.s4 1983009808
        %v8817 = vunpack.c.0.s8 %v8816
        %v8818 = vlaneseq
        %v8819 = vshrl.u32 %v8818, 7
        %v8820 = vsub.s32 %v8817, %v8819
        %v8821 = vrot.slane %v8807, %v8820
        %v8822 = vcombine.low %v8629, %v8637
        %v8823 = vcombine.high %v8629, %v8637
        %v8825 = vunpack.c.l.s4 1983009808
        %v8826 = vunpack.c.0.s8 %v8825
        %v8827 = vlaneseq
        %v8828 = vshrl.u32 %v8827, 7
        %v8829 = vsub.s32 %v8826, %v8828
        %v8830 = vrot.slane %v8822, %v8829
        %v8832 = vunpack.c.l.s4 1983009808
        %v8833 = vunpack.c.0.s8 %v8832
        %v8834 = vlaneseq
        %v8835 = vshrl.u32 %v8834, 7
        %v8836 = vsub.s32 %v8833, %v8835
        %v8837 = vrot.slane %v8823, %v8836
        %v8838 = vcombine.low %v8641, %v8649
        %v8839 = vcombine.high %v8641, %v8649
        %v8841 = vunpack.c.l.s4 1983009808
        %v8842 = vunpack.c.0.s8 %v8841
        %v8843 = vlaneseq
        %v8844 = vshrl.u32 %v8843, 7
        %v8845 = vsub.s32 %v8842, %v8844
        %v8846 = vrot.slane %v8838, %v8845
        %v8848 = vunpack.c.l.s4 1983009808
        %v8849 = vunpack.c.0.s8 %v8848
        %v8850 = vlaneseq
        %v8851 = vshrl.u32 %v8850, 7
        %v8852 = vsub.s32 %v8849, %v8851
        %v8853 = vrot.slane %v8839, %v8852
        %v8854 = vcombine.low %v8645, %v8653
        %v8855 = vcombine.high %v8645, %v8653
        %v8857 = vunpack.c.l.s4 1983009808
        %v8858 = vunpack.c.0.s8 %v8857
        %v8859 = vlaneseq
        %v8860 = vshrl.u32 %v8859, 7
        %v8861 = vsub.s32 %v8858, %v8860
        %v8862 = vrot.slane %v8854, %v8861
        %v8864 = vunpack.c.l.s4 1983009808
        %v8865 = vunpack.c.0.s8 %v8864
        %v8866 = vlaneseq
        %v8867 = vshrl.u32 %v8866, 7
        %v8868 = vsub.s32 %v8865, %v8867
        %v8869 = vrot.slane %v8855, %v8868
        %v8870 = vcombine.low %v8814, %v8830
        %v8871 = vcombine.high %v8814, %v8830
        %v8873 = vunpack.c.l.s4 1934713408
        %v8874 = vunpack.c.0.s8 %v8873
        %v8875 = vlaneseq
        %v8876 = vshrl.u32 %v8875, 7
        %v8877 = vsub.s32 %v8874, %v8876
        %v8878 = vrot.slane %v8870, %v8877
        %v8880 = vunpack.c.l.s4 1934713408
        %v8881 = vunpack.c.0.s8 %v8880
        %v8882 = vlaneseq
        %v8883 = vshrl.u32 %v8882, 7
        %v8884 = vsub.s32 %v8881, %v8883
        %v8885 = vrot.slane %v8871, %v8884
        %v8886 = vcombine.low %v8821, %v8837
        %v8887 = vcombine.high %v8821, %v8837
        %v8889 = vunpack.c.l.s4 1934713408
        %v8890 = vunpack.c.0.s8 %v8889
        %v8891 = vlaneseq
        %v8892 = vshrl.u32 %v8891, 7
        %v8893 = vsub.s32 %v8890, %v8892
        %v8894 = vrot.slane %v8886, %v8893
        %v8896 = vunpack.c.l.s4 1934713408
        %v8897 = vunpack.c.0.s8 %v8896
        %v8898 = vlaneseq
        %v8899 = vshrl.u32 %v8898, 7
        %v8900 = vsub.s32 %v8897, %v8899
        %v8901 = vrot.slane %v8887, %v8900
        %v8902 = vcombine.low %v8846, %v8862
        %v8903 = vcombine.high %v8846, %v8862
        %v8905 = vunpack.c.l.s4 1934713408
        %v8906 = vunpack.c.0.s8 %v8905
        %v8907 = vlaneseq
        %v8908 = vshrl.u32 %v8907, 7
        %v8909 = vsub.s32 %v8906, %v8908
        %v8910 = vrot.slane %v8902, %v8909
        %v8912 = vunpack.c.l.s4 1934713408
        %v8913 = vunpack.c.0.s8 %v8912
        %v8914 = vlaneseq
        %v8915 = vshrl.u32 %v8914, 7
        %v8916 = vsub.s32 %v8913, %v8915
        %v8917 = vrot.slane %v8903, %v8916
        %v8918 = vcombine.low %v8853, %v8869
        %v8919 = vcombine.high %v8853, %v8869
        %v8921 = vunpack.c.l.s4 1934713408
        %v8922 = vunpack.c.0.s8 %v8921
        %v8923 = vlaneseq
        %v8924 = vshrl.u32 %v8923, 7
        %v8925 = vsub.s32 %v8922, %v8924
        %v8926 = vrot.slane %v8918, %v8925
        %v8928 = vunpack.c.l.s4 1934713408
        %v8929 = vunpack.c.0.s8 %v8928
        %v8930 = vlaneseq
        %v8931 = vshrl.u32 %v8930, 7
        %v8932 = vsub.s32 %v8929, %v8931
        %v8933 = vrot.slane %v8919, %v8932
        %v8934 = vcombine.low %v8878, %v8910
        %v8935 = vcombine.high %v8878, %v8910
        %v8936 = vcombine.low %v8885, %v8917
        %v8937 = vcombine.high %v8885, %v8917
        %v8938 = vcombine.low %v8894, %v8926
        %v8939 = vcombine.high %v8894, %v8926
        %v8940 = vcombine.low %v8901, %v8933
        %v8941 = vcombine.high %v8901, %v8933
        %8943 = vrot.lane.b32.xlu0 %v8799, 16
        %v8944 = vpop.permute.xlu0 %8943
        %8947 = vrot.lane.b32.xlu0 %v8800, 32
        %v8948 = vpop.permute.xlu0 %8947
        %8951 = vrot.lane.b32.xlu0 %v8801, 48
        %v8952 = vpop.permute.xlu0 %8951
        %8955 = vrot.lane.b32.xlu0 %v8802, 64
        %v8956 = vpop.permute.xlu0 %8955
        %8959 = vrot.lane.b32.xlu0 %v8803, 80
        %v8960 = vpop.permute.xlu0 %8959
        %8963 = vrot.lane.b32.xlu0 %v8804, 96
        %v8964 = vpop.permute.xlu0 %8963
        %8967 = vrot.lane.b32.xlu0 %v8805, 112
        %v8968 = vpop.permute.xlu0 %8967
        %8971 = vrot.lane.b32.xlu0 %v8935, 16
        %v8972 = vpop.permute.xlu0 %8971
        %8975 = vrot.lane.b32.xlu0 %v8936, 32
        %v8976 = vpop.permute.xlu0 %8975
        %8979 = vrot.lane.b32.xlu0 %v8937, 48
        %v8980 = vpop.permute.xlu0 %8979
        %8983 = vrot.lane.b32.xlu0 %v8938, 64
        %v8984 = vpop.permute.xlu0 %8983
        %8987 = vrot.lane.b32.xlu0 %v8939, 80
        %v8988 = vpop.permute.xlu0 %8987
        %8991 = vrot.lane.b32.xlu0 %v8940, 96
        %v8992 = vpop.permute.xlu0 %8991
        %8995 = vrot.lane.b32.xlu0 %v8941, 112
        %v8996 = vpop.permute.xlu0 %8995
        %v8998 = vsel %vm1295, %v8798, %v8944
        %v8999 = vsel %vm1297, %v8998, %v8948
        %v9000 = vsel %vm1299, %v8999, %v8952
        %v9001 = vsel %vm1301, %v9000, %v8956
        %v9002 = vsel %vm1303, %v9001, %v8960
        %v9003 = vsel %vm1305, %v9002, %v8964
        %v9004 = vsel %vm1307, %v9003, %v8968
        %v9005 = vsel %vm1295, %v8934, %v8972
        %v9006 = vsel %vm1297, %v9005, %v8976
        %v9007 = vsel %vm1299, %v9006, %v8980
        %v9008 = vsel %vm1301, %v9007, %v8984
        %v9009 = vsel %vm1303, %v9008, %v8988
        %v9010 = vsel %vm1305, %v9009, %v8992
        %v9011 = vsel %vm1307, %v9010, %v8996
        %9012 = vst [vmem:[#allocation3 + $0x80] sm:$0xff] %v9004
        %9013 = vst [vmem:[#allocation3 + $0x88] sm:$0xff] %v9011
        %v9014 = vld [vmem:[#allocation3] sm:$0xff]
        %v9015 = vld [vmem:[#allocation3 + $0x8] sm:$0xff]
        %v9016 = vld [vmem:[#allocation3 + $0x10] sm:$0xff]
        %v9017 = vld [vmem:[#allocation3 + $0x18] sm:$0xff]
        %v9018 = vld [vmem:[#allocation3 + $0x20] sm:$0xff]
        %v9019 = vld [vmem:[#allocation3 + $0x28] sm:$0xff]
        %v9020 = vld [vmem:[#allocation3 + $0x30] sm:$0xff]
        %v9021 = vld [vmem:[#allocation3 + $0x38] sm:$0xff]
        %v9022 = vld [vmem:[#allocation3 + $0x40] sm:$0xff]
        %v9023 = vld [vmem:[#allocation3 + $0x48] sm:$0xff]
        %v9024 = vld [vmem:[#allocation3 + $0x50] sm:$0xff]
        %v9025 = vld [vmem:[#allocation3 + $0x58] sm:$0xff]
        %v9026 = vld [vmem:[#allocation3 + $0x60] sm:$0xff]
        %v9027 = vld [vmem:[#allocation3 + $0x68] sm:$0xff]
        %v9028 = vld [vmem:[#allocation3 + $0x70] sm:$0xff]
        %v9029 = vld [vmem:[#allocation3 + $0x78] sm:$0xff]
        %v9030 = vld [vmem:[#allocation3 + $0x80] sm:$0xff]
        %v9031 = vld [vmem:[#allocation3 + $0x88] sm:$0xff]
        %v9032 = vpack.c.bf16 %v9016, %v9014
        %v9033 = vpack.c.bf16 %v9017, %v9015
        %v9034 = vpack.c.bf16 %v9020, %v9018
        %v9035 = vpack.c.bf16 %v9021, %v9019
        %v9036 = vpack.c.bf16 %v9024, %v9022
        %v9037 = vpack.c.bf16 %v9025, %v9023
        %v9038 = vpack.c.bf16 %v9028, %v9026
        %v9039 = vpack.c.bf16 %v9029, %v9027
        %v9040 = vpack.c.bf16 %v9030, %v9030
        %v9041 = vpack.c.bf16 %v9031, %v9031
        %v9042 = vld [vmem:[%s3] sm:$0xff]
        %v9043 = vpack.c.bf16 %v9042, %v9042
        %v9044 = vld [vmem:[%s4] sm:$0xff]
        %9046 = vset.pattern.permute.xlu0 0
        %9047 = vperm.xlu0 %9046, %v9044
        %v9048 = vpop.permute.xlu0 %9047
        %v9051 = vsel %vm4618, %v9043, 0
        %v9054 = vsel %vm4622, %v9040, 0
        %v9057 = vsel %vm4622, %v9041, 0
        %9059 = vmatprep.subr.bf16.mxu0 %v9033
        %9060 = vmatpush1.bf16.msra.mxu0 %v9032
        %9061 = vmatprep.subr.bf16.mxu0 %v9035
        %9062 = vmatpush1.bf16.msra.mxu0 %v9034
        %9063 = vmatprep.subr.bf16.mxu0 %v9037
        %9064 = vmatpush1.bf16.msra.mxu0 %v9036
        %9065 = vmatprep.subr.bf16.mxu0 %v9039
        %9066 = vmatpush1.bf16.msra.mxu0 %v9038
        %9067 = vmatprep.subr.bf16.mxu0 %v9057
        %9068 = vmatpush1.bf16.msra.mxu0 %v9054
        %9069 = vmatprep.subr.bf16.mxu0 0
        %9070 = vmatpush1.bf16.msra.mxu0 0
        %9071 = vmatprep.subr.bf16.mxu0 0
        %9072 = vmatpush1.bf16.msra.mxu0 0
        %9073 = vmatprep.subr.bf16.mxu0 0
        %9074 = vmatpush1.bf16.msra.mxu0 0
        %9075 = vmatprep.subr.bf16.mxu0 0
        %9076 = vmatpush1.bf16.msra.mxu0 0
        %9077 = vmatprep.subr.bf16.mxu0 0
        %9078 = vmatpush1.bf16.msra.mxu0 0
        %9079 = vmatprep.subr.bf16.mxu0 0
        %9080 = vmatpush1.bf16.msra.mxu0 0
        %9081 = vmatprep.subr.bf16.mxu0 0
        %9082 = vmatpush1.bf16.msra.mxu0 0
        %9083 = vmatprep.subr.bf16.mxu0 0
        %9084 = vmatpush1.bf16.msra.mxu0 0
        %9085 = vmatprep.subr.bf16.mxu0 0
        %9086 = vmatpush1.bf16.msra.mxu0 0
        %9087 = vmatprep.subr.bf16.mxu0 0
        %9088 = vmatpush1.bf16.msra.mxu0 0
        %9089 = vmatprep.subr.bf16.mxu0 0
        %9090 = vmatpush1.bf16.msra.mxu0 0
        %9091 = vmatprep.mubr.bf16.mxu0 0
        %9092 = vmatmul.mubr.bf16.gmra.mrb[0].mxu0 %v9051
        %v9093 = vpop.f32.mrb[0].mxu0
        %v9094 = vadd.f32 %v9048, %v9093
        %v9095 = vpop.f32.mrb[0].mxu0
        %v9096 = vadd.f32 %v9048, %v9095
        %v9097 = vpop.f32.mrb[0].mxu0
        %v9098 = vpop.f32.mrb[0].mxu0
        %9099 = vdwg.mxu0
        %v9100 = vadd.f32 %v9094, %v9096
        %9101 = vadd.xlane.f32.xlu0 %v9100
        %v9102 = vpop.xlane.xlu0 %9101
        %v9103 = vmul.f32 %v9102, 0.00390625
        %v9104 = vmul.f32 %v9094, %v9094
        %v9105 = vmul.f32 %v9096, %v9096
        %v9106 = vadd.f32 %v9104, %v9105
        %9107 = vadd.xlane.f32.xlu0 %v9106
        %v9108 = vpop.xlane.xlu0 %9107
        %v9109 = vmul.f32 %v9108, 0.00390625
        %v9110 = vmul.f32 %v9103, %v9103
        %v9111 = vsub.f32 %v9109, %v9110
        %v9112 = vsub.f32 %v9094, %v9103
        %v9113 = vsub.f32 %v9096, %v9103
        %v9114 = vadd.f32 %v9111, 1e-05
        %v9115 = vrsqrt.pop %v9114
        %v9116 = vmul.f32 %v9112, %v9115
        %v9117 = vmul.f32 %v9113, %v9115
        %v9118 = vld [vmem:[%s214] sm:$0xff]
        %v9119 = vld [vmem:[%s214 + $0x8] sm:$0xff]
        %v9120 = vadd.f32 %v9118, %v9116
        %v9121 = vadd.f32 %v9119, %v9117
        %9122 = vst [vmem:[%s240] sm:$0xff] %v9120
        %9123 = vst [vmem:[%s240 + $0x8] sm:$0xff] %v9121
        %s9124 = sand.u32 %s140, 1
        %s9125 = scalar_lea.sflag [#allocation6], %s9124
        %s9126 = sand.u32 %s140, 1
        %s9127 = smul.addr %s9126, 16
        %s9128 = scalar_lea.vmem [#allocation7], %s9127
        // Predicated region
        $region45: #{tpu_custom_call.1} parent=39 // pred_check
          %p9129 = pneg %p150
        $region46: #{tpu_custom_call.1} parent=39 // pred_check_branch
          %9131 = sbr.rel (%p9129) target = $region48
        $region47: #{tpu_custom_call.1} parent=39 // pred_region
          %s9133 = ssub.s32 256, 256
          %9134 = vsyncadd %s9125, %s9133
          %s9135 = smul.addr %s22, 2
          %s9136 = smul.addr %s9135, 128
          %s9137 = scalar_lea.hbm %s5, %s9136
          %s9139 = sshll.u32 %s9128, 4
          %s9140 = int_to_ptr.vmem [resolvable:$true] %s9139
          %9142 = dma.vmem_to_hbm [thread:$0]  %s9140, 256, %s9137, %s9125
        $region48: #{tpu_custom_call.1} parent=39 // pred_fallthru
          _
      $region40: #{tpu_custom_call.1} parent=5 // pred_fallthru
        _
      %p9143 = scmp.le.s32.totalorder 2, %s17
      // Predicated region
      $region49: #{tpu_custom_call.1} parent=5 // pred_check
        %p9144 = pneg %p9143
      $region50: #{tpu_custom_call.1} parent=5 // pred_check_branch
        %9146 = sbr.rel (%p9144) target = $region52
      $region51: #{tpu_custom_call.1} parent=5 // pred_region
        %s9147 = ssub.s32 %s17, 2
        // Predicated region
        $region53: #{tpu_custom_call.1} parent=51 // pred_check
          %p9148 = pneg %p156
        $region54: #{tpu_custom_call.1} parent=51 // pred_check_branch
          %9150 = sbr.rel (%p9148) target = $region56
        $region55: #{tpu_custom_call.1} parent=51 // pred_region
          %s9151 = sand.u32 %s141, 1
          %s9152 = scalar_lea.sflag [#allocation6], %s9151
          %s9153 = sand.u32 %s141, 1
          %s9154 = smul.addr %s9153, 16
          %s9155 = scalar_lea.vmem [#allocation7], %s9154
          %9156 = dma.done %s9152, 256
        $region56: #{tpu_custom_call.1} parent=51 // pred_fallthru
          _
      $region52: #{tpu_custom_call.1} parent=5 // pred_fallthru
        _
    $region6: #{tpu_custom_call.1} parent=1 // loop_footer
      %s21 = sadd.s32 1, %s17
    $region7: #{tpu_custom_call.1} parent=1 // loop_footer_branch
      %16 = sbr.rel target = $region3
    $region8: #{tpu_custom_call.1} parent=1 // loop_exit
      _
    %9157 = vsyncpa [#allocation5], 1
    %s9158 = scalar_lea.sflag [#allocation5], 1
    %9159 = vsyncpa %s9158, 1
    %9160 = vsyncpa [#allocation6], 1
    %s9161 = scalar_lea.sflag [#allocation6], 1
    %9162 = vsyncpa %s9161, 1

</llo_original>
